<compile_context>
chip_gen: v6e
topology: v6e:2x2x1
jax: 0.10.0
libtpu: 0.0.40
codegen_flags: <defaults>
</compile_context>

<pallas_src>
import functools
import math

import jax
import jax.numpy as jnp
from jax import lax
from jax.experimental import pallas as pl
from jax.experimental.pallas import tpu as pltpu


def _self_attention_kernel(x_ref, wqkv_ref, bqkv_ref, wo_ref, bo_ref, o_ref,
                           qkv_ref, ctx_ref, *, num_heads, head_dim):
    """Fused MHA for a block of `Bb` batch elements.

    x_ref:    (Bb, S, E)   bf16
    wqkv_ref: (E, 3E)      bf16   [Wq | Wk | Wv], stored (in_features, out_features)
    bqkv_ref: (1, 3E)      f32
    wo_ref:   (E, E)       bf16
    bo_ref:   (1, E)       f32
    o_ref:    (Bb, S, E)   f32 (module output dtype)
    qkv_ref:  (Bb*S, 3E)   bf16 VMEM scratch: [q*scale | k | v]
    ctx_ref:  (Bb*S, E)    bf16 VMEM scratch: merged head contexts
    """
    Bb, S, E = x_ref.shape
    M = Bb * S
    Dh = head_dim

    x = x_ref[...].reshape(M, E)  # (M, E) bf16 — clean leading-dim merge, lanes untouched

    # Fused QKV projection: one MXU pass (N = 3E), f32 accumulation, bias add.
    qkv = jnp.dot(x, wqkv_ref[...], preferred_element_type=jnp.float32) + bqkv_ref[...]

    # Stage in VMEM (bf16) to bound live ranges; fold the 1/sqrt(Dh) scale into q once
    # (S*E mults once instead of S*S mults per head).
    scale = 1.0 / math.sqrt(Dh)
    qkv_ref[:, pl.ds(0, E)] = (qkv[:, 0:E] * scale).astype(qkv_ref.dtype)
    qkv_ref[:, pl.ds(E, 2 * E)] = qkv[:, E:3 * E].astype(qkv_ref.dtype)

    # Per-(batch, head) scaled-dot-product attention with a numerically stable softmax.
    # Static unroll (Bb*H iterations); state between iterations lives only in ctx_ref.
    for b in range(Bb):
        r = b * S
        for h in range(num_heads):
            c = h * Dh
            qh = qkv_ref[pl.ds(r, S), pl.ds(c, Dh)]            # (S, Dh) bf16, pre-scaled
            kh = qkv_ref[pl.ds(r, S), pl.ds(E + c, Dh)]        # (S, Dh) bf16
            vh = qkv_ref[pl.ds(r, S), pl.ds(2 * E + c, Dh)]    # (S, Dh) bf16

            # q @ k^T without materializing a transpose: contract both operands on dim 1.
            s = lax.dot_general(qh, kh, (((1,), (1,)), ((), ())),
                                preferred_element_type=jnp.float32)       # (S, S) f32
            m = jnp.max(s, axis=-1, keepdims=True)
            p = jnp.exp(s - m)
            denom = jnp.sum(p, axis=-1, keepdims=True)                    # (S, 1)
            p = p * pl.reciprocal(denom, approx=True)                     # softmax (EUP recip)
            # TODO(synk): attn_dropout omitted (inference-mode identity).

            ctx = jnp.dot(p.astype(vh.dtype), vh,
                          preferred_element_type=jnp.float32)             # (S, Dh) f32
            # Head-major merge along lanes == permute(0, 2, 1, 3) + view(.., all_head_size).
            ctx_ref[pl.ds(r, S), pl.ds(c, Dh)] = ctx.astype(ctx_ref.dtype)

    # Output projection from the merged-context scratch.
    out = jnp.dot(ctx_ref[...], wo_ref[...], preferred_element_type=jnp.float32) + bo_ref[...]
    # TODO(synk): proj_dropout omitted (inference-mode identity).
    o_ref[...] = out.reshape(Bb, S, E).astype(o_ref.dtype)


def _default_batch_blocks(batch):
    """One grid step per TensorCore: B parallel blocks on 2-core v7x, 1 block on v5e/v6e."""
    try:
        kind = jax.devices()[0].device_kind.lower()
    except Exception:
        kind = ""
    return batch if (batch > 1 and "v7" in kind) else 1


def self_attention(x, wq, bq, wk, bk, wv, bv, wo, bo, *, num_heads, batch_blocks=None):
    """Forward pass of the SelfAttention module (eval mode).

    x:            (B, S, E)
    wq/wk/wv/wo:  (E, E), laid out as (in_features, out_features)  [== nn.Linear.weight.T]
    bq/bk/bv/bo:  (E,)
    returns (attention_output (B, S, E), weights=None)   # vis=False in the module
    """
    B, S, E = x.shape
    assert E % num_heads == 0
    head_dim = E // num_heads

    G = _default_batch_blocks(B) if batch_blocks is None else batch_blocks
    assert B % G == 0
    Bb = B // G

    # bf16 operands (MXU-native); biases stay f32 and are added to the f32 accumulators.
    x_b = x.astype(jnp.bfloat16)
    wqkv = jnp.concatenate([wq, wk, wv], axis=1).astype(jnp.bfloat16)          # (E, 3E)
    bqkv = jnp.concatenate([bq, bk, bv]).reshape(1, 3 * E).astype(jnp.float32)  # (1, 3E)
    wo_b = wo.astype(jnp.bfloat16)
    bo_b = bo.reshape(1, E).astype(jnp.float32)

    kernel = functools.partial(_self_attention_kernel,
                               num_heads=num_heads, head_dim=head_dim)

    out = pl.pallas_call(
        kernel,
        out_shape=jax.ShapeDtypeStruct((B, S, E), x.dtype),
        grid_spec=pltpu.PrefetchScalarGridSpec(
            num_scalar_prefetch=0,
            grid=(G,),
            in_specs=[
                pl.BlockSpec((Bb, S, E), lambda g: (g, 0, 0)),   # x block (Bb batch elems)
                pl.BlockSpec((E, 3 * E), lambda g: (0, 0)),      # fused Wqkv (grid-invariant)
                pl.BlockSpec((1, 3 * E), lambda g: (0, 0)),      # fused qkv bias
                pl.BlockSpec((E, E), lambda g: (0, 0)),          # Wo
                pl.BlockSpec((1, E), lambda g: (0, 0)),          # bo
            ],
            out_specs=pl.BlockSpec((Bb, S, E), lambda g: (g, 0, 0)),
            scratch_shapes=[
                pltpu.VMEM((Bb * S, 3 * E), jnp.bfloat16),       # staged [q*scale | k | v]
                pltpu.VMEM((Bb * S, E), jnp.bfloat16),           # merged head contexts
            ],
        ),
        compiler_params=pltpu.CompilerParams(
            # With G == B (v7x) this shards batch elements across the two TensorCores;
            # with G == 1 (single-TC v5e/v6e default) there is one step and it is a no-op.
            dimension_semantics=("parallel",),
        ),
    )(x_b, wqkv, bqkv, wo_b, bo_b)

    return out, None  # vis=False in the module -> weights is None


def _reference(x, wq, bq, wk, bk, wv, bv, wo, bo, num_heads):
    """Pure-JAX reference mirroring the PyTorch SelfAttention.forward (eval mode, f32)."""
    B, S, E = x.shape
    Dh = E // num_heads

    q = x @ wq + bq
    k = x @ wk + bk
    v = x @ wv + bv

    def split_heads(t):  # (B, S, E) -> (B, H, S, Dh)
        return t.reshape(B, S, num_heads, Dh).transpose(0, 2, 1, 3)

    qh, kh, vh = split_heads(q), split_heads(k), split_heads(v)
    scores = jnp.einsum("bhqd,bhkd->bhqk", qh, kh) / math.sqrt(Dh)
    probs = jax.nn.softmax(scores, axis=-1)
    ctx = jnp.einsum("bhqk,bhkd->bhqd", probs, vh)
    ctx = ctx.transpose(0, 2, 1, 3).reshape(B, S, E)
    return ctx @ wo + bo


if __name__ == "__main__":
    # Small shapes consistent with the module: batch=2, seq=128, embed_dim=128, 4 heads.
    B, S, E, H = 2, 128, 128, 4

    key = jax.random.PRNGKey(0)
    kx, kq, kk, kv, ko, kbq, kbk, kbv, kbo = jax.random.split(key, 9)

    x = jax.random.normal(kx, (B, S, E), dtype=jnp.float32)
    scale_w = 1.0 / math.sqrt(E)
    wq = jax.random.normal(kq, (E, E), dtype=jnp.float32) * scale_w
    wk = jax.random.normal(kk, (E, E), dtype=jnp.float32) * scale_w
    wv = jax.random.normal(kv, (E, E), dtype=jnp.float32) * scale_w
    wo = jax.random.normal(ko, (E, E), dtype=jnp.float32) * scale_w
    bq = jax.random.normal(kbq, (E,), dtype=jnp.float32) * 0.1
    bk = jax.random.normal(kbk, (E,), dtype=jnp.float32) * 0.1
    bv = jax.random.normal(kbv, (E,), dtype=jnp.float32) * 0.1
    bo = jax.random.normal(kbo, (E,), dtype=jnp.float32) * 0.1

    out, weights = self_attention(x, wq, bq, wk, bk, wv, bv, wo, bo, num_heads=H)
    out = jax.block_until_ready(out)

    ref = _reference(x, wq, bq, wk, bk, wv, bv, wo, bo, num_heads=H)
    assert out.shape == (B, S, E)
    assert weights is None  # vis=False in the module
    # Tolerance accounts for bf16 operands (MXU-native) vs the f32 default-precision reference.
    assert jnp.allclose(out, ref, atol=5e-2, rtol=5e-2), "mismatch vs reference"

    print("KERNEL_OK")
</pallas_src>

<mosaic_0001>
module attributes {stable_mosaic.version = 11 : i64} {
  func.func @_self_attention_kernel(%arg0: i32, %arg1: memref<2x128x128xbf16, #tpu.memory_space<vmem>>, %arg2: memref<128x384xbf16, #tpu.memory_space<vmem>>, %arg3: memref<1x384xf32, #tpu.memory_space<vmem>>, %arg4: memref<128x128xbf16, #tpu.memory_space<vmem>>, %arg5: memref<1x128xf32, #tpu.memory_space<vmem>>, %arg6: memref<2x128x128xf32, #tpu.memory_space<vmem>>, %arg7: memref<256x384xbf16, #tpu.memory_space<vmem>>, %arg8: memref<256x128xbf16, #tpu.memory_space<vmem>>) attributes {dimension_semantics = [#tpu.dimension_semantics<parallel>], iteration_bounds = array<i64: 1>, scalar_prefetch = 0 : i64, scratch_operands = 2 : i64, tpu.core_type = #tpu.core_type<tc>, window_params = [{transform_indices = @transform_0, window_bounds = array<i64: 2, 128, 128>}, {pipeline_mode = #tpu.pipeline_mode<synchronous>, transform_indices = @transform_1, window_bounds = array<i64: 128, 384>}, {pipeline_mode = #tpu.pipeline_mode<synchronous>, transform_indices = @transform_2, window_bounds = array<i64: 1, 384>}, {pipeline_mode = #tpu.pipeline_mode<synchronous>, transform_indices = @transform_3, window_bounds = array<i64: 128, 128>}, {pipeline_mode = #tpu.pipeline_mode<synchronous>, transform_indices = @transform_4, window_bounds = array<i64: 1, 128>}, {transform_indices = @transform_5, window_bounds = array<i64: 2, 128, 128>}]} {
    %c0 = arith.constant 0 : index
    %c0_0 = arith.constant 0 : index
    %c0_1 = arith.constant 0 : index
    %0 = vector.load %arg1[%c0, %c0_0, %c0_1] : memref<2x128x128xbf16, #tpu.memory_space<vmem>>, vector<2x128x128xbf16>
    %1 = vector.shape_cast %0 : vector<2x128x128xbf16> to vector<256x128xbf16>
    %c0_2 = arith.constant 0 : index
    %c0_3 = arith.constant 0 : index
    %2 = vector.load %arg2[%c0_2, %c0_3] : memref<128x384xbf16, #tpu.memory_space<vmem>>, vector<128x384xbf16>
    %cst = arith.constant dense<0.000000e+00> : vector<256x384xf32>
    %3 = tpu.matmul %1, %2, %cst {dimension_numbers = #tpu.dot_dimension_numbers<[1], [0], [0], [1], [0, 0, 1, 1], [], []>} : vector<256x128xbf16>, vector<128x384xbf16>, vector<256x384xf32> -> vector<256x384xf32>
    %c0_4 = arith.constant 0 : index
    %c0_5 = arith.constant 0 : index
    %4 = vector.load %arg3[%c0_4, %c0_5] : memref<1x384xf32, #tpu.memory_space<vmem>>, vector<1x384xf32>
    %5 = vector.broadcast %4 : vector<1x384xf32> to vector<256x384xf32>
    %6 = arith.addf %3, %5 : vector<256x384xf32>
    %7 = vector.extract_strided_slice %6 {offsets = [0, 0], sizes = [256, 128], strides = [1, 1]} : vector<256x384xf32> to vector<256x128xf32>
    %cst_6 = arith.constant 0.176776692 : f32
    %8 = vector.broadcast %cst_6 : f32 to vector<256x128xf32>
    %9 = arith.mulf %7, %8 : vector<256x128xf32>
    %10 = arith.truncf %9 : vector<256x128xf32> to vector<256x128xbf16>
    %c0_7 = arith.constant 0 : index
    %c0_8 = arith.constant 0 : index
    %11 = vector.load %arg7[%c0_7, %c0_8] : memref<256x384xbf16, #tpu.memory_space<vmem>>, vector<256x128xbf16>
    tpu.vector_store %arg7[%c0_7, %c0_8], %10 {strides = array<i32>} : memref<256x384xbf16, #tpu.memory_space<vmem>>, vector<256x128xbf16>,
    %12 = vector.extract_strided_slice %6 {offsets = [0, 128], sizes = [256, 256], strides = [1, 1]} : vector<256x384xf32> to vector<256x256xf32>
    %13 = arith.truncf %12 : vector<256x256xf32> to vector<256x256xbf16>
    %c0_9 = arith.constant 0 : index
    %c128 = arith.constant 128 : index
    %14 = vector.load %arg7[%c0_9, %c128] : memref<256x384xbf16, #tpu.memory_space<vmem>>, vector<256x256xbf16>
    tpu.vector_store %arg7[%c0_9, %c128], %13 {strides = array<i32>} : memref<256x384xbf16, #tpu.memory_space<vmem>>, vector<256x256xbf16>,
    %c0_10 = arith.constant 0 : index
    %c0_11 = arith.constant 0 : index
    %15 = vector.load %arg7[%c0_10, %c0_11] : memref<256x384xbf16, #tpu.memory_space<vmem>>, vector<128x32xbf16>
    %c0_12 = arith.constant 0 : index
    %c128_13 = arith.constant 128 : index
    %16 = vector.load %arg7[%c0_12, %c128_13] : memref<256x384xbf16, #tpu.memory_space<vmem>>, vector<128x32xbf16>
    %c0_14 = arith.constant 0 : index
    %c256 = arith.constant 256 : index
    %17 = vector.load %arg7[%c0_14, %c256] : memref<256x384xbf16, #tpu.memory_space<vmem>>, vector<128x32xbf16>
    %cst_15 = arith.constant dense<0.000000e+00> : vector<128x128xf32>
    %18 = tpu.matmul %15, %16, %cst_15 {dimension_numbers = #tpu.dot_dimension_numbers<[1], [1], [0], [0], [0, 0, 1, 0], [], []>} : vector<128x32xbf16>, vector<128x32xbf16>, vector<128x128xf32> -> vector<128x128xf32>
    %cst_16 = arith.constant dense<0xFF800000> : vector<128xf32>
    %19 = vector.multi_reduction <maximumf>, %18, %cst_16 [1] : vector<128x128xf32> to vector<128xf32>
    %20 = vector.shape_cast %19 : vector<128xf32> to vector<128x1xf32>
    %21 = vector.broadcast %20 : vector<128x1xf32> to vector<128x128xf32>
    %22 = arith.subf %18, %21 : vector<128x128xf32>
    %23 = math.exp %22 : vector<128x128xf32>
    %cst_17 = arith.constant dense<0.000000e+00> : vector<128xf32>
    %24 = vector.multi_reduction <add>, %23, %cst_17 [1] : vector<128x128xf32> to vector<128xf32>
    %25 = vector.shape_cast %24 : vector<128xf32> to vector<128x1xf32>
    %26 = tpu.reciprocal %25 {approx = true} : vector<128x1xf32> -> vector<128x1xf32>
    %27 = vector.broadcast %26 : vector<128x1xf32> to vector<128x128xf32>
    %28 = arith.mulf %23, %27 : vector<128x128xf32>
    %29 = arith.truncf %28 : vector<128x128xf32> to vector<128x128xbf16>
    %cst_18 = arith.constant dense<0.000000e+00> : vector<128x32xf32>
    %30 = tpu.matmul %29, %17, %cst_18 {dimension_numbers = #tpu.dot_dimension_numbers<[1], [0], [0], [1], [0, 0, 1, 1], [], []>} : vector<128x128xbf16>, vector<128x32xbf16>, vector<128x32xf32> -> vector<128x32xf32>
    %31 = arith.truncf %30 : vector<128x32xf32> to vector<128x32xbf16>
    %c0_19 = arith.constant 0 : index
    %c0_20 = arith.constant 0 : index
    %32 = vector.load %arg8[%c0_19, %c0_20] : memref<256x128xbf16, #tpu.memory_space<vmem>>, vector<128x32xbf16>
    tpu.vector_store %arg8[%c0_19, %c0_20], %31 {strides = array<i32>} : memref<256x128xbf16, #tpu.memory_space<vmem>>, vector<128x32xbf16>,
    %c0_21 = arith.constant 0 : index
    %c32 = arith.constant 32 : index
    %33 = vector.load %arg7[%c0_21, %c32] : memref<256x384xbf16, #tpu.memory_space<vmem>>, vector<128x32xbf16>
    %c0_22 = arith.constant 0 : index
    %c160 = arith.constant 160 : index
    %34 = vector.load %arg7[%c0_22, %c160] : memref<256x384xbf16, #tpu.memory_space<vmem>>, vector<128x32xbf16>
    %c0_23 = arith.constant 0 : index
    %c288 = arith.constant 288 : index
    %35 = vector.load %arg7[%c0_23, %c288] : memref<256x384xbf16, #tpu.memory_space<vmem>>, vector<128x32xbf16>
    %cst_24 = arith.constant dense<0.000000e+00> : vector<128x128xf32>
    %36 = tpu.matmul %33, %34, %cst_24 {dimension_numbers = #tpu.dot_dimension_numbers<[1], [1], [0], [0], [0, 0, 1, 0], [], []>} : vector<128x32xbf16>, vector<128x32xbf16>, vector<128x128xf32> -> vector<128x128xf32>
    %cst_25 = arith.constant dense<0xFF800000> : vector<128xf32>
    %37 = vector.multi_reduction <maximumf>, %36, %cst_25 [1] : vector<128x128xf32> to vector<128xf32>
    %38 = vector.shape_cast %37 : vector<128xf32> to vector<128x1xf32>
    %39 = vector.broadcast %38 : vector<128x1xf32> to vector<128x128xf32>
    %40 = arith.subf %36, %39 : vector<128x128xf32>
    %41 = math.exp %40 : vector<128x128xf32>
    %cst_26 = arith.constant dense<0.000000e+00> : vector<128xf32>
    %42 = vector.multi_reduction <add>, %41, %cst_26 [1] : vector<128x128xf32> to vector<128xf32>
    %43 = vector.shape_cast %42 : vector<128xf32> to vector<128x1xf32>
    %44 = tpu.reciprocal %43 {approx = true} : vector<128x1xf32> -> vector<128x1xf32>
    %45 = vector.broadcast %44 : vector<128x1xf32> to vector<128x128xf32>
    %46 = arith.mulf %41, %45 : vector<128x128xf32>
    %47 = arith.truncf %46 : vector<128x128xf32> to vector<128x128xbf16>
    %cst_27 = arith.constant dense<0.000000e+00> : vector<128x32xf32>
    %48 = tpu.matmul %47, %35, %cst_27 {dimension_numbers = #tpu.dot_dimension_numbers<[1], [0], [0], [1], [0, 0, 1, 1], [], []>} : vector<128x128xbf16>, vector<128x32xbf16>, vector<128x32xf32> -> vector<128x32xf32>
    %49 = arith.truncf %48 : vector<128x32xf32> to vector<128x32xbf16>
    %c0_28 = arith.constant 0 : index
    %c32_29 = arith.constant 32 : index
    %50 = vector.load %arg8[%c0_28, %c32_29] : memref<256x128xbf16, #tpu.memory_space<vmem>>, vector<128x32xbf16>
    tpu.vector_store %arg8[%c0_28, %c32_29], %49 {strides = array<i32>} : memref<256x128xbf16, #tpu.memory_space<vmem>>, vector<128x32xbf16>,
    %c0_30 = arith.constant 0 : index
    %c64 = arith.constant 64 : index
    %51 = vector.load %arg7[%c0_30, %c64] : memref<256x384xbf16, #tpu.memory_space<vmem>>, vector<128x32xbf16>
    %c0_31 = arith.constant 0 : index
    %c192 = arith.constant 192 : index
    %52 = vector.load %arg7[%c0_31, %c192] : memref<256x384xbf16, #tpu.memory_space<vmem>>, vector<128x32xbf16>
    %c0_32 = arith.constant 0 : index
    %c320 = arith.constant 320 : index
    %53 = vector.load %arg7[%c0_32, %c320] : memref<256x384xbf16, #tpu.memory_space<vmem>>, vector<128x32xbf16>
    %cst_33 = arith.constant dense<0.000000e+00> : vector<128x128xf32>
    %54 = tpu.matmul %51, %52, %cst_33 {dimension_numbers = #tpu.dot_dimension_numbers<[1], [1], [0], [0], [0, 0, 1, 0], [], []>} : vector<128x32xbf16>, vector<128x32xbf16>, vector<128x128xf32> -> vector<128x128xf32>
    %cst_34 = arith.constant dense<0xFF800000> : vector<128xf32>
    %55 = vector.multi_reduction <maximumf>, %54, %cst_34 [1] : vector<128x128xf32> to vector<128xf32>
    %56 = vector.shape_cast %55 : vector<128xf32> to vector<128x1xf32>
    %57 = vector.broadcast %56 : vector<128x1xf32> to vector<128x128xf32>
    %58 = arith.subf %54, %57 : vector<128x128xf32>
    %59 = math.exp %58 : vector<128x128xf32>
    %cst_35 = arith.constant dense<0.000000e+00> : vector<128xf32>
    %60 = vector.multi_reduction <add>, %59, %cst_35 [1] : vector<128x128xf32> to vector<128xf32>
    %61 = vector.shape_cast %60 : vector<128xf32> to vector<128x1xf32>
    %62 = tpu.reciprocal %61 {approx = true} : vector<128x1xf32> -> vector<128x1xf32>
    %63 = vector.broadcast %62 : vector<128x1xf32> to vector<128x128xf32>
    %64 = arith.mulf %59, %63 : vector<128x128xf32>
    %65 = arith.truncf %64 : vector<128x128xf32> to vector<128x128xbf16>
    %cst_36 = arith.constant dense<0.000000e+00> : vector<128x32xf32>
    %66 = tpu.matmul %65, %53, %cst_36 {dimension_numbers = #tpu.dot_dimension_numbers<[1], [0], [0], [1], [0, 0, 1, 1], [], []>} : vector<128x128xbf16>, vector<128x32xbf16>, vector<128x32xf32> -> vector<128x32xf32>
    %67 = arith.truncf %66 : vector<128x32xf32> to vector<128x32xbf16>
    %c0_37 = arith.constant 0 : index
    %c64_38 = arith.constant 64 : index
    %68 = vector.load %arg8[%c0_37, %c64_38] : memref<256x128xbf16, #tpu.memory_space<vmem>>, vector<128x32xbf16>
    tpu.vector_store %arg8[%c0_37, %c64_38], %67 {strides = array<i32>} : memref<256x128xbf16, #tpu.memory_space<vmem>>, vector<128x32xbf16>,
    %c0_39 = arith.constant 0 : index
    %c96 = arith.constant 96 : index
    %69 = vector.load %arg7[%c0_39, %c96] : memref<256x384xbf16, #tpu.memory_space<vmem>>, vector<128x32xbf16>
    %c0_40 = arith.constant 0 : index
    %c224 = arith.constant 224 : index
    %70 = vector.load %arg7[%c0_40, %c224] : memref<256x384xbf16, #tpu.memory_space<vmem>>, vector<128x32xbf16>
    %c0_41 = arith.constant 0 : index
    %c352 = arith.constant 352 : index
    %71 = vector.load %arg7[%c0_41, %c352] : memref<256x384xbf16, #tpu.memory_space<vmem>>, vector<128x32xbf16>
    %cst_42 = arith.constant dense<0.000000e+00> : vector<128x128xf32>
    %72 = tpu.matmul %69, %70, %cst_42 {dimension_numbers = #tpu.dot_dimension_numbers<[1], [1], [0], [0], [0, 0, 1, 0], [], []>} : vector<128x32xbf16>, vector<128x32xbf16>, vector<128x128xf32> -> vector<128x128xf32>
    %cst_43 = arith.constant dense<0xFF800000> : vector<128xf32>
    %73 = vector.multi_reduction <maximumf>, %72, %cst_43 [1] : vector<128x128xf32> to vector<128xf32>
    %74 = vector.shape_cast %73 : vector<128xf32> to vector<128x1xf32>
    %75 = vector.broadcast %74 : vector<128x1xf32> to vector<128x128xf32>
    %76 = arith.subf %72, %75 : vector<128x128xf32>
    %77 = math.exp %76 : vector<128x128xf32>
    %cst_44 = arith.constant dense<0.000000e+00> : vector<128xf32>
    %78 = vector.multi_reduction <add>, %77, %cst_44 [1] : vector<128x128xf32> to vector<128xf32>
    %79 = vector.shape_cast %78 : vector<128xf32> to vector<128x1xf32>
    %80 = tpu.reciprocal %79 {approx = true} : vector<128x1xf32> -> vector<128x1xf32>
    %81 = vector.broadcast %80 : vector<128x1xf32> to vector<128x128xf32>
    %82 = arith.mulf %77, %81 : vector<128x128xf32>
    %83 = arith.truncf %82 : vector<128x128xf32> to vector<128x128xbf16>
    %cst_45 = arith.constant dense<0.000000e+00> : vector<128x32xf32>
    %84 = tpu.matmul %83, %71, %cst_45 {dimension_numbers = #tpu.dot_dimension_numbers<[1], [0], [0], [1], [0, 0, 1, 1], [], []>} : vector<128x128xbf16>, vector<128x32xbf16>, vector<128x32xf32> -> vector<128x32xf32>
    %85 = arith.truncf %84 : vector<128x32xf32> to vector<128x32xbf16>
    %c0_46 = arith.constant 0 : index
    %c96_47 = arith.constant 96 : index
    %86 = vector.load %arg8[%c0_46, %c96_47] : memref<256x128xbf16, #tpu.memory_space<vmem>>, vector<128x32xbf16>
    tpu.vector_store %arg8[%c0_46, %c96_47], %85 {strides = array<i32>} : memref<256x128xbf16, #tpu.memory_space<vmem>>, vector<128x32xbf16>,
    %c128_48 = arith.constant 128 : index
    %c0_49 = arith.constant 0 : index
    %87 = vector.load %arg7[%c128_48, %c0_49] : memref<256x384xbf16, #tpu.memory_space<vmem>>, vector<128x32xbf16>
    %c128_50 = arith.constant 128 : index
    %c128_51 = arith.constant 128 : index
    %88 = vector.load %arg7[%c128_50, %c128_51] : memref<256x384xbf16, #tpu.memory_space<vmem>>, vector<128x32xbf16>
    %c128_52 = arith.constant 128 : index
    %c256_53 = arith.constant 256 : index
    %89 = vector.load %arg7[%c128_52, %c256_53] : memref<256x384xbf16, #tpu.memory_space<vmem>>, vector<128x32xbf16>
    %cst_54 = arith.constant dense<0.000000e+00> : vector<128x128xf32>
    %90 = tpu.matmul %87, %88, %cst_54 {dimension_numbers = #tpu.dot_dimension_numbers<[1], [1], [0], [0], [0, 0, 1, 0], [], []>} : vector<128x32xbf16>, vector<128x32xbf16>, vector<128x128xf32> -> vector<128x128xf32>
    %cst_55 = arith.constant dense<0xFF800000> : vector<128xf32>
    %91 = vector.multi_reduction <maximumf>, %90, %cst_55 [1] : vector<128x128xf32> to vector<128xf32>
    %92 = vector.shape_cast %91 : vector<128xf32> to vector<128x1xf32>
    %93 = vector.broadcast %92 : vector<128x1xf32> to vector<128x128xf32>
    %94 = arith.subf %90, %93 : vector<128x128xf32>
    %95 = math.exp %94 : vector<128x128xf32>
    %cst_56 = arith.constant dense<0.000000e+00> : vector<128xf32>
    %96 = vector.multi_reduction <add>, %95, %cst_56 [1] : vector<128x128xf32> to vector<128xf32>
    %97 = vector.shape_cast %96 : vector<128xf32> to vector<128x1xf32>
    %98 = tpu.reciprocal %97 {approx = true} : vector<128x1xf32> -> vector<128x1xf32>
    %99 = vector.broadcast %98 : vector<128x1xf32> to vector<128x128xf32>
    %100 = arith.mulf %95, %99 : vector<128x128xf32>
    %101 = arith.truncf %100 : vector<128x128xf32> to vector<128x128xbf16>
    %cst_57 = arith.constant dense<0.000000e+00> : vector<128x32xf32>
    %102 = tpu.matmul %101, %89, %cst_57 {dimension_numbers = #tpu.dot_dimension_numbers<[1], [0], [0], [1], [0, 0, 1, 1], [], []>} : vector<128x128xbf16>, vector<128x32xbf16>, vector<128x32xf32> -> vector<128x32xf32>
    %103 = arith.truncf %102 : vector<128x32xf32> to vector<128x32xbf16>
    %c128_58 = arith.constant 128 : index
    %c0_59 = arith.constant 0 : index
    %104 = vector.load %arg8[%c128_58, %c0_59] : memref<256x128xbf16, #tpu.memory_space<vmem>>, vector<128x32xbf16>
    tpu.vector_store %arg8[%c128_58, %c0_59], %103 {strides = array<i32>} : memref<256x128xbf16, #tpu.memory_space<vmem>>, vector<128x32xbf16>,
    %c128_60 = arith.constant 128 : index
    %c32_61 = arith.constant 32 : index
    %105 = vector.load %arg7[%c128_60, %c32_61] : memref<256x384xbf16, #tpu.memory_space<vmem>>, vector<128x32xbf16>
    %c128_62 = arith.constant 128 : index
    %c160_63 = arith.constant 160 : index
    %106 = vector.load %arg7[%c128_62, %c160_63] : memref<256x384xbf16, #tpu.memory_space<vmem>>, vector<128x32xbf16>
    %c128_64 = arith.constant 128 : index
    %c288_65 = arith.constant 288 : index
    %107 = vector.load %arg7[%c128_64, %c288_65] : memref<256x384xbf16, #tpu.memory_space<vmem>>, vector<128x32xbf16>
    %cst_66 = arith.constant dense<0.000000e+00> : vector<128x128xf32>
    %108 = tpu.matmul %105, %106, %cst_66 {dimension_numbers = #tpu.dot_dimension_numbers<[1], [1], [0], [0], [0, 0, 1, 0], [], []>} : vector<128x32xbf16>, vector<128x32xbf16>, vector<128x128xf32> -> vector<128x128xf32>
    %cst_67 = arith.constant dense<0xFF800000> : vector<128xf32>
    %109 = vector.multi_reduction <maximumf>, %108, %cst_67 [1] : vector<128x128xf32> to vector<128xf32>
    %110 = vector.shape_cast %109 : vector<128xf32> to vector<128x1xf32>
    %111 = vector.broadcast %110 : vector<128x1xf32> to vector<128x128xf32>
    %112 = arith.subf %108, %111 : vector<128x128xf32>
    %113 = math.exp %112 : vector<128x128xf32>
    %cst_68 = arith.constant dense<0.000000e+00> : vector<128xf32>
    %114 = vector.multi_reduction <add>, %113, %cst_68 [1] : vector<128x128xf32> to vector<128xf32>
    %115 = vector.shape_cast %114 : vector<128xf32> to vector<128x1xf32>
    %116 = tpu.reciprocal %115 {approx = true} : vector<128x1xf32> -> vector<128x1xf32>
    %117 = vector.broadcast %116 : vector<128x1xf32> to vector<128x128xf32>
    %118 = arith.mulf %113, %117 : vector<128x128xf32>
    %119 = arith.truncf %118 : vector<128x128xf32> to vector<128x128xbf16>
    %cst_69 = arith.constant dense<0.000000e+00> : vector<128x32xf32>
    %120 = tpu.matmul %119, %107, %cst_69 {dimension_numbers = #tpu.dot_dimension_numbers<[1], [0], [0], [1], [0, 0, 1, 1], [], []>} : vector<128x128xbf16>, vector<128x32xbf16>, vector<128x32xf32> -> vector<128x32xf32>
    %121 = arith.truncf %120 : vector<128x32xf32> to vector<128x32xbf16>
    %c128_70 = arith.constant 128 : index
    %c32_71 = arith.constant 32 : index
    %122 = vector.load %arg8[%c128_70, %c32_71] : memref<256x128xbf16, #tpu.memory_space<vmem>>, vector<128x32xbf16>
    tpu.vector_store %arg8[%c128_70, %c32_71], %121 {strides = array<i32>} : memref<256x128xbf16, #tpu.memory_space<vmem>>, vector<128x32xbf16>,
    %c128_72 = arith.constant 128 : index
    %c64_73 = arith.constant 64 : index
    %123 = vector.load %arg7[%c128_72, %c64_73] : memref<256x384xbf16, #tpu.memory_space<vmem>>, vector<128x32xbf16>
    %c128_74 = arith.constant 128 : index
    %c192_75 = arith.constant 192 : index
    %124 = vector.load %arg7[%c128_74, %c192_75] : memref<256x384xbf16, #tpu.memory_space<vmem>>, vector<128x32xbf16>
    %c128_76 = arith.constant 128 : index
    %c320_77 = arith.constant 320 : index
    %125 = vector.load %arg7[%c128_76, %c320_77] : memref<256x384xbf16, #tpu.memory_space<vmem>>, vector<128x32xbf16>
    %cst_78 = arith.constant dense<0.000000e+00> : vector<128x128xf32>
    %126 = tpu.matmul %123, %124, %cst_78 {dimension_numbers = #tpu.dot_dimension_numbers<[1], [1], [0], [0], [0, 0, 1, 0], [], []>} : vector<128x32xbf16>, vector<128x32xbf16>, vector<128x128xf32> -> vector<128x128xf32>
    %cst_79 = arith.constant dense<0xFF800000> : vector<128xf32>
    %127 = vector.multi_reduction <maximumf>, %126, %cst_79 [1] : vector<128x128xf32> to vector<128xf32>
    %128 = vector.shape_cast %127 : vector<128xf32> to vector<128x1xf32>
    %129 = vector.broadcast %128 : vector<128x1xf32> to vector<128x128xf32>
    %130 = arith.subf %126, %129 : vector<128x128xf32>
    %131 = math.exp %130 : vector<128x128xf32>
    %cst_80 = arith.constant dense<0.000000e+00> : vector<128xf32>
    %132 = vector.multi_reduction <add>, %131, %cst_80 [1] : vector<128x128xf32> to vector<128xf32>
    %133 = vector.shape_cast %132 : vector<128xf32> to vector<128x1xf32>
    %134 = tpu.reciprocal %133 {approx = true} : vector<128x1xf32> -> vector<128x1xf32>
    %135 = vector.broadcast %134 : vector<128x1xf32> to vector<128x128xf32>
    %136 = arith.mulf %131, %135 : vector<128x128xf32>
    %137 = arith.truncf %136 : vector<128x128xf32> to vector<128x128xbf16>
    %cst_81 = arith.constant dense<0.000000e+00> : vector<128x32xf32>
    %138 = tpu.matmul %137, %125, %cst_81 {dimension_numbers = #tpu.dot_dimension_numbers<[1], [0], [0], [1], [0, 0, 1, 1], [], []>} : vector<128x128xbf16>, vector<128x32xbf16>, vector<128x32xf32> -> vector<128x32xf32>
    %139 = arith.truncf %138 : vector<128x32xf32> to vector<128x32xbf16>
    %c128_82 = arith.constant 128 : index
    %c64_83 = arith.constant 64 : index
    %140 = vector.load %arg8[%c128_82, %c64_83] : memref<256x128xbf16, #tpu.memory_space<vmem>>, vector<128x32xbf16>
    tpu.vector_store %arg8[%c128_82, %c64_83], %139 {strides = array<i32>} : memref<256x128xbf16, #tpu.memory_space<vmem>>, vector<128x32xbf16>,
    %c128_84 = arith.constant 128 : index
    %c96_85 = arith.constant 96 : index
    %141 = vector.load %arg7[%c128_84, %c96_85] : memref<256x384xbf16, #tpu.memory_space<vmem>>, vector<128x32xbf16>
    %c128_86 = arith.constant 128 : index
    %c224_87 = arith.constant 224 : index
    %142 = vector.load %arg7[%c128_86, %c224_87] : memref<256x384xbf16, #tpu.memory_space<vmem>>, vector<128x32xbf16>
    %c128_88 = arith.constant 128 : index
    %c352_89 = arith.constant 352 : index
    %143 = vector.load %arg7[%c128_88, %c352_89] : memref<256x384xbf16, #tpu.memory_space<vmem>>, vector<128x32xbf16>
    %cst_90 = arith.constant dense<0.000000e+00> : vector<128x128xf32>
    %144 = tpu.matmul %141, %142, %cst_90 {dimension_numbers = #tpu.dot_dimension_numbers<[1], [1], [0], [0], [0, 0, 1, 0], [], []>} : vector<128x32xbf16>, vector<128x32xbf16>, vector<128x128xf32> -> vector<128x128xf32>
    %cst_91 = arith.constant dense<0xFF800000> : vector<128xf32>
    %145 = vector.multi_reduction <maximumf>, %144, %cst_91 [1] : vector<128x128xf32> to vector<128xf32>
    %146 = vector.shape_cast %145 : vector<128xf32> to vector<128x1xf32>
    %147 = vector.broadcast %146 : vector<128x1xf32> to vector<128x128xf32>
    %148 = arith.subf %144, %147 : vector<128x128xf32>
    %149 = math.exp %148 : vector<128x128xf32>
    %cst_92 = arith.constant dense<0.000000e+00> : vector<128xf32>
    %150 = vector.multi_reduction <add>, %149, %cst_92 [1] : vector<128x128xf32> to vector<128xf32>
    %151 = vector.shape_cast %150 : vector<128xf32> to vector<128x1xf32>
    %152 = tpu.reciprocal %151 {approx = true} : vector<128x1xf32> -> vector<128x1xf32>
    %153 = vector.broadcast %152 : vector<128x1xf32> to vector<128x128xf32>
    %154 = arith.mulf %149, %153 : vector<128x128xf32>
    %155 = arith.truncf %154 : vector<128x128xf32> to vector<128x128xbf16>
    %cst_93 = arith.constant dense<0.000000e+00> : vector<128x32xf32>
    %156 = tpu.matmul %155, %143, %cst_93 {dimension_numbers = #tpu.dot_dimension_numbers<[1], [0], [0], [1], [0, 0, 1, 1], [], []>} : vector<128x128xbf16>, vector<128x32xbf16>, vector<128x32xf32> -> vector<128x32xf32>
    %157 = arith.truncf %156 : vector<128x32xf32> to vector<128x32xbf16>
    %c128_94 = arith.constant 128 : index
    %c96_95 = arith.constant 96 : index
    %158 = vector.load %arg8[%c128_94, %c96_95] : memref<256x128xbf16, #tpu.memory_space<vmem>>, vector<128x32xbf16>
    tpu.vector_store %arg8[%c128_94, %c96_95], %157 {strides = array<i32>} : memref<256x128xbf16, #tpu.memory_space<vmem>>, vector<128x32xbf16>,
    %c0_96 = arith.constant 0 : index
    %c0_97 = arith.constant 0 : index
    %159 = vector.load %arg8[%c0_96, %c0_97] : memref<256x128xbf16, #tpu.memory_space<vmem>>, vector<256x128xbf16>
    %c0_98 = arith.constant 0 : index
    %c0_99 = arith.constant 0 : index
    %160 = vector.load %arg4[%c0_98, %c0_99] : memref<128x128xbf16, #tpu.memory_space<vmem>>, vector<128x128xbf16>
    %cst_100 = arith.constant dense<0.000000e+00> : vector<256x128xf32>
    %161 = tpu.matmul %159, %160, %cst_100 {dimension_numbers = #tpu.dot_dimension_numbers<[1], [0], [0], [1], [0, 0, 1, 1], [], []>} : vector<256x128xbf16>, vector<128x128xbf16>, vector<256x128xf32> -> vector<256x128xf32>
    %c0_101 = arith.constant 0 : index
    %c0_102 = arith.constant 0 : index
    %162 = vector.load %arg5[%c0_101, %c0_102] : memref<1x128xf32, #tpu.memory_space<vmem>>, vector<1x128xf32>
    %163 = vector.broadcast %162 : vector<1x128xf32> to vector<256x128xf32>
    %164 = arith.addf %161, %163 : vector<256x128xf32>
    %165 = vector.shape_cast %164 : vector<256x128xf32> to vector<2x128x128xf32>
    %c0_103 = arith.constant 0 : index
    %c0_104 = arith.constant 0 : index
    %c0_105 = arith.constant 0 : index
    %166 = vector.load %arg6[%c0_103, %c0_104, %c0_105] : memref<2x128x128xf32, #tpu.memory_space<vmem>>, vector<2x128x128xf32>
    tpu.vector_store %arg6[%c0_103, %c0_104, %c0_105], %165 {strides = array<i32>} : memref<2x128x128xf32, #tpu.memory_space<vmem>>, vector<2x128x128xf32>,
    return
  }
  func.func @transform_0(%arg0: i32) -> (i32, i32, i32) {
    %c0_i32 = arith.constant 0 : i32
    %c0_i32_0 = arith.constant 0 : i32
    %c0_i32_1 = arith.constant 0 : i32
    return %arg0, %c0_i32, %c0_i32_0 : i32, i32, i32
  }
  func.func @transform_1(%arg0: i32) -> (i32, i32) {
    %c0_i32 = arith.constant 0 : i32
    %c0_i32_0 = arith.constant 0 : i32
    %c0_i32_1 = arith.constant 0 : i32
    return %c0_i32, %c0_i32_0 : i32, i32
  }
  func.func @transform_2(%arg0: i32) -> (i32, i32) {
    %c0_i32 = arith.constant 0 : i32
    %c0_i32_0 = arith.constant 0 : i32
    %c0_i32_1 = arith.constant 0 : i32
    return %c0_i32, %c0_i32_0 : i32, i32
  }
  func.func @transform_3(%arg0: i32) -> (i32, i32) {
    %c0_i32 = arith.constant 0 : i32
    %c0_i32_0 = arith.constant 0 : i32
    %c0_i32_1 = arith.constant 0 : i32
    return %c0_i32, %c0_i32_0 : i32, i32
  }
  func.func @transform_4(%arg0: i32) -> (i32, i32) {
    %c0_i32 = arith.constant 0 : i32
    %c0_i32_0 = arith.constant 0 : i32
    %c0_i32_1 = arith.constant 0 : i32
    return %c0_i32, %c0_i32_0 : i32, i32
  }
  func.func @transform_5(%arg0: i32) -> (i32, i32, i32) {
    %c0_i32 = arith.constant 0 : i32
    %c0_i32_0 = arith.constant 0 : i32
    %c0_i32_1 = arith.constant 0 : i32
    return %arg0, %c0_i32, %c0_i32_0 : i32, i32, i32
  }
}

</mosaic_0001>

<llo_original>
// kernel: tpu_custom_call.1
$region0: #{tpu_custom_call.1}
  #allocation0 [shape = 'u32[]', space=smem, size = 0x4, offset = 0x4, fixed_abs, tag = 'smem constant byte address 0x4 - core index']
  #allocation1 [shape = 'u32[144,128]{1,0:T(1,128)}', space=vmem, size = 0x12000, scoped, tag = 'internal scratch']
  #allocation2 [shape = 'bf16[256,384]{1,0:T(8,128)(2,1)}', space=vmem, size = 0x30000, scoped, tag = 'scratch operand']
  #allocation3 [shape = 'bf16[256,128]{1,0:T(8,128)(2,1)}', space=vmem, size = 0x10000, scoped, tag = 'scratch operand']
  %s0 = inlined_call_operand.hbm [shape: bf16[2,128,128], index: 0, kind: input, shape index: {}]
  %s1 = inlined_call_operand.hbm [shape: bf16[128,384], index: 1, kind: input, shape index: {}]
  %s2 = inlined_call_operand.vmem [shape: f32[1,384], index: 2, kind: input, shape index: {}]
  %s3 = inlined_call_operand.hbm [shape: bf16[128,128], index: 3, kind: input, shape index: {}]
  %s4 = inlined_call_operand.vmem [shape: f32[1,128], index: 4, kind: input, shape index: {}]
  %s5 = inlined_call_operand.hbm [shape: f32[2,128,128], index: 5, kind: output, shape index: {}]
  %s6 = sld [smem:[#allocation0]]
  $region42: #{tpu_custom_call.1} parent=0
    _
  %s8 = ssub.s32 1, %s6
  %s9 = scalar_select 0, %s8, %s6
  $region1: #{tpu_custom_call.1} parent=0
    #allocation4 [shape = 'u8[65536]{0}', space=vmem, size = 0x10000, scoped, tag = 'input window, operand 0, single buffered']
    #allocation5 [shape = 's32[1]{0}', space=sflag, size = 0x4, scoped, tag = 'scoped memory for tpu_custom_call.1']
    #allocation6 [shape = 's32[1]{0}', space=sflag, size = 0x4, scoped, tag = 'scoped memory for tpu_custom_call.1']
    #allocation7 [shape = 'u8[98304]{0}', space=vmem, size = 0x18000, scoped, tag = 'input window, operand 1, single buffered']
    #allocation8 [shape = 's32[1]{0}', space=sflag, size = 0x4, scoped, tag = 'scoped memory for tpu_custom_call.1']
    #allocation9 [shape = 'u8[32768]{0}', space=vmem, size = 0x8000, scoped, tag = 'input window, operand 3, single buffered']
    #allocation10 [shape = 'u8[131072]{0}', space=vmem, size = 0x20000, scoped, tag = 'output window, operand 0, single buffered']
    %10 = vsyncpa [#allocation5], 0
    %11 = vsyncpa [#allocation8], 0
    %12 = vsyncpa [#allocation6], 0
    // Predicated region
    $region2: #{tpu_custom_call.1} parent=1 // pred_check
      _
    $region3: #{tpu_custom_call.1} parent=1 // pred_check_branch
      %14 = sbr.rel (0) target = $region5
    $region4: #{tpu_custom_call.1} parent=1 // pred_region
      %s16 = ssub.s32 2048, 2048
      %17 = vsyncadd [#allocation5], %s16
      %s18 = sshll.u32 [#allocation4], 4
      %s19 = int_to_ptr.vmem [resolvable:$true] %s18
      %24 = dma.hbm_to_vmem [thread:$0]  %s0, 2048, %s19, [#allocation5], 64, 64, 4
    $region5: #{tpu_custom_call.1} parent=1 // pred_fallthru
      _
    // Predicated region
    $region6: #{tpu_custom_call.1} parent=1 // pred_check
      _
    $region7: #{tpu_custom_call.1} parent=1 // pred_check_branch
      %26 = sbr.rel (0) target = $region9
    $region8: #{tpu_custom_call.1} parent=1 // pred_region
      %s28 = ssub.s32 3072, 3072
      %29 = vsyncadd [#allocation8], %s28
      %s30 = sshll.u32 [#allocation7], 4
      %s31 = int_to_ptr.vmem [resolvable:$true] %s30
      %36 = dma.hbm_to_vmem [thread:$0]  %s1, 3072, %s31, [#allocation8], 192, 192, 12
    $region9: #{tpu_custom_call.1} parent=1 // pred_fallthru
      _
    // Predicated region
    $region10: #{tpu_custom_call.1} parent=1 // pred_check
      _
    $region11: #{tpu_custom_call.1} parent=1 // pred_check_branch
      %38 = sbr.rel (0) target = $region13
    $region12: #{tpu_custom_call.1} parent=1 // pred_region
      _
    $region13: #{tpu_custom_call.1} parent=1 // pred_fallthru
      _
    // Predicated region
    $region14: #{tpu_custom_call.1} parent=1 // pred_check
      _
    $region15: #{tpu_custom_call.1} parent=1 // pred_check_branch
      %40 = sbr.rel (0) target = $region17
    $region16: #{tpu_custom_call.1} parent=1 // pred_region
      %s42 = ssub.s32 1024, 1024
      %43 = vsyncadd [#allocation8], %s42
      %s44 = sshll.u32 [#allocation9], 4
      %s45 = int_to_ptr.vmem [resolvable:$true] %s44
      %50 = dma.hbm_to_vmem [thread:$0]  %s3, 1024, %s45, [#allocation8], 64, 64, 4
    $region17: #{tpu_custom_call.1} parent=1 // pred_fallthru
      _
    // Predicated region
    $region18: #{tpu_custom_call.1} parent=1 // pred_check
      _
    $region19: #{tpu_custom_call.1} parent=1 // pred_check_branch
      %52 = sbr.rel (0) target = $region21
    $region20: #{tpu_custom_call.1} parent=1 // pred_region
      _
    $region21: #{tpu_custom_call.1} parent=1 // pred_fallthru
      _
    // Predicated region
    $region22: #{tpu_custom_call.1} parent=1 // pred_check
      _
    $region23: #{tpu_custom_call.1} parent=1 // pred_check_branch
      %54 = sbr.rel (0) target = $region25
    $region24: #{tpu_custom_call.1} parent=1 // pred_region
      %55 = dma.done [#allocation5], 2048
    $region25: #{tpu_custom_call.1} parent=1 // pred_fallthru
      _
    // Predicated region
    $region26: #{tpu_custom_call.1} parent=1 // pred_check
      _
    $region27: #{tpu_custom_call.1} parent=1 // pred_check_branch
      %57 = sbr.rel (0) target = $region29
    $region28: #{tpu_custom_call.1} parent=1 // pred_region
      %58 = dma.done [#allocation8], 3072
    $region29: #{tpu_custom_call.1} parent=1 // pred_fallthru
      _
    // Predicated region
    $region30: #{tpu_custom_call.1} parent=1 // pred_check
      _
    $region31: #{tpu_custom_call.1} parent=1 // pred_check_branch
      %60 = sbr.rel (0) target = $region33
    $region32: #{tpu_custom_call.1} parent=1 // pred_region
      %61 = dma.done [#allocation8], 1024
    $region33: #{tpu_custom_call.1} parent=1 // pred_fallthru
      _
    %v63 = vld [vmem:[#allocation4] sm:$0xf]
    %v64 = vld [vmem:[#allocation4 + $0x4] sm:$0xf]
    %v65 = vld [vmem:[#allocation4 + $0x8] sm:$0xf]
    %v66 = vld [vmem:[#allocation4 + $0xc] sm:$0xf]
    %v67 = vld [vmem:[#allocation4 + $0x10] sm:$0xf]
    %v68 = vld [vmem:[#allocation4 + $0x14] sm:$0xf]
    %v69 = vld [vmem:[#allocation4 + $0x18] sm:$0xf]
    %v70 = vld [vmem:[#allocation4 + $0x1c] sm:$0xf]
    %v71 = vld [vmem:[#allocation4 + $0x20] sm:$0xf]
    %v72 = vld [vmem:[#allocation4 + $0x24] sm:$0xf]
    %v73 = vld [vmem:[#allocation4 + $0x28] sm:$0xf]
    %v74 = vld [vmem:[#allocation4 + $0x2c] sm:$0xf]
    %v75 = vld [vmem:[#allocation4 + $0x30] sm:$0xf]
    %v76 = vld [vmem:[#allocation4 + $0x34] sm:$0xf]
    %v77 = vld [vmem:[#allocation4 + $0x38] sm:$0xf]
    %v78 = vld [vmem:[#allocation4 + $0x3c] sm:$0xf]
    %v79 = vld [vmem:[#allocation4 + $0x40] sm:$0xf]
    %v80 = vld [vmem:[#allocation4 + $0x44] sm:$0xf]
    %v81 = vld [vmem:[#allocation4 + $0x48] sm:$0xf]
    %v82 = vld [vmem:[#allocation4 + $0x4c] sm:$0xf]
    %v83 = vld [vmem:[#allocation4 + $0x50] sm:$0xf]
    %v84 = vld [vmem:[#allocation4 + $0x54] sm:$0xf]
    %v85 = vld [vmem:[#allocation4 + $0x58] sm:$0xf]
    %v86 = vld [vmem:[#allocation4 + $0x5c] sm:$0xf]
    %v87 = vld [vmem:[#allocation4 + $0x60] sm:$0xf]
    %v88 = vld [vmem:[#allocation4 + $0x64] sm:$0xf]
    %v89 = vld [vmem:[#allocation4 + $0x68] sm:$0xf]
    %v90 = vld [vmem:[#allocation4 + $0x6c] sm:$0xf]
    %v91 = vld [vmem:[#allocation4 + $0x70] sm:$0xf]
    %v92 = vld [vmem:[#allocation4 + $0x74] sm:$0xf]
    %v93 = vld [vmem:[#allocation4 + $0x78] sm:$0xf]
    %v94 = vld [vmem:[#allocation4 + $0x7c] sm:$0xf]
    %v95 = vld [vmem:[#allocation7] sm:$0xff]
    %v96 = vld [vmem:[#allocation7 + $0x8] sm:$0xf]
    %v97 = vld [vmem:[#allocation7 + $0xc] sm:$0xff]
    %v98 = vld [vmem:[#allocation7 + $0x14] sm:$0xf]
    %v99 = vld [vmem:[#allocation7 + $0x18] sm:$0xff]
    %v100 = vld [vmem:[#allocation7 + $0x20] sm:$0xf]
    %v101 = vld [vmem:[#allocation7 + $0x24] sm:$0xff]
    %v102 = vld [vmem:[#allocation7 + $0x2c] sm:$0xf]
    %v103 = vld [vmem:[#allocation7 + $0x30] sm:$0xff]
    %v104 = vld [vmem:[#allocation7 + $0x38] sm:$0xf]
    %v105 = vld [vmem:[#allocation7 + $0x3c] sm:$0xff]
    %v106 = vld [vmem:[#allocation7 + $0x44] sm:$0xf]
    %v107 = vld [vmem:[#allocation7 + $0x48] sm:$0xff]
    %v108 = vld [vmem:[#allocation7 + $0x50] sm:$0xf]
    %v109 = vld [vmem:[#allocation7 + $0x54] sm:$0xff]
    %v110 = vld [vmem:[#allocation7 + $0x5c] sm:$0xf]
    %v111 = vld [vmem:[#allocation7 + $0x60] sm:$0xff]
    %v112 = vld [vmem:[#allocation7 + $0x68] sm:$0xf]
    %v113 = vld [vmem:[#allocation7 + $0x6c] sm:$0xff]
    %v114 = vld [vmem:[#allocation7 + $0x74] sm:$0xf]
    %v115 = vld [vmem:[#allocation7 + $0x78] sm:$0xff]
    %v116 = vld [vmem:[#allocation7 + $0x80] sm:$0xf]
    %v117 = vld [vmem:[#allocation7 + $0x84] sm:$0xff]
    %v118 = vld [vmem:[#allocation7 + $0x8c] sm:$0xf]
    %v119 = vld [vmem:[#allocation7 + $0x90] sm:$0xff]
    %v120 = vld [vmem:[#allocation7 + $0x98] sm:$0xf]
    %v121 = vld [vmem:[#allocation7 + $0x9c] sm:$0xff]
    %v122 = vld [vmem:[#allocation7 + $0xa4] sm:$0xf]
    %v123 = vld [vmem:[#allocation7 + $0xa8] sm:$0xff]
    %v124 = vld [vmem:[#allocation7 + $0xb0] sm:$0xf]
    %v125 = vld [vmem:[#allocation7 + $0xb4] sm:$0xff]
    %v126 = vld [vmem:[#allocation7 + $0xbc] sm:$0xf]
    %v127 = vld [vmem:[%s2] sm:$0x7]
    %v129 = vlaneseq
    %v130 = vshrl.u32 %v129, 7
    %v131 = vsub.s32 0, %v130
    %v132 = vrot.slane %v127, %v131
    %v133 = vlaneseq
    %v134 = vshrl.u32 %v133, 7
    %v135 = vsub.s32 1, %v134
    %v136 = vrot.slane %v127, %v135
    %v137 = vlaneseq
    %v138 = vshrl.u32 %v137, 7
    %v139 = vsub.s32 2, %v138
    %v140 = vrot.slane %v127, %v139
    %v176 = vunpack.c.l.b16 %v63
    %v177 = vunpack.c.l.b16 %v64
    %v178 = vunpack.c.l.b16 %v65
    %v179 = vunpack.c.l.b16 %v66
    %v180 = vunpack.c.l.b16 %v67
    %v181 = vunpack.c.l.b16 %v68
    %v182 = vunpack.c.l.b16 %v69
    %v183 = vunpack.c.l.b16 %v70
    %v184 = vunpack.c.l.b16 %v71
    %v185 = vunpack.c.l.b16 %v72
    %v186 = vunpack.c.l.b16 %v73
    %v187 = vunpack.c.l.b16 %v74
    %v188 = vunpack.c.l.b16 %v75
    %v189 = vunpack.c.l.b16 %v76
    %v190 = vunpack.c.l.b16 %v77
    %v191 = vunpack.c.l.b16 %v78
    %v192 = vunpack.c.l.b16 %v79
    %v193 = vunpack.c.l.b16 %v80
    %v194 = vunpack.c.l.b16 %v81
    %v195 = vunpack.c.l.b16 %v82
    %v196 = vunpack.c.l.b16 %v83
    %v197 = vunpack.c.l.b16 %v84
    %v198 = vunpack.c.l.b16 %v85
    %v199 = vunpack.c.l.b16 %v86
    %v200 = vunpack.c.l.b16 %v87
    %v201 = vunpack.c.l.b16 %v88
    %v202 = vunpack.c.l.b16 %v89
    %v203 = vunpack.c.l.b16 %v90
    %v204 = vunpack.c.l.b16 %v91
    %v205 = vunpack.c.l.b16 %v92
    %v206 = vunpack.c.l.b16 %v93
    %v207 = vunpack.c.l.b16 %v94
    %v208 = vpack.c.b16 %v177, %v176
    %v209 = vpack.c.b16 %v179, %v178
    %v210 = vpack.c.b16 %v181, %v180
    %v211 = vpack.c.b16 %v183, %v182
    %v212 = vpack.c.b16 %v185, %v184
    %v213 = vpack.c.b16 %v187, %v186
    %v214 = vpack.c.b16 %v189, %v188
    %v215 = vpack.c.b16 %v191, %v190
    %v216 = vpack.c.b16 %v193, %v192
    %v217 = vpack.c.b16 %v195, %v194
    %v218 = vpack.c.b16 %v197, %v196
    %v219 = vpack.c.b16 %v199, %v198
    %v220 = vpack.c.b16 %v201, %v200
    %v221 = vpack.c.b16 %v203, %v202
    %v222 = vpack.c.b16 %v205, %v204
    %v223 = vpack.c.b16 %v207, %v206
    %v272 = vunpack.c.l.b16 %v95
    %v273 = vunpack.c.h.b16 %v95
    %v274 = vunpack.c.l.b16 %v96
    %v275 = vunpack.c.l.b16 %v97
    %v276 = vunpack.c.h.b16 %v97
    %v277 = vunpack.c.l.b16 %v98
    %v278 = vunpack.c.l.b16 %v99
    %v279 = vunpack.c.h.b16 %v99
    %v280 = vunpack.c.l.b16 %v100
    %v281 = vunpack.c.l.b16 %v101
    %v282 = vunpack.c.h.b16 %v101
    %v283 = vunpack.c.l.b16 %v102
    %v284 = vunpack.c.l.b16 %v103
    %v285 = vunpack.c.h.b16 %v103
    %v286 = vunpack.c.l.b16 %v104
    %v287 = vunpack.c.l.b16 %v105
    %v288 = vunpack.c.h.b16 %v105
    %v289 = vunpack.c.l.b16 %v106
    %v290 = vunpack.c.l.b16 %v107
    %v291 = vunpack.c.h.b16 %v107
    %v292 = vunpack.c.l.b16 %v108
    %v293 = vunpack.c.l.b16 %v109
    %v294 = vunpack.c.h.b16 %v109
    %v295 = vunpack.c.l.b16 %v110
    %v296 = vunpack.c.l.b16 %v111
    %v297 = vunpack.c.h.b16 %v111
    %v298 = vunpack.c.l.b16 %v112
    %v299 = vunpack.c.l.b16 %v113
    %v300 = vunpack.c.h.b16 %v113
    %v301 = vunpack.c.l.b16 %v114
    %v302 = vunpack.c.l.b16 %v115
    %v303 = vunpack.c.h.b16 %v115
    %v304 = vunpack.c.l.b16 %v116
    %v305 = vunpack.c.l.b16 %v117
    %v306 = vunpack.c.h.b16 %v117
    %v307 = vunpack.c.l.b16 %v118
    %v308 = vunpack.c.l.b16 %v119
    %v309 = vunpack.c.h.b16 %v119
    %v310 = vunpack.c.l.b16 %v120
    %v311 = vunpack.c.l.b16 %v121
    %v312 = vunpack.c.h.b16 %v121
    %v313 = vunpack.c.l.b16 %v122
    %v314 = vunpack.c.l.b16 %v123
    %v315 = vunpack.c.h.b16 %v123
    %v316 = vunpack.c.l.b16 %v124
    %v317 = vunpack.c.l.b16 %v125
    %v318 = vunpack.c.h.b16 %v125
    %v319 = vunpack.c.l.b16 %v126
    %v320 = vpack.c.b16 %v275, %v272
    %v321 = vpack.c.b16 %v276, %v273
    %v322 = vpack.c.b16 %v277, %v274
    %v323 = vpack.c.b16 %v281, %v278
    %v324 = vpack.c.b16 %v282, %v279
    %v325 = vpack.c.b16 %v283, %v280
    %v326 = vpack.c.b16 %v287, %v284
    %v327 = vpack.c.b16 %v288, %v285
    %v328 = vpack.c.b16 %v289, %v286
    %v329 = vpack.c.b16 %v293, %v290
    %v330 = vpack.c.b16 %v294, %v291
    %v331 = vpack.c.b16 %v295, %v292
    %v332 = vpack.c.b16 %v299, %v296
    %v333 = vpack.c.b16 %v300, %v297
    %v334 = vpack.c.b16 %v301, %v298
    %v335 = vpack.c.b16 %v305, %v302
    %v336 = vpack.c.b16 %v306, %v303
    %v337 = vpack.c.b16 %v307, %v304
    %v338 = vpack.c.b16 %v311, %v308
    %v339 = vpack.c.b16 %v312, %v309
    %v340 = vpack.c.b16 %v313, %v310
    %v341 = vpack.c.b16 %v317, %v314
    %v342 = vpack.c.b16 %v318, %v315
    %v343 = vpack.c.b16 %v319, %v316
    %368 = vmatprep.subr.bf16.mxu0 %v342
    %369 = vmatpush1.bf16.msra.mxu0 %v341
    %370 = vmatprep.subr.bf16.mxu0 %v339
    %371 = vmatpush1.bf16.msra.mxu0 %v338
    %372 = vmatprep.subr.bf16.mxu0 %v336
    %373 = vmatpush1.bf16.msra.mxu0 %v335
    %374 = vmatprep.subr.bf16.mxu0 %v333
    %375 = vmatpush1.bf16.msra.mxu0 %v332
    %376 = vmatprep.subr.bf16.mxu0 %v330
    %377 = vmatpush1.bf16.msra.mxu0 %v329
    %378 = vmatprep.subr.bf16.mxu0 %v327
    %379 = vmatpush1.bf16.msra.mxu0 %v326
    %380 = vmatprep.subr.bf16.mxu0 %v324
    %381 = vmatpush1.bf16.msra.mxu0 %v323
    %382 = vmatprep.subr.bf16.mxu0 %v321
    %383 = vmatpush1.bf16.msra.mxu0 %v320
    %384 = vmatprep.subr.bf16.mxu0 0
    %385 = vmatpush2.bf16.msra.mxu0 0
    %386 = vmatprep.subr.bf16.mxu0 0
    %387 = vmatpush2.bf16.msra.mxu0 0
    %388 = vmatprep.subr.bf16.mxu0 0
    %389 = vmatpush2.bf16.msra.mxu0 0
    %390 = vmatprep.subr.bf16.mxu0 0
    %391 = vmatpush2.bf16.msra.mxu0 0
    %392 = vmatprep.subr.bf16.mxu0 0
    %393 = vmatpush2.bf16.msra.mxu0 0
    %394 = vmatprep.subr.bf16.mxu0 0
    %395 = vmatpush2.bf16.msra.mxu0 0
    %396 = vmatprep.subr.bf16.mxu0 0
    %397 = vmatpush2.bf16.msra.mxu0 0
    %398 = vmatprep.subr.bf16.mxu0 0
    %399 = vmatpush2.bf16.msra.mxu0 0
    %400 = vmatprep.mubr.bf16.mxu0 0
    %401 = vmatmul.mubr.bf16.gmra.mxu0 %v208
    %v402 = vpop.f32.mrf.mxu0
    %v403 = vadd.f32 %v132, %v402
    %v404 = vpop.f32.mrf.mxu0
    %v405 = vadd.f32 %v136, %v404
    %v406 = vpop.f32.mrf.mxu0
    %v407 = vadd.f32 %v132, %v406
    %v408 = vpop.f32.mrf.mxu0
    %v409 = vadd.f32 %v136, %v408
    %410 = vmatprep.mubr.bf16.mxu0 0
    %411 = vmatmul.mubr.bf16.gmra.mxu0 %v209
    %v412 = vpop.f32.mrf.mxu0
    %v413 = vadd.f32 %v132, %v412
    %v414 = vpop.f32.mrf.mxu0
    %v415 = vadd.f32 %v136, %v414
    %v416 = vpop.f32.mrf.mxu0
    %v417 = vadd.f32 %v132, %v416
    %v418 = vpop.f32.mrf.mxu0
    %v419 = vadd.f32 %v136, %v418
    %420 = vmatprep.mubr.bf16.mxu0 0
    %421 = vmatmul.mubr.bf16.gmra.mxu0 %v210
    %v422 = vpop.f32.mrf.mxu0
    %v423 = vadd.f32 %v132, %v422
    %v424 = vpop.f32.mrf.mxu0
    %v425 = vadd.f32 %v136, %v424
    %v426 = vpop.f32.mrf.mxu0
    %v427 = vadd.f32 %v132, %v426
    %v428 = vpop.f32.mrf.mxu0
    %v429 = vadd.f32 %v136, %v428
    %430 = vmatprep.mubr.bf16.mxu0 0
    %431 = vmatmul.mubr.bf16.gmra.mxu0 %v211
    %v432 = vpop.f32.mrf.mxu0
    %v433 = vadd.f32 %v132, %v432
    %v434 = vpop.f32.mrf.mxu0
    %v435 = vadd.f32 %v136, %v434
    %v436 = vpop.f32.mrf.mxu0
    %v437 = vadd.f32 %v132, %v436
    %v438 = vpop.f32.mrf.mxu0
    %v439 = vadd.f32 %v136, %v438
    %440 = vmatprep.mubr.bf16.mxu0 0
    %441 = vmatmul.mubr.bf16.gmra.mxu0 %v212
    %v442 = vpop.f32.mrf.mxu0
    %v443 = vadd.f32 %v132, %v442
    %v444 = vpop.f32.mrf.mxu0
    %v445 = vadd.f32 %v136, %v444
    %v446 = vpop.f32.mrf.mxu0
    %v447 = vadd.f32 %v132, %v446
    %v448 = vpop.f32.mrf.mxu0
    %v449 = vadd.f32 %v136, %v448
    %450 = vmatprep.mubr.bf16.mxu0 0
    %451 = vmatmul.mubr.bf16.gmra.mxu0 %v213
    %v452 = vpop.f32.mrf.mxu0
    %v453 = vadd.f32 %v132, %v452
    %v454 = vpop.f32.mrf.mxu0
    %v455 = vadd.f32 %v136, %v454
    %v456 = vpop.f32.mrf.mxu0
    %v457 = vadd.f32 %v132, %v456
    %v458 = vpop.f32.mrf.mxu0
    %v459 = vadd.f32 %v136, %v458
    %460 = vmatprep.mubr.bf16.mxu0 0
    %461 = vmatmul.mubr.bf16.gmra.mxu0 %v214
    %v462 = vpop.f32.mrf.mxu0
    %v463 = vadd.f32 %v132, %v462
    %v464 = vpop.f32.mrf.mxu0
    %v465 = vadd.f32 %v136, %v464
    %v466 = vpop.f32.mrf.mxu0
    %v467 = vadd.f32 %v132, %v466
    %v468 = vpop.f32.mrf.mxu0
    %v469 = vadd.f32 %v136, %v468
    %470 = vmatprep.mubr.bf16.mxu0 0
    %471 = vmatmul.mubr.bf16.gmra.mxu0 %v215
    %v472 = vpop.f32.mrf.mxu0
    %v473 = vadd.f32 %v132, %v472
    %v474 = vpop.f32.mrf.mxu0
    %v475 = vadd.f32 %v136, %v474
    %v476 = vpop.f32.mrf.mxu0
    %v477 = vadd.f32 %v132, %v476
    %v478 = vpop.f32.mrf.mxu0
    %v479 = vadd.f32 %v136, %v478
    %480 = vmatprep.mubr.bf16.mxu0 0
    %481 = vmatmul.mubr.bf16.gmra.mxu0 %v216
    %v482 = vpop.f32.mrf.mxu0
    %v483 = vadd.f32 %v132, %v482
    %v484 = vpop.f32.mrf.mxu0
    %v485 = vadd.f32 %v136, %v484
    %v486 = vpop.f32.mrf.mxu0
    %v487 = vadd.f32 %v132, %v486
    %v488 = vpop.f32.mrf.mxu0
    %v489 = vadd.f32 %v136, %v488
    %490 = vmatprep.mubr.bf16.mxu0 0
    %491 = vmatmul.mubr.bf16.gmra.mxu0 %v217
    %v492 = vpop.f32.mrf.mxu0
    %v493 = vadd.f32 %v132, %v492
    %v494 = vpop.f32.mrf.mxu0
    %v495 = vadd.f32 %v136, %v494
    %v496 = vpop.f32.mrf.mxu0
    %v497 = vadd.f32 %v132, %v496
    %v498 = vpop.f32.mrf.mxu0
    %v499 = vadd.f32 %v136, %v498
    %500 = vmatprep.mubr.bf16.mxu0 0
    %501 = vmatmul.mubr.bf16.gmra.mxu0 %v218
    %v502 = vpop.f32.mrf.mxu0
    %v503 = vadd.f32 %v132, %v502
    %v504 = vpop.f32.mrf.mxu0
    %v505 = vadd.f32 %v136, %v504
    %v506 = vpop.f32.mrf.mxu0
    %v507 = vadd.f32 %v132, %v506
    %v508 = vpop.f32.mrf.mxu0
    %v509 = vadd.f32 %v136, %v508
    %510 = vmatprep.mubr.bf16.mxu0 0
    %511 = vmatmul.mubr.bf16.gmra.mxu0 %v219
    %v512 = vpop.f32.mrf.mxu0
    %v513 = vadd.f32 %v132, %v512
    %v514 = vpop.f32.mrf.mxu0
    %v515 = vadd.f32 %v136, %v514
    %v516 = vpop.f32.mrf.mxu0
    %v517 = vadd.f32 %v132, %v516
    %v518 = vpop.f32.mrf.mxu0
    %v519 = vadd.f32 %v136, %v518
    %520 = vmatprep.mubr.bf16.mxu0 0
    %521 = vmatmul.mubr.bf16.gmra.mxu0 %v220
    %v522 = vpop.f32.mrf.mxu0
    %v523 = vadd.f32 %v132, %v522
    %v524 = vpop.f32.mrf.mxu0
    %v525 = vadd.f32 %v136, %v524
    %v526 = vpop.f32.mrf.mxu0
    %v527 = vadd.f32 %v132, %v526
    %v528 = vpop.f32.mrf.mxu0
    %v529 = vadd.f32 %v136, %v528
    %530 = vmatprep.mubr.bf16.mxu0 0
    %531 = vmatmul.mubr.bf16.gmra.mxu0 %v221
    %v532 = vpop.f32.mrf.mxu0
    %v533 = vadd.f32 %v132, %v532
    %v534 = vpop.f32.mrf.mxu0
    %v535 = vadd.f32 %v136, %v534
    %v536 = vpop.f32.mrf.mxu0
    %v537 = vadd.f32 %v132, %v536
    %v538 = vpop.f32.mrf.mxu0
    %v539 = vadd.f32 %v136, %v538
    %540 = vmatprep.mubr.bf16.mxu0 0
    %541 = vmatmul.mubr.bf16.gmra.mxu0 %v222
    %v542 = vpop.f32.mrf.mxu0
    %v543 = vadd.f32 %v132, %v542
    %v544 = vpop.f32.mrf.mxu0
    %v545 = vadd.f32 %v136, %v544
    %v546 = vpop.f32.mrf.mxu0
    %v547 = vadd.f32 %v132, %v546
    %v548 = vpop.f32.mrf.mxu0
    %v549 = vadd.f32 %v136, %v548
    %550 = vmatprep.mubr.bf16.mxu0 0
    %551 = vmatmul.mubr.bf16.gmra.mxu0 %v223
    %v552 = vpop.f32.mrf.mxu0
    %v553 = vadd.f32 %v132, %v552
    %v554 = vpop.f32.mrf.mxu0
    %v555 = vadd.f32 %v136, %v554
    %v556 = vpop.f32.mrf.mxu0
    %v557 = vadd.f32 %v132, %v556
    %v558 = vpop.f32.mrf.mxu0
    %v559 = vadd.f32 %v136, %v558
    %560 = vdwg.mxu0
    %561 = vmatprep.subr.bf16.mxu0 0
    %562 = vmatpush1.bf16.msra.mxu0 %v343
    %563 = vmatprep.subr.bf16.mxu0 0
    %564 = vmatpush1.bf16.msra.mxu0 %v340
    %565 = vmatprep.subr.bf16.mxu0 0
    %566 = vmatpush1.bf16.msra.mxu0 %v337
    %567 = vmatprep.subr.bf16.mxu0 0
    %568 = vmatpush1.bf16.msra.mxu0 %v334
    %569 = vmatprep.subr.bf16.mxu0 0
    %570 = vmatpush1.bf16.msra.mxu0 %v331
    %571 = vmatprep.subr.bf16.mxu0 0
    %572 = vmatpush1.bf16.msra.mxu0 %v328
    %573 = vmatprep.subr.bf16.mxu0 0
    %574 = vmatpush1.bf16.msra.mxu0 %v325
    %575 = vmatprep.subr.bf16.mxu0 0
    %576 = vmatpush1.bf16.msra.mxu0 %v322
    %577 = vmatprep.subr.bf16.mxu0 0
    %578 = vmatpush2.bf16.msra.mxu0 0
    %579 = vmatprep.subr.bf16.mxu0 0
    %580 = vmatpush2.bf16.msra.mxu0 0
    %581 = vmatprep.subr.bf16.mxu0 0
    %582 = vmatpush2.bf16.msra.mxu0 0
    %583 = vmatprep.subr.bf16.mxu0 0
    %584 = vmatpush2.bf16.msra.mxu0 0
    %585 = vmatprep.subr.bf16.mxu0 0
    %586 = vmatpush2.bf16.msra.mxu0 0
    %587 = vmatprep.subr.bf16.mxu0 0
    %588 = vmatpush2.bf16.msra.mxu0 0
    %589 = vmatprep.subr.bf16.mxu0 0
    %590 = vmatpush2.bf16.msra.mxu0 0
    %591 = vmatprep.subr.bf16.mxu0 0
    %592 = vmatpush2.bf16.msra.mxu0 0
    %593 = vmatprep.mubr.bf16.mxu0 0
    %594 = vmatmul.mubr.bf16.gmra.mxu0 %v208
    %v595 = vpop.f32.mrf.mxu0
    %v596 = vadd.f32 %v140, %v595
    %v597 = vpop.f32.mrf.mxu0
    %v598 = vpop.f32.mrf.mxu0
    %v599 = vadd.f32 %v140, %v598
    %v600 = vpop.f32.mrf.mxu0
    %601 = vmatprep.mubr.bf16.mxu0 0
    %602 = vmatmul.mubr.bf16.gmra.mxu0 %v209
    %v603 = vpop.f32.mrf.mxu0
    %v604 = vadd.f32 %v140, %v603
    %v605 = vpop.f32.mrf.mxu0
    %v606 = vpop.f32.mrf.mxu0
    %v607 = vadd.f32 %v140, %v606
    %v608 = vpop.f32.mrf.mxu0
    %609 = vmatprep.mubr.bf16.mxu0 0
    %610 = vmatmul.mubr.bf16.gmra.mxu0 %v210
    %v611 = vpop.f32.mrf.mxu0
    %v612 = vadd.f32 %v140, %v611
    %v613 = vpop.f32.mrf.mxu0
    %v614 = vpop.f32.mrf.mxu0
    %v615 = vadd.f32 %v140, %v614
    %v616 = vpop.f32.mrf.mxu0
    %617 = vmatprep.mubr.bf16.mxu0 0
    %618 = vmatmul.mubr.bf16.gmra.mxu0 %v211
    %v619 = vpop.f32.mrf.mxu0
    %v620 = vadd.f32 %v140, %v619
    %v621 = vpop.f32.mrf.mxu0
    %v622 = vpop.f32.mrf.mxu0
    %v623 = vadd.f32 %v140, %v622
    %v624 = vpop.f32.mrf.mxu0
    %625 = vmatprep.mubr.bf16.mxu0 0
    %626 = vmatmul.mubr.bf16.gmra.mxu0 %v212
    %v627 = vpop.f32.mrf.mxu0
    %v628 = vadd.f32 %v140, %v627
    %v629 = vpop.f32.mrf.mxu0
    %v630 = vpop.f32.mrf.mxu0
    %v631 = vadd.f32 %v140, %v630
    %v632 = vpop.f32.mrf.mxu0
    %633 = vmatprep.mubr.bf16.mxu0 0
    %634 = vmatmul.mubr.bf16.gmra.mxu0 %v213
    %v635 = vpop.f32.mrf.mxu0
    %v636 = vadd.f32 %v140, %v635
    %v637 = vpop.f32.mrf.mxu0
    %v638 = vpop.f32.mrf.mxu0
    %v639 = vadd.f32 %v140, %v638
    %v640 = vpop.f32.mrf.mxu0
    %641 = vmatprep.mubr.bf16.mxu0 0
    %642 = vmatmul.mubr.bf16.gmra.mxu0 %v214
    %v643 = vpop.f32.mrf.mxu0
    %v644 = vadd.f32 %v140, %v643
    %v645 = vpop.f32.mrf.mxu0
    %v646 = vpop.f32.mrf.mxu0
    %v647 = vadd.f32 %v140, %v646
    %v648 = vpop.f32.mrf.mxu0
    %649 = vmatprep.mubr.bf16.mxu0 0
    %650 = vmatmul.mubr.bf16.gmra.mxu0 %v215
    %v651 = vpop.f32.mrf.mxu0
    %v652 = vadd.f32 %v140, %v651
    %v653 = vpop.f32.mrf.mxu0
    %v654 = vpop.f32.mrf.mxu0
    %v655 = vadd.f32 %v140, %v654
    %v656 = vpop.f32.mrf.mxu0
    %657 = vmatprep.mubr.bf16.mxu0 0
    %658 = vmatmul.mubr.bf16.gmra.mxu0 %v216
    %v659 = vpop.f32.mrf.mxu0
    %v660 = vadd.f32 %v140, %v659
    %v661 = vpop.f32.mrf.mxu0
    %v662 = vpop.f32.mrf.mxu0
    %v663 = vadd.f32 %v140, %v662
    %v664 = vpop.f32.mrf.mxu0
    %665 = vmatprep.mubr.bf16.mxu0 0
    %666 = vmatmul.mubr.bf16.gmra.mxu0 %v217
    %v667 = vpop.f32.mrf.mxu0
    %v668 = vadd.f32 %v140, %v667
    %v669 = vpop.f32.mrf.mxu0
    %v670 = vpop.f32.mrf.mxu0
    %v671 = vadd.f32 %v140, %v670
    %v672 = vpop.f32.mrf.mxu0
    %673 = vmatprep.mubr.bf16.mxu0 0
    %674 = vmatmul.mubr.bf16.gmra.mxu0 %v218
    %v675 = vpop.f32.mrf.mxu0
    %v676 = vadd.f32 %v140, %v675
    %v677 = vpop.f32.mrf.mxu0
    %v678 = vpop.f32.mrf.mxu0
    %v679 = vadd.f32 %v140, %v678
    %v680 = vpop.f32.mrf.mxu0
    %681 = vmatprep.mubr.bf16.mxu0 0
    %682 = vmatmul.mubr.bf16.gmra.mxu0 %v219
    %v683 = vpop.f32.mrf.mxu0
    %v684 = vadd.f32 %v140, %v683
    %v685 = vpop.f32.mrf.mxu0
    %v686 = vpop.f32.mrf.mxu0
    %v687 = vadd.f32 %v140, %v686
    %v688 = vpop.f32.mrf.mxu0
    %689 = vmatprep.mubr.bf16.mxu0 0
    %690 = vmatmul.mubr.bf16.gmra.mxu0 %v220
    %v691 = vpop.f32.mrf.mxu0
    %v692 = vadd.f32 %v140, %v691
    %v693 = vpop.f32.mrf.mxu0
    %v694 = vpop.f32.mrf.mxu0
    %v695 = vadd.f32 %v140, %v694
    %v696 = vpop.f32.mrf.mxu0
    %697 = vmatprep.mubr.bf16.mxu0 0
    %698 = vmatmul.mubr.bf16.gmra.mxu0 %v221
    %v699 = vpop.f32.mrf.mxu0
    %v700 = vadd.f32 %v140, %v699
    %v701 = vpop.f32.mrf.mxu0
    %v702 = vpop.f32.mrf.mxu0
    %v703 = vadd.f32 %v140, %v702
    %v704 = vpop.f32.mrf.mxu0
    %705 = vmatprep.mubr.bf16.mxu0 0
    %706 = vmatmul.mubr.bf16.gmra.mxu0 %v222
    %v707 = vpop.f32.mrf.mxu0
    %v708 = vadd.f32 %v140, %v707
    %v709 = vpop.f32.mrf.mxu0
    %v710 = vpop.f32.mrf.mxu0
    %v711 = vadd.f32 %v140, %v710
    %v712 = vpop.f32.mrf.mxu0
    %713 = vmatprep.mubr.bf16.mxu0 0
    %714 = vmatmul.mubr.bf16.gmra.mxu0 %v223
    %v715 = vpop.f32.mrf.mxu0
    %v716 = vadd.f32 %v140, %v715
    %v717 = vpop.f32.mrf.mxu0
    %v718 = vpop.f32.mrf.mxu0
    %v719 = vadd.f32 %v140, %v718
    %v720 = vpop.f32.mrf.mxu0
    %721 = vdwg.mxu0
    %v722 = vmul.f32 %v403, 0.17677669
    %v723 = vmul.f32 %v407, 0.17677669
    %v724 = vmul.f32 %v413, 0.17677669
    %v725 = vmul.f32 %v417, 0.17677669
    %v726 = vmul.f32 %v423, 0.17677669
    %v727 = vmul.f32 %v427, 0.17677669
    %v728 = vmul.f32 %v433, 0.17677669
    %v729 = vmul.f32 %v437, 0.17677669
    %v730 = vmul.f32 %v443, 0.17677669
    %v731 = vmul.f32 %v447, 0.17677669
    %v732 = vmul.f32 %v453, 0.17677669
    %v733 = vmul.f32 %v457, 0.17677669
    %v734 = vmul.f32 %v463, 0.17677669
    %v735 = vmul.f32 %v467, 0.17677669
    %v736 = vmul.f32 %v473, 0.17677669
    %v737 = vmul.f32 %v477, 0.17677669
    %v738 = vmul.f32 %v483, 0.17677669
    %v739 = vmul.f32 %v487, 0.17677669
    %v740 = vmul.f32 %v493, 0.17677669
    %v741 = vmul.f32 %v497, 0.17677669
    %v742 = vmul.f32 %v503, 0.17677669
    %v743 = vmul.f32 %v507, 0.17677669
    %v744 = vmul.f32 %v513, 0.17677669
    %v745 = vmul.f32 %v517, 0.17677669
    %v746 = vmul.f32 %v523, 0.17677669
    %v747 = vmul.f32 %v527, 0.17677669
    %v748 = vmul.f32 %v533, 0.17677669
    %v749 = vmul.f32 %v537, 0.17677669
    %v750 = vmul.f32 %v543, 0.17677669
    %v751 = vmul.f32 %v547, 0.17677669
    %v752 = vmul.f32 %v553, 0.17677669
    %v753 = vmul.f32 %v557, 0.17677669
    %v754 = vpack.c.bf16 %v723, %v722
    %v755 = vpack.c.bf16 %v725, %v724
    %v756 = vpack.c.bf16 %v727, %v726
    %v757 = vpack.c.bf16 %v729, %v728
    %v758 = vpack.c.bf16 %v731, %v730
    %v759 = vpack.c.bf16 %v733, %v732
    %v760 = vpack.c.bf16 %v735, %v734
    %v761 = vpack.c.bf16 %v737, %v736
    %v762 = vpack.c.bf16 %v739, %v738
    %v763 = vpack.c.bf16 %v741, %v740
    %v764 = vpack.c.bf16 %v743, %v742
    %v765 = vpack.c.bf16 %v745, %v744
    %v766 = vpack.c.bf16 %v747, %v746
    %v767 = vpack.c.bf16 %v749, %v748
    %v768 = vpack.c.bf16 %v751, %v750
    %v769 = vpack.c.bf16 %v753, %v752
    %v786 = vunpack.c.l.b16 %v754
    %v787 = vunpack.c.h.b16 %v754
    %v788 = vunpack.c.l.b16 %v755
    %v789 = vunpack.c.h.b16 %v755
    %v790 = vunpack.c.l.b16 %v756
    %v791 = vunpack.c.h.b16 %v756
    %v792 = vunpack.c.l.b16 %v757
    %v793 = vunpack.c.h.b16 %v757
    %v794 = vunpack.c.l.b16 %v758
    %v795 = vunpack.c.h.b16 %v758
    %v796 = vunpack.c.l.b16 %v759
    %v797 = vunpack.c.h.b16 %v759
    %v798 = vunpack.c.l.b16 %v760
    %v799 = vunpack.c.h.b16 %v760
    %v800 = vunpack.c.l.b16 %v761
    %v801 = vunpack.c.h.b16 %v761
    %v802 = vunpack.c.l.b16 %v762
    %v803 = vunpack.c.h.b16 %v762
    %v804 = vunpack.c.l.b16 %v763
    %v805 = vunpack.c.h.b16 %v763
    %v806 = vunpack.c.l.b16 %v764
    %v807 = vunpack.c.h.b16 %v764
    %v808 = vunpack.c.l.b16 %v765
    %v809 = vunpack.c.h.b16 %v765
    %v810 = vunpack.c.l.b16 %v766
    %v811 = vunpack.c.h.b16 %v766
    %v812 = vunpack.c.l.b16 %v767
    %v813 = vunpack.c.h.b16 %v767
    %v814 = vunpack.c.l.b16 %v768
    %v815 = vunpack.c.h.b16 %v768
    %v816 = vunpack.c.l.b16 %v769
    %v817 = vunpack.c.h.b16 %v769
    %v818 = vpack.c.b16 %v786, %v786
    %v819 = vpack.c.b16 %v787, %v787
    %v820 = vpack.c.b16 %v788, %v788
    %v821 = vpack.c.b16 %v789, %v789
    %v822 = vpack.c.b16 %v790, %v790
    %v823 = vpack.c.b16 %v791, %v791
    %v824 = vpack.c.b16 %v792, %v792
    %v825 = vpack.c.b16 %v793, %v793
    %v826 = vpack.c.b16 %v794, %v794
    %v827 = vpack.c.b16 %v795, %v795
    %v828 = vpack.c.b16 %v796, %v796
    %v829 = vpack.c.b16 %v797, %v797
    %v830 = vpack.c.b16 %v798, %v798
    %v831 = vpack.c.b16 %v799, %v799
    %v832 = vpack.c.b16 %v800, %v800
    %v833 = vpack.c.b16 %v801, %v801
    %v834 = vpack.c.b16 %v802, %v802
    %v835 = vpack.c.b16 %v803, %v803
    %v836 = vpack.c.b16 %v804, %v804
    %v837 = vpack.c.b16 %v805, %v805
    %v838 = vpack.c.b16 %v806, %v806
    %v839 = vpack.c.b16 %v807, %v807
    %v840 = vpack.c.b16 %v808, %v808
    %v841 = vpack.c.b16 %v809, %v809
    %v842 = vpack.c.b16 %v810, %v810
    %v843 = vpack.c.b16 %v811, %v811
    %v844 = vpack.c.b16 %v812, %v812
    %v845 = vpack.c.b16 %v813, %v813
    %v846 = vpack.c.b16 %v814, %v814
    %v847 = vpack.c.b16 %v815, %v815
    %v848 = vpack.c.b16 %v816, %v816
    %v849 = vpack.c.b16 %v817, %v817
    %882 = vst [vmem:[#allocation2] sm:$0xf] %v818
    %883 = vst [vmem:[#allocation2 + $0xc] sm:$0xf] %v819
    %884 = vst [vmem:[#allocation2 + $0x18] sm:$0xf] %v820
    %885 = vst [vmem:[#allocation2 + $0x24] sm:$0xf] %v821
    %886 = vst [vmem:[#allocation2 + $0x30] sm:$0xf] %v822
    %887 = vst [vmem:[#allocation2 + $0x3c] sm:$0xf] %v823
    %888 = vst [vmem:[#allocation2 + $0x48] sm:$0xf] %v824
    %889 = vst [vmem:[#allocation2 + $0x54] sm:$0xf] %v825
    %890 = vst [vmem:[#allocation2 + $0x60] sm:$0xf] %v826
    %891 = vst [vmem:[#allocation2 + $0x6c] sm:$0xf] %v827
    %892 = vst [vmem:[#allocation2 + $0x78] sm:$0xf] %v828
    %893 = vst [vmem:[#allocation2 + $0x84] sm:$0xf] %v829
    %894 = vst [vmem:[#allocation2 + $0x90] sm:$0xf] %v830
    %895 = vst [vmem:[#allocation2 + $0x9c] sm:$0xf] %v831
    %896 = vst [vmem:[#allocation2 + $0xa8] sm:$0xf] %v832
    %897 = vst [vmem:[#allocation2 + $0xb4] sm:$0xf] %v833
    %898 = vst [vmem:[#allocation2 + $0xc0] sm:$0xf] %v834
    %899 = vst [vmem:[#allocation2 + $0xcc] sm:$0xf] %v835
    %900 = vst [vmem:[#allocation2 + $0xd8] sm:$0xf] %v836
    %901 = vst [vmem:[#allocation2 + $0xe4] sm:$0xf] %v837
    %902 = vst [vmem:[#allocation2 + $0xf0] sm:$0xf] %v838
    %903 = vst [vmem:[#allocation2 + $0xfc] sm:$0xf] %v839
    %904 = vst [vmem:[#allocation2 + $0x108] sm:$0xf] %v840
    %905 = vst [vmem:[#allocation2 + $0x114] sm:$0xf] %v841
    %906 = vst [vmem:[#allocation2 + $0x120] sm:$0xf] %v842
    %907 = vst [vmem:[#allocation2 + $0x12c] sm:$0xf] %v843
    %908 = vst [vmem:[#allocation2 + $0x138] sm:$0xf] %v844
    %909 = vst [vmem:[#allocation2 + $0x144] sm:$0xf] %v845
    %910 = vst [vmem:[#allocation2 + $0x150] sm:$0xf] %v846
    %911 = vst [vmem:[#allocation2 + $0x15c] sm:$0xf] %v847
    %912 = vst [vmem:[#allocation2 + $0x168] sm:$0xf] %v848
    %913 = vst [vmem:[#allocation2 + $0x174] sm:$0xf] %v849
    %v914 = vpack.c.bf16 %v409, %v405
    %v915 = vpack.c.bf16 %v599, %v596
    %v916 = vpack.c.bf16 %v419, %v415
    %v917 = vpack.c.bf16 %v607, %v604
    %v918 = vpack.c.bf16 %v429, %v425
    %v919 = vpack.c.bf16 %v615, %v612
    %v920 = vpack.c.bf16 %v439, %v435
    %v921 = vpack.c.bf16 %v623, %v620
    %v922 = vpack.c.bf16 %v449, %v445
    %v923 = vpack.c.bf16 %v631, %v628
    %v924 = vpack.c.bf16 %v459, %v455
    %v925 = vpack.c.bf16 %v639, %v636
    %v926 = vpack.c.bf16 %v469, %v465
    %v927 = vpack.c.bf16 %v647, %v644
    %v928 = vpack.c.bf16 %v479, %v475
    %v929 = vpack.c.bf16 %v655, %v652
    %v930 = vpack.c.bf16 %v489, %v485
    %v931 = vpack.c.bf16 %v663, %v660
    %v932 = vpack.c.bf16 %v499, %v495
    %v933 = vpack.c.bf16 %v671, %v668
    %v934 = vpack.c.bf16 %v509, %v505
    %v935 = vpack.c.bf16 %v679, %v676
    %v936 = vpack.c.bf16 %v519, %v515
    %v937 = vpack.c.bf16 %v687, %v684
    %v938 = vpack.c.bf16 %v529, %v525
    %v939 = vpack.c.bf16 %v695, %v692
    %v940 = vpack.c.bf16 %v539, %v535
    %v941 = vpack.c.bf16 %v703, %v700
    %v942 = vpack.c.bf16 %v549, %v545
    %v943 = vpack.c.bf16 %v711, %v708
    %v944 = vpack.c.bf16 %v559, %v555
    %v945 = vpack.c.bf16 %v719, %v716
    %v978 = vunpack.c.l.b16 %v914
    %v979 = vunpack.c.l.b16 %v915
    %v980 = vunpack.c.h.b16 %v914
    %v981 = vunpack.c.h.b16 %v915
    %v982 = vunpack.c.l.b16 %v916
    %v983 = vunpack.c.l.b16 %v917
    %v984 = vunpack.c.h.b16 %v916
    %v985 = vunpack.c.h.b16 %v917
    %v986 = vunpack.c.l.b16 %v918
    %v987 = vunpack.c.l.b16 %v919
    %v988 = vunpack.c.h.b16 %v918
    %v989 = vunpack.c.h.b16 %v919
    %v990 = vunpack.c.l.b16 %v920
    %v991 = vunpack.c.l.b16 %v921
    %v992 = vunpack.c.h.b16 %v920
    %v993 = vunpack.c.h.b16 %v921
    %v994 = vunpack.c.l.b16 %v922
    %v995 = vunpack.c.l.b16 %v923
    %v996 = vunpack.c.h.b16 %v922
    %v997 = vunpack.c.h.b16 %v923
    %v998 = vunpack.c.l.b16 %v924
    %v999 = vunpack.c.l.b16 %v925
    %v1000 = vunpack.c.h.b16 %v924
    %v1001 = vunpack.c.h.b16 %v925
    %v1002 = vunpack.c.l.b16 %v926
    %v1003 = vunpack.c.l.b16 %v927
    %v1004 = vunpack.c.h.b16 %v926
    %v1005 = vunpack.c.h.b16 %v927
    %v1006 = vunpack.c.l.b16 %v928
    %v1007 = vunpack.c.l.b16 %v929
    %v1008 = vunpack.c.h.b16 %v928
    %v1009 = vunpack.c.h.b16 %v929
    %v1010 = vunpack.c.l.b16 %v930
    %v1011 = vunpack.c.l.b16 %v931
    %v1012 = vunpack.c.h.b16 %v930
    %v1013 = vunpack.c.h.b16 %v931
    %v1014 = vunpack.c.l.b16 %v932
    %v1015 = vunpack.c.l.b16 %v933
    %v1016 = vunpack.c.h.b16 %v932
    %v1017 = vunpack.c.h.b16 %v933
    %v1018 = vunpack.c.l.b16 %v934
    %v1019 = vunpack.c.l.b16 %v935
    %v1020 = vunpack.c.h.b16 %v934
    %v1021 = vunpack.c.h.b16 %v935
    %v1022 = vunpack.c.l.b16 %v936
    %v1023 = vunpack.c.l.b16 %v937
    %v1024 = vunpack.c.h.b16 %v936
    %v1025 = vunpack.c.h.b16 %v937
    %v1026 = vunpack.c.l.b16 %v938
    %v1027 = vunpack.c.l.b16 %v939
    %v1028 = vunpack.c.h.b16 %v938
    %v1029 = vunpack.c.h.b16 %v939
    %v1030 = vunpack.c.l.b16 %v940
    %v1031 = vunpack.c.l.b16 %v941
    %v1032 = vunpack.c.h.b16 %v940
    %v1033 = vunpack.c.h.b16 %v941
    %v1034 = vunpack.c.l.b16 %v942
    %v1035 = vunpack.c.l.b16 %v943
    %v1036 = vunpack.c.h.b16 %v942
    %v1037 = vunpack.c.h.b16 %v943
    %v1038 = vunpack.c.l.b16 %v944
    %v1039 = vunpack.c.l.b16 %v945
    %v1040 = vunpack.c.h.b16 %v944
    %v1041 = vunpack.c.h.b16 %v945
    %v1042 = vpack.c.b16 %v979, %v978
    %v1043 = vpack.c.b16 %v981, %v980
    %v1044 = vpack.c.b16 %v983, %v982
    %v1045 = vpack.c.b16 %v985, %v984
    %v1046 = vpack.c.b16 %v987, %v986
    %v1047 = vpack.c.b16 %v989, %v988
    %v1048 = vpack.c.b16 %v991, %v990
    %v1049 = vpack.c.b16 %v993, %v992
    %v1050 = vpack.c.b16 %v995, %v994
    %v1051 = vpack.c.b16 %v997, %v996
    %v1052 = vpack.c.b16 %v999, %v998
    %v1053 = vpack.c.b16 %v1001, %v1000
    %v1054 = vpack.c.b16 %v1003, %v1002
    %v1055 = vpack.c.b16 %v1005, %v1004
    %v1056 = vpack.c.b16 %v1007, %v1006
    %v1057 = vpack.c.b16 %v1009, %v1008
    %v1058 = vpack.c.b16 %v1011, %v1010
    %v1059 = vpack.c.b16 %v1013, %v1012
    %v1060 = vpack.c.b16 %v1015, %v1014
    %v1061 = vpack.c.b16 %v1017, %v1016
    %v1062 = vpack.c.b16 %v1019, %v1018
    %v1063 = vpack.c.b16 %v1021, %v1020
    %v1064 = vpack.c.b16 %v1023, %v1022
    %v1065 = vpack.c.b16 %v1025, %v1024
    %v1066 = vpack.c.b16 %v1027, %v1026
    %v1067 = vpack.c.b16 %v1029, %v1028
    %v1068 = vpack.c.b16 %v1031, %v1030
    %v1069 = vpack.c.b16 %v1033, %v1032
    %v1070 = vpack.c.b16 %v1035, %v1034
    %v1071 = vpack.c.b16 %v1037, %v1036
    %v1072 = vpack.c.b16 %v1039, %v1038
    %v1073 = vpack.c.b16 %v1041, %v1040
    %1106 = vst [vmem:[#allocation2 + $0x4] sm:$0xff] %v1042
    %1107 = vst [vmem:[#allocation2 + $0x10] sm:$0xff] %v1043
    %1108 = vst [vmem:[#allocation2 + $0x1c] sm:$0xff] %v1044
    %1109 = vst [vmem:[#allocation2 + $0x28] sm:$0xff] %v1045
    %1110 = vst [vmem:[#allocation2 + $0x34] sm:$0xff] %v1046
    %1111 = vst [vmem:[#allocation2 + $0x40] sm:$0xff] %v1047
    %1112 = vst [vmem:[#allocation2 + $0x4c] sm:$0xff] %v1048
    %1113 = vst [vmem:[#allocation2 + $0x58] sm:$0xff] %v1049
    %1114 = vst [vmem:[#allocation2 + $0x64] sm:$0xff] %v1050
    %1115 = vst [vmem:[#allocation2 + $0x70] sm:$0xff] %v1051
    %1116 = vst [vmem:[#allocation2 + $0x7c] sm:$0xff] %v1052
    %1117 = vst [vmem:[#allocation2 + $0x88] sm:$0xff] %v1053
    %1118 = vst [vmem:[#allocation2 + $0x94] sm:$0xff] %v1054
    %1119 = vst [vmem:[#allocation2 + $0xa0] sm:$0xff] %v1055
    %1120 = vst [vmem:[#allocation2 + $0xac] sm:$0xff] %v1056
    %1121 = vst [vmem:[#allocation2 + $0xb8] sm:$0xff] %v1057
    %1122 = vst [vmem:[#allocation2 + $0xc4] sm:$0xff] %v1058
    %1123 = vst [vmem:[#allocation2 + $0xd0] sm:$0xff] %v1059
    %1124 = vst [vmem:[#allocation2 + $0xdc] sm:$0xff] %v1060
    %1125 = vst [vmem:[#allocation2 + $0xe8] sm:$0xff] %v1061
    %1126 = vst [vmem:[#allocation2 + $0xf4] sm:$0xff] %v1062
    %1127 = vst [vmem:[#allocation2 + $0x100] sm:$0xff] %v1063
    %1128 = vst [vmem:[#allocation2 + $0x10c] sm:$0xff] %v1064
    %1129 = vst [vmem:[#allocation2 + $0x118] sm:$0xff] %v1065
    %1130 = vst [vmem:[#allocation2 + $0x124] sm:$0xff] %v1066
    %1131 = vst [vmem:[#allocation2 + $0x130] sm:$0xff] %v1067
    %1132 = vst [vmem:[#allocation2 + $0x13c] sm:$0xff] %v1068
    %1133 = vst [vmem:[#allocation2 + $0x148] sm:$0xff] %v1069
    %1134 = vst [vmem:[#allocation2 + $0x154] sm:$0xff] %v1070
    %1135 = vst [vmem:[#allocation2 + $0x160] sm:$0xff] %v1071
    %1136 = vst [vmem:[#allocation2 + $0x16c] sm:$0xff] %v1072
    %1137 = vst [vmem:[#allocation2 + $0x178] sm:$0xff] %v1073
    %v1138 = vld [vmem:[#allocation2] sm:$0xf]
    %v1139 = vld [vmem:[#allocation2 + $0xc] sm:$0xf]
    %v1140 = vld [vmem:[#allocation2 + $0x18] sm:$0xf]
    %v1141 = vld [vmem:[#allocation2 + $0x24] sm:$0xf]
    %v1142 = vld [vmem:[#allocation2 + $0x30] sm:$0xf]
    %v1143 = vld [vmem:[#allocation2 + $0x3c] sm:$0xf]
    %v1144 = vld [vmem:[#allocation2 + $0x48] sm:$0xf]
    %v1145 = vld [vmem:[#allocation2 + $0x54] sm:$0xf]
    %v1146 = vld [vmem:[#allocation2 + $0x60] sm:$0xf]
    %v1147 = vld [vmem:[#allocation2 + $0x6c] sm:$0xf]
    %v1148 = vld [vmem:[#allocation2 + $0x78] sm:$0xf]
    %v1149 = vld [vmem:[#allocation2 + $0x84] sm:$0xf]
    %v1150 = vld [vmem:[#allocation2 + $0x90] sm:$0xf]
    %v1151 = vld [vmem:[#allocation2 + $0x9c] sm:$0xf]
    %v1152 = vld [vmem:[#allocation2 + $0xa8] sm:$0xf]
    %v1153 = vld [vmem:[#allocation2 + $0xb4] sm:$0xf]
    %v1154 = vld [vmem:[#allocation2 + $0x4] sm:$0xf]
    %v1155 = vld [vmem:[#allocation2 + $0x10] sm:$0xf]
    %v1156 = vld [vmem:[#allocation2 + $0x1c] sm:$0xf]
    %v1157 = vld [vmem:[#allocation2 + $0x28] sm:$0xf]
    %v1158 = vld [vmem:[#allocation2 + $0x34] sm:$0xf]
    %v1159 = vld [vmem:[#allocation2 + $0x40] sm:$0xf]
    %v1160 = vld [vmem:[#allocation2 + $0x4c] sm:$0xf]
    %v1161 = vld [vmem:[#allocation2 + $0x58] sm:$0xf]
    %v1162 = vld [vmem:[#allocation2 + $0x64] sm:$0xf]
    %v1163 = vld [vmem:[#allocation2 + $0x70] sm:$0xf]
    %v1164 = vld [vmem:[#allocation2 + $0x7c] sm:$0xf]
    %v1165 = vld [vmem:[#allocation2 + $0x88] sm:$0xf]
    %v1166 = vld [vmem:[#allocation2 + $0x94] sm:$0xf]
    %v1167 = vld [vmem:[#allocation2 + $0xa0] sm:$0xf]
    %v1168 = vld [vmem:[#allocation2 + $0xac] sm:$0xf]
    %v1169 = vld [vmem:[#allocation2 + $0xb8] sm:$0xf]
    %v1170 = vld [vmem:[#allocation2 + $0x8] sm:$0xf]
    %v1171 = vld [vmem:[#allocation2 + $0x14] sm:$0xf]
    %v1172 = vld [vmem:[#allocation2 + $0x20] sm:$0xf]
    %v1173 = vld [vmem:[#allocation2 + $0x2c] sm:$0xf]
    %v1174 = vld [vmem:[#allocation2 + $0x38] sm:$0xf]
    %v1175 = vld [vmem:[#allocation2 + $0x44] sm:$0xf]
    %v1176 = vld [vmem:[#allocation2 + $0x50] sm:$0xf]
    %v1177 = vld [vmem:[#allocation2 + $0x5c] sm:$0xf]
    %v1178 = vld [vmem:[#allocation2 + $0x68] sm:$0xf]
    %v1179 = vld [vmem:[#allocation2 + $0x74] sm:$0xf]
    %v1180 = vld [vmem:[#allocation2 + $0x80] sm:$0xf]
    %v1181 = vld [vmem:[#allocation2 + $0x8c] sm:$0xf]
    %v1182 = vld [vmem:[#allocation2 + $0x98] sm:$0xf]
    %v1183 = vld [vmem:[#allocation2 + $0xa4] sm:$0xf]
    %v1184 = vld [vmem:[#allocation2 + $0xb0] sm:$0xf]
    %v1185 = vld [vmem:[#allocation2 + $0xbc] sm:$0xf]
    %v1202 = vunpack.c.l.b16 %v1138
    %v1203 = vunpack.c.l.b16 %v1139
    %v1204 = vunpack.c.l.b16 %v1140
    %v1205 = vunpack.c.l.b16 %v1141
    %v1206 = vunpack.c.l.b16 %v1142
    %v1207 = vunpack.c.l.b16 %v1143
    %v1208 = vunpack.c.l.b16 %v1144
    %v1209 = vunpack.c.l.b16 %v1145
    %v1210 = vunpack.c.l.b16 %v1146
    %v1211 = vunpack.c.l.b16 %v1147
    %v1212 = vunpack.c.l.b16 %v1148
    %v1213 = vunpack.c.l.b16 %v1149
    %v1214 = vunpack.c.l.b16 %v1150
    %v1215 = vunpack.c.l.b16 %v1151
    %v1216 = vunpack.c.l.b16 %v1152
    %v1217 = vunpack.c.l.b16 %v1153
    %v1218 = vpack.c.b16 %v1203, %v1202
    %v1219 = vpack.c.b16 %v1205, %v1204
    %v1220 = vpack.c.b16 %v1207, %v1206
    %v1221 = vpack.c.b16 %v1209, %v1208
    %v1222 = vpack.c.b16 %v1211, %v1210
    %v1223 = vpack.c.b16 %v1213, %v1212
    %v1224 = vpack.c.b16 %v1215, %v1214
    %v1225 = vpack.c.b16 %v1217, %v1216
    %v1242 = vunpack.c.l.b16 %v1154
    %v1243 = vunpack.c.l.b16 %v1155
    %v1244 = vunpack.c.l.b16 %v1156
    %v1245 = vunpack.c.l.b16 %v1157
    %v1246 = vunpack.c.l.b16 %v1158
    %v1247 = vunpack.c.l.b16 %v1159
    %v1248 = vunpack.c.l.b16 %v1160
    %v1249 = vunpack.c.l.b16 %v1161
    %v1250 = vunpack.c.l.b16 %v1162
    %v1251 = vunpack.c.l.b16 %v1163
    %v1252 = vunpack.c.l.b16 %v1164
    %v1253 = vunpack.c.l.b16 %v1165
    %v1254 = vunpack.c.l.b16 %v1166
    %v1255 = vunpack.c.l.b16 %v1167
    %v1256 = vunpack.c.l.b16 %v1168
    %v1257 = vunpack.c.l.b16 %v1169
    %v1258 = vpack.c.b16 %v1243, %v1242
    %v1259 = vpack.c.b16 %v1245, %v1244
    %v1260 = vpack.c.b16 %v1247, %v1246
    %v1261 = vpack.c.b16 %v1249, %v1248
    %v1262 = vpack.c.b16 %v1251, %v1250
    %v1263 = vpack.c.b16 %v1253, %v1252
    %v1264 = vpack.c.b16 %v1255, %v1254
    %v1265 = vpack.c.b16 %v1257, %v1256
    %vm1266 = vcmask 261120
    %v1268 = vsel %vm1266, %v1218, 0
    %v1271 = vsel %vm1266, %v1219, 0
    %v1274 = vsel %vm1266, %v1220, 0
    %v1277 = vsel %vm1266, %v1221, 0
    %v1280 = vsel %vm1266, %v1222, 0
    %v1283 = vsel %vm1266, %v1223, 0
    %v1286 = vsel %vm1266, %v1224, 0
    %v1289 = vsel %vm1266, %v1225, 0
    %v1292 = vsel %vm1266, %v1258, 0
    %v1295 = vsel %vm1266, %v1259, 0
    %v1298 = vsel %vm1266, %v1260, 0
    %v1301 = vsel %vm1266, %v1261, 0
    %v1304 = vsel %vm1266, %v1262, 0
    %v1307 = vsel %vm1266, %v1263, 0
    %v1310 = vsel %vm1266, %v1264, 0
    %v1313 = vsel %vm1266, %v1265, 0
    %1315 = vmatprep.subr.bf16.mxu0 0
    %1316 = vmatpush1.bf16.xpose.msra.mxu0 %v1313
    %1317 = vmatprep.subr.bf16.mxu0 0
    %1318 = vmatpush1.bf16.xpose.msra.mxu0 %v1310
    %1319 = vmatprep.subr.bf16.mxu0 0
    %1320 = vmatpush1.bf16.xpose.msra.mxu0 %v1307
    %1321 = vmatprep.subr.bf16.mxu0 0
    %1322 = vmatpush1.bf16.xpose.msra.mxu0 %v1304
    %1323 = vmatprep.subr.bf16.mxu0 0
    %1324 = vmatpush1.bf16.xpose.msra.mxu0 %v1301
    %1325 = vmatprep.subr.bf16.mxu0 0
    %1326 = vmatpush1.bf16.xpose.msra.mxu0 %v1298
    %1327 = vmatprep.subr.bf16.mxu0 0
    %1328 = vmatpush1.bf16.xpose.msra.mxu0 %v1295
    %1329 = vmatprep.subr.bf16.mxu0 0
    %1330 = vmatpush1.bf16.xpose.msra.mxu0 %v1292
    %1331 = vmatprep.subr.bf16.mxu0 0
    %1332 = vmatpush2.bf16.xpose.msra.mxu0 0
    %1333 = vmatprep.subr.bf16.mxu0 0
    %1334 = vmatpush2.bf16.xpose.msra.mxu0 0
    %1335 = vmatprep.subr.bf16.mxu0 0
    %1336 = vmatpush2.bf16.xpose.msra.mxu0 0
    %1337 = vmatprep.subr.bf16.mxu0 0
    %1338 = vmatpush2.bf16.xpose.msra.mxu0 0
    %1339 = vmatprep.subr.bf16.mxu0 0
    %1340 = vmatpush2.bf16.xpose.msra.mxu0 0
    %1341 = vmatprep.subr.bf16.mxu0 0
    %1342 = vmatpush2.bf16.xpose.msra.mxu0 0
    %1343 = vmatprep.subr.bf16.mxu0 0
    %1344 = vmatpush2.bf16.xpose.msra.mxu0 0
    %1345 = vmatprep.subr.bf16.mxu0 0
    %1346 = vmatpush2.bf16.xpose.msra.mxu0 0
    %1347 = vmatprep.mubr.bf16.mxu0 0
    %1348 = vmatmul.mubr.bf16.gmra.mxu0 %v1268
    %v1349 = vpop.f32.mrf.mxu0
    %v1350 = vadd.f32 0.0, %v1349
    %v1351 = vpop.f32.mrf.mxu0
    %v1352 = vpop.f32.mrf.mxu0
    %v1353 = vadd.f32 0.0, %v1352
    %v1354 = vpop.f32.mrf.mxu0
    %1355 = vmatprep.mubr.bf16.mxu0 0
    %1356 = vmatmul.mubr.bf16.gmra.mxu0 %v1271
    %v1357 = vpop.f32.mrf.mxu0
    %v1358 = vadd.f32 0.0, %v1357
    %v1359 = vpop.f32.mrf.mxu0
    %v1360 = vpop.f32.mrf.mxu0
    %v1361 = vadd.f32 0.0, %v1360
    %v1362 = vpop.f32.mrf.mxu0
    %1363 = vmatprep.mubr.bf16.mxu0 0
    %1364 = vmatmul.mubr.bf16.gmra.mxu0 %v1274
    %v1365 = vpop.f32.mrf.mxu0
    %v1366 = vadd.f32 0.0, %v1365
    %v1367 = vpop.f32.mrf.mxu0
    %v1368 = vpop.f32.mrf.mxu0
    %v1369 = vadd.f32 0.0, %v1368
    %v1370 = vpop.f32.mrf.mxu0
    %1371 = vmatprep.mubr.bf16.mxu0 0
    %1372 = vmatmul.mubr.bf16.gmra.mxu0 %v1277
    %v1373 = vpop.f32.mrf.mxu0
    %v1374 = vadd.f32 0.0, %v1373
    %v1375 = vpop.f32.mrf.mxu0
    %v1376 = vpop.f32.mrf.mxu0
    %v1377 = vadd.f32 0.0, %v1376
    %v1378 = vpop.f32.mrf.mxu0
    %1379 = vmatprep.mubr.bf16.mxu0 0
    %1380 = vmatmul.mubr.bf16.gmra.mxu0 %v1280
    %v1381 = vpop.f32.mrf.mxu0
    %v1382 = vadd.f32 0.0, %v1381
    %v1383 = vpop.f32.mrf.mxu0
    %v1384 = vpop.f32.mrf.mxu0
    %v1385 = vadd.f32 0.0, %v1384
    %v1386 = vpop.f32.mrf.mxu0
    %1387 = vmatprep.mubr.bf16.mxu0 0
    %1388 = vmatmul.mubr.bf16.gmra.mxu0 %v1283
    %v1389 = vpop.f32.mrf.mxu0
    %v1390 = vadd.f32 0.0, %v1389
    %v1391 = vpop.f32.mrf.mxu0
    %v1392 = vpop.f32.mrf.mxu0
    %v1393 = vadd.f32 0.0, %v1392
    %v1394 = vpop.f32.mrf.mxu0
    %1395 = vmatprep.mubr.bf16.mxu0 0
    %1396 = vmatmul.mubr.bf16.gmra.mxu0 %v1286
    %v1397 = vpop.f32.mrf.mxu0
    %v1398 = vadd.f32 0.0, %v1397
    %v1399 = vpop.f32.mrf.mxu0
    %v1400 = vpop.f32.mrf.mxu0
    %v1401 = vadd.f32 0.0, %v1400
    %v1402 = vpop.f32.mrf.mxu0
    %1403 = vmatprep.mubr.bf16.mxu0 0
    %1404 = vmatmul.mubr.bf16.gmra.mxu0 %v1289
    %v1405 = vpop.f32.mrf.mxu0
    %v1406 = vadd.f32 0.0, %v1405
    %v1407 = vpop.f32.mrf.mxu0
    %v1408 = vpop.f32.mrf.mxu0
    %v1409 = vadd.f32 0.0, %v1408
    %v1410 = vpop.f32.mrf.mxu0
    %1411 = vdwg.mxu0
    %1412 = vmax.xlane.f32.xlu0 %v1350
    %v1413 = vpop.xlane.xlu0 %1412
    %1414 = vmax.xlane.f32.xlu0 %v1353
    %v1415 = vpop.xlane.xlu0 %1414
    %1416 = vmax.xlane.f32.xlu0 %v1358
    %v1417 = vpop.xlane.xlu0 %1416
    %1418 = vmax.xlane.f32.xlu0 %v1361
    %v1419 = vpop.xlane.xlu0 %1418
    %1420 = vmax.xlane.f32.xlu0 %v1366
    %v1421 = vpop.xlane.xlu0 %1420
    %1422 = vmax.xlane.f32.xlu0 %v1369
    %v1423 = vpop.xlane.xlu0 %1422
    %1424 = vmax.xlane.f32.xlu0 %v1374
    %v1425 = vpop.xlane.xlu0 %1424
    %1426 = vmax.xlane.f32.xlu0 %v1377
    %v1427 = vpop.xlane.xlu0 %1426
    %1428 = vmax.xlane.f32.xlu0 %v1382
    %v1429 = vpop.xlane.xlu0 %1428
    %1430 = vmax.xlane.f32.xlu0 %v1385
    %v1431 = vpop.xlane.xlu0 %1430
    %1432 = vmax.xlane.f32.xlu0 %v1390
    %v1433 = vpop.xlane.xlu0 %1432
    %1434 = vmax.xlane.f32.xlu0 %v1393
    %v1435 = vpop.xlane.xlu0 %1434
    %1436 = vmax.xlane.f32.xlu0 %v1398
    %v1437 = vpop.xlane.xlu0 %1436
    %1438 = vmax.xlane.f32.xlu0 %v1401
    %v1439 = vpop.xlane.xlu0 %1438
    %1440 = vmax.xlane.f32.xlu0 %v1406
    %v1441 = vpop.xlane.xlu0 %1440
    %1442 = vmax.xlane.f32.xlu0 %v1409
    %v1443 = vpop.xlane.xlu0 %1442
    %v1444 = vsub.f32 %v1350, %v1413
    %v1445 = vsub.f32 %v1353, %v1415
    %v1446 = vsub.f32 %v1358, %v1417
    %v1447 = vsub.f32 %v1361, %v1419
    %v1448 = vsub.f32 %v1366, %v1421
    %v1449 = vsub.f32 %v1369, %v1423
    %v1450 = vsub.f32 %v1374, %v1425
    %v1451 = vsub.f32 %v1377, %v1427
    %v1452 = vsub.f32 %v1382, %v1429
    %v1453 = vsub.f32 %v1385, %v1431
    %v1454 = vsub.f32 %v1390, %v1433
    %v1455 = vsub.f32 %v1393, %v1435
    %v1456 = vsub.f32 %v1398, %v1437
    %v1457 = vsub.f32 %v1401, %v1439
    %v1458 = vsub.f32 %v1406, %v1441
    %v1459 = vsub.f32 %v1409, %v1443
    %v1460 = vmul.f32 %v1444, 1.442695
    %v1461 = vpow.pop %v1460
    %v1462 = vmul.f32 %v1445, 1.442695
    %v1463 = vpow.pop %v1462
    %v1464 = vmul.f32 %v1446, 1.442695
    %v1465 = vpow.pop %v1464
    %v1466 = vmul.f32 %v1447, 1.442695
    %v1467 = vpow.pop %v1466
    %v1468 = vmul.f32 %v1448, 1.442695
    %v1469 = vpow.pop %v1468
    %v1470 = vmul.f32 %v1449, 1.442695
    %v1471 = vpow.pop %v1470
    %v1472 = vmul.f32 %v1450, 1.442695
    %v1473 = vpow.pop %v1472
    %v1474 = vmul.f32 %v1451, 1.442695
    %v1475 = vpow.pop %v1474
    %v1476 = vmul.f32 %v1452, 1.442695
    %v1477 = vpow.pop %v1476
    %v1478 = vmul.f32 %v1453, 1.442695
    %v1479 = vpow.pop %v1478
    %v1480 = vmul.f32 %v1454, 1.442695
    %v1481 = vpow.pop %v1480
    %v1482 = vmul.f32 %v1455, 1.442695
    %v1483 = vpow.pop %v1482
    %v1484 = vmul.f32 %v1456, 1.442695
    %v1485 = vpow.pop %v1484
    %v1486 = vmul.f32 %v1457, 1.442695
    %v1487 = vpow.pop %v1486
    %v1488 = vmul.f32 %v1458, 1.442695
    %v1489 = vpow.pop %v1488
    %v1490 = vmul.f32 %v1459, 1.442695
    %v1491 = vpow.pop %v1490
    %1492 = vadd.xlane.f32.xlu0 %v1461
    %v1493 = vpop.xlane.xlu0 %1492
    %1494 = vadd.xlane.f32.xlu0 %v1463
    %v1495 = vpop.xlane.xlu0 %1494
    %1496 = vadd.xlane.f32.xlu0 %v1465
    %v1497 = vpop.xlane.xlu0 %1496
    %1498 = vadd.xlane.f32.xlu0 %v1467
    %v1499 = vpop.xlane.xlu0 %1498
    %1500 = vadd.xlane.f32.xlu0 %v1469
    %v1501 = vpop.xlane.xlu0 %1500
    %1502 = vadd.xlane.f32.xlu0 %v1471
    %v1503 = vpop.xlane.xlu0 %1502
    %1504 = vadd.xlane.f32.xlu0 %v1473
    %v1505 = vpop.xlane.xlu0 %1504
    %1506 = vadd.xlane.f32.xlu0 %v1475
    %v1507 = vpop.xlane.xlu0 %1506
    %1508 = vadd.xlane.f32.xlu0 %v1477
    %v1509 = vpop.xlane.xlu0 %1508
    %1510 = vadd.xlane.f32.xlu0 %v1479
    %v1511 = vpop.xlane.xlu0 %1510
    %1512 = vadd.xlane.f32.xlu0 %v1481
    %v1513 = vpop.xlane.xlu0 %1512
    %1514 = vadd.xlane.f32.xlu0 %v1483
    %v1515 = vpop.xlane.xlu0 %1514
    %1516 = vadd.xlane.f32.xlu0 %v1485
    %v1517 = vpop.xlane.xlu0 %1516
    %1518 = vadd.xlane.f32.xlu0 %v1487
    %v1519 = vpop.xlane.xlu0 %1518
    %1520 = vadd.xlane.f32.xlu0 %v1489
    %v1521 = vpop.xlane.xlu0 %1520
    %1522 = vadd.xlane.f32.xlu0 %v1491
    %v1523 = vpop.xlane.xlu0 %1522
    %v1524 = vrcp.pop %v1493
    %v1525 = vrcp.pop %v1495
    %v1526 = vrcp.pop %v1497
    %v1527 = vrcp.pop %v1499
    %v1528 = vrcp.pop %v1501
    %v1529 = vrcp.pop %v1503
    %v1530 = vrcp.pop %v1505
    %v1531 = vrcp.pop %v1507
    %v1532 = vrcp.pop %v1509
    %v1533 = vrcp.pop %v1511
    %v1534 = vrcp.pop %v1513
    %v1535 = vrcp.pop %v1515
    %v1536 = vrcp.pop %v1517
    %v1537 = vrcp.pop %v1519
    %v1538 = vrcp.pop %v1521
    %v1539 = vrcp.pop %v1523
    %v1540 = vmul.f32 %v1461, %v1524
    %v1541 = vmul.f32 %v1463, %v1525
    %v1542 = vmul.f32 %v1465, %v1526
    %v1543 = vmul.f32 %v1467, %v1527
    %v1544 = vmul.f32 %v1469, %v1528
    %v1545 = vmul.f32 %v1471, %v1529
    %v1546 = vmul.f32 %v1473, %v1530
    %v1547 = vmul.f32 %v1475, %v1531
    %v1548 = vmul.f32 %v1477, %v1532
    %v1549 = vmul.f32 %v1479, %v1533
    %v1550 = vmul.f32 %v1481, %v1534
    %v1551 = vmul.f32 %v1483, %v1535
    %v1552 = vmul.f32 %v1485, %v1536
    %v1553 = vmul.f32 %v1487, %v1537
    %v1554 = vmul.f32 %v1489, %v1538
    %v1555 = vmul.f32 %v1491, %v1539
    %v1556 = vpack.c.bf16 %v1541, %v1540
    %v1557 = vpack.c.bf16 %v1543, %v1542
    %v1558 = vpack.c.bf16 %v1545, %v1544
    %v1559 = vpack.c.bf16 %v1547, %v1546
    %v1560 = vpack.c.bf16 %v1549, %v1548
    %v1561 = vpack.c.bf16 %v1551, %v1550
    %v1562 = vpack.c.bf16 %v1553, %v1552
    %v1563 = vpack.c.bf16 %v1555, %v1554
    %v1580 = vunpack.c.l.b16 %v1170
    %v1581 = vunpack.c.l.b16 %v1171
    %v1582 = vunpack.c.l.b16 %v1172
    %v1583 = vunpack.c.l.b16 %v1173
    %v1584 = vunpack.c.l.b16 %v1174
    %v1585 = vunpack.c.l.b16 %v1175
    %v1586 = vunpack.c.l.b16 %v1176
    %v1587 = vunpack.c.l.b16 %v1177
    %v1588 = vunpack.c.l.b16 %v1178
    %v1589 = vunpack.c.l.b16 %v1179
    %v1590 = vunpack.c.l.b16 %v1180
    %v1591 = vunpack.c.l.b16 %v1181
    %v1592 = vunpack.c.l.b16 %v1182
    %v1593 = vunpack.c.l.b16 %v1183
    %v1594 = vunpack.c.l.b16 %v1184
    %v1595 = vunpack.c.l.b16 %v1185
    %v1596 = vpack.c.b16 %v1581, %v1580
    %v1597 = vpack.c.b16 %v1583, %v1582
    %v1598 = vpack.c.b16 %v1585, %v1584
    %v1599 = vpack.c.b16 %v1587, %v1586
    %v1600 = vpack.c.b16 %v1589, %v1588
    %v1601 = vpack.c.b16 %v1591, %v1590
    %v1602 = vpack.c.b16 %v1593, %v1592
    %v1603 = vpack.c.b16 %v1595, %v1594
    %1612 = vmatprep.subr.bf16.mxu0 0
    %1613 = vmatpush1.bf16.msra.mxu0 %v1603
    %1614 = vmatprep.subr.bf16.mxu0 0
    %1615 = vmatpush1.bf16.msra.mxu0 %v1602
    %1616 = vmatprep.subr.bf16.mxu0 0
    %1617 = vmatpush1.bf16.msra.mxu0 %v1601
    %1618 = vmatprep.subr.bf16.mxu0 0
    %1619 = vmatpush1.bf16.msra.mxu0 %v1600
    %1620 = vmatprep.subr.bf16.mxu0 0
    %1621 = vmatpush1.bf16.msra.mxu0 %v1599
    %1622 = vmatprep.subr.bf16.mxu0 0
    %1623 = vmatpush1.bf16.msra.mxu0 %v1598
    %1624 = vmatprep.subr.bf16.mxu0 0
    %1625 = vmatpush1.bf16.msra.mxu0 %v1597
    %1626 = vmatprep.subr.bf16.mxu0 0
    %1627 = vmatpush1.bf16.msra.mxu0 %v1596
    %1628 = vmatprep.subr.bf16.mxu0 0
    %1629 = vmatpush2.bf16.msra.mxu0 0
    %1630 = vmatprep.subr.bf16.mxu0 0
    %1631 = vmatpush2.bf16.msra.mxu0 0
    %1632 = vmatprep.subr.bf16.mxu0 0
    %1633 = vmatpush2.bf16.msra.mxu0 0
    %1634 = vmatprep.subr.bf16.mxu0 0
    %1635 = vmatpush2.bf16.msra.mxu0 0
    %1636 = vmatprep.subr.bf16.mxu0 0
    %1637 = vmatpush2.bf16.msra.mxu0 0
    %1638 = vmatprep.subr.bf16.mxu0 0
    %1639 = vmatpush2.bf16.msra.mxu0 0
    %1640 = vmatprep.subr.bf16.mxu0 0
    %1641 = vmatpush2.bf16.msra.mxu0 0
    %1642 = vmatprep.subr.bf16.mxu0 0
    %1643 = vmatpush2.bf16.msra.mxu0 0
    %1644 = vmatprep.mubr.bf16.mxu0 0
    %1645 = vmatmul.mubr.bf16.gmra.mxu0 %v1556
    %v1646 = vpop.f32.mrf.mxu0
    %v1647 = vadd.f32 0.0, %v1646
    %v1648 = vpop.f32.mrf.mxu0
    %v1649 = vpop.f32.mrf.mxu0
    %v1650 = vadd.f32 0.0, %v1649
    %v1651 = vpop.f32.mrf.mxu0
    %1652 = vmatprep.mubr.bf16.mxu0 0
    %1653 = vmatmul.mubr.bf16.gmra.mxu0 %v1557
    %v1654 = vpop.f32.mrf.mxu0
    %v1655 = vadd.f32 0.0, %v1654
    %v1656 = vpop.f32.mrf.mxu0
    %v1657 = vpop.f32.mrf.mxu0
    %v1658 = vadd.f32 0.0, %v1657
    %v1659 = vpop.f32.mrf.mxu0
    %1660 = vmatprep.mubr.bf16.mxu0 0
    %1661 = vmatmul.mubr.bf16.gmra.mxu0 %v1558
    %v1662 = vpop.f32.mrf.mxu0
    %v1663 = vadd.f32 0.0, %v1662
    %v1664 = vpop.f32.mrf.mxu0
    %v1665 = vpop.f32.mrf.mxu0
    %v1666 = vadd.f32 0.0, %v1665
    %v1667 = vpop.f32.mrf.mxu0
    %1668 = vmatprep.mubr.bf16.mxu0 0
    %1669 = vmatmul.mubr.bf16.gmra.mxu0 %v1559
    %v1670 = vpop.f32.mrf.mxu0
    %v1671 = vadd.f32 0.0, %v1670
    %v1672 = vpop.f32.mrf.mxu0
    %v1673 = vpop.f32.mrf.mxu0
    %v1674 = vadd.f32 0.0, %v1673
    %v1675 = vpop.f32.mrf.mxu0
    %1676 = vmatprep.mubr.bf16.mxu0 0
    %1677 = vmatmul.mubr.bf16.gmra.mxu0 %v1560
    %v1678 = vpop.f32.mrf.mxu0
    %v1679 = vadd.f32 0.0, %v1678
    %v1680 = vpop.f32.mrf.mxu0
    %v1681 = vpop.f32.mrf.mxu0
    %v1682 = vadd.f32 0.0, %v1681
    %v1683 = vpop.f32.mrf.mxu0
    %1684 = vmatprep.mubr.bf16.mxu0 0
    %1685 = vmatmul.mubr.bf16.gmra.mxu0 %v1561
    %v1686 = vpop.f32.mrf.mxu0
    %v1687 = vadd.f32 0.0, %v1686
    %v1688 = vpop.f32.mrf.mxu0
    %v1689 = vpop.f32.mrf.mxu0
    %v1690 = vadd.f32 0.0, %v1689
    %v1691 = vpop.f32.mrf.mxu0
    %1692 = vmatprep.mubr.bf16.mxu0 0
    %1693 = vmatmul.mubr.bf16.gmra.mxu0 %v1562
    %v1694 = vpop.f32.mrf.mxu0
    %v1695 = vadd.f32 0.0, %v1694
    %v1696 = vpop.f32.mrf.mxu0
    %v1697 = vpop.f32.mrf.mxu0
    %v1698 = vadd.f32 0.0, %v1697
    %v1699 = vpop.f32.mrf.mxu0
    %1700 = vmatprep.mubr.bf16.mxu0 0
    %1701 = vmatmul.mubr.bf16.gmra.mxu0 %v1563
    %v1702 = vpop.f32.mrf.mxu0
    %v1703 = vadd.f32 0.0, %v1702
    %v1704 = vpop.f32.mrf.mxu0
    %v1705 = vpop.f32.mrf.mxu0
    %v1706 = vadd.f32 0.0, %v1705
    %v1707 = vpop.f32.mrf.mxu0
    %1708 = vdwg.mxu0
    %v1709 = vpack.c.bf16 %v1650, %v1647
    %v1710 = vpack.c.bf16 %v1658, %v1655
    %v1711 = vpack.c.bf16 %v1666, %v1663
    %v1712 = vpack.c.bf16 %v1674, %v1671
    %v1713 = vpack.c.bf16 %v1682, %v1679
    %v1714 = vpack.c.bf16 %v1690, %v1687
    %v1715 = vpack.c.bf16 %v1698, %v1695
    %v1716 = vpack.c.bf16 %v1706, %v1703
    %v1725 = vunpack.c.l.b16 %v1709
    %v1726 = vunpack.c.h.b16 %v1709
    %v1727 = vunpack.c.l.b16 %v1710
    %v1728 = vunpack.c.h.b16 %v1710
    %v1729 = vunpack.c.l.b16 %v1711
    %v1730 = vunpack.c.h.b16 %v1711
    %v1731 = vunpack.c.l.b16 %v1712
    %v1732 = vunpack.c.h.b16 %v1712
    %v1733 = vunpack.c.l.b16 %v1713
    %v1734 = vunpack.c.h.b16 %v1713
    %v1735 = vunpack.c.l.b16 %v1714
    %v1736 = vunpack.c.h.b16 %v1714
    %v1737 = vunpack.c.l.b16 %v1715
    %v1738 = vunpack.c.h.b16 %v1715
    %v1739 = vunpack.c.l.b16 %v1716
    %v1740 = vunpack.c.h.b16 %v1716
    %v1741 = vpack.c.b16 %v1725, %v1725
    %v1742 = vpack.c.b16 %v1726, %v1726
    %v1743 = vpack.c.b16 %v1727, %v1727
    %v1744 = vpack.c.b16 %v1728, %v1728
    %v1745 = vpack.c.b16 %v1729, %v1729
    %v1746 = vpack.c.b16 %v1730, %v1730
    %v1747 = vpack.c.b16 %v1731, %v1731
    %v1748 = vpack.c.b16 %v1732, %v1732
    %v1749 = vpack.c.b16 %v1733, %v1733
    %v1750 = vpack.c.b16 %v1734, %v1734
    %v1751 = vpack.c.b16 %v1735, %v1735
    %v1752 = vpack.c.b16 %v1736, %v1736
    %v1753 = vpack.c.b16 %v1737, %v1737
    %v1754 = vpack.c.b16 %v1738, %v1738
    %v1755 = vpack.c.b16 %v1739, %v1739
    %v1756 = vpack.c.b16 %v1740, %v1740
    %vm1773 = vcmask 257024
    %1774 = vst.msk [vmem:[#allocation3] sm:$0xf] %vm1773, %v1741
    %1775 = vst.msk [vmem:[#allocation3 + $0x4] sm:$0xf] %vm1773, %v1742
    %1776 = vst.msk [vmem:[#allocation3 + $0x8] sm:$0xf] %vm1773, %v1743
    %1777 = vst.msk [vmem:[#allocation3 + $0xc] sm:$0xf] %vm1773, %v1744
    %1778 = vst.msk [vmem:[#allocation3 + $0x10] sm:$0xf] %vm1773, %v1745
    %1779 = vst.msk [vmem:[#allocation3 + $0x14] sm:$0xf] %vm1773, %v1746
    %1780 = vst.msk [vmem:[#allocation3 + $0x18] sm:$0xf] %vm1773, %v1747
    %1781 = vst.msk [vmem:[#allocation3 + $0x1c] sm:$0xf] %vm1773, %v1748
    %1782 = vst.msk [vmem:[#allocation3 + $0x20] sm:$0xf] %vm1773, %v1749
    %1783 = vst.msk [vmem:[#allocation3 + $0x24] sm:$0xf] %vm1773, %v1750
    %1784 = vst.msk [vmem:[#allocation3 + $0x28] sm:$0xf] %vm1773, %v1751
    %1785 = vst.msk [vmem:[#allocation3 + $0x2c] sm:$0xf] %vm1773, %v1752
    %1786 = vst.msk [vmem:[#allocation3 + $0x30] sm:$0xf] %vm1773, %v1753
    %1787 = vst.msk [vmem:[#allocation3 + $0x34] sm:$0xf] %vm1773, %v1754
    %1788 = vst.msk [vmem:[#allocation3 + $0x38] sm:$0xf] %vm1773, %v1755
    %1789 = vst.msk [vmem:[#allocation3 + $0x3c] sm:$0xf] %vm1773, %v1756
    %v1790 = vld [vmem:[#allocation2] sm:$0xf]
    %v1791 = vld [vmem:[#allocation2 + $0xc] sm:$0xf]
    %v1792 = vld [vmem:[#allocation2 + $0x18] sm:$0xf]
    %v1793 = vld [vmem:[#allocation2 + $0x24] sm:$0xf]
    %v1794 = vld [vmem:[#allocation2 + $0x30] sm:$0xf]
    %v1795 = vld [vmem:[#allocation2 + $0x3c] sm:$0xf]
    %v1796 = vld [vmem:[#allocation2 + $0x48] sm:$0xf]
    %v1797 = vld [vmem:[#allocation2 + $0x54] sm:$0xf]
    %v1798 = vld [vmem:[#allocation2 + $0x60] sm:$0xf]
    %v1799 = vld [vmem:[#allocation2 + $0x6c] sm:$0xf]
    %v1800 = vld [vmem:[#allocation2 + $0x78] sm:$0xf]
    %v1801 = vld [vmem:[#allocation2 + $0x84] sm:$0xf]
    %v1802 = vld [vmem:[#allocation2 + $0x90] sm:$0xf]
    %v1803 = vld [vmem:[#allocation2 + $0x9c] sm:$0xf]
    %v1804 = vld [vmem:[#allocation2 + $0xa8] sm:$0xf]
    %v1805 = vld [vmem:[#allocation2 + $0xb4] sm:$0xf]
    %v1806 = vld [vmem:[#allocation2 + $0x4] sm:$0xf]
    %v1807 = vld [vmem:[#allocation2 + $0x10] sm:$0xf]
    %v1808 = vld [vmem:[#allocation2 + $0x1c] sm:$0xf]
    %v1809 = vld [vmem:[#allocation2 + $0x28] sm:$0xf]
    %v1810 = vld [vmem:[#allocation2 + $0x34] sm:$0xf]
    %v1811 = vld [vmem:[#allocation2 + $0x40] sm:$0xf]
    %v1812 = vld [vmem:[#allocation2 + $0x4c] sm:$0xf]
    %v1813 = vld [vmem:[#allocation2 + $0x58] sm:$0xf]
    %v1814 = vld [vmem:[#allocation2 + $0x64] sm:$0xf]
    %v1815 = vld [vmem:[#allocation2 + $0x70] sm:$0xf]
    %v1816 = vld [vmem:[#allocation2 + $0x7c] sm:$0xf]
    %v1817 = vld [vmem:[#allocation2 + $0x88] sm:$0xf]
    %v1818 = vld [vmem:[#allocation2 + $0x94] sm:$0xf]
    %v1819 = vld [vmem:[#allocation2 + $0xa0] sm:$0xf]
    %v1820 = vld [vmem:[#allocation2 + $0xac] sm:$0xf]
    %v1821 = vld [vmem:[#allocation2 + $0xb8] sm:$0xf]
    %v1822 = vld [vmem:[#allocation2 + $0x8] sm:$0xf]
    %v1823 = vld [vmem:[#allocation2 + $0x14] sm:$0xf]
    %v1824 = vld [vmem:[#allocation2 + $0x20] sm:$0xf]
    %v1825 = vld [vmem:[#allocation2 + $0x2c] sm:$0xf]
    %v1826 = vld [vmem:[#allocation2 + $0x38] sm:$0xf]
    %v1827 = vld [vmem:[#allocation2 + $0x44] sm:$0xf]
    %v1828 = vld [vmem:[#allocation2 + $0x50] sm:$0xf]
    %v1829 = vld [vmem:[#allocation2 + $0x5c] sm:$0xf]
    %v1830 = vld [vmem:[#allocation2 + $0x68] sm:$0xf]
    %v1831 = vld [vmem:[#allocation2 + $0x74] sm:$0xf]
    %v1832 = vld [vmem:[#allocation2 + $0x80] sm:$0xf]
    %v1833 = vld [vmem:[#allocation2 + $0x8c] sm:$0xf]
    %v1834 = vld [vmem:[#allocation2 + $0x98] sm:$0xf]
    %v1835 = vld [vmem:[#allocation2 + $0xa4] sm:$0xf]
    %v1836 = vld [vmem:[#allocation2 + $0xb0] sm:$0xf]
    %v1837 = vld [vmem:[#allocation2 + $0xbc] sm:$0xf]
    %v1854 = vunpack.c.l.b16 %v1790
    %v1855 = vunpack.c.l.b16 %v1791
    %v1856 = vunpack.c.l.b16 %v1792
    %v1857 = vunpack.c.l.b16 %v1793
    %v1858 = vunpack.c.l.b16 %v1794
    %v1859 = vunpack.c.l.b16 %v1795
    %v1860 = vunpack.c.l.b16 %v1796
    %v1861 = vunpack.c.l.b16 %v1797
    %v1862 = vunpack.c.l.b16 %v1798
    %v1863 = vunpack.c.l.b16 %v1799
    %v1864 = vunpack.c.l.b16 %v1800
    %v1865 = vunpack.c.l.b16 %v1801
    %v1866 = vunpack.c.l.b16 %v1802
    %v1867 = vunpack.c.l.b16 %v1803
    %v1868 = vunpack.c.l.b16 %v1804
    %v1869 = vunpack.c.l.b16 %v1805
    %v1870 = vpack.c.b16 %v1855, %v1854
    %v1871 = vpack.c.b16 %v1857, %v1856
    %v1872 = vpack.c.b16 %v1859, %v1858
    %v1873 = vpack.c.b16 %v1861, %v1860
    %v1874 = vpack.c.b16 %v1863, %v1862
    %v1875 = vpack.c.b16 %v1865, %v1864
    %v1876 = vpack.c.b16 %v1867, %v1866
    %v1877 = vpack.c.b16 %v1869, %v1868
    %1878 = vrot.lane.b32.xlu0 %v1870, 96
    %v1879 = vpop.permute.xlu0 %1878
    %1880 = vrot.lane.b32.xlu0 %v1871, 96
    %v1881 = vpop.permute.xlu0 %1880
    %1882 = vrot.lane.b32.xlu0 %v1872, 96
    %v1883 = vpop.permute.xlu0 %1882
    %1884 = vrot.lane.b32.xlu0 %v1873, 96
    %v1885 = vpop.permute.xlu0 %1884
    %1886 = vrot.lane.b32.xlu0 %v1874, 96
    %v1887 = vpop.permute.xlu0 %1886
    %1888 = vrot.lane.b32.xlu0 %v1875, 96
    %v1889 = vpop.permute.xlu0 %1888
    %1890 = vrot.lane.b32.xlu0 %v1876, 96
    %v1891 = vpop.permute.xlu0 %1890
    %1892 = vrot.lane.b32.xlu0 %v1877, 96
    %v1893 = vpop.permute.xlu0 %1892
    %v1910 = vunpack.c.l.b16 %v1806
    %v1911 = vunpack.c.l.b16 %v1807
    %v1912 = vunpack.c.l.b16 %v1808
    %v1913 = vunpack.c.l.b16 %v1809
    %v1914 = vunpack.c.l.b16 %v1810
    %v1915 = vunpack.c.l.b16 %v1811
    %v1916 = vunpack.c.l.b16 %v1812
    %v1917 = vunpack.c.l.b16 %v1813
    %v1918 = vunpack.c.l.b16 %v1814
    %v1919 = vunpack.c.l.b16 %v1815
    %v1920 = vunpack.c.l.b16 %v1816
    %v1921 = vunpack.c.l.b16 %v1817
    %v1922 = vunpack.c.l.b16 %v1818
    %v1923 = vunpack.c.l.b16 %v1819
    %v1924 = vunpack.c.l.b16 %v1820
    %v1925 = vunpack.c.l.b16 %v1821
    %v1926 = vpack.c.b16 %v1911, %v1910
    %v1927 = vpack.c.b16 %v1913, %v1912
    %v1928 = vpack.c.b16 %v1915, %v1914
    %v1929 = vpack.c.b16 %v1917, %v1916
    %v1930 = vpack.c.b16 %v1919, %v1918
    %v1931 = vpack.c.b16 %v1921, %v1920
    %v1932 = vpack.c.b16 %v1923, %v1922
    %v1933 = vpack.c.b16 %v1925, %v1924
    %1934 = vrot.lane.b32.xlu0 %v1926, 96
    %v1935 = vpop.permute.xlu0 %1934
    %1936 = vrot.lane.b32.xlu0 %v1927, 96
    %v1937 = vpop.permute.xlu0 %1936
    %1938 = vrot.lane.b32.xlu0 %v1928, 96
    %v1939 = vpop.permute.xlu0 %1938
    %1940 = vrot.lane.b32.xlu0 %v1929, 96
    %v1941 = vpop.permute.xlu0 %1940
    %1942 = vrot.lane.b32.xlu0 %v1930, 96
    %v1943 = vpop.permute.xlu0 %1942
    %1944 = vrot.lane.b32.xlu0 %v1931, 96
    %v1945 = vpop.permute.xlu0 %1944
    %1946 = vrot.lane.b32.xlu0 %v1932, 96
    %v1947 = vpop.permute.xlu0 %1946
    %1948 = vrot.lane.b32.xlu0 %v1933, 96
    %v1949 = vpop.permute.xlu0 %1948
    %v1951 = vsel %vm1266, %v1879, 0
    %v1954 = vsel %vm1266, %v1881, 0
    %v1957 = vsel %vm1266, %v1883, 0
    %v1960 = vsel %vm1266, %v1885, 0
    %v1963 = vsel %vm1266, %v1887, 0
    %v1966 = vsel %vm1266, %v1889, 0
    %v1969 = vsel %vm1266, %v1891, 0
    %v1972 = vsel %vm1266, %v1893, 0
    %v1975 = vsel %vm1266, %v1935, 0
    %v1978 = vsel %vm1266, %v1937, 0
    %v1981 = vsel %vm1266, %v1939, 0
    %v1984 = vsel %vm1266, %v1941, 0
    %v1987 = vsel %vm1266, %v1943, 0
    %v1990 = vsel %vm1266, %v1945, 0
    %v1993 = vsel %vm1266, %v1947, 0
    %v1996 = vsel %vm1266, %v1949, 0
    %1998 = vmatprep.subr.bf16.mxu0 0
    %1999 = vmatpush1.bf16.xpose.msra.mxu0 %v1996
    %2000 = vmatprep.subr.bf16.mxu0 0
    %2001 = vmatpush1.bf16.xpose.msra.mxu0 %v1993
    %2002 = vmatprep.subr.bf16.mxu0 0
    %2003 = vmatpush1.bf16.xpose.msra.mxu0 %v1990
    %2004 = vmatprep.subr.bf16.mxu0 0
    %2005 = vmatpush1.bf16.xpose.msra.mxu0 %v1987
    %2006 = vmatprep.subr.bf16.mxu0 0
    %2007 = vmatpush1.bf16.xpose.msra.mxu0 %v1984
    %2008 = vmatprep.subr.bf16.mxu0 0
    %2009 = vmatpush1.bf16.xpose.msra.mxu0 %v1981
    %2010 = vmatprep.subr.bf16.mxu0 0
    %2011 = vmatpush1.bf16.xpose.msra.mxu0 %v1978
    %2012 = vmatprep.subr.bf16.mxu0 0
    %2013 = vmatpush1.bf16.xpose.msra.mxu0 %v1975
    %2014 = vmatprep.subr.bf16.mxu0 0
    %2015 = vmatpush2.bf16.xpose.msra.mxu0 0
    %2016 = vmatprep.subr.bf16.mxu0 0
    %2017 = vmatpush2.bf16.xpose.msra.mxu0 0
    %2018 = vmatprep.subr.bf16.mxu0 0
    %2019 = vmatpush2.bf16.xpose.msra.mxu0 0
    %2020 = vmatprep.subr.bf16.mxu0 0
    %2021 = vmatpush2.bf16.xpose.msra.mxu0 0
    %2022 = vmatprep.subr.bf16.mxu0 0
    %2023 = vmatpush2.bf16.xpose.msra.mxu0 0
    %2024 = vmatprep.subr.bf16.mxu0 0
    %2025 = vmatpush2.bf16.xpose.msra.mxu0 0
    %2026 = vmatprep.subr.bf16.mxu0 0
    %2027 = vmatpush2.bf16.xpose.msra.mxu0 0
    %2028 = vmatprep.subr.bf16.mxu0 0
    %2029 = vmatpush2.bf16.xpose.msra.mxu0 0
    %2030 = vmatprep.mubr.bf16.mxu0 0
    %2031 = vmatmul.mubr.bf16.gmra.mxu0 %v1951
    %v2032 = vpop.f32.mrf.mxu0
    %v2033 = vadd.f32 0.0, %v2032
    %v2034 = vpop.f32.mrf.mxu0
    %v2035 = vpop.f32.mrf.mxu0
    %v2036 = vadd.f32 0.0, %v2035
    %v2037 = vpop.f32.mrf.mxu0
    %2038 = vmatprep.mubr.bf16.mxu0 0
    %2039 = vmatmul.mubr.bf16.gmra.mxu0 %v1954
    %v2040 = vpop.f32.mrf.mxu0
    %v2041 = vadd.f32 0.0, %v2040
    %v2042 = vpop.f32.mrf.mxu0
    %v2043 = vpop.f32.mrf.mxu0
    %v2044 = vadd.f32 0.0, %v2043
    %v2045 = vpop.f32.mrf.mxu0
    %2046 = vmatprep.mubr.bf16.mxu0 0
    %2047 = vmatmul.mubr.bf16.gmra.mxu0 %v1957
    %v2048 = vpop.f32.mrf.mxu0
    %v2049 = vadd.f32 0.0, %v2048
    %v2050 = vpop.f32.mrf.mxu0
    %v2051 = vpop.f32.mrf.mxu0
    %v2052 = vadd.f32 0.0, %v2051
    %v2053 = vpop.f32.mrf.mxu0
    %2054 = vmatprep.mubr.bf16.mxu0 0
    %2055 = vmatmul.mubr.bf16.gmra.mxu0 %v1960
    %v2056 = vpop.f32.mrf.mxu0
    %v2057 = vadd.f32 0.0, %v2056
    %v2058 = vpop.f32.mrf.mxu0
    %v2059 = vpop.f32.mrf.mxu0
    %v2060 = vadd.f32 0.0, %v2059
    %v2061 = vpop.f32.mrf.mxu0
    %2062 = vmatprep.mubr.bf16.mxu0 0
    %2063 = vmatmul.mubr.bf16.gmra.mxu0 %v1963
    %v2064 = vpop.f32.mrf.mxu0
    %v2065 = vadd.f32 0.0, %v2064
    %v2066 = vpop.f32.mrf.mxu0
    %v2067 = vpop.f32.mrf.mxu0
    %v2068 = vadd.f32 0.0, %v2067
    %v2069 = vpop.f32.mrf.mxu0
    %2070 = vmatprep.mubr.bf16.mxu0 0
    %2071 = vmatmul.mubr.bf16.gmra.mxu0 %v1966
    %v2072 = vpop.f32.mrf.mxu0
    %v2073 = vadd.f32 0.0, %v2072
    %v2074 = vpop.f32.mrf.mxu0
    %v2075 = vpop.f32.mrf.mxu0
    %v2076 = vadd.f32 0.0, %v2075
    %v2077 = vpop.f32.mrf.mxu0
    %2078 = vmatprep.mubr.bf16.mxu0 0
    %2079 = vmatmul.mubr.bf16.gmra.mxu0 %v1969
    %v2080 = vpop.f32.mrf.mxu0
    %v2081 = vadd.f32 0.0, %v2080
    %v2082 = vpop.f32.mrf.mxu0
    %v2083 = vpop.f32.mrf.mxu0
    %v2084 = vadd.f32 0.0, %v2083
    %v2085 = vpop.f32.mrf.mxu0
    %2086 = vmatprep.mubr.bf16.mxu0 0
    %2087 = vmatmul.mubr.bf16.gmra.mxu0 %v1972
    %v2088 = vpop.f32.mrf.mxu0
    %v2089 = vadd.f32 0.0, %v2088
    %v2090 = vpop.f32.mrf.mxu0
    %v2091 = vpop.f32.mrf.mxu0
    %v2092 = vadd.f32 0.0, %v2091
    %v2093 = vpop.f32.mrf.mxu0
    %2094 = vdwg.mxu0
    %2095 = vmax.xlane.f32.xlu0 %v2033
    %v2096 = vpop.xlane.xlu0 %2095
    %2097 = vmax.xlane.f32.xlu0 %v2036
    %v2098 = vpop.xlane.xlu0 %2097
    %2099 = vmax.xlane.f32.xlu0 %v2041
    %v2100 = vpop.xlane.xlu0 %2099
    %2101 = vmax.xlane.f32.xlu0 %v2044
    %v2102 = vpop.xlane.xlu0 %2101
    %2103 = vmax.xlane.f32.xlu0 %v2049
    %v2104 = vpop.xlane.xlu0 %2103
    %2105 = vmax.xlane.f32.xlu0 %v2052
    %v2106 = vpop.xlane.xlu0 %2105
    %2107 = vmax.xlane.f32.xlu0 %v2057
    %v2108 = vpop.xlane.xlu0 %2107
    %2109 = vmax.xlane.f32.xlu0 %v2060
    %v2110 = vpop.xlane.xlu0 %2109
    %2111 = vmax.xlane.f32.xlu0 %v2065
    %v2112 = vpop.xlane.xlu0 %2111
    %2113 = vmax.xlane.f32.xlu0 %v2068
    %v2114 = vpop.xlane.xlu0 %2113
    %2115 = vmax.xlane.f32.xlu0 %v2073
    %v2116 = vpop.xlane.xlu0 %2115
    %2117 = vmax.xlane.f32.xlu0 %v2076
    %v2118 = vpop.xlane.xlu0 %2117
    %2119 = vmax.xlane.f32.xlu0 %v2081
    %v2120 = vpop.xlane.xlu0 %2119
    %2121 = vmax.xlane.f32.xlu0 %v2084
    %v2122 = vpop.xlane.xlu0 %2121
    %2123 = vmax.xlane.f32.xlu0 %v2089
    %v2124 = vpop.xlane.xlu0 %2123
    %2125 = vmax.xlane.f32.xlu0 %v2092
    %v2126 = vpop.xlane.xlu0 %2125
    %v2127 = vsub.f32 %v2033, %v2096
    %v2128 = vsub.f32 %v2036, %v2098
    %v2129 = vsub.f32 %v2041, %v2100
    %v2130 = vsub.f32 %v2044, %v2102
    %v2131 = vsub.f32 %v2049, %v2104
    %v2132 = vsub.f32 %v2052, %v2106
    %v2133 = vsub.f32 %v2057, %v2108
    %v2134 = vsub.f32 %v2060, %v2110
    %v2135 = vsub.f32 %v2065, %v2112
    %v2136 = vsub.f32 %v2068, %v2114
    %v2137 = vsub.f32 %v2073, %v2116
    %v2138 = vsub.f32 %v2076, %v2118
    %v2139 = vsub.f32 %v2081, %v2120
    %v2140 = vsub.f32 %v2084, %v2122
    %v2141 = vsub.f32 %v2089, %v2124
    %v2142 = vsub.f32 %v2092, %v2126
    %v2143 = vmul.f32 %v2127, 1.442695
    %v2144 = vpow.pop %v2143
    %v2145 = vmul.f32 %v2128, 1.442695
    %v2146 = vpow.pop %v2145
    %v2147 = vmul.f32 %v2129, 1.442695
    %v2148 = vpow.pop %v2147
    %v2149 = vmul.f32 %v2130, 1.442695
    %v2150 = vpow.pop %v2149
    %v2151 = vmul.f32 %v2131, 1.442695
    %v2152 = vpow.pop %v2151
    %v2153 = vmul.f32 %v2132, 1.442695
    %v2154 = vpow.pop %v2153
    %v2155 = vmul.f32 %v2133, 1.442695
    %v2156 = vpow.pop %v2155
    %v2157 = vmul.f32 %v2134, 1.442695
    %v2158 = vpow.pop %v2157
    %v2159 = vmul.f32 %v2135, 1.442695
    %v2160 = vpow.pop %v2159
    %v2161 = vmul.f32 %v2136, 1.442695
    %v2162 = vpow.pop %v2161
    %v2163 = vmul.f32 %v2137, 1.442695
    %v2164 = vpow.pop %v2163
    %v2165 = vmul.f32 %v2138, 1.442695
    %v2166 = vpow.pop %v2165
    %v2167 = vmul.f32 %v2139, 1.442695
    %v2168 = vpow.pop %v2167
    %v2169 = vmul.f32 %v2140, 1.442695
    %v2170 = vpow.pop %v2169
    %v2171 = vmul.f32 %v2141, 1.442695
    %v2172 = vpow.pop %v2171
    %v2173 = vmul.f32 %v2142, 1.442695
    %v2174 = vpow.pop %v2173
    %2175 = vadd.xlane.f32.xlu0 %v2144
    %v2176 = vpop.xlane.xlu0 %2175
    %2177 = vadd.xlane.f32.xlu0 %v2146
    %v2178 = vpop.xlane.xlu0 %2177
    %2179 = vadd.xlane.f32.xlu0 %v2148
    %v2180 = vpop.xlane.xlu0 %2179
    %2181 = vadd.xlane.f32.xlu0 %v2150
    %v2182 = vpop.xlane.xlu0 %2181
    %2183 = vadd.xlane.f32.xlu0 %v2152
    %v2184 = vpop.xlane.xlu0 %2183
    %2185 = vadd.xlane.f32.xlu0 %v2154
    %v2186 = vpop.xlane.xlu0 %2185
    %2187 = vadd.xlane.f32.xlu0 %v2156
    %v2188 = vpop.xlane.xlu0 %2187
    %2189 = vadd.xlane.f32.xlu0 %v2158
    %v2190 = vpop.xlane.xlu0 %2189
    %2191 = vadd.xlane.f32.xlu0 %v2160
    %v2192 = vpop.xlane.xlu0 %2191
    %2193 = vadd.xlane.f32.xlu0 %v2162
    %v2194 = vpop.xlane.xlu0 %2193
    %2195 = vadd.xlane.f32.xlu0 %v2164
    %v2196 = vpop.xlane.xlu0 %2195
    %2197 = vadd.xlane.f32.xlu0 %v2166
    %v2198 = vpop.xlane.xlu0 %2197
    %2199 = vadd.xlane.f32.xlu0 %v2168
    %v2200 = vpop.xlane.xlu0 %2199
    %2201 = vadd.xlane.f32.xlu0 %v2170
    %v2202 = vpop.xlane.xlu0 %2201
    %2203 = vadd.xlane.f32.xlu0 %v2172
    %v2204 = vpop.xlane.xlu0 %2203
    %2205 = vadd.xlane.f32.xlu0 %v2174
    %v2206 = vpop.xlane.xlu0 %2205
    %v2207 = vrcp.pop %v2176
    %v2208 = vrcp.pop %v2178
    %v2209 = vrcp.pop %v2180
    %v2210 = vrcp.pop %v2182
    %v2211 = vrcp.pop %v2184
    %v2212 = vrcp.pop %v2186
    %v2213 = vrcp.pop %v2188
    %v2214 = vrcp.pop %v2190
    %v2215 = vrcp.pop %v2192
    %v2216 = vrcp.pop %v2194
    %v2217 = vrcp.pop %v2196
    %v2218 = vrcp.pop %v2198
    %v2219 = vrcp.pop %v2200
    %v2220 = vrcp.pop %v2202
    %v2221 = vrcp.pop %v2204
    %v2222 = vrcp.pop %v2206
    %v2223 = vmul.f32 %v2144, %v2207
    %v2224 = vmul.f32 %v2146, %v2208
    %v2225 = vmul.f32 %v2148, %v2209
    %v2226 = vmul.f32 %v2150, %v2210
    %v2227 = vmul.f32 %v2152, %v2211
    %v2228 = vmul.f32 %v2154, %v2212
    %v2229 = vmul.f32 %v2156, %v2213
    %v2230 = vmul.f32 %v2158, %v2214
    %v2231 = vmul.f32 %v2160, %v2215
    %v2232 = vmul.f32 %v2162, %v2216
    %v2233 = vmul.f32 %v2164, %v2217
    %v2234 = vmul.f32 %v2166, %v2218
    %v2235 = vmul.f32 %v2168, %v2219
    %v2236 = vmul.f32 %v2170, %v2220
    %v2237 = vmul.f32 %v2172, %v2221
    %v2238 = vmul.f32 %v2174, %v2222
    %v2239 = vpack.c.bf16 %v2224, %v2223
    %v2240 = vpack.c.bf16 %v2226, %v2225
    %v2241 = vpack.c.bf16 %v2228, %v2227
    %v2242 = vpack.c.bf16 %v2230, %v2229
    %v2243 = vpack.c.bf16 %v2232, %v2231
    %v2244 = vpack.c.bf16 %v2234, %v2233
    %v2245 = vpack.c.bf16 %v2236, %v2235
    %v2246 = vpack.c.bf16 %v2238, %v2237
    %v2263 = vunpack.c.l.b16 %v1822
    %v2264 = vunpack.c.l.b16 %v1823
    %v2265 = vunpack.c.l.b16 %v1824
    %v2266 = vunpack.c.l.b16 %v1825
    %v2267 = vunpack.c.l.b16 %v1826
    %v2268 = vunpack.c.l.b16 %v1827
    %v2269 = vunpack.c.l.b16 %v1828
    %v2270 = vunpack.c.l.b16 %v1829
    %v2271 = vunpack.c.l.b16 %v1830
    %v2272 = vunpack.c.l.b16 %v1831
    %v2273 = vunpack.c.l.b16 %v1832
    %v2274 = vunpack.c.l.b16 %v1833
    %v2275 = vunpack.c.l.b16 %v1834
    %v2276 = vunpack.c.l.b16 %v1835
    %v2277 = vunpack.c.l.b16 %v1836
    %v2278 = vunpack.c.l.b16 %v1837
    %v2279 = vpack.c.b16 %v2264, %v2263
    %v2280 = vpack.c.b16 %v2266, %v2265
    %v2281 = vpack.c.b16 %v2268, %v2267
    %v2282 = vpack.c.b16 %v2270, %v2269
    %v2283 = vpack.c.b16 %v2272, %v2271
    %v2284 = vpack.c.b16 %v2274, %v2273
    %v2285 = vpack.c.b16 %v2276, %v2275
    %v2286 = vpack.c.b16 %v2278, %v2277
    %2287 = vrot.lane.b32.xlu0 %v2279, 96
    %v2288 = vpop.permute.xlu0 %2287
    %2289 = vrot.lane.b32.xlu0 %v2280, 96
    %v2290 = vpop.permute.xlu0 %2289
    %2291 = vrot.lane.b32.xlu0 %v2281, 96
    %v2292 = vpop.permute.xlu0 %2291
    %2293 = vrot.lane.b32.xlu0 %v2282, 96
    %v2294 = vpop.permute.xlu0 %2293
    %2295 = vrot.lane.b32.xlu0 %v2283, 96
    %v2296 = vpop.permute.xlu0 %2295
    %2297 = vrot.lane.b32.xlu0 %v2284, 96
    %v2298 = vpop.permute.xlu0 %2297
    %2299 = vrot.lane.b32.xlu0 %v2285, 96
    %v2300 = vpop.permute.xlu0 %2299
    %2301 = vrot.lane.b32.xlu0 %v2286, 96
    %v2302 = vpop.permute.xlu0 %2301
    %2311 = vmatprep.subr.bf16.mxu0 0
    %2312 = vmatpush1.bf16.msra.mxu0 %v2302
    %2313 = vmatprep.subr.bf16.mxu0 0
    %2314 = vmatpush1.bf16.msra.mxu0 %v2300
    %2315 = vmatprep.subr.bf16.mxu0 0
    %2316 = vmatpush1.bf16.msra.mxu0 %v2298
    %2317 = vmatprep.subr.bf16.mxu0 0
    %2318 = vmatpush1.bf16.msra.mxu0 %v2296
    %2319 = vmatprep.subr.bf16.mxu0 0
    %2320 = vmatpush1.bf16.msra.mxu0 %v2294
    %2321 = vmatprep.subr.bf16.mxu0 0
    %2322 = vmatpush1.bf16.msra.mxu0 %v2292
    %2323 = vmatprep.subr.bf16.mxu0 0
    %2324 = vmatpush1.bf16.msra.mxu0 %v2290
    %2325 = vmatprep.subr.bf16.mxu0 0
    %2326 = vmatpush1.bf16.msra.mxu0 %v2288
    %2327 = vmatprep.subr.bf16.mxu0 0
    %2328 = vmatpush2.bf16.msra.mxu0 0
    %2329 = vmatprep.subr.bf16.mxu0 0
    %2330 = vmatpush2.bf16.msra.mxu0 0
    %2331 = vmatprep.subr.bf16.mxu0 0
    %2332 = vmatpush2.bf16.msra.mxu0 0
    %2333 = vmatprep.subr.bf16.mxu0 0
    %2334 = vmatpush2.bf16.msra.mxu0 0
    %2335 = vmatprep.subr.bf16.mxu0 0
    %2336 = vmatpush2.bf16.msra.mxu0 0
    %2337 = vmatprep.subr.bf16.mxu0 0
    %2338 = vmatpush2.bf16.msra.mxu0 0
    %2339 = vmatprep.subr.bf16.mxu0 0
    %2340 = vmatpush2.bf16.msra.mxu0 0
    %2341 = vmatprep.subr.bf16.mxu0 0
    %2342 = vmatpush2.bf16.msra.mxu0 0
    %2343 = vmatprep.mubr.bf16.mxu0 0
    %2344 = vmatmul.mubr.bf16.gmra.mxu0 %v2239
    %v2345 = vpop.f32.mrf.mxu0
    %v2346 = vadd.f32 0.0, %v2345
    %v2347 = vpop.f32.mrf.mxu0
    %v2348 = vpop.f32.mrf.mxu0
    %v2349 = vadd.f32 0.0, %v2348
    %v2350 = vpop.f32.mrf.mxu0
    %2351 = vmatprep.mubr.bf16.mxu0 0
    %2352 = vmatmul.mubr.bf16.gmra.mxu0 %v2240
    %v2353 = vpop.f32.mrf.mxu0
    %v2354 = vadd.f32 0.0, %v2353
    %v2355 = vpop.f32.mrf.mxu0
    %v2356 = vpop.f32.mrf.mxu0
    %v2357 = vadd.f32 0.0, %v2356
    %v2358 = vpop.f32.mrf.mxu0
    %2359 = vmatprep.mubr.bf16.mxu0 0
    %2360 = vmatmul.mubr.bf16.gmra.mxu0 %v2241
    %v2361 = vpop.f32.mrf.mxu0
    %v2362 = vadd.f32 0.0, %v2361
    %v2363 = vpop.f32.mrf.mxu0
    %v2364 = vpop.f32.mrf.mxu0
    %v2365 = vadd.f32 0.0, %v2364
    %v2366 = vpop.f32.mrf.mxu0
    %2367 = vmatprep.mubr.bf16.mxu0 0
    %2368 = vmatmul.mubr.bf16.gmra.mxu0 %v2242
    %v2369 = vpop.f32.mrf.mxu0
    %v2370 = vadd.f32 0.0, %v2369
    %v2371 = vpop.f32.mrf.mxu0
    %v2372 = vpop.f32.mrf.mxu0
    %v2373 = vadd.f32 0.0, %v2372
    %v2374 = vpop.f32.mrf.mxu0
    %2375 = vmatprep.mubr.bf16.mxu0 0
    %2376 = vmatmul.mubr.bf16.gmra.mxu0 %v2243
    %v2377 = vpop.f32.mrf.mxu0
    %v2378 = vadd.f32 0.0, %v2377
    %v2379 = vpop.f32.mrf.mxu0
    %v2380 = vpop.f32.mrf.mxu0
    %v2381 = vadd.f32 0.0, %v2380
    %v2382 = vpop.f32.mrf.mxu0
    %2383 = vmatprep.mubr.bf16.mxu0 0
    %2384 = vmatmul.mubr.bf16.gmra.mxu0 %v2244
    %v2385 = vpop.f32.mrf.mxu0
    %v2386 = vadd.f32 0.0, %v2385
    %v2387 = vpop.f32.mrf.mxu0
    %v2388 = vpop.f32.mrf.mxu0
    %v2389 = vadd.f32 0.0, %v2388
    %v2390 = vpop.f32.mrf.mxu0
    %2391 = vmatprep.mubr.bf16.mxu0 0
    %2392 = vmatmul.mubr.bf16.gmra.mxu0 %v2245
    %v2393 = vpop.f32.mrf.mxu0
    %v2394 = vadd.f32 0.0, %v2393
    %v2395 = vpop.f32.mrf.mxu0
    %v2396 = vpop.f32.mrf.mxu0
    %v2397 = vadd.f32 0.0, %v2396
    %v2398 = vpop.f32.mrf.mxu0
    %2399 = vmatprep.mubr.bf16.mxu0 0
    %2400 = vmatmul.mubr.bf16.gmra.mxu0 %v2246
    %v2401 = vpop.f32.mrf.mxu0
    %v2402 = vadd.f32 0.0, %v2401
    %v2403 = vpop.f32.mrf.mxu0
    %v2404 = vpop.f32.mrf.mxu0
    %v2405 = vadd.f32 0.0, %v2404
    %v2406 = vpop.f32.mrf.mxu0
    %2407 = vdwg.mxu0
    %v2408 = vpack.c.bf16 %v2349, %v2346
    %v2409 = vpack.c.bf16 %v2357, %v2354
    %v2410 = vpack.c.bf16 %v2365, %v2362
    %v2411 = vpack.c.bf16 %v2373, %v2370
    %v2412 = vpack.c.bf16 %v2381, %v2378
    %v2413 = vpack.c.bf16 %v2389, %v2386
    %v2414 = vpack.c.bf16 %v2397, %v2394
    %v2415 = vpack.c.bf16 %v2405, %v2402
    %v2424 = vunpack.c.l.b16 %v2408
    %v2425 = vunpack.c.h.b16 %v2408
    %v2426 = vunpack.c.l.b16 %v2409
    %v2427 = vunpack.c.h.b16 %v2409
    %v2428 = vunpack.c.l.b16 %v2410
    %v2429 = vunpack.c.h.b16 %v2410
    %v2430 = vunpack.c.l.b16 %v2411
    %v2431 = vunpack.c.h.b16 %v2411
    %v2432 = vunpack.c.l.b16 %v2412
    %v2433 = vunpack.c.h.b16 %v2412
    %v2434 = vunpack.c.l.b16 %v2413
    %v2435 = vunpack.c.h.b16 %v2413
    %v2436 = vunpack.c.l.b16 %v2414
    %v2437 = vunpack.c.h.b16 %v2414
    %v2438 = vunpack.c.l.b16 %v2415
    %v2439 = vunpack.c.h.b16 %v2415
    %v2440 = vpack.c.b16 %v2424, %v2424
    %v2441 = vpack.c.b16 %v2425, %v2425
    %v2442 = vpack.c.b16 %v2426, %v2426
    %v2443 = vpack.c.b16 %v2427, %v2427
    %v2444 = vpack.c.b16 %v2428, %v2428
    %v2445 = vpack.c.b16 %v2429, %v2429
    %v2446 = vpack.c.b16 %v2430, %v2430
    %v2447 = vpack.c.b16 %v2431, %v2431
    %v2448 = vpack.c.b16 %v2432, %v2432
    %v2449 = vpack.c.b16 %v2433, %v2433
    %v2450 = vpack.c.b16 %v2434, %v2434
    %v2451 = vpack.c.b16 %v2435, %v2435
    %v2452 = vpack.c.b16 %v2436, %v2436
    %v2453 = vpack.c.b16 %v2437, %v2437
    %v2454 = vpack.c.b16 %v2438, %v2438
    %v2455 = vpack.c.b16 %v2439, %v2439
    %2456 = vrot.lane.b32.xlu0 %v2440, 32
    %v2457 = vpop.permute.xlu0 %2456
    %2458 = vrot.lane.b32.xlu0 %v2441, 32
    %v2459 = vpop.permute.xlu0 %2458
    %2460 = vrot.lane.b32.xlu0 %v2442, 32
    %v2461 = vpop.permute.xlu0 %2460
    %2462 = vrot.lane.b32.xlu0 %v2443, 32
    %v2463 = vpop.permute.xlu0 %2462
    %2464 = vrot.lane.b32.xlu0 %v2444, 32
    %v2465 = vpop.permute.xlu0 %2464
    %2466 = vrot.lane.b32.xlu0 %v2445, 32
    %v2467 = vpop.permute.xlu0 %2466
    %2468 = vrot.lane.b32.xlu0 %v2446, 32
    %v2469 = vpop.permute.xlu0 %2468
    %2470 = vrot.lane.b32.xlu0 %v2447, 32
    %v2471 = vpop.permute.xlu0 %2470
    %2472 = vrot.lane.b32.xlu0 %v2448, 32
    %v2473 = vpop.permute.xlu0 %2472
    %2474 = vrot.lane.b32.xlu0 %v2449, 32
    %v2475 = vpop.permute.xlu0 %2474
    %2476 = vrot.lane.b32.xlu0 %v2450, 32
    %v2477 = vpop.permute.xlu0 %2476
    %2478 = vrot.lane.b32.xlu0 %v2451, 32
    %v2479 = vpop.permute.xlu0 %2478
    %2480 = vrot.lane.b32.xlu0 %v2452, 32
    %v2481 = vpop.permute.xlu0 %2480
    %2482 = vrot.lane.b32.xlu0 %v2453, 32
    %v2483 = vpop.permute.xlu0 %2482
    %2484 = vrot.lane.b32.xlu0 %v2454, 32
    %v2485 = vpop.permute.xlu0 %2484
    %2486 = vrot.lane.b32.xlu0 %v2455, 32
    %v2487 = vpop.permute.xlu0 %2486
    %vm2504 = vcmask 519424
    %2505 = vst.msk [vmem:[#allocation3] sm:$0xf] %vm2504, %v2457
    %2506 = vst.msk [vmem:[#allocation3 + $0x4] sm:$0xf] %vm2504, %v2459
    %2507 = vst.msk [vmem:[#allocation3 + $0x8] sm:$0xf] %vm2504, %v2461
    %2508 = vst.msk [vmem:[#allocation3 + $0xc] sm:$0xf] %vm2504, %v2463
    %2509 = vst.msk [vmem:[#allocation3 + $0x10] sm:$0xf] %vm2504, %v2465
    %2510 = vst.msk [vmem:[#allocation3 + $0x14] sm:$0xf] %vm2504, %v2467
    %2511 = vst.msk [vmem:[#allocation3 + $0x18] sm:$0xf] %vm2504, %v2469
    %2512 = vst.msk [vmem:[#allocation3 + $0x1c] sm:$0xf] %vm2504, %v2471
    %2513 = vst.msk [vmem:[#allocation3 + $0x20] sm:$0xf] %vm2504, %v2473
    %2514 = vst.msk [vmem:[#allocation3 + $0x24] sm:$0xf] %vm2504, %v2475
    %2515 = vst.msk [vmem:[#allocation3 + $0x28] sm:$0xf] %vm2504, %v2477
    %2516 = vst.msk [vmem:[#allocation3 + $0x2c] sm:$0xf] %vm2504, %v2479
    %2517 = vst.msk [vmem:[#allocation3 + $0x30] sm:$0xf] %vm2504, %v2481
    %2518 = vst.msk [vmem:[#allocation3 + $0x34] sm:$0xf] %vm2504, %v2483
    %2519 = vst.msk [vmem:[#allocation3 + $0x38] sm:$0xf] %vm2504, %v2485
    %2520 = vst.msk [vmem:[#allocation3 + $0x3c] sm:$0xf] %vm2504, %v2487
    %v2521 = vld [vmem:[#allocation2] sm:$0xf]
    %v2522 = vld [vmem:[#allocation2 + $0xc] sm:$0xf]
    %v2523 = vld [vmem:[#allocation2 + $0x18] sm:$0xf]
    %v2524 = vld [vmem:[#allocation2 + $0x24] sm:$0xf]
    %v2525 = vld [vmem:[#allocation2 + $0x30] sm:$0xf]
    %v2526 = vld [vmem:[#allocation2 + $0x3c] sm:$0xf]
    %v2527 = vld [vmem:[#allocation2 + $0x48] sm:$0xf]
    %v2528 = vld [vmem:[#allocation2 + $0x54] sm:$0xf]
    %v2529 = vld [vmem:[#allocation2 + $0x60] sm:$0xf]
    %v2530 = vld [vmem:[#allocation2 + $0x6c] sm:$0xf]
    %v2531 = vld [vmem:[#allocation2 + $0x78] sm:$0xf]
    %v2532 = vld [vmem:[#allocation2 + $0x84] sm:$0xf]
    %v2533 = vld [vmem:[#allocation2 + $0x90] sm:$0xf]
    %v2534 = vld [vmem:[#allocation2 + $0x9c] sm:$0xf]
    %v2535 = vld [vmem:[#allocation2 + $0xa8] sm:$0xf]
    %v2536 = vld [vmem:[#allocation2 + $0xb4] sm:$0xf]
    %v2537 = vld [vmem:[#allocation2 + $0x4] sm:$0xf]
    %v2538 = vld [vmem:[#allocation2 + $0x10] sm:$0xf]
    %v2539 = vld [vmem:[#allocation2 + $0x1c] sm:$0xf]
    %v2540 = vld [vmem:[#allocation2 + $0x28] sm:$0xf]
    %v2541 = vld [vmem:[#allocation2 + $0x34] sm:$0xf]
    %v2542 = vld [vmem:[#allocation2 + $0x40] sm:$0xf]
    %v2543 = vld [vmem:[#allocation2 + $0x4c] sm:$0xf]
    %v2544 = vld [vmem:[#allocation2 + $0x58] sm:$0xf]
    %v2545 = vld [vmem:[#allocation2 + $0x64] sm:$0xf]
    %v2546 = vld [vmem:[#allocation2 + $0x70] sm:$0xf]
    %v2547 = vld [vmem:[#allocation2 + $0x7c] sm:$0xf]
    %v2548 = vld [vmem:[#allocation2 + $0x88] sm:$0xf]
    %v2549 = vld [vmem:[#allocation2 + $0x94] sm:$0xf]
    %v2550 = vld [vmem:[#allocation2 + $0xa0] sm:$0xf]
    %v2551 = vld [vmem:[#allocation2 + $0xac] sm:$0xf]
    %v2552 = vld [vmem:[#allocation2 + $0xb8] sm:$0xf]
    %v2553 = vld [vmem:[#allocation2 + $0x8] sm:$0xf]
    %v2554 = vld [vmem:[#allocation2 + $0x14] sm:$0xf]
    %v2555 = vld [vmem:[#allocation2 + $0x20] sm:$0xf]
    %v2556 = vld [vmem:[#allocation2 + $0x2c] sm:$0xf]
    %v2557 = vld [vmem:[#allocation2 + $0x38] sm:$0xf]
    %v2558 = vld [vmem:[#allocation2 + $0x44] sm:$0xf]
    %v2559 = vld [vmem:[#allocation2 + $0x50] sm:$0xf]
    %v2560 = vld [vmem:[#allocation2 + $0x5c] sm:$0xf]
    %v2561 = vld [vmem:[#allocation2 + $0x68] sm:$0xf]
    %v2562 = vld [vmem:[#allocation2 + $0x74] sm:$0xf]
    %v2563 = vld [vmem:[#allocation2 + $0x80] sm:$0xf]
    %v2564 = vld [vmem:[#allocation2 + $0x8c] sm:$0xf]
    %v2565 = vld [vmem:[#allocation2 + $0x98] sm:$0xf]
    %v2566 = vld [vmem:[#allocation2 + $0xa4] sm:$0xf]
    %v2567 = vld [vmem:[#allocation2 + $0xb0] sm:$0xf]
    %v2568 = vld [vmem:[#allocation2 + $0xbc] sm:$0xf]
    %v2585 = vunpack.c.l.b16 %v2521
    %v2586 = vunpack.c.l.b16 %v2522
    %v2587 = vunpack.c.l.b16 %v2523
    %v2588 = vunpack.c.l.b16 %v2524
    %v2589 = vunpack.c.l.b16 %v2525
    %v2590 = vunpack.c.l.b16 %v2526
    %v2591 = vunpack.c.l.b16 %v2527
    %v2592 = vunpack.c.l.b16 %v2528
    %v2593 = vunpack.c.l.b16 %v2529
    %v2594 = vunpack.c.l.b16 %v2530
    %v2595 = vunpack.c.l.b16 %v2531
    %v2596 = vunpack.c.l.b16 %v2532
    %v2597 = vunpack.c.l.b16 %v2533
    %v2598 = vunpack.c.l.b16 %v2534
    %v2599 = vunpack.c.l.b16 %v2535
    %v2600 = vunpack.c.l.b16 %v2536
    %v2601 = vpack.c.b16 %v2586, %v2585
    %v2602 = vpack.c.b16 %v2588, %v2587
    %v2603 = vpack.c.b16 %v2590, %v2589
    %v2604 = vpack.c.b16 %v2592, %v2591
    %v2605 = vpack.c.b16 %v2594, %v2593
    %v2606 = vpack.c.b16 %v2596, %v2595
    %v2607 = vpack.c.b16 %v2598, %v2597
    %v2608 = vpack.c.b16 %v2600, %v2599
    %2609 = vrot.lane.b32.xlu0 %v2601, 64
    %v2610 = vpop.permute.xlu0 %2609
    %2611 = vrot.lane.b32.xlu0 %v2602, 64
    %v2612 = vpop.permute.xlu0 %2611
    %2613 = vrot.lane.b32.xlu0 %v2603, 64
    %v2614 = vpop.permute.xlu0 %2613
    %2615 = vrot.lane.b32.xlu0 %v2604, 64
    %v2616 = vpop.permute.xlu0 %2615
    %2617 = vrot.lane.b32.xlu0 %v2605, 64
    %v2618 = vpop.permute.xlu0 %2617
    %2619 = vrot.lane.b32.xlu0 %v2606, 64
    %v2620 = vpop.permute.xlu0 %2619
    %2621 = vrot.lane.b32.xlu0 %v2607, 64
    %v2622 = vpop.permute.xlu0 %2621
    %2623 = vrot.lane.b32.xlu0 %v2608, 64
    %v2624 = vpop.permute.xlu0 %2623
    %v2641 = vunpack.c.l.b16 %v2537
    %v2642 = vunpack.c.l.b16 %v2538
    %v2643 = vunpack.c.l.b16 %v2539
    %v2644 = vunpack.c.l.b16 %v2540
    %v2645 = vunpack.c.l.b16 %v2541
    %v2646 = vunpack.c.l.b16 %v2542
    %v2647 = vunpack.c.l.b16 %v2543
    %v2648 = vunpack.c.l.b16 %v2544
    %v2649 = vunpack.c.l.b16 %v2545
    %v2650 = vunpack.c.l.b16 %v2546
    %v2651 = vunpack.c.l.b16 %v2547
    %v2652 = vunpack.c.l.b16 %v2548
    %v2653 = vunpack.c.l.b16 %v2549
    %v2654 = vunpack.c.l.b16 %v2550
    %v2655 = vunpack.c.l.b16 %v2551
    %v2656 = vunpack.c.l.b16 %v2552
    %v2657 = vpack.c.b16 %v2642, %v2641
    %v2658 = vpack.c.b16 %v2644, %v2643
    %v2659 = vpack.c.b16 %v2646, %v2645
    %v2660 = vpack.c.b16 %v2648, %v2647
    %v2661 = vpack.c.b16 %v2650, %v2649
    %v2662 = vpack.c.b16 %v2652, %v2651
    %v2663 = vpack.c.b16 %v2654, %v2653
    %v2664 = vpack.c.b16 %v2656, %v2655
    %2665 = vrot.lane.b32.xlu0 %v2657, 64
    %v2666 = vpop.permute.xlu0 %2665
    %2667 = vrot.lane.b32.xlu0 %v2658, 64
    %v2668 = vpop.permute.xlu0 %2667
    %2669 = vrot.lane.b32.xlu0 %v2659, 64
    %v2670 = vpop.permute.xlu0 %2669
    %2671 = vrot.lane.b32.xlu0 %v2660, 64
    %v2672 = vpop.permute.xlu0 %2671
    %2673 = vrot.lane.b32.xlu0 %v2661, 64
    %v2674 = vpop.permute.xlu0 %2673
    %2675 = vrot.lane.b32.xlu0 %v2662, 64
    %v2676 = vpop.permute.xlu0 %2675
    %2677 = vrot.lane.b32.xlu0 %v2663, 64
    %v2678 = vpop.permute.xlu0 %2677
    %2679 = vrot.lane.b32.xlu0 %v2664, 64
    %v2680 = vpop.permute.xlu0 %2679
    %v2682 = vsel %vm1266, %v2610, 0
    %v2685 = vsel %vm1266, %v2612, 0
    %v2688 = vsel %vm1266, %v2614, 0
    %v2691 = vsel %vm1266, %v2616, 0
    %v2694 = vsel %vm1266, %v2618, 0
    %v2697 = vsel %vm1266, %v2620, 0
    %v2700 = vsel %vm1266, %v2622, 0
    %v2703 = vsel %vm1266, %v2624, 0
    %v2706 = vsel %vm1266, %v2666, 0
    %v2709 = vsel %vm1266, %v2668, 0
    %v2712 = vsel %vm1266, %v2670, 0
    %v2715 = vsel %vm1266, %v2672, 0
    %v2718 = vsel %vm1266, %v2674, 0
    %v2721 = vsel %vm1266, %v2676, 0
    %v2724 = vsel %vm1266, %v2678, 0
    %v2727 = vsel %vm1266, %v2680, 0
    %2729 = vmatprep.subr.bf16.mxu0 0
    %2730 = vmatpush1.bf16.xpose.msra.mxu0 %v2727
    %2731 = vmatprep.subr.bf16.mxu0 0
    %2732 = vmatpush1.bf16.xpose.msra.mxu0 %v2724
    %2733 = vmatprep.subr.bf16.mxu0 0
    %2734 = vmatpush1.bf16.xpose.msra.mxu0 %v2721
    %2735 = vmatprep.subr.bf16.mxu0 0
    %2736 = vmatpush1.bf16.xpose.msra.mxu0 %v2718
    %2737 = vmatprep.subr.bf16.mxu0 0
    %2738 = vmatpush1.bf16.xpose.msra.mxu0 %v2715
    %2739 = vmatprep.subr.bf16.mxu0 0
    %2740 = vmatpush1.bf16.xpose.msra.mxu0 %v2712
    %2741 = vmatprep.subr.bf16.mxu0 0
    %2742 = vmatpush1.bf16.xpose.msra.mxu0 %v2709
    %2743 = vmatprep.subr.bf16.mxu0 0
    %2744 = vmatpush1.bf16.xpose.msra.mxu0 %v2706
    %2745 = vmatprep.subr.bf16.mxu0 0
    %2746 = vmatpush2.bf16.xpose.msra.mxu0 0
    %2747 = vmatprep.subr.bf16.mxu0 0
    %2748 = vmatpush2.bf16.xpose.msra.mxu0 0
    %2749 = vmatprep.subr.bf16.mxu0 0
    %2750 = vmatpush2.bf16.xpose.msra.mxu0 0
    %2751 = vmatprep.subr.bf16.mxu0 0
    %2752 = vmatpush2.bf16.xpose.msra.mxu0 0
    %2753 = vmatprep.subr.bf16.mxu0 0
    %2754 = vmatpush2.bf16.xpose.msra.mxu0 0
    %2755 = vmatprep.subr.bf16.mxu0 0
    %2756 = vmatpush2.bf16.xpose.msra.mxu0 0
    %2757 = vmatprep.subr.bf16.mxu0 0
    %2758 = vmatpush2.bf16.xpose.msra.mxu0 0
    %2759 = vmatprep.subr.bf16.mxu0 0
    %2760 = vmatpush2.bf16.xpose.msra.mxu0 0
    %2761 = vmatprep.mubr.bf16.mxu0 0
    %2762 = vmatmul.mubr.bf16.gmra.mxu0 %v2682
    %v2763 = vpop.f32.mrf.mxu0
    %v2764 = vadd.f32 0.0, %v2763
    %v2765 = vpop.f32.mrf.mxu0
    %v2766 = vpop.f32.mrf.mxu0
    %v2767 = vadd.f32 0.0, %v2766
    %v2768 = vpop.f32.mrf.mxu0
    %2769 = vmatprep.mubr.bf16.mxu0 0
    %2770 = vmatmul.mubr.bf16.gmra.mxu0 %v2685
    %v2771 = vpop.f32.mrf.mxu0
    %v2772 = vadd.f32 0.0, %v2771
    %v2773 = vpop.f32.mrf.mxu0
    %v2774 = vpop.f32.mrf.mxu0
    %v2775 = vadd.f32 0.0, %v2774
    %v2776 = vpop.f32.mrf.mxu0
    %2777 = vmatprep.mubr.bf16.mxu0 0
    %2778 = vmatmul.mubr.bf16.gmra.mxu0 %v2688
    %v2779 = vpop.f32.mrf.mxu0
    %v2780 = vadd.f32 0.0, %v2779
    %v2781 = vpop.f32.mrf.mxu0
    %v2782 = vpop.f32.mrf.mxu0
    %v2783 = vadd.f32 0.0, %v2782
    %v2784 = vpop.f32.mrf.mxu0
    %2785 = vmatprep.mubr.bf16.mxu0 0
    %2786 = vmatmul.mubr.bf16.gmra.mxu0 %v2691
    %v2787 = vpop.f32.mrf.mxu0
    %v2788 = vadd.f32 0.0, %v2787
    %v2789 = vpop.f32.mrf.mxu0
    %v2790 = vpop.f32.mrf.mxu0
    %v2791 = vadd.f32 0.0, %v2790
    %v2792 = vpop.f32.mrf.mxu0
    %2793 = vmatprep.mubr.bf16.mxu0 0
    %2794 = vmatmul.mubr.bf16.gmra.mxu0 %v2694
    %v2795 = vpop.f32.mrf.mxu0
    %v2796 = vadd.f32 0.0, %v2795
    %v2797 = vpop.f32.mrf.mxu0
    %v2798 = vpop.f32.mrf.mxu0
    %v2799 = vadd.f32 0.0, %v2798
    %v2800 = vpop.f32.mrf.mxu0
    %2801 = vmatprep.mubr.bf16.mxu0 0
    %2802 = vmatmul.mubr.bf16.gmra.mxu0 %v2697
    %v2803 = vpop.f32.mrf.mxu0
    %v2804 = vadd.f32 0.0, %v2803
    %v2805 = vpop.f32.mrf.mxu0
    %v2806 = vpop.f32.mrf.mxu0
    %v2807 = vadd.f32 0.0, %v2806
    %v2808 = vpop.f32.mrf.mxu0
    %2809 = vmatprep.mubr.bf16.mxu0 0
    %2810 = vmatmul.mubr.bf16.gmra.mxu0 %v2700
    %v2811 = vpop.f32.mrf.mxu0
    %v2812 = vadd.f32 0.0, %v2811
    %v2813 = vpop.f32.mrf.mxu0
    %v2814 = vpop.f32.mrf.mxu0
    %v2815 = vadd.f32 0.0, %v2814
    %v2816 = vpop.f32.mrf.mxu0
    %2817 = vmatprep.mubr.bf16.mxu0 0
    %2818 = vmatmul.mubr.bf16.gmra.mxu0 %v2703
    %v2819 = vpop.f32.mrf.mxu0
    %v2820 = vadd.f32 0.0, %v2819
    %v2821 = vpop.f32.mrf.mxu0
    %v2822 = vpop.f32.mrf.mxu0
    %v2823 = vadd.f32 0.0, %v2822
    %v2824 = vpop.f32.mrf.mxu0
    %2825 = vdwg.mxu0
    %2826 = vmax.xlane.f32.xlu0 %v2764
    %v2827 = vpop.xlane.xlu0 %2826
    %2828 = vmax.xlane.f32.xlu0 %v2767
    %v2829 = vpop.xlane.xlu0 %2828
    %2830 = vmax.xlane.f32.xlu0 %v2772
    %v2831 = vpop.xlane.xlu0 %2830
    %2832 = vmax.xlane.f32.xlu0 %v2775
    %v2833 = vpop.xlane.xlu0 %2832
    %2834 = vmax.xlane.f32.xlu0 %v2780
    %v2835 = vpop.xlane.xlu0 %2834
    %2836 = vmax.xlane.f32.xlu0 %v2783
    %v2837 = vpop.xlane.xlu0 %2836
    %2838 = vmax.xlane.f32.xlu0 %v2788
    %v2839 = vpop.xlane.xlu0 %2838
    %2840 = vmax.xlane.f32.xlu0 %v2791
    %v2841 = vpop.xlane.xlu0 %2840
    %2842 = vmax.xlane.f32.xlu0 %v2796
    %v2843 = vpop.xlane.xlu0 %2842
    %2844 = vmax.xlane.f32.xlu0 %v2799
    %v2845 = vpop.xlane.xlu0 %2844
    %2846 = vmax.xlane.f32.xlu0 %v2804
    %v2847 = vpop.xlane.xlu0 %2846
    %2848 = vmax.xlane.f32.xlu0 %v2807
    %v2849 = vpop.xlane.xlu0 %2848
    %2850 = vmax.xlane.f32.xlu0 %v2812
    %v2851 = vpop.xlane.xlu0 %2850
    %2852 = vmax.xlane.f32.xlu0 %v2815
    %v2853 = vpop.xlane.xlu0 %2852
    %2854 = vmax.xlane.f32.xlu0 %v2820
    %v2855 = vpop.xlane.xlu0 %2854
    %2856 = vmax.xlane.f32.xlu0 %v2823
    %v2857 = vpop.xlane.xlu0 %2856
    %v2858 = vsub.f32 %v2764, %v2827
    %v2859 = vsub.f32 %v2767, %v2829
    %v2860 = vsub.f32 %v2772, %v2831
    %v2861 = vsub.f32 %v2775, %v2833
    %v2862 = vsub.f32 %v2780, %v2835
    %v2863 = vsub.f32 %v2783, %v2837
    %v2864 = vsub.f32 %v2788, %v2839
    %v2865 = vsub.f32 %v2791, %v2841
    %v2866 = vsub.f32 %v2796, %v2843
    %v2867 = vsub.f32 %v2799, %v2845
    %v2868 = vsub.f32 %v2804, %v2847
    %v2869 = vsub.f32 %v2807, %v2849
    %v2870 = vsub.f32 %v2812, %v2851
    %v2871 = vsub.f32 %v2815, %v2853
    %v2872 = vsub.f32 %v2820, %v2855
    %v2873 = vsub.f32 %v2823, %v2857
    %v2874 = vmul.f32 %v2858, 1.442695
    %v2875 = vpow.pop %v2874
    %v2876 = vmul.f32 %v2859, 1.442695
    %v2877 = vpow.pop %v2876
    %v2878 = vmul.f32 %v2860, 1.442695
    %v2879 = vpow.pop %v2878
    %v2880 = vmul.f32 %v2861, 1.442695
    %v2881 = vpow.pop %v2880
    %v2882 = vmul.f32 %v2862, 1.442695
    %v2883 = vpow.pop %v2882
    %v2884 = vmul.f32 %v2863, 1.442695
    %v2885 = vpow.pop %v2884
    %v2886 = vmul.f32 %v2864, 1.442695
    %v2887 = vpow.pop %v2886
    %v2888 = vmul.f32 %v2865, 1.442695
    %v2889 = vpow.pop %v2888
    %v2890 = vmul.f32 %v2866, 1.442695
    %v2891 = vpow.pop %v2890
    %v2892 = vmul.f32 %v2867, 1.442695
    %v2893 = vpow.pop %v2892
    %v2894 = vmul.f32 %v2868, 1.442695
    %v2895 = vpow.pop %v2894
    %v2896 = vmul.f32 %v2869, 1.442695
    %v2897 = vpow.pop %v2896
    %v2898 = vmul.f32 %v2870, 1.442695
    %v2899 = vpow.pop %v2898
    %v2900 = vmul.f32 %v2871, 1.442695
    %v2901 = vpow.pop %v2900
    %v2902 = vmul.f32 %v2872, 1.442695
    %v2903 = vpow.pop %v2902
    %v2904 = vmul.f32 %v2873, 1.442695
    %v2905 = vpow.pop %v2904
    %2906 = vadd.xlane.f32.xlu0 %v2875
    %v2907 = vpop.xlane.xlu0 %2906
    %2908 = vadd.xlane.f32.xlu0 %v2877
    %v2909 = vpop.xlane.xlu0 %2908
    %2910 = vadd.xlane.f32.xlu0 %v2879
    %v2911 = vpop.xlane.xlu0 %2910
    %2912 = vadd.xlane.f32.xlu0 %v2881
    %v2913 = vpop.xlane.xlu0 %2912
    %2914 = vadd.xlane.f32.xlu0 %v2883
    %v2915 = vpop.xlane.xlu0 %2914
    %2916 = vadd.xlane.f32.xlu0 %v2885
    %v2917 = vpop.xlane.xlu0 %2916
    %2918 = vadd.xlane.f32.xlu0 %v2887
    %v2919 = vpop.xlane.xlu0 %2918
    %2920 = vadd.xlane.f32.xlu0 %v2889
    %v2921 = vpop.xlane.xlu0 %2920
    %2922 = vadd.xlane.f32.xlu0 %v2891
    %v2923 = vpop.xlane.xlu0 %2922
    %2924 = vadd.xlane.f32.xlu0 %v2893
    %v2925 = vpop.xlane.xlu0 %2924
    %2926 = vadd.xlane.f32.xlu0 %v2895
    %v2927 = vpop.xlane.xlu0 %2926
    %2928 = vadd.xlane.f32.xlu0 %v2897
    %v2929 = vpop.xlane.xlu0 %2928
    %2930 = vadd.xlane.f32.xlu0 %v2899
    %v2931 = vpop.xlane.xlu0 %2930
    %2932 = vadd.xlane.f32.xlu0 %v2901
    %v2933 = vpop.xlane.xlu0 %2932
    %2934 = vadd.xlane.f32.xlu0 %v2903
    %v2935 = vpop.xlane.xlu0 %2934
    %2936 = vadd.xlane.f32.xlu0 %v2905
    %v2937 = vpop.xlane.xlu0 %2936
    %v2938 = vrcp.pop %v2907
    %v2939 = vrcp.pop %v2909
    %v2940 = vrcp.pop %v2911
    %v2941 = vrcp.pop %v2913
    %v2942 = vrcp.pop %v2915
    %v2943 = vrcp.pop %v2917
    %v2944 = vrcp.pop %v2919
    %v2945 = vrcp.pop %v2921
    %v2946 = vrcp.pop %v2923
    %v2947 = vrcp.pop %v2925
    %v2948 = vrcp.pop %v2927
    %v2949 = vrcp.pop %v2929
    %v2950 = vrcp.pop %v2931
    %v2951 = vrcp.pop %v2933
    %v2952 = vrcp.pop %v2935
    %v2953 = vrcp.pop %v2937
    %v2954 = vmul.f32 %v2875, %v2938
    %v2955 = vmul.f32 %v2877, %v2939
    %v2956 = vmul.f32 %v2879, %v2940
    %v2957 = vmul.f32 %v2881, %v2941
    %v2958 = vmul.f32 %v2883, %v2942
    %v2959 = vmul.f32 %v2885, %v2943
    %v2960 = vmul.f32 %v2887, %v2944
    %v2961 = vmul.f32 %v2889, %v2945
    %v2962 = vmul.f32 %v2891, %v2946
    %v2963 = vmul.f32 %v2893, %v2947
    %v2964 = vmul.f32 %v2895, %v2948
    %v2965 = vmul.f32 %v2897, %v2949
    %v2966 = vmul.f32 %v2899, %v2950
    %v2967 = vmul.f32 %v2901, %v2951
    %v2968 = vmul.f32 %v2903, %v2952
    %v2969 = vmul.f32 %v2905, %v2953
    %v2970 = vpack.c.bf16 %v2955, %v2954
    %v2971 = vpack.c.bf16 %v2957, %v2956
    %v2972 = vpack.c.bf16 %v2959, %v2958
    %v2973 = vpack.c.bf16 %v2961, %v2960
    %v2974 = vpack.c.bf16 %v2963, %v2962
    %v2975 = vpack.c.bf16 %v2965, %v2964
    %v2976 = vpack.c.bf16 %v2967, %v2966
    %v2977 = vpack.c.bf16 %v2969, %v2968
    %v2994 = vunpack.c.l.b16 %v2553
    %v2995 = vunpack.c.l.b16 %v2554
    %v2996 = vunpack.c.l.b16 %v2555
    %v2997 = vunpack.c.l.b16 %v2556
    %v2998 = vunpack.c.l.b16 %v2557
    %v2999 = vunpack.c.l.b16 %v2558
    %v3000 = vunpack.c.l.b16 %v2559
    %v3001 = vunpack.c.l.b16 %v2560
    %v3002 = vunpack.c.l.b16 %v2561
    %v3003 = vunpack.c.l.b16 %v2562
    %v3004 = vunpack.c.l.b16 %v2563
    %v3005 = vunpack.c.l.b16 %v2564
    %v3006 = vunpack.c.l.b16 %v2565
    %v3007 = vunpack.c.l.b16 %v2566
    %v3008 = vunpack.c.l.b16 %v2567
    %v3009 = vunpack.c.l.b16 %v2568
    %v3010 = vpack.c.b16 %v2995, %v2994
    %v3011 = vpack.c.b16 %v2997, %v2996
    %v3012 = vpack.c.b16 %v2999, %v2998
    %v3013 = vpack.c.b16 %v3001, %v3000
    %v3014 = vpack.c.b16 %v3003, %v3002
    %v3015 = vpack.c.b16 %v3005, %v3004
    %v3016 = vpack.c.b16 %v3007, %v3006
    %v3017 = vpack.c.b16 %v3009, %v3008
    %3018 = vrot.lane.b32.xlu0 %v3010, 64
    %v3019 = vpop.permute.xlu0 %3018
    %3020 = vrot.lane.b32.xlu0 %v3011, 64
    %v3021 = vpop.permute.xlu0 %3020
    %3022 = vrot.lane.b32.xlu0 %v3012, 64
    %v3023 = vpop.permute.xlu0 %3022
    %3024 = vrot.lane.b32.xlu0 %v3013, 64
    %v3025 = vpop.permute.xlu0 %3024
    %3026 = vrot.lane.b32.xlu0 %v3014, 64
    %v3027 = vpop.permute.xlu0 %3026
    %3028 = vrot.lane.b32.xlu0 %v3015, 64
    %v3029 = vpop.permute.xlu0 %3028
    %3030 = vrot.lane.b32.xlu0 %v3016, 64
    %v3031 = vpop.permute.xlu0 %3030
    %3032 = vrot.lane.b32.xlu0 %v3017, 64
    %v3033 = vpop.permute.xlu0 %3032
    %3042 = vmatprep.subr.bf16.mxu0 0
    %3043 = vmatpush1.bf16.msra.mxu0 %v3033
    %3044 = vmatprep.subr.bf16.mxu0 0
    %3045 = vmatpush1.bf16.msra.mxu0 %v3031
    %3046 = vmatprep.subr.bf16.mxu0 0
    %3047 = vmatpush1.bf16.msra.mxu0 %v3029
    %3048 = vmatprep.subr.bf16.mxu0 0
    %3049 = vmatpush1.bf16.msra.mxu0 %v3027
    %3050 = vmatprep.subr.bf16.mxu0 0
    %3051 = vmatpush1.bf16.msra.mxu0 %v3025
    %3052 = vmatprep.subr.bf16.mxu0 0
    %3053 = vmatpush1.bf16.msra.mxu0 %v3023
    %3054 = vmatprep.subr.bf16.mxu0 0
    %3055 = vmatpush1.bf16.msra.mxu0 %v3021
    %3056 = vmatprep.subr.bf16.mxu0 0
    %3057 = vmatpush1.bf16.msra.mxu0 %v3019
    %3058 = vmatprep.subr.bf16.mxu0 0
    %3059 = vmatpush2.bf16.msra.mxu0 0
    %3060 = vmatprep.subr.bf16.mxu0 0
    %3061 = vmatpush2.bf16.msra.mxu0 0
    %3062 = vmatprep.subr.bf16.mxu0 0
    %3063 = vmatpush2.bf16.msra.mxu0 0
    %3064 = vmatprep.subr.bf16.mxu0 0
    %3065 = vmatpush2.bf16.msra.mxu0 0
    %3066 = vmatprep.subr.bf16.mxu0 0
    %3067 = vmatpush2.bf16.msra.mxu0 0
    %3068 = vmatprep.subr.bf16.mxu0 0
    %3069 = vmatpush2.bf16.msra.mxu0 0
    %3070 = vmatprep.subr.bf16.mxu0 0
    %3071 = vmatpush2.bf16.msra.mxu0 0
    %3072 = vmatprep.subr.bf16.mxu0 0
    %3073 = vmatpush2.bf16.msra.mxu0 0
    %3074 = vmatprep.mubr.bf16.mxu0 0
    %3075 = vmatmul.mubr.bf16.gmra.mxu0 %v2970
    %v3076 = vpop.f32.mrf.mxu0
    %v3077 = vadd.f32 0.0, %v3076
    %v3078 = vpop.f32.mrf.mxu0
    %v3079 = vpop.f32.mrf.mxu0
    %v3080 = vadd.f32 0.0, %v3079
    %v3081 = vpop.f32.mrf.mxu0
    %3082 = vmatprep.mubr.bf16.mxu0 0
    %3083 = vmatmul.mubr.bf16.gmra.mxu0 %v2971
    %v3084 = vpop.f32.mrf.mxu0
    %v3085 = vadd.f32 0.0, %v3084
    %v3086 = vpop.f32.mrf.mxu0
    %v3087 = vpop.f32.mrf.mxu0
    %v3088 = vadd.f32 0.0, %v3087
    %v3089 = vpop.f32.mrf.mxu0
    %3090 = vmatprep.mubr.bf16.mxu0 0
    %3091 = vmatmul.mubr.bf16.gmra.mxu0 %v2972
    %v3092 = vpop.f32.mrf.mxu0
    %v3093 = vadd.f32 0.0, %v3092
    %v3094 = vpop.f32.mrf.mxu0
    %v3095 = vpop.f32.mrf.mxu0
    %v3096 = vadd.f32 0.0, %v3095
    %v3097 = vpop.f32.mrf.mxu0
    %3098 = vmatprep.mubr.bf16.mxu0 0
    %3099 = vmatmul.mubr.bf16.gmra.mxu0 %v2973
    %v3100 = vpop.f32.mrf.mxu0
    %v3101 = vadd.f32 0.0, %v3100
    %v3102 = vpop.f32.mrf.mxu0
    %v3103 = vpop.f32.mrf.mxu0
    %v3104 = vadd.f32 0.0, %v3103
    %v3105 = vpop.f32.mrf.mxu0
    %3106 = vmatprep.mubr.bf16.mxu0 0
    %3107 = vmatmul.mubr.bf16.gmra.mxu0 %v2974
    %v3108 = vpop.f32.mrf.mxu0
    %v3109 = vadd.f32 0.0, %v3108
    %v3110 = vpop.f32.mrf.mxu0
    %v3111 = vpop.f32.mrf.mxu0
    %v3112 = vadd.f32 0.0, %v3111
    %v3113 = vpop.f32.mrf.mxu0
    %3114 = vmatprep.mubr.bf16.mxu0 0
    %3115 = vmatmul.mubr.bf16.gmra.mxu0 %v2975
    %v3116 = vpop.f32.mrf.mxu0
    %v3117 = vadd.f32 0.0, %v3116
    %v3118 = vpop.f32.mrf.mxu0
    %v3119 = vpop.f32.mrf.mxu0
    %v3120 = vadd.f32 0.0, %v3119
    %v3121 = vpop.f32.mrf.mxu0
    %3122 = vmatprep.mubr.bf16.mxu0 0
    %3123 = vmatmul.mubr.bf16.gmra.mxu0 %v2976
    %v3124 = vpop.f32.mrf.mxu0
    %v3125 = vadd.f32 0.0, %v3124
    %v3126 = vpop.f32.mrf.mxu0
    %v3127 = vpop.f32.mrf.mxu0
    %v3128 = vadd.f32 0.0, %v3127
    %v3129 = vpop.f32.mrf.mxu0
    %3130 = vmatprep.mubr.bf16.mxu0 0
    %3131 = vmatmul.mubr.bf16.gmra.mxu0 %v2977
    %v3132 = vpop.f32.mrf.mxu0
    %v3133 = vadd.f32 0.0, %v3132
    %v3134 = vpop.f32.mrf.mxu0
    %v3135 = vpop.f32.mrf.mxu0
    %v3136 = vadd.f32 0.0, %v3135
    %v3137 = vpop.f32.mrf.mxu0
    %3138 = vdwg.mxu0
    %v3139 = vpack.c.bf16 %v3080, %v3077
    %v3140 = vpack.c.bf16 %v3088, %v3085
    %v3141 = vpack.c.bf16 %v3096, %v3093
    %v3142 = vpack.c.bf16 %v3104, %v3101
    %v3143 = vpack.c.bf16 %v3112, %v3109
    %v3144 = vpack.c.bf16 %v3120, %v3117
    %v3145 = vpack.c.bf16 %v3128, %v3125
    %v3146 = vpack.c.bf16 %v3136, %v3133
    %v3155 = vunpack.c.l.b16 %v3139
    %v3156 = vunpack.c.h.b16 %v3139
    %v3157 = vunpack.c.l.b16 %v3140
    %v3158 = vunpack.c.h.b16 %v3140
    %v3159 = vunpack.c.l.b16 %v3141
    %v3160 = vunpack.c.h.b16 %v3141
    %v3161 = vunpack.c.l.b16 %v3142
    %v3162 = vunpack.c.h.b16 %v3142
    %v3163 = vunpack.c.l.b16 %v3143
    %v3164 = vunpack.c.h.b16 %v3143
    %v3165 = vunpack.c.l.b16 %v3144
    %v3166 = vunpack.c.h.b16 %v3144
    %v3167 = vunpack.c.l.b16 %v3145
    %v3168 = vunpack.c.h.b16 %v3145
    %v3169 = vunpack.c.l.b16 %v3146
    %v3170 = vunpack.c.h.b16 %v3146
    %v3171 = vpack.c.b16 %v3155, %v3155
    %v3172 = vpack.c.b16 %v3156, %v3156
    %v3173 = vpack.c.b16 %v3157, %v3157
    %v3174 = vpack.c.b16 %v3158, %v3158
    %v3175 = vpack.c.b16 %v3159, %v3159
    %v3176 = vpack.c.b16 %v3160, %v3160
    %v3177 = vpack.c.b16 %v3161, %v3161
    %v3178 = vpack.c.b16 %v3162, %v3162
    %v3179 = vpack.c.b16 %v3163, %v3163
    %v3180 = vpack.c.b16 %v3164, %v3164
    %v3181 = vpack.c.b16 %v3165, %v3165
    %v3182 = vpack.c.b16 %v3166, %v3166
    %v3183 = vpack.c.b16 %v3167, %v3167
    %v3184 = vpack.c.b16 %v3168, %v3168
    %v3185 = vpack.c.b16 %v3169, %v3169
    %v3186 = vpack.c.b16 %v3170, %v3170
    %3187 = vrot.lane.b32.xlu0 %v3171, 64
    %v3188 = vpop.permute.xlu0 %3187
    %3189 = vrot.lane.b32.xlu0 %v3172, 64
    %v3190 = vpop.permute.xlu0 %3189
    %3191 = vrot.lane.b32.xlu0 %v3173, 64
    %v3192 = vpop.permute.xlu0 %3191
    %3193 = vrot.lane.b32.xlu0 %v3174, 64
    %v3194 = vpop.permute.xlu0 %3193
    %3195 = vrot.lane.b32.xlu0 %v3175, 64
    %v3196 = vpop.permute.xlu0 %3195
    %3197 = vrot.lane.b32.xlu0 %v3176, 64
    %v3198 = vpop.permute.xlu0 %3197
    %3199 = vrot.lane.b32.xlu0 %v3177, 64
    %v3200 = vpop.permute.xlu0 %3199
    %3201 = vrot.lane.b32.xlu0 %v3178, 64
    %v3202 = vpop.permute.xlu0 %3201
    %3203 = vrot.lane.b32.xlu0 %v3179, 64
    %v3204 = vpop.permute.xlu0 %3203
    %3205 = vrot.lane.b32.xlu0 %v3180, 64
    %v3206 = vpop.permute.xlu0 %3205
    %3207 = vrot.lane.b32.xlu0 %v3181, 64
    %v3208 = vpop.permute.xlu0 %3207
    %3209 = vrot.lane.b32.xlu0 %v3182, 64
    %v3210 = vpop.permute.xlu0 %3209
    %3211 = vrot.lane.b32.xlu0 %v3183, 64
    %v3212 = vpop.permute.xlu0 %3211
    %3213 = vrot.lane.b32.xlu0 %v3184, 64
    %v3214 = vpop.permute.xlu0 %3213
    %3215 = vrot.lane.b32.xlu0 %v3185, 64
    %v3216 = vpop.permute.xlu0 %3215
    %3217 = vrot.lane.b32.xlu0 %v3186, 64
    %v3218 = vpop.permute.xlu0 %3217
    %vm3235 = vcmask 781824
    %3236 = vst.msk [vmem:[#allocation3] sm:$0xf] %vm3235, %v3188
    %3237 = vst.msk [vmem:[#allocation3 + $0x4] sm:$0xf] %vm3235, %v3190
    %3238 = vst.msk [vmem:[#allocation3 + $0x8] sm:$0xf] %vm3235, %v3192
    %3239 = vst.msk [vmem:[#allocation3 + $0xc] sm:$0xf] %vm3235, %v3194
    %3240 = vst.msk [vmem:[#allocation3 + $0x10] sm:$0xf] %vm3235, %v3196
    %3241 = vst.msk [vmem:[#allocation3 + $0x14] sm:$0xf] %vm3235, %v3198
    %3242 = vst.msk [vmem:[#allocation3 + $0x18] sm:$0xf] %vm3235, %v3200
    %3243 = vst.msk [vmem:[#allocation3 + $0x1c] sm:$0xf] %vm3235, %v3202
    %3244 = vst.msk [vmem:[#allocation3 + $0x20] sm:$0xf] %vm3235, %v3204
    %3245 = vst.msk [vmem:[#allocation3 + $0x24] sm:$0xf] %vm3235, %v3206
    %3246 = vst.msk [vmem:[#allocation3 + $0x28] sm:$0xf] %vm3235, %v3208
    %3247 = vst.msk [vmem:[#allocation3 + $0x2c] sm:$0xf] %vm3235, %v3210
    %3248 = vst.msk [vmem:[#allocation3 + $0x30] sm:$0xf] %vm3235, %v3212
    %3249 = vst.msk [vmem:[#allocation3 + $0x34] sm:$0xf] %vm3235, %v3214
    %3250 = vst.msk [vmem:[#allocation3 + $0x38] sm:$0xf] %vm3235, %v3216
    %3251 = vst.msk [vmem:[#allocation3 + $0x3c] sm:$0xf] %vm3235, %v3218
    %v3252 = vld [vmem:[#allocation2] sm:$0xf]
    %v3253 = vld [vmem:[#allocation2 + $0xc] sm:$0xf]
    %v3254 = vld [vmem:[#allocation2 + $0x18] sm:$0xf]
    %v3255 = vld [vmem:[#allocation2 + $0x24] sm:$0xf]
    %v3256 = vld [vmem:[#allocation2 + $0x30] sm:$0xf]
    %v3257 = vld [vmem:[#allocation2 + $0x3c] sm:$0xf]
    %v3258 = vld [vmem:[#allocation2 + $0x48] sm:$0xf]
    %v3259 = vld [vmem:[#allocation2 + $0x54] sm:$0xf]
    %v3260 = vld [vmem:[#allocation2 + $0x60] sm:$0xf]
    %v3261 = vld [vmem:[#allocation2 + $0x6c] sm:$0xf]
    %v3262 = vld [vmem:[#allocation2 + $0x78] sm:$0xf]
    %v3263 = vld [vmem:[#allocation2 + $0x84] sm:$0xf]
    %v3264 = vld [vmem:[#allocation2 + $0x90] sm:$0xf]
    %v3265 = vld [vmem:[#allocation2 + $0x9c] sm:$0xf]
    %v3266 = vld [vmem:[#allocation2 + $0xa8] sm:$0xf]
    %v3267 = vld [vmem:[#allocation2 + $0xb4] sm:$0xf]
    %v3268 = vld [vmem:[#allocation2 + $0x4] sm:$0xf]
    %v3269 = vld [vmem:[#allocation2 + $0x10] sm:$0xf]
    %v3270 = vld [vmem:[#allocation2 + $0x1c] sm:$0xf]
    %v3271 = vld [vmem:[#allocation2 + $0x28] sm:$0xf]
    %v3272 = vld [vmem:[#allocation2 + $0x34] sm:$0xf]
    %v3273 = vld [vmem:[#allocation2 + $0x40] sm:$0xf]
    %v3274 = vld [vmem:[#allocation2 + $0x4c] sm:$0xf]
    %v3275 = vld [vmem:[#allocation2 + $0x58] sm:$0xf]
    %v3276 = vld [vmem:[#allocation2 + $0x64] sm:$0xf]
    %v3277 = vld [vmem:[#allocation2 + $0x70] sm:$0xf]
    %v3278 = vld [vmem:[#allocation2 + $0x7c] sm:$0xf]
    %v3279 = vld [vmem:[#allocation2 + $0x88] sm:$0xf]
    %v3280 = vld [vmem:[#allocation2 + $0x94] sm:$0xf]
    %v3281 = vld [vmem:[#allocation2 + $0xa0] sm:$0xf]
    %v3282 = vld [vmem:[#allocation2 + $0xac] sm:$0xf]
    %v3283 = vld [vmem:[#allocation2 + $0xb8] sm:$0xf]
    %v3284 = vld [vmem:[#allocation2 + $0x8] sm:$0xf]
    %v3285 = vld [vmem:[#allocation2 + $0x14] sm:$0xf]
    %v3286 = vld [vmem:[#allocation2 + $0x20] sm:$0xf]
    %v3287 = vld [vmem:[#allocation2 + $0x2c] sm:$0xf]
    %v3288 = vld [vmem:[#allocation2 + $0x38] sm:$0xf]
    %v3289 = vld [vmem:[#allocation2 + $0x44] sm:$0xf]
    %v3290 = vld [vmem:[#allocation2 + $0x50] sm:$0xf]
    %v3291 = vld [vmem:[#allocation2 + $0x5c] sm:$0xf]
    %v3292 = vld [vmem:[#allocation2 + $0x68] sm:$0xf]
    %v3293 = vld [vmem:[#allocation2 + $0x74] sm:$0xf]
    %v3294 = vld [vmem:[#allocation2 + $0x80] sm:$0xf]
    %v3295 = vld [vmem:[#allocation2 + $0x8c] sm:$0xf]
    %v3296 = vld [vmem:[#allocation2 + $0x98] sm:$0xf]
    %v3297 = vld [vmem:[#allocation2 + $0xa4] sm:$0xf]
    %v3298 = vld [vmem:[#allocation2 + $0xb0] sm:$0xf]
    %v3299 = vld [vmem:[#allocation2 + $0xbc] sm:$0xf]
    %v3316 = vunpack.c.l.b16 %v3252
    %v3317 = vunpack.c.l.b16 %v3253
    %v3318 = vunpack.c.l.b16 %v3254
    %v3319 = vunpack.c.l.b16 %v3255
    %v3320 = vunpack.c.l.b16 %v3256
    %v3321 = vunpack.c.l.b16 %v3257
    %v3322 = vunpack.c.l.b16 %v3258
    %v3323 = vunpack.c.l.b16 %v3259
    %v3324 = vunpack.c.l.b16 %v3260
    %v3325 = vunpack.c.l.b16 %v3261
    %v3326 = vunpack.c.l.b16 %v3262
    %v3327 = vunpack.c.l.b16 %v3263
    %v3328 = vunpack.c.l.b16 %v3264
    %v3329 = vunpack.c.l.b16 %v3265
    %v3330 = vunpack.c.l.b16 %v3266
    %v3331 = vunpack.c.l.b16 %v3267
    %v3332 = vpack.c.b16 %v3317, %v3316
    %v3333 = vpack.c.b16 %v3319, %v3318
    %v3334 = vpack.c.b16 %v3321, %v3320
    %v3335 = vpack.c.b16 %v3323, %v3322
    %v3336 = vpack.c.b16 %v3325, %v3324
    %v3337 = vpack.c.b16 %v3327, %v3326
    %v3338 = vpack.c.b16 %v3329, %v3328
    %v3339 = vpack.c.b16 %v3331, %v3330
    %3340 = vrot.lane.b32.xlu0 %v3332, 32
    %v3341 = vpop.permute.xlu0 %3340
    %3342 = vrot.lane.b32.xlu0 %v3333, 32
    %v3343 = vpop.permute.xlu0 %3342
    %3344 = vrot.lane.b32.xlu0 %v3334, 32
    %v3345 = vpop.permute.xlu0 %3344
    %3346 = vrot.lane.b32.xlu0 %v3335, 32
    %v3347 = vpop.permute.xlu0 %3346
    %3348 = vrot.lane.b32.xlu0 %v3336, 32
    %v3349 = vpop.permute.xlu0 %3348
    %3350 = vrot.lane.b32.xlu0 %v3337, 32
    %v3351 = vpop.permute.xlu0 %3350
    %3352 = vrot.lane.b32.xlu0 %v3338, 32
    %v3353 = vpop.permute.xlu0 %3352
    %3354 = vrot.lane.b32.xlu0 %v3339, 32
    %v3355 = vpop.permute.xlu0 %3354
    %v3372 = vunpack.c.l.b16 %v3268
    %v3373 = vunpack.c.l.b16 %v3269
    %v3374 = vunpack.c.l.b16 %v3270
    %v3375 = vunpack.c.l.b16 %v3271
    %v3376 = vunpack.c.l.b16 %v3272
    %v3377 = vunpack.c.l.b16 %v3273
    %v3378 = vunpack.c.l.b16 %v3274
    %v3379 = vunpack.c.l.b16 %v3275
    %v3380 = vunpack.c.l.b16 %v3276
    %v3381 = vunpack.c.l.b16 %v3277
    %v3382 = vunpack.c.l.b16 %v3278
    %v3383 = vunpack.c.l.b16 %v3279
    %v3384 = vunpack.c.l.b16 %v3280
    %v3385 = vunpack.c.l.b16 %v3281
    %v3386 = vunpack.c.l.b16 %v3282
    %v3387 = vunpack.c.l.b16 %v3283
    %v3388 = vpack.c.b16 %v3373, %v3372
    %v3389 = vpack.c.b16 %v3375, %v3374
    %v3390 = vpack.c.b16 %v3377, %v3376
    %v3391 = vpack.c.b16 %v3379, %v3378
    %v3392 = vpack.c.b16 %v3381, %v3380
    %v3393 = vpack.c.b16 %v3383, %v3382
    %v3394 = vpack.c.b16 %v3385, %v3384
    %v3395 = vpack.c.b16 %v3387, %v3386
    %3396 = vrot.lane.b32.xlu0 %v3388, 32
    %v3397 = vpop.permute.xlu0 %3396
    %3398 = vrot.lane.b32.xlu0 %v3389, 32
    %v3399 = vpop.permute.xlu0 %3398
    %3400 = vrot.lane.b32.xlu0 %v3390, 32
    %v3401 = vpop.permute.xlu0 %3400
    %3402 = vrot.lane.b32.xlu0 %v3391, 32
    %v3403 = vpop.permute.xlu0 %3402
    %3404 = vrot.lane.b32.xlu0 %v3392, 32
    %v3405 = vpop.permute.xlu0 %3404
    %3406 = vrot.lane.b32.xlu0 %v3393, 32
    %v3407 = vpop.permute.xlu0 %3406
    %3408 = vrot.lane.b32.xlu0 %v3394, 32
    %v3409 = vpop.permute.xlu0 %3408
    %3410 = vrot.lane.b32.xlu0 %v3395, 32
    %v3411 = vpop.permute.xlu0 %3410
    %v3413 = vsel %vm1266, %v3341, 0
    %v3416 = vsel %vm1266, %v3343, 0
    %v3419 = vsel %vm1266, %v3345, 0
    %v3422 = vsel %vm1266, %v3347, 0
    %v3425 = vsel %vm1266, %v3349, 0
    %v3428 = vsel %vm1266, %v3351, 0
    %v3431 = vsel %vm1266, %v3353, 0
    %v3434 = vsel %vm1266, %v3355, 0
    %v3437 = vsel %vm1266, %v3397, 0
    %v3440 = vsel %vm1266, %v3399, 0
    %v3443 = vsel %vm1266, %v3401, 0
    %v3446 = vsel %vm1266, %v3403, 0
    %v3449 = vsel %vm1266, %v3405, 0
    %v3452 = vsel %vm1266, %v3407, 0
    %v3455 = vsel %vm1266, %v3409, 0
    %v3458 = vsel %vm1266, %v3411, 0
    %3460 = vmatprep.subr.bf16.mxu0 0
    %3461 = vmatpush1.bf16.xpose.msra.mxu0 %v3458
    %3462 = vmatprep.subr.bf16.mxu0 0
    %3463 = vmatpush1.bf16.xpose.msra.mxu0 %v3455
    %3464 = vmatprep.subr.bf16.mxu0 0
    %3465 = vmatpush1.bf16.xpose.msra.mxu0 %v3452
    %3466 = vmatprep.subr.bf16.mxu0 0
    %3467 = vmatpush1.bf16.xpose.msra.mxu0 %v3449
    %3468 = vmatprep.subr.bf16.mxu0 0
    %3469 = vmatpush1.bf16.xpose.msra.mxu0 %v3446
    %3470 = vmatprep.subr.bf16.mxu0 0
    %3471 = vmatpush1.bf16.xpose.msra.mxu0 %v3443
    %3472 = vmatprep.subr.bf16.mxu0 0
    %3473 = vmatpush1.bf16.xpose.msra.mxu0 %v3440
    %3474 = vmatprep.subr.bf16.mxu0 0
    %3475 = vmatpush1.bf16.xpose.msra.mxu0 %v3437
    %3476 = vmatprep.subr.bf16.mxu0 0
    %3477 = vmatpush2.bf16.xpose.msra.mxu0 0
    %3478 = vmatprep.subr.bf16.mxu0 0
    %3479 = vmatpush2.bf16.xpose.msra.mxu0 0
    %3480 = vmatprep.subr.bf16.mxu0 0
    %3481 = vmatpush2.bf16.xpose.msra.mxu0 0
    %3482 = vmatprep.subr.bf16.mxu0 0
    %3483 = vmatpush2.bf16.xpose.msra.mxu0 0
    %3484 = vmatprep.subr.bf16.mxu0 0
    %3485 = vmatpush2.bf16.xpose.msra.mxu0 0
    %3486 = vmatprep.subr.bf16.mxu0 0
    %3487 = vmatpush2.bf16.xpose.msra.mxu0 0
    %3488 = vmatprep.subr.bf16.mxu0 0
    %3489 = vmatpush2.bf16.xpose.msra.mxu0 0
    %3490 = vmatprep.subr.bf16.mxu0 0
    %3491 = vmatpush2.bf16.xpose.msra.mxu0 0
    %3492 = vmatprep.mubr.bf16.mxu0 0
    %3493 = vmatmul.mubr.bf16.gmra.mxu0 %v3413
    %v3494 = vpop.f32.mrf.mxu0
    %v3495 = vadd.f32 0.0, %v3494
    %v3496 = vpop.f32.mrf.mxu0
    %v3497 = vpop.f32.mrf.mxu0
    %v3498 = vadd.f32 0.0, %v3497
    %v3499 = vpop.f32.mrf.mxu0
    %3500 = vmatprep.mubr.bf16.mxu0 0
    %3501 = vmatmul.mubr.bf16.gmra.mxu0 %v3416
    %v3502 = vpop.f32.mrf.mxu0
    %v3503 = vadd.f32 0.0, %v3502
    %v3504 = vpop.f32.mrf.mxu0
    %v3505 = vpop.f32.mrf.mxu0
    %v3506 = vadd.f32 0.0, %v3505
    %v3507 = vpop.f32.mrf.mxu0
    %3508 = vmatprep.mubr.bf16.mxu0 0
    %3509 = vmatmul.mubr.bf16.gmra.mxu0 %v3419
    %v3510 = vpop.f32.mrf.mxu0
    %v3511 = vadd.f32 0.0, %v3510
    %v3512 = vpop.f32.mrf.mxu0
    %v3513 = vpop.f32.mrf.mxu0
    %v3514 = vadd.f32 0.0, %v3513
    %v3515 = vpop.f32.mrf.mxu0
    %3516 = vmatprep.mubr.bf16.mxu0 0
    %3517 = vmatmul.mubr.bf16.gmra.mxu0 %v3422
    %v3518 = vpop.f32.mrf.mxu0
    %v3519 = vadd.f32 0.0, %v3518
    %v3520 = vpop.f32.mrf.mxu0
    %v3521 = vpop.f32.mrf.mxu0
    %v3522 = vadd.f32 0.0, %v3521
    %v3523 = vpop.f32.mrf.mxu0
    %3524 = vmatprep.mubr.bf16.mxu0 0
    %3525 = vmatmul.mubr.bf16.gmra.mxu0 %v3425
    %v3526 = vpop.f32.mrf.mxu0
    %v3527 = vadd.f32 0.0, %v3526
    %v3528 = vpop.f32.mrf.mxu0
    %v3529 = vpop.f32.mrf.mxu0
    %v3530 = vadd.f32 0.0, %v3529
    %v3531 = vpop.f32.mrf.mxu0
    %3532 = vmatprep.mubr.bf16.mxu0 0
    %3533 = vmatmul.mubr.bf16.gmra.mxu0 %v3428
    %v3534 = vpop.f32.mrf.mxu0
    %v3535 = vadd.f32 0.0, %v3534
    %v3536 = vpop.f32.mrf.mxu0
    %v3537 = vpop.f32.mrf.mxu0
    %v3538 = vadd.f32 0.0, %v3537
    %v3539 = vpop.f32.mrf.mxu0
    %3540 = vmatprep.mubr.bf16.mxu0 0
    %3541 = vmatmul.mubr.bf16.gmra.mxu0 %v3431
    %v3542 = vpop.f32.mrf.mxu0
    %v3543 = vadd.f32 0.0, %v3542
    %v3544 = vpop.f32.mrf.mxu0
    %v3545 = vpop.f32.mrf.mxu0
    %v3546 = vadd.f32 0.0, %v3545
    %v3547 = vpop.f32.mrf.mxu0
    %3548 = vmatprep.mubr.bf16.mxu0 0
    %3549 = vmatmul.mubr.bf16.gmra.mxu0 %v3434
    %v3550 = vpop.f32.mrf.mxu0
    %v3551 = vadd.f32 0.0, %v3550
    %v3552 = vpop.f32.mrf.mxu0
    %v3553 = vpop.f32.mrf.mxu0
    %v3554 = vadd.f32 0.0, %v3553
    %v3555 = vpop.f32.mrf.mxu0
    %3556 = vdwg.mxu0
    %3557 = vmax.xlane.f32.xlu0 %v3495
    %v3558 = vpop.xlane.xlu0 %3557
    %3559 = vmax.xlane.f32.xlu0 %v3498
    %v3560 = vpop.xlane.xlu0 %3559
    %3561 = vmax.xlane.f32.xlu0 %v3503
    %v3562 = vpop.xlane.xlu0 %3561
    %3563 = vmax.xlane.f32.xlu0 %v3506
    %v3564 = vpop.xlane.xlu0 %3563
    %3565 = vmax.xlane.f32.xlu0 %v3511
    %v3566 = vpop.xlane.xlu0 %3565
    %3567 = vmax.xlane.f32.xlu0 %v3514
    %v3568 = vpop.xlane.xlu0 %3567
    %3569 = vmax.xlane.f32.xlu0 %v3519
    %v3570 = vpop.xlane.xlu0 %3569
    %3571 = vmax.xlane.f32.xlu0 %v3522
    %v3572 = vpop.xlane.xlu0 %3571
    %3573 = vmax.xlane.f32.xlu0 %v3527
    %v3574 = vpop.xlane.xlu0 %3573
    %3575 = vmax.xlane.f32.xlu0 %v3530
    %v3576 = vpop.xlane.xlu0 %3575
    %3577 = vmax.xlane.f32.xlu0 %v3535
    %v3578 = vpop.xlane.xlu0 %3577
    %3579 = vmax.xlane.f32.xlu0 %v3538
    %v3580 = vpop.xlane.xlu0 %3579
    %3581 = vmax.xlane.f32.xlu0 %v3543
    %v3582 = vpop.xlane.xlu0 %3581
    %3583 = vmax.xlane.f32.xlu0 %v3546
    %v3584 = vpop.xlane.xlu0 %3583
    %3585 = vmax.xlane.f32.xlu0 %v3551
    %v3586 = vpop.xlane.xlu0 %3585
    %3587 = vmax.xlane.f32.xlu0 %v3554
    %v3588 = vpop.xlane.xlu0 %3587
    %v3589 = vsub.f32 %v3495, %v3558
    %v3590 = vsub.f32 %v3498, %v3560
    %v3591 = vsub.f32 %v3503, %v3562
    %v3592 = vsub.f32 %v3506, %v3564
    %v3593 = vsub.f32 %v3511, %v3566
    %v3594 = vsub.f32 %v3514, %v3568
    %v3595 = vsub.f32 %v3519, %v3570
    %v3596 = vsub.f32 %v3522, %v3572
    %v3597 = vsub.f32 %v3527, %v3574
    %v3598 = vsub.f32 %v3530, %v3576
    %v3599 = vsub.f32 %v3535, %v3578
    %v3600 = vsub.f32 %v3538, %v3580
    %v3601 = vsub.f32 %v3543, %v3582
    %v3602 = vsub.f32 %v3546, %v3584
    %v3603 = vsub.f32 %v3551, %v3586
    %v3604 = vsub.f32 %v3554, %v3588
    %v3605 = vmul.f32 %v3589, 1.442695
    %v3606 = vpow.pop %v3605
    %v3607 = vmul.f32 %v3590, 1.442695
    %v3608 = vpow.pop %v3607
    %v3609 = vmul.f32 %v3591, 1.442695
    %v3610 = vpow.pop %v3609
    %v3611 = vmul.f32 %v3592, 1.442695
    %v3612 = vpow.pop %v3611
    %v3613 = vmul.f32 %v3593, 1.442695
    %v3614 = vpow.pop %v3613
    %v3615 = vmul.f32 %v3594, 1.442695
    %v3616 = vpow.pop %v3615
    %v3617 = vmul.f32 %v3595, 1.442695
    %v3618 = vpow.pop %v3617
    %v3619 = vmul.f32 %v3596, 1.442695
    %v3620 = vpow.pop %v3619
    %v3621 = vmul.f32 %v3597, 1.442695
    %v3622 = vpow.pop %v3621
    %v3623 = vmul.f32 %v3598, 1.442695
    %v3624 = vpow.pop %v3623
    %v3625 = vmul.f32 %v3599, 1.442695
    %v3626 = vpow.pop %v3625
    %v3627 = vmul.f32 %v3600, 1.442695
    %v3628 = vpow.pop %v3627
    %v3629 = vmul.f32 %v3601, 1.442695
    %v3630 = vpow.pop %v3629
    %v3631 = vmul.f32 %v3602, 1.442695
    %v3632 = vpow.pop %v3631
    %v3633 = vmul.f32 %v3603, 1.442695
    %v3634 = vpow.pop %v3633
    %v3635 = vmul.f32 %v3604, 1.442695
    %v3636 = vpow.pop %v3635
    %3637 = vadd.xlane.f32.xlu0 %v3606
    %v3638 = vpop.xlane.xlu0 %3637
    %3639 = vadd.xlane.f32.xlu0 %v3608
    %v3640 = vpop.xlane.xlu0 %3639
    %3641 = vadd.xlane.f32.xlu0 %v3610
    %v3642 = vpop.xlane.xlu0 %3641
    %3643 = vadd.xlane.f32.xlu0 %v3612
    %v3644 = vpop.xlane.xlu0 %3643
    %3645 = vadd.xlane.f32.xlu0 %v3614
    %v3646 = vpop.xlane.xlu0 %3645
    %3647 = vadd.xlane.f32.xlu0 %v3616
    %v3648 = vpop.xlane.xlu0 %3647
    %3649 = vadd.xlane.f32.xlu0 %v3618
    %v3650 = vpop.xlane.xlu0 %3649
    %3651 = vadd.xlane.f32.xlu0 %v3620
    %v3652 = vpop.xlane.xlu0 %3651
    %3653 = vadd.xlane.f32.xlu0 %v3622
    %v3654 = vpop.xlane.xlu0 %3653
    %3655 = vadd.xlane.f32.xlu0 %v3624
    %v3656 = vpop.xlane.xlu0 %3655
    %3657 = vadd.xlane.f32.xlu0 %v3626
    %v3658 = vpop.xlane.xlu0 %3657
    %3659 = vadd.xlane.f32.xlu0 %v3628
    %v3660 = vpop.xlane.xlu0 %3659
    %3661 = vadd.xlane.f32.xlu0 %v3630
    %v3662 = vpop.xlane.xlu0 %3661
    %3663 = vadd.xlane.f32.xlu0 %v3632
    %v3664 = vpop.xlane.xlu0 %3663
    %3665 = vadd.xlane.f32.xlu0 %v3634
    %v3666 = vpop.xlane.xlu0 %3665
    %3667 = vadd.xlane.f32.xlu0 %v3636
    %v3668 = vpop.xlane.xlu0 %3667
    %v3669 = vrcp.pop %v3638
    %v3670 = vrcp.pop %v3640
    %v3671 = vrcp.pop %v3642
    %v3672 = vrcp.pop %v3644
    %v3673 = vrcp.pop %v3646
    %v3674 = vrcp.pop %v3648
    %v3675 = vrcp.pop %v3650
    %v3676 = vrcp.pop %v3652
    %v3677 = vrcp.pop %v3654
    %v3678 = vrcp.pop %v3656
    %v3679 = vrcp.pop %v3658
    %v3680 = vrcp.pop %v3660
    %v3681 = vrcp.pop %v3662
    %v3682 = vrcp.pop %v3664
    %v3683 = vrcp.pop %v3666
    %v3684 = vrcp.pop %v3668
    %v3685 = vmul.f32 %v3606, %v3669
    %v3686 = vmul.f32 %v3608, %v3670
    %v3687 = vmul.f32 %v3610, %v3671
    %v3688 = vmul.f32 %v3612, %v3672
    %v3689 = vmul.f32 %v3614, %v3673
    %v3690 = vmul.f32 %v3616, %v3674
    %v3691 = vmul.f32 %v3618, %v3675
    %v3692 = vmul.f32 %v3620, %v3676
    %v3693 = vmul.f32 %v3622, %v3677
    %v3694 = vmul.f32 %v3624, %v3678
    %v3695 = vmul.f32 %v3626, %v3679
    %v3696 = vmul.f32 %v3628, %v3680
    %v3697 = vmul.f32 %v3630, %v3681
    %v3698 = vmul.f32 %v3632, %v3682
    %v3699 = vmul.f32 %v3634, %v3683
    %v3700 = vmul.f32 %v3636, %v3684
    %v3701 = vpack.c.bf16 %v3686, %v3685
    %v3702 = vpack.c.bf16 %v3688, %v3687
    %v3703 = vpack.c.bf16 %v3690, %v3689
    %v3704 = vpack.c.bf16 %v3692, %v3691
    %v3705 = vpack.c.bf16 %v3694, %v3693
    %v3706 = vpack.c.bf16 %v3696, %v3695
    %v3707 = vpack.c.bf16 %v3698, %v3697
    %v3708 = vpack.c.bf16 %v3700, %v3699
    %v3725 = vunpack.c.l.b16 %v3284
    %v3726 = vunpack.c.l.b16 %v3285
    %v3727 = vunpack.c.l.b16 %v3286
    %v3728 = vunpack.c.l.b16 %v3287
    %v3729 = vunpack.c.l.b16 %v3288
    %v3730 = vunpack.c.l.b16 %v3289
    %v3731 = vunpack.c.l.b16 %v3290
    %v3732 = vunpack.c.l.b16 %v3291
    %v3733 = vunpack.c.l.b16 %v3292
    %v3734 = vunpack.c.l.b16 %v3293
    %v3735 = vunpack.c.l.b16 %v3294
    %v3736 = vunpack.c.l.b16 %v3295
    %v3737 = vunpack.c.l.b16 %v3296
    %v3738 = vunpack.c.l.b16 %v3297
    %v3739 = vunpack.c.l.b16 %v3298
    %v3740 = vunpack.c.l.b16 %v3299
    %v3741 = vpack.c.b16 %v3726, %v3725
    %v3742 = vpack.c.b16 %v3728, %v3727
    %v3743 = vpack.c.b16 %v3730, %v3729
    %v3744 = vpack.c.b16 %v3732, %v3731
    %v3745 = vpack.c.b16 %v3734, %v3733
    %v3746 = vpack.c.b16 %v3736, %v3735
    %v3747 = vpack.c.b16 %v3738, %v3737
    %v3748 = vpack.c.b16 %v3740, %v3739
    %3749 = vrot.lane.b32.xlu0 %v3741, 32
    %v3750 = vpop.permute.xlu0 %3749
    %3751 = vrot.lane.b32.xlu0 %v3742, 32
    %v3752 = vpop.permute.xlu0 %3751
    %3753 = vrot.lane.b32.xlu0 %v3743, 32
    %v3754 = vpop.permute.xlu0 %3753
    %3755 = vrot.lane.b32.xlu0 %v3744, 32
    %v3756 = vpop.permute.xlu0 %3755
    %3757 = vrot.lane.b32.xlu0 %v3745, 32
    %v3758 = vpop.permute.xlu0 %3757
    %3759 = vrot.lane.b32.xlu0 %v3746, 32
    %v3760 = vpop.permute.xlu0 %3759
    %3761 = vrot.lane.b32.xlu0 %v3747, 32
    %v3762 = vpop.permute.xlu0 %3761
    %3763 = vrot.lane.b32.xlu0 %v3748, 32
    %v3764 = vpop.permute.xlu0 %3763
    %3773 = vmatprep.subr.bf16.mxu0 0
    %3774 = vmatpush1.bf16.msra.mxu0 %v3764
    %3775 = vmatprep.subr.bf16.mxu0 0
    %3776 = vmatpush1.bf16.msra.mxu0 %v3762
    %3777 = vmatprep.subr.bf16.mxu0 0
    %3778 = vmatpush1.bf16.msra.mxu0 %v3760
    %3779 = vmatprep.subr.bf16.mxu0 0
    %3780 = vmatpush1.bf16.msra.mxu0 %v3758
    %3781 = vmatprep.subr.bf16.mxu0 0
    %3782 = vmatpush1.bf16.msra.mxu0 %v3756
    %3783 = vmatprep.subr.bf16.mxu0 0
    %3784 = vmatpush1.bf16.msra.mxu0 %v3754
    %3785 = vmatprep.subr.bf16.mxu0 0
    %3786 = vmatpush1.bf16.msra.mxu0 %v3752
    %3787 = vmatprep.subr.bf16.mxu0 0
    %3788 = vmatpush1.bf16.msra.mxu0 %v3750
    %3789 = vmatprep.subr.bf16.mxu0 0
    %3790 = vmatpush2.bf16.msra.mxu0 0
    %3791 = vmatprep.subr.bf16.mxu0 0
    %3792 = vmatpush2.bf16.msra.mxu0 0
    %3793 = vmatprep.subr.bf16.mxu0 0
    %3794 = vmatpush2.bf16.msra.mxu0 0
    %3795 = vmatprep.subr.bf16.mxu0 0
    %3796 = vmatpush2.bf16.msra.mxu0 0
    %3797 = vmatprep.subr.bf16.mxu0 0
    %3798 = vmatpush2.bf16.msra.mxu0 0
    %3799 = vmatprep.subr.bf16.mxu0 0
    %3800 = vmatpush2.bf16.msra.mxu0 0
    %3801 = vmatprep.subr.bf16.mxu0 0
    %3802 = vmatpush2.bf16.msra.mxu0 0
    %3803 = vmatprep.subr.bf16.mxu0 0
    %3804 = vmatpush2.bf16.msra.mxu0 0
    %3805 = vmatprep.mubr.bf16.mxu0 0
    %3806 = vmatmul.mubr.bf16.gmra.mxu0 %v3701
    %v3807 = vpop.f32.mrf.mxu0
    %v3808 = vadd.f32 0.0, %v3807
    %v3809 = vpop.f32.mrf.mxu0
    %v3810 = vpop.f32.mrf.mxu0
    %v3811 = vadd.f32 0.0, %v3810
    %v3812 = vpop.f32.mrf.mxu0
    %3813 = vmatprep.mubr.bf16.mxu0 0
    %3814 = vmatmul.mubr.bf16.gmra.mxu0 %v3702
    %v3815 = vpop.f32.mrf.mxu0
    %v3816 = vadd.f32 0.0, %v3815
    %v3817 = vpop.f32.mrf.mxu0
    %v3818 = vpop.f32.mrf.mxu0
    %v3819 = vadd.f32 0.0, %v3818
    %v3820 = vpop.f32.mrf.mxu0
    %3821 = vmatprep.mubr.bf16.mxu0 0
    %3822 = vmatmul.mubr.bf16.gmra.mxu0 %v3703
    %v3823 = vpop.f32.mrf.mxu0
    %v3824 = vadd.f32 0.0, %v3823
    %v3825 = vpop.f32.mrf.mxu0
    %v3826 = vpop.f32.mrf.mxu0
    %v3827 = vadd.f32 0.0, %v3826
    %v3828 = vpop.f32.mrf.mxu0
    %3829 = vmatprep.mubr.bf16.mxu0 0
    %3830 = vmatmul.mubr.bf16.gmra.mxu0 %v3704
    %v3831 = vpop.f32.mrf.mxu0
    %v3832 = vadd.f32 0.0, %v3831
    %v3833 = vpop.f32.mrf.mxu0
    %v3834 = vpop.f32.mrf.mxu0
    %v3835 = vadd.f32 0.0, %v3834
    %v3836 = vpop.f32.mrf.mxu0
    %3837 = vmatprep.mubr.bf16.mxu0 0
    %3838 = vmatmul.mubr.bf16.gmra.mxu0 %v3705
    %v3839 = vpop.f32.mrf.mxu0
    %v3840 = vadd.f32 0.0, %v3839
    %v3841 = vpop.f32.mrf.mxu0
    %v3842 = vpop.f32.mrf.mxu0
    %v3843 = vadd.f32 0.0, %v3842
    %v3844 = vpop.f32.mrf.mxu0
    %3845 = vmatprep.mubr.bf16.mxu0 0
    %3846 = vmatmul.mubr.bf16.gmra.mxu0 %v3706
    %v3847 = vpop.f32.mrf.mxu0
    %v3848 = vadd.f32 0.0, %v3847
    %v3849 = vpop.f32.mrf.mxu0
    %v3850 = vpop.f32.mrf.mxu0
    %v3851 = vadd.f32 0.0, %v3850
    %v3852 = vpop.f32.mrf.mxu0
    %3853 = vmatprep.mubr.bf16.mxu0 0
    %3854 = vmatmul.mubr.bf16.gmra.mxu0 %v3707
    %v3855 = vpop.f32.mrf.mxu0
    %v3856 = vadd.f32 0.0, %v3855
    %v3857 = vpop.f32.mrf.mxu0
    %v3858 = vpop.f32.mrf.mxu0
    %v3859 = vadd.f32 0.0, %v3858
    %v3860 = vpop.f32.mrf.mxu0
    %3861 = vmatprep.mubr.bf16.mxu0 0
    %3862 = vmatmul.mubr.bf16.gmra.mxu0 %v3708
    %v3863 = vpop.f32.mrf.mxu0
    %v3864 = vadd.f32 0.0, %v3863
    %v3865 = vpop.f32.mrf.mxu0
    %v3866 = vpop.f32.mrf.mxu0
    %v3867 = vadd.f32 0.0, %v3866
    %v3868 = vpop.f32.mrf.mxu0
    %3869 = vdwg.mxu0
    %v3870 = vpack.c.bf16 %v3811, %v3808
    %v3871 = vpack.c.bf16 %v3819, %v3816
    %v3872 = vpack.c.bf16 %v3827, %v3824
    %v3873 = vpack.c.bf16 %v3835, %v3832
    %v3874 = vpack.c.bf16 %v3843, %v3840
    %v3875 = vpack.c.bf16 %v3851, %v3848
    %v3876 = vpack.c.bf16 %v3859, %v3856
    %v3877 = vpack.c.bf16 %v3867, %v3864
    %v3886 = vunpack.c.l.b16 %v3870
    %v3887 = vunpack.c.h.b16 %v3870
    %v3888 = vunpack.c.l.b16 %v3871
    %v3889 = vunpack.c.h.b16 %v3871
    %v3890 = vunpack.c.l.b16 %v3872
    %v3891 = vunpack.c.h.b16 %v3872
    %v3892 = vunpack.c.l.b16 %v3873
    %v3893 = vunpack.c.h.b16 %v3873
    %v3894 = vunpack.c.l.b16 %v3874
    %v3895 = vunpack.c.h.b16 %v3874
    %v3896 = vunpack.c.l.b16 %v3875
    %v3897 = vunpack.c.h.b16 %v3875
    %v3898 = vunpack.c.l.b16 %v3876
    %v3899 = vunpack.c.h.b16 %v3876
    %v3900 = vunpack.c.l.b16 %v3877
    %v3901 = vunpack.c.h.b16 %v3877
    %v3902 = vpack.c.b16 %v3886, %v3886
    %v3903 = vpack.c.b16 %v3887, %v3887
    %v3904 = vpack.c.b16 %v3888, %v3888
    %v3905 = vpack.c.b16 %v3889, %v3889
    %v3906 = vpack.c.b16 %v3890, %v3890
    %v3907 = vpack.c.b16 %v3891, %v3891
    %v3908 = vpack.c.b16 %v3892, %v3892
    %v3909 = vpack.c.b16 %v3893, %v3893
    %v3910 = vpack.c.b16 %v3894, %v3894
    %v3911 = vpack.c.b16 %v3895, %v3895
    %v3912 = vpack.c.b16 %v3896, %v3896
    %v3913 = vpack.c.b16 %v3897, %v3897
    %v3914 = vpack.c.b16 %v3898, %v3898
    %v3915 = vpack.c.b16 %v3899, %v3899
    %v3916 = vpack.c.b16 %v3900, %v3900
    %v3917 = vpack.c.b16 %v3901, %v3901
    %3918 = vrot.lane.b32.xlu0 %v3902, 96
    %v3919 = vpop.permute.xlu0 %3918
    %3920 = vrot.lane.b32.xlu0 %v3903, 96
    %v3921 = vpop.permute.xlu0 %3920
    %3922 = vrot.lane.b32.xlu0 %v3904, 96
    %v3923 = vpop.permute.xlu0 %3922
    %3924 = vrot.lane.b32.xlu0 %v3905, 96
    %v3925 = vpop.permute.xlu0 %3924
    %3926 = vrot.lane.b32.xlu0 %v3906, 96
    %v3927 = vpop.permute.xlu0 %3926
    %3928 = vrot.lane.b32.xlu0 %v3907, 96
    %v3929 = vpop.permute.xlu0 %3928
    %3930 = vrot.lane.b32.xlu0 %v3908, 96
    %v3931 = vpop.permute.xlu0 %3930
    %3932 = vrot.lane.b32.xlu0 %v3909, 96
    %v3933 = vpop.permute.xlu0 %3932
    %3934 = vrot.lane.b32.xlu0 %v3910, 96
    %v3935 = vpop.permute.xlu0 %3934
    %3936 = vrot.lane.b32.xlu0 %v3911, 96
    %v3937 = vpop.permute.xlu0 %3936
    %3938 = vrot.lane.b32.xlu0 %v3912, 96
    %v3939 = vpop.permute.xlu0 %3938
    %3940 = vrot.lane.b32.xlu0 %v3913, 96
    %v3941 = vpop.permute.xlu0 %3940
    %3942 = vrot.lane.b32.xlu0 %v3914, 96
    %v3943 = vpop.permute.xlu0 %3942
    %3944 = vrot.lane.b32.xlu0 %v3915, 96
    %v3945 = vpop.permute.xlu0 %3944
    %3946 = vrot.lane.b32.xlu0 %v3916, 96
    %v3947 = vpop.permute.xlu0 %3946
    %3948 = vrot.lane.b32.xlu0 %v3917, 96
    %v3949 = vpop.permute.xlu0 %3948
    %vm3966 = vcmask 1044224
    %3967 = vst.msk [vmem:[#allocation3] sm:$0xf] %vm3966, %v3919
    %3968 = vst.msk [vmem:[#allocation3 + $0x4] sm:$0xf] %vm3966, %v3921
    %3969 = vst.msk [vmem:[#allocation3 + $0x8] sm:$0xf] %vm3966, %v3923
    %3970 = vst.msk [vmem:[#allocation3 + $0xc] sm:$0xf] %vm3966, %v3925
    %3971 = vst.msk [vmem:[#allocation3 + $0x10] sm:$0xf] %vm3966, %v3927
    %3972 = vst.msk [vmem:[#allocation3 + $0x14] sm:$0xf] %vm3966, %v3929
    %3973 = vst.msk [vmem:[#allocation3 + $0x18] sm:$0xf] %vm3966, %v3931
    %3974 = vst.msk [vmem:[#allocation3 + $0x1c] sm:$0xf] %vm3966, %v3933
    %3975 = vst.msk [vmem:[#allocation3 + $0x20] sm:$0xf] %vm3966, %v3935
    %3976 = vst.msk [vmem:[#allocation3 + $0x24] sm:$0xf] %vm3966, %v3937
    %3977 = vst.msk [vmem:[#allocation3 + $0x28] sm:$0xf] %vm3966, %v3939
    %3978 = vst.msk [vmem:[#allocation3 + $0x2c] sm:$0xf] %vm3966, %v3941
    %3979 = vst.msk [vmem:[#allocation3 + $0x30] sm:$0xf] %vm3966, %v3943
    %3980 = vst.msk [vmem:[#allocation3 + $0x34] sm:$0xf] %vm3966, %v3945
    %3981 = vst.msk [vmem:[#allocation3 + $0x38] sm:$0xf] %vm3966, %v3947
    %3982 = vst.msk [vmem:[#allocation3 + $0x3c] sm:$0xf] %vm3966, %v3949
    %v3983 = vld [vmem:[#allocation2 + $0xc0] sm:$0xf]
    %v3984 = vld [vmem:[#allocation2 + $0xcc] sm:$0xf]
    %v3985 = vld [vmem:[#allocation2 + $0xd8] sm:$0xf]
    %v3986 = vld [vmem:[#allocation2 + $0xe4] sm:$0xf]
    %v3987 = vld [vmem:[#allocation2 + $0xf0] sm:$0xf]
    %v3988 = vld [vmem:[#allocation2 + $0xfc] sm:$0xf]
    %v3989 = vld [vmem:[#allocation2 + $0x108] sm:$0xf]
    %v3990 = vld [vmem:[#allocation2 + $0x114] sm:$0xf]
    %v3991 = vld [vmem:[#allocation2 + $0x120] sm:$0xf]
    %v3992 = vld [vmem:[#allocation2 + $0x12c] sm:$0xf]
    %v3993 = vld [vmem:[#allocation2 + $0x138] sm:$0xf]
    %v3994 = vld [vmem:[#allocation2 + $0x144] sm:$0xf]
    %v3995 = vld [vmem:[#allocation2 + $0x150] sm:$0xf]
    %v3996 = vld [vmem:[#allocation2 + $0x15c] sm:$0xf]
    %v3997 = vld [vmem:[#allocation2 + $0x168] sm:$0xf]
    %v3998 = vld [vmem:[#allocation2 + $0x174] sm:$0xf]
    %v3999 = vld [vmem:[#allocation2 + $0xc4] sm:$0xf]
    %v4000 = vld [vmem:[#allocation2 + $0xd0] sm:$0xf]
    %v4001 = vld [vmem:[#allocation2 + $0xdc] sm:$0xf]
    %v4002 = vld [vmem:[#allocation2 + $0xe8] sm:$0xf]
    %v4003 = vld [vmem:[#allocation2 + $0xf4] sm:$0xf]
    %v4004 = vld [vmem:[#allocation2 + $0x100] sm:$0xf]
    %v4005 = vld [vmem:[#allocation2 + $0x10c] sm:$0xf]
    %v4006 = vld [vmem:[#allocation2 + $0x118] sm:$0xf]
    %v4007 = vld [vmem:[#allocation2 + $0x124] sm:$0xf]
    %v4008 = vld [vmem:[#allocation2 + $0x130] sm:$0xf]
    %v4009 = vld [vmem:[#allocation2 + $0x13c] sm:$0xf]
    %v4010 = vld [vmem:[#allocation2 + $0x148] sm:$0xf]
    %v4011 = vld [vmem:[#allocation2 + $0x154] sm:$0xf]
    %v4012 = vld [vmem:[#allocation2 + $0x160] sm:$0xf]
    %v4013 = vld [vmem:[#allocation2 + $0x16c] sm:$0xf]
    %v4014 = vld [vmem:[#allocation2 + $0x178] sm:$0xf]
    %v4015 = vld [vmem:[#allocation2 + $0xc8] sm:$0xf]
    %v4016 = vld [vmem:[#allocation2 + $0xd4] sm:$0xf]
    %v4017 = vld [vmem:[#allocation2 + $0xe0] sm:$0xf]
    %v4018 = vld [vmem:[#allocation2 + $0xec] sm:$0xf]
    %v4019 = vld [vmem:[#allocation2 + $0xf8] sm:$0xf]
    %v4020 = vld [vmem:[#allocation2 + $0x104] sm:$0xf]
    %v4021 = vld [vmem:[#allocation2 + $0x110] sm:$0xf]
    %v4022 = vld [vmem:[#allocation2 + $0x11c] sm:$0xf]
    %v4023 = vld [vmem:[#allocation2 + $0x128] sm:$0xf]
    %v4024 = vld [vmem:[#allocation2 + $0x134] sm:$0xf]
    %v4025 = vld [vmem:[#allocation2 + $0x140] sm:$0xf]
    %v4026 = vld [vmem:[#allocation2 + $0x14c] sm:$0xf]
    %v4027 = vld [vmem:[#allocation2 + $0x158] sm:$0xf]
    %v4028 = vld [vmem:[#allocation2 + $0x164] sm:$0xf]
    %v4029 = vld [vmem:[#allocation2 + $0x170] sm:$0xf]
    %v4030 = vld [vmem:[#allocation2 + $0x17c] sm:$0xf]
    %v4047 = vunpack.c.l.b16 %v3983
    %v4048 = vunpack.c.l.b16 %v3984
    %v4049 = vunpack.c.l.b16 %v3985
    %v4050 = vunpack.c.l.b16 %v3986
    %v4051 = vunpack.c.l.b16 %v3987
    %v4052 = vunpack.c.l.b16 %v3988
    %v4053 = vunpack.c.l.b16 %v3989
    %v4054 = vunpack.c.l.b16 %v3990
    %v4055 = vunpack.c.l.b16 %v3991
    %v4056 = vunpack.c.l.b16 %v3992
    %v4057 = vunpack.c.l.b16 %v3993
    %v4058 = vunpack.c.l.b16 %v3994
    %v4059 = vunpack.c.l.b16 %v3995
    %v4060 = vunpack.c.l.b16 %v3996
    %v4061 = vunpack.c.l.b16 %v3997
    %v4062 = vunpack.c.l.b16 %v3998
    %v4063 = vpack.c.b16 %v4048, %v4047
    %v4064 = vpack.c.b16 %v4050, %v4049
    %v4065 = vpack.c.b16 %v4052, %v4051
    %v4066 = vpack.c.b16 %v4054, %v4053
    %v4067 = vpack.c.b16 %v4056, %v4055
    %v4068 = vpack.c.b16 %v4058, %v4057
    %v4069 = vpack.c.b16 %v4060, %v4059
    %v4070 = vpack.c.b16 %v4062, %v4061
    %v4087 = vunpack.c.l.b16 %v3999
    %v4088 = vunpack.c.l.b16 %v4000
    %v4089 = vunpack.c.l.b16 %v4001
    %v4090 = vunpack.c.l.b16 %v4002
    %v4091 = vunpack.c.l.b16 %v4003
    %v4092 = vunpack.c.l.b16 %v4004
    %v4093 = vunpack.c.l.b16 %v4005
    %v4094 = vunpack.c.l.b16 %v4006
    %v4095 = vunpack.c.l.b16 %v4007
    %v4096 = vunpack.c.l.b16 %v4008
    %v4097 = vunpack.c.l.b16 %v4009
    %v4098 = vunpack.c.l.b16 %v4010
    %v4099 = vunpack.c.l.b16 %v4011
    %v4100 = vunpack.c.l.b16 %v4012
    %v4101 = vunpack.c.l.b16 %v4013
    %v4102 = vunpack.c.l.b16 %v4014
    %v4103 = vpack.c.b16 %v4088, %v4087
    %v4104 = vpack.c.b16 %v4090, %v4089
    %v4105 = vpack.c.b16 %v4092, %v4091
    %v4106 = vpack.c.b16 %v4094, %v4093
    %v4107 = vpack.c.b16 %v4096, %v4095
    %v4108 = vpack.c.b16 %v4098, %v4097
    %v4109 = vpack.c.b16 %v4100, %v4099
    %v4110 = vpack.c.b16 %v4102, %v4101
    %v4112 = vsel %vm1266, %v4063, 0
    %v4115 = vsel %vm1266, %v4064, 0
    %v4118 = vsel %vm1266, %v4065, 0
    %v4121 = vsel %vm1266, %v4066, 0
    %v4124 = vsel %vm1266, %v4067, 0
    %v4127 = vsel %vm1266, %v4068, 0
    %v4130 = vsel %vm1266, %v4069, 0
    %v4133 = vsel %vm1266, %v4070, 0
    %v4136 = vsel %vm1266, %v4103, 0
    %v4139 = vsel %vm1266, %v4104, 0
    %v4142 = vsel %vm1266, %v4105, 0
    %v4145 = vsel %vm1266, %v4106, 0
    %v4148 = vsel %vm1266, %v4107, 0
    %v4151 = vsel %vm1266, %v4108, 0
    %v4154 = vsel %vm1266, %v4109, 0
    %v4157 = vsel %vm1266, %v4110, 0
    %4159 = vmatprep.subr.bf16.mxu0 0
    %4160 = vmatpush1.bf16.xpose.msra.mxu0 %v4157
    %4161 = vmatprep.subr.bf16.mxu0 0
    %4162 = vmatpush1.bf16.xpose.msra.mxu0 %v4154
    %4163 = vmatprep.subr.bf16.mxu0 0
    %4164 = vmatpush1.bf16.xpose.msra.mxu0 %v4151
    %4165 = vmatprep.subr.bf16.mxu0 0
    %4166 = vmatpush1.bf16.xpose.msra.mxu0 %v4148
    %4167 = vmatprep.subr.bf16.mxu0 0
    %4168 = vmatpush1.bf16.xpose.msra.mxu0 %v4145
    %4169 = vmatprep.subr.bf16.mxu0 0
    %4170 = vmatpush1.bf16.xpose.msra.mxu0 %v4142
    %4171 = vmatprep.subr.bf16.mxu0 0
    %4172 = vmatpush1.bf16.xpose.msra.mxu0 %v4139
    %4173 = vmatprep.subr.bf16.mxu0 0
    %4174 = vmatpush1.bf16.xpose.msra.mxu0 %v4136
    %4175 = vmatprep.subr.bf16.mxu0 0
    %4176 = vmatpush2.bf16.xpose.msra.mxu0 0
    %4177 = vmatprep.subr.bf16.mxu0 0
    %4178 = vmatpush2.bf16.xpose.msra.mxu0 0
    %4179 = vmatprep.subr.bf16.mxu0 0
    %4180 = vmatpush2.bf16.xpose.msra.mxu0 0
    %4181 = vmatprep.subr.bf16.mxu0 0
    %4182 = vmatpush2.bf16.xpose.msra.mxu0 0
    %4183 = vmatprep.subr.bf16.mxu0 0
    %4184 = vmatpush2.bf16.xpose.msra.mxu0 0
    %4185 = vmatprep.subr.bf16.mxu0 0
    %4186 = vmatpush2.bf16.xpose.msra.mxu0 0
    %4187 = vmatprep.subr.bf16.mxu0 0
    %4188 = vmatpush2.bf16.xpose.msra.mxu0 0
    %4189 = vmatprep.subr.bf16.mxu0 0
    %4190 = vmatpush2.bf16.xpose.msra.mxu0 0
    %4191 = vmatprep.mubr.bf16.mxu0 0
    %4192 = vmatmul.mubr.bf16.gmra.mxu0 %v4112
    %v4193 = vpop.f32.mrf.mxu0
    %v4194 = vadd.f32 0.0, %v4193
    %v4195 = vpop.f32.mrf.mxu0
    %v4196 = vpop.f32.mrf.mxu0
    %v4197 = vadd.f32 0.0, %v4196
    %v4198 = vpop.f32.mrf.mxu0
    %4199 = vmatprep.mubr.bf16.mxu0 0
    %4200 = vmatmul.mubr.bf16.gmra.mxu0 %v4115
    %v4201 = vpop.f32.mrf.mxu0
    %v4202 = vadd.f32 0.0, %v4201
    %v4203 = vpop.f32.mrf.mxu0
    %v4204 = vpop.f32.mrf.mxu0
    %v4205 = vadd.f32 0.0, %v4204
    %v4206 = vpop.f32.mrf.mxu0
    %4207 = vmatprep.mubr.bf16.mxu0 0
    %4208 = vmatmul.mubr.bf16.gmra.mxu0 %v4118
    %v4209 = vpop.f32.mrf.mxu0
    %v4210 = vadd.f32 0.0, %v4209
    %v4211 = vpop.f32.mrf.mxu0
    %v4212 = vpop.f32.mrf.mxu0
    %v4213 = vadd.f32 0.0, %v4212
    %v4214 = vpop.f32.mrf.mxu0
    %4215 = vmatprep.mubr.bf16.mxu0 0
    %4216 = vmatmul.mubr.bf16.gmra.mxu0 %v4121
    %v4217 = vpop.f32.mrf.mxu0
    %v4218 = vadd.f32 0.0, %v4217
    %v4219 = vpop.f32.mrf.mxu0
    %v4220 = vpop.f32.mrf.mxu0
    %v4221 = vadd.f32 0.0, %v4220
    %v4222 = vpop.f32.mrf.mxu0
    %4223 = vmatprep.mubr.bf16.mxu0 0
    %4224 = vmatmul.mubr.bf16.gmra.mxu0 %v4124
    %v4225 = vpop.f32.mrf.mxu0
    %v4226 = vadd.f32 0.0, %v4225
    %v4227 = vpop.f32.mrf.mxu0
    %v4228 = vpop.f32.mrf.mxu0
    %v4229 = vadd.f32 0.0, %v4228
    %v4230 = vpop.f32.mrf.mxu0
    %4231 = vmatprep.mubr.bf16.mxu0 0
    %4232 = vmatmul.mubr.bf16.gmra.mxu0 %v4127
    %v4233 = vpop.f32.mrf.mxu0
    %v4234 = vadd.f32 0.0, %v4233
    %v4235 = vpop.f32.mrf.mxu0
    %v4236 = vpop.f32.mrf.mxu0
    %v4237 = vadd.f32 0.0, %v4236
    %v4238 = vpop.f32.mrf.mxu0
    %4239 = vmatprep.mubr.bf16.mxu0 0
    %4240 = vmatmul.mubr.bf16.gmra.mxu0 %v4130
    %v4241 = vpop.f32.mrf.mxu0
    %v4242 = vadd.f32 0.0, %v4241
    %v4243 = vpop.f32.mrf.mxu0
    %v4244 = vpop.f32.mrf.mxu0
    %v4245 = vadd.f32 0.0, %v4244
    %v4246 = vpop.f32.mrf.mxu0
    %4247 = vmatprep.mubr.bf16.mxu0 0
    %4248 = vmatmul.mubr.bf16.gmra.mxu0 %v4133
    %v4249 = vpop.f32.mrf.mxu0
    %v4250 = vadd.f32 0.0, %v4249
    %v4251 = vpop.f32.mrf.mxu0
    %v4252 = vpop.f32.mrf.mxu0
    %v4253 = vadd.f32 0.0, %v4252
    %v4254 = vpop.f32.mrf.mxu0
    %4255 = vdwg.mxu0
    %4256 = vmax.xlane.f32.xlu0 %v4194
    %v4257 = vpop.xlane.xlu0 %4256
    %4258 = vmax.xlane.f32.xlu0 %v4197
    %v4259 = vpop.xlane.xlu0 %4258
    %4260 = vmax.xlane.f32.xlu0 %v4202
    %v4261 = vpop.xlane.xlu0 %4260
    %4262 = vmax.xlane.f32.xlu0 %v4205
    %v4263 = vpop.xlane.xlu0 %4262
    %4264 = vmax.xlane.f32.xlu0 %v4210
    %v4265 = vpop.xlane.xlu0 %4264
    %4266 = vmax.xlane.f32.xlu0 %v4213
    %v4267 = vpop.xlane.xlu0 %4266
    %4268 = vmax.xlane.f32.xlu0 %v4218
    %v4269 = vpop.xlane.xlu0 %4268
    %4270 = vmax.xlane.f32.xlu0 %v4221
    %v4271 = vpop.xlane.xlu0 %4270
    %4272 = vmax.xlane.f32.xlu0 %v4226
    %v4273 = vpop.xlane.xlu0 %4272
    %4274 = vmax.xlane.f32.xlu0 %v4229
    %v4275 = vpop.xlane.xlu0 %4274
    %4276 = vmax.xlane.f32.xlu0 %v4234
    %v4277 = vpop.xlane.xlu0 %4276
    %4278 = vmax.xlane.f32.xlu0 %v4237
    %v4279 = vpop.xlane.xlu0 %4278
    %4280 = vmax.xlane.f32.xlu0 %v4242
    %v4281 = vpop.xlane.xlu0 %4280
    %4282 = vmax.xlane.f32.xlu0 %v4245
    %v4283 = vpop.xlane.xlu0 %4282
    %4284 = vmax.xlane.f32.xlu0 %v4250
    %v4285 = vpop.xlane.xlu0 %4284
    %4286 = vmax.xlane.f32.xlu0 %v4253
    %v4287 = vpop.xlane.xlu0 %4286
    %v4288 = vsub.f32 %v4194, %v4257
    %v4289 = vsub.f32 %v4197, %v4259
    %v4290 = vsub.f32 %v4202, %v4261
    %v4291 = vsub.f32 %v4205, %v4263
    %v4292 = vsub.f32 %v4210, %v4265
    %v4293 = vsub.f32 %v4213, %v4267
    %v4294 = vsub.f32 %v4218, %v4269
    %v4295 = vsub.f32 %v4221, %v4271
    %v4296 = vsub.f32 %v4226, %v4273
    %v4297 = vsub.f32 %v4229, %v4275
    %v4298 = vsub.f32 %v4234, %v4277
    %v4299 = vsub.f32 %v4237, %v4279
    %v4300 = vsub.f32 %v4242, %v4281
    %v4301 = vsub.f32 %v4245, %v4283
    %v4302 = vsub.f32 %v4250, %v4285
    %v4303 = vsub.f32 %v4253, %v4287
    %v4304 = vmul.f32 %v4288, 1.442695
    %v4305 = vpow.pop %v4304
    %v4306 = vmul.f32 %v4289, 1.442695
    %v4307 = vpow.pop %v4306
    %v4308 = vmul.f32 %v4290, 1.442695
    %v4309 = vpow.pop %v4308
    %v4310 = vmul.f32 %v4291, 1.442695
    %v4311 = vpow.pop %v4310
    %v4312 = vmul.f32 %v4292, 1.442695
    %v4313 = vpow.pop %v4312
    %v4314 = vmul.f32 %v4293, 1.442695
    %v4315 = vpow.pop %v4314
    %v4316 = vmul.f32 %v4294, 1.442695
    %v4317 = vpow.pop %v4316
    %v4318 = vmul.f32 %v4295, 1.442695
    %v4319 = vpow.pop %v4318
    %v4320 = vmul.f32 %v4296, 1.442695
    %v4321 = vpow.pop %v4320
    %v4322 = vmul.f32 %v4297, 1.442695
    %v4323 = vpow.pop %v4322
    %v4324 = vmul.f32 %v4298, 1.442695
    %v4325 = vpow.pop %v4324
    %v4326 = vmul.f32 %v4299, 1.442695
    %v4327 = vpow.pop %v4326
    %v4328 = vmul.f32 %v4300, 1.442695
    %v4329 = vpow.pop %v4328
    %v4330 = vmul.f32 %v4301, 1.442695
    %v4331 = vpow.pop %v4330
    %v4332 = vmul.f32 %v4302, 1.442695
    %v4333 = vpow.pop %v4332
    %v4334 = vmul.f32 %v4303, 1.442695
    %v4335 = vpow.pop %v4334
    %4336 = vadd.xlane.f32.xlu0 %v4305
    %v4337 = vpop.xlane.xlu0 %4336
    %4338 = vadd.xlane.f32.xlu0 %v4307
    %v4339 = vpop.xlane.xlu0 %4338
    %4340 = vadd.xlane.f32.xlu0 %v4309
    %v4341 = vpop.xlane.xlu0 %4340
    %4342 = vadd.xlane.f32.xlu0 %v4311
    %v4343 = vpop.xlane.xlu0 %4342
    %4344 = vadd.xlane.f32.xlu0 %v4313
    %v4345 = vpop.xlane.xlu0 %4344
    %4346 = vadd.xlane.f32.xlu0 %v4315
    %v4347 = vpop.xlane.xlu0 %4346
    %4348 = vadd.xlane.f32.xlu0 %v4317
    %v4349 = vpop.xlane.xlu0 %4348
    %4350 = vadd.xlane.f32.xlu0 %v4319
    %v4351 = vpop.xlane.xlu0 %4350
    %4352 = vadd.xlane.f32.xlu0 %v4321
    %v4353 = vpop.xlane.xlu0 %4352
    %4354 = vadd.xlane.f32.xlu0 %v4323
    %v4355 = vpop.xlane.xlu0 %4354
    %4356 = vadd.xlane.f32.xlu0 %v4325
    %v4357 = vpop.xlane.xlu0 %4356
    %4358 = vadd.xlane.f32.xlu0 %v4327
    %v4359 = vpop.xlane.xlu0 %4358
    %4360 = vadd.xlane.f32.xlu0 %v4329
    %v4361 = vpop.xlane.xlu0 %4360
    %4362 = vadd.xlane.f32.xlu0 %v4331
    %v4363 = vpop.xlane.xlu0 %4362
    %4364 = vadd.xlane.f32.xlu0 %v4333
    %v4365 = vpop.xlane.xlu0 %4364
    %4366 = vadd.xlane.f32.xlu0 %v4335
    %v4367 = vpop.xlane.xlu0 %4366
    %v4368 = vrcp.pop %v4337
    %v4369 = vrcp.pop %v4339
    %v4370 = vrcp.pop %v4341
    %v4371 = vrcp.pop %v4343
    %v4372 = vrcp.pop %v4345
    %v4373 = vrcp.pop %v4347
    %v4374 = vrcp.pop %v4349
    %v4375 = vrcp.pop %v4351
    %v4376 = vrcp.pop %v4353
    %v4377 = vrcp.pop %v4355
    %v4378 = vrcp.pop %v4357
    %v4379 = vrcp.pop %v4359
    %v4380 = vrcp.pop %v4361
    %v4381 = vrcp.pop %v4363
    %v4382 = vrcp.pop %v4365
    %v4383 = vrcp.pop %v4367
    %v4384 = vmul.f32 %v4305, %v4368
    %v4385 = vmul.f32 %v4307, %v4369
    %v4386 = vmul.f32 %v4309, %v4370
    %v4387 = vmul.f32 %v4311, %v4371
    %v4388 = vmul.f32 %v4313, %v4372
    %v4389 = vmul.f32 %v4315, %v4373
    %v4390 = vmul.f32 %v4317, %v4374
    %v4391 = vmul.f32 %v4319, %v4375
    %v4392 = vmul.f32 %v4321, %v4376
    %v4393 = vmul.f32 %v4323, %v4377
    %v4394 = vmul.f32 %v4325, %v4378
    %v4395 = vmul.f32 %v4327, %v4379
    %v4396 = vmul.f32 %v4329, %v4380
    %v4397 = vmul.f32 %v4331, %v4381
    %v4398 = vmul.f32 %v4333, %v4382
    %v4399 = vmul.f32 %v4335, %v4383
    %v4400 = vpack.c.bf16 %v4385, %v4384
    %v4401 = vpack.c.bf16 %v4387, %v4386
    %v4402 = vpack.c.bf16 %v4389, %v4388
    %v4403 = vpack.c.bf16 %v4391, %v4390
    %v4404 = vpack.c.bf16 %v4393, %v4392
    %v4405 = vpack.c.bf16 %v4395, %v4394
    %v4406 = vpack.c.bf16 %v4397, %v4396
    %v4407 = vpack.c.bf16 %v4399, %v4398
    %v4424 = vunpack.c.l.b16 %v4015
    %v4425 = vunpack.c.l.b16 %v4016
    %v4426 = vunpack.c.l.b16 %v4017
    %v4427 = vunpack.c.l.b16 %v4018
    %v4428 = vunpack.c.l.b16 %v4019
    %v4429 = vunpack.c.l.b16 %v4020
    %v4430 = vunpack.c.l.b16 %v4021
    %v4431 = vunpack.c.l.b16 %v4022
    %v4432 = vunpack.c.l.b16 %v4023
    %v4433 = vunpack.c.l.b16 %v4024
    %v4434 = vunpack.c.l.b16 %v4025
    %v4435 = vunpack.c.l.b16 %v4026
    %v4436 = vunpack.c.l.b16 %v4027
    %v4437 = vunpack.c.l.b16 %v4028
    %v4438 = vunpack.c.l.b16 %v4029
    %v4439 = vunpack.c.l.b16 %v4030
    %v4440 = vpack.c.b16 %v4425, %v4424
    %v4441 = vpack.c.b16 %v4427, %v4426
    %v4442 = vpack.c.b16 %v4429, %v4428
    %v4443 = vpack.c.b16 %v4431, %v4430
    %v4444 = vpack.c.b16 %v4433, %v4432
    %v4445 = vpack.c.b16 %v4435, %v4434
    %v4446 = vpack.c.b16 %v4437, %v4436
    %v4447 = vpack.c.b16 %v4439, %v4438
    %4456 = vmatprep.subr.bf16.mxu0 0
    %4457 = vmatpush1.bf16.msra.mxu0 %v4447
    %4458 = vmatprep.subr.bf16.mxu0 0
    %4459 = vmatpush1.bf16.msra.mxu0 %v4446
    %4460 = vmatprep.subr.bf16.mxu0 0
    %4461 = vmatpush1.bf16.msra.mxu0 %v4445
    %4462 = vmatprep.subr.bf16.mxu0 0
    %4463 = vmatpush1.bf16.msra.mxu0 %v4444
    %4464 = vmatprep.subr.bf16.mxu0 0
    %4465 = vmatpush1.bf16.msra.mxu0 %v4443
    %4466 = vmatprep.subr.bf16.mxu0 0
    %4467 = vmatpush1.bf16.msra.mxu0 %v4442
    %4468 = vmatprep.subr.bf16.mxu0 0
    %4469 = vmatpush1.bf16.msra.mxu0 %v4441
    %4470 = vmatprep.subr.bf16.mxu0 0
    %4471 = vmatpush1.bf16.msra.mxu0 %v4440
    %4472 = vmatprep.subr.bf16.mxu0 0
    %4473 = vmatpush2.bf16.msra.mxu0 0
    %4474 = vmatprep.subr.bf16.mxu0 0
    %4475 = vmatpush2.bf16.msra.mxu0 0
    %4476 = vmatprep.subr.bf16.mxu0 0
    %4477 = vmatpush2.bf16.msra.mxu0 0
    %4478 = vmatprep.subr.bf16.mxu0 0
    %4479 = vmatpush2.bf16.msra.mxu0 0
    %4480 = vmatprep.subr.bf16.mxu0 0
    %4481 = vmatpush2.bf16.msra.mxu0 0
    %4482 = vmatprep.subr.bf16.mxu0 0
    %4483 = vmatpush2.bf16.msra.mxu0 0
    %4484 = vmatprep.subr.bf16.mxu0 0
    %4485 = vmatpush2.bf16.msra.mxu0 0
    %4486 = vmatprep.subr.bf16.mxu0 0
    %4487 = vmatpush2.bf16.msra.mxu0 0
    %4488 = vmatprep.mubr.bf16.mxu0 0
    %4489 = vmatmul.mubr.bf16.gmra.mxu0 %v4400
    %v4490 = vpop.f32.mrf.mxu0
    %v4491 = vadd.f32 0.0, %v4490
    %v4492 = vpop.f32.mrf.mxu0
    %v4493 = vpop.f32.mrf.mxu0
    %v4494 = vadd.f32 0.0, %v4493
    %v4495 = vpop.f32.mrf.mxu0
    %4496 = vmatprep.mubr.bf16.mxu0 0
    %4497 = vmatmul.mubr.bf16.gmra.mxu0 %v4401
    %v4498 = vpop.f32.mrf.mxu0
    %v4499 = vadd.f32 0.0, %v4498
    %v4500 = vpop.f32.mrf.mxu0
    %v4501 = vpop.f32.mrf.mxu0
    %v4502 = vadd.f32 0.0, %v4501
    %v4503 = vpop.f32.mrf.mxu0
    %4504 = vmatprep.mubr.bf16.mxu0 0
    %4505 = vmatmul.mubr.bf16.gmra.mxu0 %v4402
    %v4506 = vpop.f32.mrf.mxu0
    %v4507 = vadd.f32 0.0, %v4506
    %v4508 = vpop.f32.mrf.mxu0
    %v4509 = vpop.f32.mrf.mxu0
    %v4510 = vadd.f32 0.0, %v4509
    %v4511 = vpop.f32.mrf.mxu0
    %4512 = vmatprep.mubr.bf16.mxu0 0
    %4513 = vmatmul.mubr.bf16.gmra.mxu0 %v4403
    %v4514 = vpop.f32.mrf.mxu0
    %v4515 = vadd.f32 0.0, %v4514
    %v4516 = vpop.f32.mrf.mxu0
    %v4517 = vpop.f32.mrf.mxu0
    %v4518 = vadd.f32 0.0, %v4517
    %v4519 = vpop.f32.mrf.mxu0
    %4520 = vmatprep.mubr.bf16.mxu0 0
    %4521 = vmatmul.mubr.bf16.gmra.mxu0 %v4404
    %v4522 = vpop.f32.mrf.mxu0
    %v4523 = vadd.f32 0.0, %v4522
    %v4524 = vpop.f32.mrf.mxu0
    %v4525 = vpop.f32.mrf.mxu0
    %v4526 = vadd.f32 0.0, %v4525
    %v4527 = vpop.f32.mrf.mxu0
    %4528 = vmatprep.mubr.bf16.mxu0 0
    %4529 = vmatmul.mubr.bf16.gmra.mxu0 %v4405
    %v4530 = vpop.f32.mrf.mxu0
    %v4531 = vadd.f32 0.0, %v4530
    %v4532 = vpop.f32.mrf.mxu0
    %v4533 = vpop.f32.mrf.mxu0
    %v4534 = vadd.f32 0.0, %v4533
    %v4535 = vpop.f32.mrf.mxu0
    %4536 = vmatprep.mubr.bf16.mxu0 0
    %4537 = vmatmul.mubr.bf16.gmra.mxu0 %v4406
    %v4538 = vpop.f32.mrf.mxu0
    %v4539 = vadd.f32 0.0, %v4538
    %v4540 = vpop.f32.mrf.mxu0
    %v4541 = vpop.f32.mrf.mxu0
    %v4542 = vadd.f32 0.0, %v4541
    %v4543 = vpop.f32.mrf.mxu0
    %4544 = vmatprep.mubr.bf16.mxu0 0
    %4545 = vmatmul.mubr.bf16.gmra.mxu0 %v4407
    %v4546 = vpop.f32.mrf.mxu0
    %v4547 = vadd.f32 0.0, %v4546
    %v4548 = vpop.f32.mrf.mxu0
    %v4549 = vpop.f32.mrf.mxu0
    %v4550 = vadd.f32 0.0, %v4549
    %v4551 = vpop.f32.mrf.mxu0
    %4552 = vdwg.mxu0
    %v4553 = vpack.c.bf16 %v4494, %v4491
    %v4554 = vpack.c.bf16 %v4502, %v4499
    %v4555 = vpack.c.bf16 %v4510, %v4507
    %v4556 = vpack.c.bf16 %v4518, %v4515
    %v4557 = vpack.c.bf16 %v4526, %v4523
    %v4558 = vpack.c.bf16 %v4534, %v4531
    %v4559 = vpack.c.bf16 %v4542, %v4539
    %v4560 = vpack.c.bf16 %v4550, %v4547
    %v4569 = vunpack.c.l.b16 %v4553
    %v4570 = vunpack.c.h.b16 %v4553
    %v4571 = vunpack.c.l.b16 %v4554
    %v4572 = vunpack.c.h.b16 %v4554
    %v4573 = vunpack.c.l.b16 %v4555
    %v4574 = vunpack.c.h.b16 %v4555
    %v4575 = vunpack.c.l.b16 %v4556
    %v4576 = vunpack.c.h.b16 %v4556
    %v4577 = vunpack.c.l.b16 %v4557
    %v4578 = vunpack.c.h.b16 %v4557
    %v4579 = vunpack.c.l.b16 %v4558
    %v4580 = vunpack.c.h.b16 %v4558
    %v4581 = vunpack.c.l.b16 %v4559
    %v4582 = vunpack.c.h.b16 %v4559
    %v4583 = vunpack.c.l.b16 %v4560
    %v4584 = vunpack.c.h.b16 %v4560
    %v4585 = vpack.c.b16 %v4569, %v4569
    %v4586 = vpack.c.b16 %v4570, %v4570
    %v4587 = vpack.c.b16 %v4571, %v4571
    %v4588 = vpack.c.b16 %v4572, %v4572
    %v4589 = vpack.c.b16 %v4573, %v4573
    %v4590 = vpack.c.b16 %v4574, %v4574
    %v4591 = vpack.c.b16 %v4575, %v4575
    %v4592 = vpack.c.b16 %v4576, %v4576
    %v4593 = vpack.c.b16 %v4577, %v4577
    %v4594 = vpack.c.b16 %v4578, %v4578
    %v4595 = vpack.c.b16 %v4579, %v4579
    %v4596 = vpack.c.b16 %v4580, %v4580
    %v4597 = vpack.c.b16 %v4581, %v4581
    %v4598 = vpack.c.b16 %v4582, %v4582
    %v4599 = vpack.c.b16 %v4583, %v4583
    %v4600 = vpack.c.b16 %v4584, %v4584
    %4617 = vst.msk [vmem:[#allocation3 + $0x40] sm:$0xf] %vm1773, %v4585
    %4618 = vst.msk [vmem:[#allocation3 + $0x44] sm:$0xf] %vm1773, %v4586
    %4619 = vst.msk [vmem:[#allocation3 + $0x48] sm:$0xf] %vm1773, %v4587
    %4620 = vst.msk [vmem:[#allocation3 + $0x4c] sm:$0xf] %vm1773, %v4588
    %4621 = vst.msk [vmem:[#allocation3 + $0x50] sm:$0xf] %vm1773, %v4589
    %4622 = vst.msk [vmem:[#allocation3 + $0x54] sm:$0xf] %vm1773, %v4590
    %4623 = vst.msk [vmem:[#allocation3 + $0x58] sm:$0xf] %vm1773, %v4591
    %4624 = vst.msk [vmem:[#allocation3 + $0x5c] sm:$0xf] %vm1773, %v4592
    %4625 = vst.msk [vmem:[#allocation3 + $0x60] sm:$0xf] %vm1773, %v4593
    %4626 = vst.msk [vmem:[#allocation3 + $0x64] sm:$0xf] %vm1773, %v4594
    %4627 = vst.msk [vmem:[#allocation3 + $0x68] sm:$0xf] %vm1773, %v4595
    %4628 = vst.msk [vmem:[#allocation3 + $0x6c] sm:$0xf] %vm1773, %v4596
    %4629 = vst.msk [vmem:[#allocation3 + $0x70] sm:$0xf] %vm1773, %v4597
    %4630 = vst.msk [vmem:[#allocation3 + $0x74] sm:$0xf] %vm1773, %v4598
    %4631 = vst.msk [vmem:[#allocation3 + $0x78] sm:$0xf] %vm1773, %v4599
    %4632 = vst.msk [vmem:[#allocation3 + $0x7c] sm:$0xf] %vm1773, %v4600
    %v4633 = vld [vmem:[#allocation2 + $0xc0] sm:$0xf]
    %v4634 = vld [vmem:[#allocation2 + $0xcc] sm:$0xf]
    %v4635 = vld [vmem:[#allocation2 + $0xd8] sm:$0xf]
    %v4636 = vld [vmem:[#allocation2 + $0xe4] sm:$0xf]
    %v4637 = vld [vmem:[#allocation2 + $0xf0] sm:$0xf]
    %v4638 = vld [vmem:[#allocation2 + $0xfc] sm:$0xf]
    %v4639 = vld [vmem:[#allocation2 + $0x108] sm:$0xf]
    %v4640 = vld [vmem:[#allocation2 + $0x114] sm:$0xf]
    %v4641 = vld [vmem:[#allocation2 + $0x120] sm:$0xf]
    %v4642 = vld [vmem:[#allocation2 + $0x12c] sm:$0xf]
    %v4643 = vld [vmem:[#allocation2 + $0x138] sm:$0xf]
    %v4644 = vld [vmem:[#allocation2 + $0x144] sm:$0xf]
    %v4645 = vld [vmem:[#allocation2 + $0x150] sm:$0xf]
    %v4646 = vld [vmem:[#allocation2 + $0x15c] sm:$0xf]
    %v4647 = vld [vmem:[#allocation2 + $0x168] sm:$0xf]
    %v4648 = vld [vmem:[#allocation2 + $0x174] sm:$0xf]
    %v4649 = vld [vmem:[#allocation2 + $0xc4] sm:$0xf]
    %v4650 = vld [vmem:[#allocation2 + $0xd0] sm:$0xf]
    %v4651 = vld [vmem:[#allocation2 + $0xdc] sm:$0xf]
    %v4652 = vld [vmem:[#allocation2 + $0xe8] sm:$0xf]
    %v4653 = vld [vmem:[#allocation2 + $0xf4] sm:$0xf]
    %v4654 = vld [vmem:[#allocation2 + $0x100] sm:$0xf]
    %v4655 = vld [vmem:[#allocation2 + $0x10c] sm:$0xf]
    %v4656 = vld [vmem:[#allocation2 + $0x118] sm:$0xf]
    %v4657 = vld [vmem:[#allocation2 + $0x124] sm:$0xf]
    %v4658 = vld [vmem:[#allocation2 + $0x130] sm:$0xf]
    %v4659 = vld [vmem:[#allocation2 + $0x13c] sm:$0xf]
    %v4660 = vld [vmem:[#allocation2 + $0x148] sm:$0xf]
    %v4661 = vld [vmem:[#allocation2 + $0x154] sm:$0xf]
    %v4662 = vld [vmem:[#allocation2 + $0x160] sm:$0xf]
    %v4663 = vld [vmem:[#allocation2 + $0x16c] sm:$0xf]
    %v4664 = vld [vmem:[#allocation2 + $0x178] sm:$0xf]
    %v4665 = vld [vmem:[#allocation2 + $0xc8] sm:$0xf]
    %v4666 = vld [vmem:[#allocation2 + $0xd4] sm:$0xf]
    %v4667 = vld [vmem:[#allocation2 + $0xe0] sm:$0xf]
    %v4668 = vld [vmem:[#allocation2 + $0xec] sm:$0xf]
    %v4669 = vld [vmem:[#allocation2 + $0xf8] sm:$0xf]
    %v4670 = vld [vmem:[#allocation2 + $0x104] sm:$0xf]
    %v4671 = vld [vmem:[#allocation2 + $0x110] sm:$0xf]
    %v4672 = vld [vmem:[#allocation2 + $0x11c] sm:$0xf]
    %v4673 = vld [vmem:[#allocation2 + $0x128] sm:$0xf]
    %v4674 = vld [vmem:[#allocation2 + $0x134] sm:$0xf]
    %v4675 = vld [vmem:[#allocation2 + $0x140] sm:$0xf]
    %v4676 = vld [vmem:[#allocation2 + $0x14c] sm:$0xf]
    %v4677 = vld [vmem:[#allocation2 + $0x158] sm:$0xf]
    %v4678 = vld [vmem:[#allocation2 + $0x164] sm:$0xf]
    %v4679 = vld [vmem:[#allocation2 + $0x170] sm:$0xf]
    %v4680 = vld [vmem:[#allocation2 + $0x17c] sm:$0xf]
    %v4697 = vunpack.c.l.b16 %v4633
    %v4698 = vunpack.c.l.b16 %v4634
    %v4699 = vunpack.c.l.b16 %v4635
    %v4700 = vunpack.c.l.b16 %v4636
    %v4701 = vunpack.c.l.b16 %v4637
    %v4702 = vunpack.c.l.b16 %v4638
    %v4703 = vunpack.c.l.b16 %v4639
    %v4704 = vunpack.c.l.b16 %v4640
    %v4705 = vunpack.c.l.b16 %v4641
    %v4706 = vunpack.c.l.b16 %v4642
    %v4707 = vunpack.c.l.b16 %v4643
    %v4708 = vunpack.c.l.b16 %v4644
    %v4709 = vunpack.c.l.b16 %v4645
    %v4710 = vunpack.c.l.b16 %v4646
    %v4711 = vunpack.c.l.b16 %v4647
    %v4712 = vunpack.c.l.b16 %v4648
    %v4713 = vpack.c.b16 %v4698, %v4697
    %v4714 = vpack.c.b16 %v4700, %v4699
    %v4715 = vpack.c.b16 %v4702, %v4701
    %v4716 = vpack.c.b16 %v4704, %v4703
    %v4717 = vpack.c.b16 %v4706, %v4705
    %v4718 = vpack.c.b16 %v4708, %v4707
    %v4719 = vpack.c.b16 %v4710, %v4709
    %v4720 = vpack.c.b16 %v4712, %v4711
    %4721 = vrot.lane.b32.xlu0 %v4713, 96
    %v4722 = vpop.permute.xlu0 %4721
    %4723 = vrot.lane.b32.xlu0 %v4714, 96
    %v4724 = vpop.permute.xlu0 %4723
    %4725 = vrot.lane.b32.xlu0 %v4715, 96
    %v4726 = vpop.permute.xlu0 %4725
    %4727 = vrot.lane.b32.xlu0 %v4716, 96
    %v4728 = vpop.permute.xlu0 %4727
    %4729 = vrot.lane.b32.xlu0 %v4717, 96
    %v4730 = vpop.permute.xlu0 %4729
    %4731 = vrot.lane.b32.xlu0 %v4718, 96
    %v4732 = vpop.permute.xlu0 %4731
    %4733 = vrot.lane.b32.xlu0 %v4719, 96
    %v4734 = vpop.permute.xlu0 %4733
    %4735 = vrot.lane.b32.xlu0 %v4720, 96
    %v4736 = vpop.permute.xlu0 %4735
    %v4753 = vunpack.c.l.b16 %v4649
    %v4754 = vunpack.c.l.b16 %v4650
    %v4755 = vunpack.c.l.b16 %v4651
    %v4756 = vunpack.c.l.b16 %v4652
    %v4757 = vunpack.c.l.b16 %v4653
    %v4758 = vunpack.c.l.b16 %v4654
    %v4759 = vunpack.c.l.b16 %v4655
    %v4760 = vunpack.c.l.b16 %v4656
    %v4761 = vunpack.c.l.b16 %v4657
    %v4762 = vunpack.c.l.b16 %v4658
    %v4763 = vunpack.c.l.b16 %v4659
    %v4764 = vunpack.c.l.b16 %v4660
    %v4765 = vunpack.c.l.b16 %v4661
    %v4766 = vunpack.c.l.b16 %v4662
    %v4767 = vunpack.c.l.b16 %v4663
    %v4768 = vunpack.c.l.b16 %v4664
    %v4769 = vpack.c.b16 %v4754, %v4753
    %v4770 = vpack.c.b16 %v4756, %v4755
    %v4771 = vpack.c.b16 %v4758, %v4757
    %v4772 = vpack.c.b16 %v4760, %v4759
    %v4773 = vpack.c.b16 %v4762, %v4761
    %v4774 = vpack.c.b16 %v4764, %v4763
    %v4775 = vpack.c.b16 %v4766, %v4765
    %v4776 = vpack.c.b16 %v4768, %v4767
    %4777 = vrot.lane.b32.xlu0 %v4769, 96
    %v4778 = vpop.permute.xlu0 %4777
    %4779 = vrot.lane.b32.xlu0 %v4770, 96
    %v4780 = vpop.permute.xlu0 %4779
    %4781 = vrot.lane.b32.xlu0 %v4771, 96
    %v4782 = vpop.permute.xlu0 %4781
    %4783 = vrot.lane.b32.xlu0 %v4772, 96
    %v4784 = vpop.permute.xlu0 %4783
    %4785 = vrot.lane.b32.xlu0 %v4773, 96
    %v4786 = vpop.permute.xlu0 %4785
    %4787 = vrot.lane.b32.xlu0 %v4774, 96
    %v4788 = vpop.permute.xlu0 %4787
    %4789 = vrot.lane.b32.xlu0 %v4775, 96
    %v4790 = vpop.permute.xlu0 %4789
    %4791 = vrot.lane.b32.xlu0 %v4776, 96
    %v4792 = vpop.permute.xlu0 %4791
    %v4794 = vsel %vm1266, %v4722, 0
    %v4797 = vsel %vm1266, %v4724, 0
    %v4800 = vsel %vm1266, %v4726, 0
    %v4803 = vsel %vm1266, %v4728, 0
    %v4806 = vsel %vm1266, %v4730, 0
    %v4809 = vsel %vm1266, %v4732, 0
    %v4812 = vsel %vm1266, %v4734, 0
    %v4815 = vsel %vm1266, %v4736, 0
    %v4818 = vsel %vm1266, %v4778, 0
    %v4821 = vsel %vm1266, %v4780, 0
    %v4824 = vsel %vm1266, %v4782, 0
    %v4827 = vsel %vm1266, %v4784, 0
    %v4830 = vsel %vm1266, %v4786, 0
    %v4833 = vsel %vm1266, %v4788, 0
    %v4836 = vsel %vm1266, %v4790, 0
    %v4839 = vsel %vm1266, %v4792, 0
    %4841 = vmatprep.subr.bf16.mxu0 0
    %4842 = vmatpush1.bf16.xpose.msra.mxu0 %v4839
    %4843 = vmatprep.subr.bf16.mxu0 0
    %4844 = vmatpush1.bf16.xpose.msra.mxu0 %v4836
    %4845 = vmatprep.subr.bf16.mxu0 0
    %4846 = vmatpush1.bf16.xpose.msra.mxu0 %v4833
    %4847 = vmatprep.subr.bf16.mxu0 0
    %4848 = vmatpush1.bf16.xpose.msra.mxu0 %v4830
    %4849 = vmatprep.subr.bf16.mxu0 0
    %4850 = vmatpush1.bf16.xpose.msra.mxu0 %v4827
    %4851 = vmatprep.subr.bf16.mxu0 0
    %4852 = vmatpush1.bf16.xpose.msra.mxu0 %v4824
    %4853 = vmatprep.subr.bf16.mxu0 0
    %4854 = vmatpush1.bf16.xpose.msra.mxu0 %v4821
    %4855 = vmatprep.subr.bf16.mxu0 0
    %4856 = vmatpush1.bf16.xpose.msra.mxu0 %v4818
    %4857 = vmatprep.subr.bf16.mxu0 0
    %4858 = vmatpush2.bf16.xpose.msra.mxu0 0
    %4859 = vmatprep.subr.bf16.mxu0 0
    %4860 = vmatpush2.bf16.xpose.msra.mxu0 0
    %4861 = vmatprep.subr.bf16.mxu0 0
    %4862 = vmatpush2.bf16.xpose.msra.mxu0 0
    %4863 = vmatprep.subr.bf16.mxu0 0
    %4864 = vmatpush2.bf16.xpose.msra.mxu0 0
    %4865 = vmatprep.subr.bf16.mxu0 0
    %4866 = vmatpush2.bf16.xpose.msra.mxu0 0
    %4867 = vmatprep.subr.bf16.mxu0 0
    %4868 = vmatpush2.bf16.xpose.msra.mxu0 0
    %4869 = vmatprep.subr.bf16.mxu0 0
    %4870 = vmatpush2.bf16.xpose.msra.mxu0 0
    %4871 = vmatprep.subr.bf16.mxu0 0
    %4872 = vmatpush2.bf16.xpose.msra.mxu0 0
    %4873 = vmatprep.mubr.bf16.mxu0 0
    %4874 = vmatmul.mubr.bf16.gmra.mxu0 %v4794
    %v4875 = vpop.f32.mrf.mxu0
    %v4876 = vadd.f32 0.0, %v4875
    %v4877 = vpop.f32.mrf.mxu0
    %v4878 = vpop.f32.mrf.mxu0
    %v4879 = vadd.f32 0.0, %v4878
    %v4880 = vpop.f32.mrf.mxu0
    %4881 = vmatprep.mubr.bf16.mxu0 0
    %4882 = vmatmul.mubr.bf16.gmra.mxu0 %v4797
    %v4883 = vpop.f32.mrf.mxu0
    %v4884 = vadd.f32 0.0, %v4883
    %v4885 = vpop.f32.mrf.mxu0
    %v4886 = vpop.f32.mrf.mxu0
    %v4887 = vadd.f32 0.0, %v4886
    %v4888 = vpop.f32.mrf.mxu0
    %4889 = vmatprep.mubr.bf16.mxu0 0
    %4890 = vmatmul.mubr.bf16.gmra.mxu0 %v4800
    %v4891 = vpop.f32.mrf.mxu0
    %v4892 = vadd.f32 0.0, %v4891
    %v4893 = vpop.f32.mrf.mxu0
    %v4894 = vpop.f32.mrf.mxu0
    %v4895 = vadd.f32 0.0, %v4894
    %v4896 = vpop.f32.mrf.mxu0
    %4897 = vmatprep.mubr.bf16.mxu0 0
    %4898 = vmatmul.mubr.bf16.gmra.mxu0 %v4803
    %v4899 = vpop.f32.mrf.mxu0
    %v4900 = vadd.f32 0.0, %v4899
    %v4901 = vpop.f32.mrf.mxu0
    %v4902 = vpop.f32.mrf.mxu0
    %v4903 = vadd.f32 0.0, %v4902
    %v4904 = vpop.f32.mrf.mxu0
    %4905 = vmatprep.mubr.bf16.mxu0 0
    %4906 = vmatmul.mubr.bf16.gmra.mxu0 %v4806
    %v4907 = vpop.f32.mrf.mxu0
    %v4908 = vadd.f32 0.0, %v4907
    %v4909 = vpop.f32.mrf.mxu0
    %v4910 = vpop.f32.mrf.mxu0
    %v4911 = vadd.f32 0.0, %v4910
    %v4912 = vpop.f32.mrf.mxu0
    %4913 = vmatprep.mubr.bf16.mxu0 0
    %4914 = vmatmul.mubr.bf16.gmra.mxu0 %v4809
    %v4915 = vpop.f32.mrf.mxu0
    %v4916 = vadd.f32 0.0, %v4915
    %v4917 = vpop.f32.mrf.mxu0
    %v4918 = vpop.f32.mrf.mxu0
    %v4919 = vadd.f32 0.0, %v4918
    %v4920 = vpop.f32.mrf.mxu0
    %4921 = vmatprep.mubr.bf16.mxu0 0
    %4922 = vmatmul.mubr.bf16.gmra.mxu0 %v4812
    %v4923 = vpop.f32.mrf.mxu0
    %v4924 = vadd.f32 0.0, %v4923
    %v4925 = vpop.f32.mrf.mxu0
    %v4926 = vpop.f32.mrf.mxu0
    %v4927 = vadd.f32 0.0, %v4926
    %v4928 = vpop.f32.mrf.mxu0
    %4929 = vmatprep.mubr.bf16.mxu0 0
    %4930 = vmatmul.mubr.bf16.gmra.mxu0 %v4815
    %v4931 = vpop.f32.mrf.mxu0
    %v4932 = vadd.f32 0.0, %v4931
    %v4933 = vpop.f32.mrf.mxu0
    %v4934 = vpop.f32.mrf.mxu0
    %v4935 = vadd.f32 0.0, %v4934
    %v4936 = vpop.f32.mrf.mxu0
    %4937 = vdwg.mxu0
    %4938 = vmax.xlane.f32.xlu0 %v4876
    %v4939 = vpop.xlane.xlu0 %4938
    %4940 = vmax.xlane.f32.xlu0 %v4879
    %v4941 = vpop.xlane.xlu0 %4940
    %4942 = vmax.xlane.f32.xlu0 %v4884
    %v4943 = vpop.xlane.xlu0 %4942
    %4944 = vmax.xlane.f32.xlu0 %v4887
    %v4945 = vpop.xlane.xlu0 %4944
    %4946 = vmax.xlane.f32.xlu0 %v4892
    %v4947 = vpop.xlane.xlu0 %4946
    %4948 = vmax.xlane.f32.xlu0 %v4895
    %v4949 = vpop.xlane.xlu0 %4948
    %4950 = vmax.xlane.f32.xlu0 %v4900
    %v4951 = vpop.xlane.xlu0 %4950
    %4952 = vmax.xlane.f32.xlu0 %v4903
    %v4953 = vpop.xlane.xlu0 %4952
    %4954 = vmax.xlane.f32.xlu0 %v4908
    %v4955 = vpop.xlane.xlu0 %4954
    %4956 = vmax.xlane.f32.xlu0 %v4911
    %v4957 = vpop.xlane.xlu0 %4956
    %4958 = vmax.xlane.f32.xlu0 %v4916
    %v4959 = vpop.xlane.xlu0 %4958
    %4960 = vmax.xlane.f32.xlu0 %v4919
    %v4961 = vpop.xlane.xlu0 %4960
    %4962 = vmax.xlane.f32.xlu0 %v4924
    %v4963 = vpop.xlane.xlu0 %4962
    %4964 = vmax.xlane.f32.xlu0 %v4927
    %v4965 = vpop.xlane.xlu0 %4964
    %4966 = vmax.xlane.f32.xlu0 %v4932
    %v4967 = vpop.xlane.xlu0 %4966
    %4968 = vmax.xlane.f32.xlu0 %v4935
    %v4969 = vpop.xlane.xlu0 %4968
    %v4970 = vsub.f32 %v4876, %v4939
    %v4971 = vsub.f32 %v4879, %v4941
    %v4972 = vsub.f32 %v4884, %v4943
    %v4973 = vsub.f32 %v4887, %v4945
    %v4974 = vsub.f32 %v4892, %v4947
    %v4975 = vsub.f32 %v4895, %v4949
    %v4976 = vsub.f32 %v4900, %v4951
    %v4977 = vsub.f32 %v4903, %v4953
    %v4978 = vsub.f32 %v4908, %v4955
    %v4979 = vsub.f32 %v4911, %v4957
    %v4980 = vsub.f32 %v4916, %v4959
    %v4981 = vsub.f32 %v4919, %v4961
    %v4982 = vsub.f32 %v4924, %v4963
    %v4983 = vsub.f32 %v4927, %v4965
    %v4984 = vsub.f32 %v4932, %v4967
    %v4985 = vsub.f32 %v4935, %v4969
    %v4986 = vmul.f32 %v4970, 1.442695
    %v4987 = vpow.pop %v4986
    %v4988 = vmul.f32 %v4971, 1.442695
    %v4989 = vpow.pop %v4988
    %v4990 = vmul.f32 %v4972, 1.442695
    %v4991 = vpow.pop %v4990
    %v4992 = vmul.f32 %v4973, 1.442695
    %v4993 = vpow.pop %v4992
    %v4994 = vmul.f32 %v4974, 1.442695
    %v4995 = vpow.pop %v4994
    %v4996 = vmul.f32 %v4975, 1.442695
    %v4997 = vpow.pop %v4996
    %v4998 = vmul.f32 %v4976, 1.442695
    %v4999 = vpow.pop %v4998
    %v5000 = vmul.f32 %v4977, 1.442695
    %v5001 = vpow.pop %v5000
    %v5002 = vmul.f32 %v4978, 1.442695
    %v5003 = vpow.pop %v5002
    %v5004 = vmul.f32 %v4979, 1.442695
    %v5005 = vpow.pop %v5004
    %v5006 = vmul.f32 %v4980, 1.442695
    %v5007 = vpow.pop %v5006
    %v5008 = vmul.f32 %v4981, 1.442695
    %v5009 = vpow.pop %v5008
    %v5010 = vmul.f32 %v4982, 1.442695
    %v5011 = vpow.pop %v5010
    %v5012 = vmul.f32 %v4983, 1.442695
    %v5013 = vpow.pop %v5012
    %v5014 = vmul.f32 %v4984, 1.442695
    %v5015 = vpow.pop %v5014
    %v5016 = vmul.f32 %v4985, 1.442695
    %v5017 = vpow.pop %v5016
    %5018 = vadd.xlane.f32.xlu0 %v4987
    %v5019 = vpop.xlane.xlu0 %5018
    %5020 = vadd.xlane.f32.xlu0 %v4989
    %v5021 = vpop.xlane.xlu0 %5020
    %5022 = vadd.xlane.f32.xlu0 %v4991
    %v5023 = vpop.xlane.xlu0 %5022
    %5024 = vadd.xlane.f32.xlu0 %v4993
    %v5025 = vpop.xlane.xlu0 %5024
    %5026 = vadd.xlane.f32.xlu0 %v4995
    %v5027 = vpop.xlane.xlu0 %5026
    %5028 = vadd.xlane.f32.xlu0 %v4997
    %v5029 = vpop.xlane.xlu0 %5028
    %5030 = vadd.xlane.f32.xlu0 %v4999
    %v5031 = vpop.xlane.xlu0 %5030
    %5032 = vadd.xlane.f32.xlu0 %v5001
    %v5033 = vpop.xlane.xlu0 %5032
    %5034 = vadd.xlane.f32.xlu0 %v5003
    %v5035 = vpop.xlane.xlu0 %5034
    %5036 = vadd.xlane.f32.xlu0 %v5005
    %v5037 = vpop.xlane.xlu0 %5036
    %5038 = vadd.xlane.f32.xlu0 %v5007
    %v5039 = vpop.xlane.xlu0 %5038
    %5040 = vadd.xlane.f32.xlu0 %v5009
    %v5041 = vpop.xlane.xlu0 %5040
    %5042 = vadd.xlane.f32.xlu0 %v5011
    %v5043 = vpop.xlane.xlu0 %5042
    %5044 = vadd.xlane.f32.xlu0 %v5013
    %v5045 = vpop.xlane.xlu0 %5044
    %5046 = vadd.xlane.f32.xlu0 %v5015
    %v5047 = vpop.xlane.xlu0 %5046
    %5048 = vadd.xlane.f32.xlu0 %v5017
    %v5049 = vpop.xlane.xlu0 %5048
    %v5050 = vrcp.pop %v5019
    %v5051 = vrcp.pop %v5021
    %v5052 = vrcp.pop %v5023
    %v5053 = vrcp.pop %v5025
    %v5054 = vrcp.pop %v5027
    %v5055 = vrcp.pop %v5029
    %v5056 = vrcp.pop %v5031
    %v5057 = vrcp.pop %v5033
    %v5058 = vrcp.pop %v5035
    %v5059 = vrcp.pop %v5037
    %v5060 = vrcp.pop %v5039
    %v5061 = vrcp.pop %v5041
    %v5062 = vrcp.pop %v5043
    %v5063 = vrcp.pop %v5045
    %v5064 = vrcp.pop %v5047
    %v5065 = vrcp.pop %v5049
    %v5066 = vmul.f32 %v4987, %v5050
    %v5067 = vmul.f32 %v4989, %v5051
    %v5068 = vmul.f32 %v4991, %v5052
    %v5069 = vmul.f32 %v4993, %v5053
    %v5070 = vmul.f32 %v4995, %v5054
    %v5071 = vmul.f32 %v4997, %v5055
    %v5072 = vmul.f32 %v4999, %v5056
    %v5073 = vmul.f32 %v5001, %v5057
    %v5074 = vmul.f32 %v5003, %v5058
    %v5075 = vmul.f32 %v5005, %v5059
    %v5076 = vmul.f32 %v5007, %v5060
    %v5077 = vmul.f32 %v5009, %v5061
    %v5078 = vmul.f32 %v5011, %v5062
    %v5079 = vmul.f32 %v5013, %v5063
    %v5080 = vmul.f32 %v5015, %v5064
    %v5081 = vmul.f32 %v5017, %v5065
    %v5082 = vpack.c.bf16 %v5067, %v5066
    %v5083 = vpack.c.bf16 %v5069, %v5068
    %v5084 = vpack.c.bf16 %v5071, %v5070
    %v5085 = vpack.c.bf16 %v5073, %v5072
    %v5086 = vpack.c.bf16 %v5075, %v5074
    %v5087 = vpack.c.bf16 %v5077, %v5076
    %v5088 = vpack.c.bf16 %v5079, %v5078
    %v5089 = vpack.c.bf16 %v5081, %v5080
    %v5106 = vunpack.c.l.b16 %v4665
    %v5107 = vunpack.c.l.b16 %v4666
    %v5108 = vunpack.c.l.b16 %v4667
    %v5109 = vunpack.c.l.b16 %v4668
    %v5110 = vunpack.c.l.b16 %v4669
    %v5111 = vunpack.c.l.b16 %v4670
    %v5112 = vunpack.c.l.b16 %v4671
    %v5113 = vunpack.c.l.b16 %v4672
    %v5114 = vunpack.c.l.b16 %v4673
    %v5115 = vunpack.c.l.b16 %v4674
    %v5116 = vunpack.c.l.b16 %v4675
    %v5117 = vunpack.c.l.b16 %v4676
    %v5118 = vunpack.c.l.b16 %v4677
    %v5119 = vunpack.c.l.b16 %v4678
    %v5120 = vunpack.c.l.b16 %v4679
    %v5121 = vunpack.c.l.b16 %v4680
    %v5122 = vpack.c.b16 %v5107, %v5106
    %v5123 = vpack.c.b16 %v5109, %v5108
    %v5124 = vpack.c.b16 %v5111, %v5110
    %v5125 = vpack.c.b16 %v5113, %v5112
    %v5126 = vpack.c.b16 %v5115, %v5114
    %v5127 = vpack.c.b16 %v5117, %v5116
    %v5128 = vpack.c.b16 %v5119, %v5118
    %v5129 = vpack.c.b16 %v5121, %v5120
    %5130 = vrot.lane.b32.xlu0 %v5122, 96
    %v5131 = vpop.permute.xlu0 %5130
    %5132 = vrot.lane.b32.xlu0 %v5123, 96
    %v5133 = vpop.permute.xlu0 %5132
    %5134 = vrot.lane.b32.xlu0 %v5124, 96
    %v5135 = vpop.permute.xlu0 %5134
    %5136 = vrot.lane.b32.xlu0 %v5125, 96
    %v5137 = vpop.permute.xlu0 %5136
    %5138 = vrot.lane.b32.xlu0 %v5126, 96
    %v5139 = vpop.permute.xlu0 %5138
    %5140 = vrot.lane.b32.xlu0 %v5127, 96
    %v5141 = vpop.permute.xlu0 %5140
    %5142 = vrot.lane.b32.xlu0 %v5128, 96
    %v5143 = vpop.permute.xlu0 %5142
    %5144 = vrot.lane.b32.xlu0 %v5129, 96
    %v5145 = vpop.permute.xlu0 %5144
    %5154 = vmatprep.subr.bf16.mxu0 0
    %5155 = vmatpush1.bf16.msra.mxu0 %v5145
    %5156 = vmatprep.subr.bf16.mxu0 0
    %5157 = vmatpush1.bf16.msra.mxu0 %v5143
    %5158 = vmatprep.subr.bf16.mxu0 0
    %5159 = vmatpush1.bf16.msra.mxu0 %v5141
    %5160 = vmatprep.subr.bf16.mxu0 0
    %5161 = vmatpush1.bf16.msra.mxu0 %v5139
    %5162 = vmatprep.subr.bf16.mxu0 0
    %5163 = vmatpush1.bf16.msra.mxu0 %v5137
    %5164 = vmatprep.subr.bf16.mxu0 0
    %5165 = vmatpush1.bf16.msra.mxu0 %v5135
    %5166 = vmatprep.subr.bf16.mxu0 0
    %5167 = vmatpush1.bf16.msra.mxu0 %v5133
    %5168 = vmatprep.subr.bf16.mxu0 0
    %5169 = vmatpush1.bf16.msra.mxu0 %v5131
    %5170 = vmatprep.subr.bf16.mxu0 0
    %5171 = vmatpush2.bf16.msra.mxu0 0
    %5172 = vmatprep.subr.bf16.mxu0 0
    %5173 = vmatpush2.bf16.msra.mxu0 0
    %5174 = vmatprep.subr.bf16.mxu0 0
    %5175 = vmatpush2.bf16.msra.mxu0 0
    %5176 = vmatprep.subr.bf16.mxu0 0
    %5177 = vmatpush2.bf16.msra.mxu0 0
    %5178 = vmatprep.subr.bf16.mxu0 0
    %5179 = vmatpush2.bf16.msra.mxu0 0
    %5180 = vmatprep.subr.bf16.mxu0 0
    %5181 = vmatpush2.bf16.msra.mxu0 0
    %5182 = vmatprep.subr.bf16.mxu0 0
    %5183 = vmatpush2.bf16.msra.mxu0 0
    %5184 = vmatprep.subr.bf16.mxu0 0
    %5185 = vmatpush2.bf16.msra.mxu0 0
    %5186 = vmatprep.mubr.bf16.mxu0 0
    %5187 = vmatmul.mubr.bf16.gmra.mxu0 %v5082
    %v5188 = vpop.f32.mrf.mxu0
    %v5189 = vadd.f32 0.0, %v5188
    %v5190 = vpop.f32.mrf.mxu0
    %v5191 = vpop.f32.mrf.mxu0
    %v5192 = vadd.f32 0.0, %v5191
    %v5193 = vpop.f32.mrf.mxu0
    %5194 = vmatprep.mubr.bf16.mxu0 0
    %5195 = vmatmul.mubr.bf16.gmra.mxu0 %v5083
    %v5196 = vpop.f32.mrf.mxu0
    %v5197 = vadd.f32 0.0, %v5196
    %v5198 = vpop.f32.mrf.mxu0
    %v5199 = vpop.f32.mrf.mxu0
    %v5200 = vadd.f32 0.0, %v5199
    %v5201 = vpop.f32.mrf.mxu0
    %5202 = vmatprep.mubr.bf16.mxu0 0
    %5203 = vmatmul.mubr.bf16.gmra.mxu0 %v5084
    %v5204 = vpop.f32.mrf.mxu0
    %v5205 = vadd.f32 0.0, %v5204
    %v5206 = vpop.f32.mrf.mxu0
    %v5207 = vpop.f32.mrf.mxu0
    %v5208 = vadd.f32 0.0, %v5207
    %v5209 = vpop.f32.mrf.mxu0
    %5210 = vmatprep.mubr.bf16.mxu0 0
    %5211 = vmatmul.mubr.bf16.gmra.mxu0 %v5085
    %v5212 = vpop.f32.mrf.mxu0
    %v5213 = vadd.f32 0.0, %v5212
    %v5214 = vpop.f32.mrf.mxu0
    %v5215 = vpop.f32.mrf.mxu0
    %v5216 = vadd.f32 0.0, %v5215
    %v5217 = vpop.f32.mrf.mxu0
    %5218 = vmatprep.mubr.bf16.mxu0 0
    %5219 = vmatmul.mubr.bf16.gmra.mxu0 %v5086
    %v5220 = vpop.f32.mrf.mxu0
    %v5221 = vadd.f32 0.0, %v5220
    %v5222 = vpop.f32.mrf.mxu0
    %v5223 = vpop.f32.mrf.mxu0
    %v5224 = vadd.f32 0.0, %v5223
    %v5225 = vpop.f32.mrf.mxu0
    %5226 = vmatprep.mubr.bf16.mxu0 0
    %5227 = vmatmul.mubr.bf16.gmra.mxu0 %v5087
    %v5228 = vpop.f32.mrf.mxu0
    %v5229 = vadd.f32 0.0, %v5228
    %v5230 = vpop.f32.mrf.mxu0
    %v5231 = vpop.f32.mrf.mxu0
    %v5232 = vadd.f32 0.0, %v5231
    %v5233 = vpop.f32.mrf.mxu0
    %5234 = vmatprep.mubr.bf16.mxu0 0
    %5235 = vmatmul.mubr.bf16.gmra.mxu0 %v5088
    %v5236 = vpop.f32.mrf.mxu0
    %v5237 = vadd.f32 0.0, %v5236
    %v5238 = vpop.f32.mrf.mxu0
    %v5239 = vpop.f32.mrf.mxu0
    %v5240 = vadd.f32 0.0, %v5239
    %v5241 = vpop.f32.mrf.mxu0
    %5242 = vmatprep.mubr.bf16.mxu0 0
    %5243 = vmatmul.mubr.bf16.gmra.mxu0 %v5089
    %v5244 = vpop.f32.mrf.mxu0
    %v5245 = vadd.f32 0.0, %v5244
    %v5246 = vpop.f32.mrf.mxu0
    %v5247 = vpop.f32.mrf.mxu0
    %v5248 = vadd.f32 0.0, %v5247
    %v5249 = vpop.f32.mrf.mxu0
    %5250 = vdwg.mxu0
    %v5251 = vpack.c.bf16 %v5192, %v5189
    %v5252 = vpack.c.bf16 %v5200, %v5197
    %v5253 = vpack.c.bf16 %v5208, %v5205
    %v5254 = vpack.c.bf16 %v5216, %v5213
    %v5255 = vpack.c.bf16 %v5224, %v5221
    %v5256 = vpack.c.bf16 %v5232, %v5229
    %v5257 = vpack.c.bf16 %v5240, %v5237
    %v5258 = vpack.c.bf16 %v5248, %v5245
    %v5267 = vunpack.c.l.b16 %v5251
    %v5268 = vunpack.c.h.b16 %v5251
    %v5269 = vunpack.c.l.b16 %v5252
    %v5270 = vunpack.c.h.b16 %v5252
    %v5271 = vunpack.c.l.b16 %v5253
    %v5272 = vunpack.c.h.b16 %v5253
    %v5273 = vunpack.c.l.b16 %v5254
    %v5274 = vunpack.c.h.b16 %v5254
    %v5275 = vunpack.c.l.b16 %v5255
    %v5276 = vunpack.c.h.b16 %v5255
    %v5277 = vunpack.c.l.b16 %v5256
    %v5278 = vunpack.c.h.b16 %v5256
    %v5279 = vunpack.c.l.b16 %v5257
    %v5280 = vunpack.c.h.b16 %v5257
    %v5281 = vunpack.c.l.b16 %v5258
    %v5282 = vunpack.c.h.b16 %v5258
    %v5283 = vpack.c.b16 %v5267, %v5267
    %v5284 = vpack.c.b16 %v5268, %v5268
    %v5285 = vpack.c.b16 %v5269, %v5269
    %v5286 = vpack.c.b16 %v5270, %v5270
    %v5287 = vpack.c.b16 %v5271, %v5271
    %v5288 = vpack.c.b16 %v5272, %v5272
    %v5289 = vpack.c.b16 %v5273, %v5273
    %v5290 = vpack.c.b16 %v5274, %v5274
    %v5291 = vpack.c.b16 %v5275, %v5275
    %v5292 = vpack.c.b16 %v5276, %v5276
    %v5293 = vpack.c.b16 %v5277, %v5277
    %v5294 = vpack.c.b16 %v5278, %v5278
    %v5295 = vpack.c.b16 %v5279, %v5279
    %v5296 = vpack.c.b16 %v5280, %v5280
    %v5297 = vpack.c.b16 %v5281, %v5281
    %v5298 = vpack.c.b16 %v5282, %v5282
    %5299 = vrot.lane.b32.xlu0 %v5283, 32
    %v5300 = vpop.permute.xlu0 %5299
    %5301 = vrot.lane.b32.xlu0 %v5284, 32
    %v5302 = vpop.permute.xlu0 %5301
    %5303 = vrot.lane.b32.xlu0 %v5285, 32
    %v5304 = vpop.permute.xlu0 %5303
    %5305 = vrot.lane.b32.xlu0 %v5286, 32
    %v5306 = vpop.permute.xlu0 %5305
    %5307 = vrot.lane.b32.xlu0 %v5287, 32
    %v5308 = vpop.permute.xlu0 %5307
    %5309 = vrot.lane.b32.xlu0 %v5288, 32
    %v5310 = vpop.permute.xlu0 %5309
    %5311 = vrot.lane.b32.xlu0 %v5289, 32
    %v5312 = vpop.permute.xlu0 %5311
    %5313 = vrot.lane.b32.xlu0 %v5290, 32
    %v5314 = vpop.permute.xlu0 %5313
    %5315 = vrot.lane.b32.xlu0 %v5291, 32
    %v5316 = vpop.permute.xlu0 %5315
    %5317 = vrot.lane.b32.xlu0 %v5292, 32
    %v5318 = vpop.permute.xlu0 %5317
    %5319 = vrot.lane.b32.xlu0 %v5293, 32
    %v5320 = vpop.permute.xlu0 %5319
    %5321 = vrot.lane.b32.xlu0 %v5294, 32
    %v5322 = vpop.permute.xlu0 %5321
    %5323 = vrot.lane.b32.xlu0 %v5295, 32
    %v5324 = vpop.permute.xlu0 %5323
    %5325 = vrot.lane.b32.xlu0 %v5296, 32
    %v5326 = vpop.permute.xlu0 %5325
    %5327 = vrot.lane.b32.xlu0 %v5297, 32
    %v5328 = vpop.permute.xlu0 %5327
    %5329 = vrot.lane.b32.xlu0 %v5298, 32
    %v5330 = vpop.permute.xlu0 %5329
    %5347 = vst.msk [vmem:[#allocation3 + $0x40] sm:$0xf] %vm2504, %v5300
    %5348 = vst.msk [vmem:[#allocation3 + $0x44] sm:$0xf] %vm2504, %v5302
    %5349 = vst.msk [vmem:[#allocation3 + $0x48] sm:$0xf] %vm2504, %v5304
    %5350 = vst.msk [vmem:[#allocation3 + $0x4c] sm:$0xf] %vm2504, %v5306
    %5351 = vst.msk [vmem:[#allocation3 + $0x50] sm:$0xf] %vm2504, %v5308
    %5352 = vst.msk [vmem:[#allocation3 + $0x54] sm:$0xf] %vm2504, %v5310
    %5353 = vst.msk [vmem:[#allocation3 + $0x58] sm:$0xf] %vm2504, %v5312
    %5354 = vst.msk [vmem:[#allocation3 + $0x5c] sm:$0xf] %vm2504, %v5314
    %5355 = vst.msk [vmem:[#allocation3 + $0x60] sm:$0xf] %vm2504, %v5316
    %5356 = vst.msk [vmem:[#allocation3 + $0x64] sm:$0xf] %vm2504, %v5318
    %5357 = vst.msk [vmem:[#allocation3 + $0x68] sm:$0xf] %vm2504, %v5320
    %5358 = vst.msk [vmem:[#allocation3 + $0x6c] sm:$0xf] %vm2504, %v5322
    %5359 = vst.msk [vmem:[#allocation3 + $0x70] sm:$0xf] %vm2504, %v5324
    %5360 = vst.msk [vmem:[#allocation3 + $0x74] sm:$0xf] %vm2504, %v5326
    %5361 = vst.msk [vmem:[#allocation3 + $0x78] sm:$0xf] %vm2504, %v5328
    %5362 = vst.msk [vmem:[#allocation3 + $0x7c] sm:$0xf] %vm2504, %v5330
    %v5363 = vld [vmem:[#allocation2 + $0xc0] sm:$0xf]
    %v5364 = vld [vmem:[#allocation2 + $0xcc] sm:$0xf]
    %v5365 = vld [vmem:[#allocation2 + $0xd8] sm:$0xf]
    %v5366 = vld [vmem:[#allocation2 + $0xe4] sm:$0xf]
    %v5367 = vld [vmem:[#allocation2 + $0xf0] sm:$0xf]
    %v5368 = vld [vmem:[#allocation2 + $0xfc] sm:$0xf]
    %v5369 = vld [vmem:[#allocation2 + $0x108] sm:$0xf]
    %v5370 = vld [vmem:[#allocation2 + $0x114] sm:$0xf]
    %v5371 = vld [vmem:[#allocation2 + $0x120] sm:$0xf]
    %v5372 = vld [vmem:[#allocation2 + $0x12c] sm:$0xf]
    %v5373 = vld [vmem:[#allocation2 + $0x138] sm:$0xf]
    %v5374 = vld [vmem:[#allocation2 + $0x144] sm:$0xf]
    %v5375 = vld [vmem:[#allocation2 + $0x150] sm:$0xf]
    %v5376 = vld [vmem:[#allocation2 + $0x15c] sm:$0xf]
    %v5377 = vld [vmem:[#allocation2 + $0x168] sm:$0xf]
    %v5378 = vld [vmem:[#allocation2 + $0x174] sm:$0xf]
    %v5379 = vld [vmem:[#allocation2 + $0xc4] sm:$0xf]
    %v5380 = vld [vmem:[#allocation2 + $0xd0] sm:$0xf]
    %v5381 = vld [vmem:[#allocation2 + $0xdc] sm:$0xf]
    %v5382 = vld [vmem:[#allocation2 + $0xe8] sm:$0xf]
    %v5383 = vld [vmem:[#allocation2 + $0xf4] sm:$0xf]
    %v5384 = vld [vmem:[#allocation2 + $0x100] sm:$0xf]
    %v5385 = vld [vmem:[#allocation2 + $0x10c] sm:$0xf]
    %v5386 = vld [vmem:[#allocation2 + $0x118] sm:$0xf]
    %v5387 = vld [vmem:[#allocation2 + $0x124] sm:$0xf]
    %v5388 = vld [vmem:[#allocation2 + $0x130] sm:$0xf]
    %v5389 = vld [vmem:[#allocation2 + $0x13c] sm:$0xf]
    %v5390 = vld [vmem:[#allocation2 + $0x148] sm:$0xf]
    %v5391 = vld [vmem:[#allocation2 + $0x154] sm:$0xf]
    %v5392 = vld [vmem:[#allocation2 + $0x160] sm:$0xf]
    %v5393 = vld [vmem:[#allocation2 + $0x16c] sm:$0xf]
    %v5394 = vld [vmem:[#allocation2 + $0x178] sm:$0xf]
    %v5395 = vld [vmem:[#allocation2 + $0xc8] sm:$0xf]
    %v5396 = vld [vmem:[#allocation2 + $0xd4] sm:$0xf]
    %v5397 = vld [vmem:[#allocation2 + $0xe0] sm:$0xf]
    %v5398 = vld [vmem:[#allocation2 + $0xec] sm:$0xf]
    %v5399 = vld [vmem:[#allocation2 + $0xf8] sm:$0xf]
    %v5400 = vld [vmem:[#allocation2 + $0x104] sm:$0xf]
    %v5401 = vld [vmem:[#allocation2 + $0x110] sm:$0xf]
    %v5402 = vld [vmem:[#allocation2 + $0x11c] sm:$0xf]
    %v5403 = vld [vmem:[#allocation2 + $0x128] sm:$0xf]
    %v5404 = vld [vmem:[#allocation2 + $0x134] sm:$0xf]
    %v5405 = vld [vmem:[#allocation2 + $0x140] sm:$0xf]
    %v5406 = vld [vmem:[#allocation2 + $0x14c] sm:$0xf]
    %v5407 = vld [vmem:[#allocation2 + $0x158] sm:$0xf]
    %v5408 = vld [vmem:[#allocation2 + $0x164] sm:$0xf]
    %v5409 = vld [vmem:[#allocation2 + $0x170] sm:$0xf]
    %v5410 = vld [vmem:[#allocation2 + $0x17c] sm:$0xf]
    %v5427 = vunpack.c.l.b16 %v5363
    %v5428 = vunpack.c.l.b16 %v5364
    %v5429 = vunpack.c.l.b16 %v5365
    %v5430 = vunpack.c.l.b16 %v5366
    %v5431 = vunpack.c.l.b16 %v5367
    %v5432 = vunpack.c.l.b16 %v5368
    %v5433 = vunpack.c.l.b16 %v5369
    %v5434 = vunpack.c.l.b16 %v5370
    %v5435 = vunpack.c.l.b16 %v5371
    %v5436 = vunpack.c.l.b16 %v5372
    %v5437 = vunpack.c.l.b16 %v5373
    %v5438 = vunpack.c.l.b16 %v5374
    %v5439 = vunpack.c.l.b16 %v5375
    %v5440 = vunpack.c.l.b16 %v5376
    %v5441 = vunpack.c.l.b16 %v5377
    %v5442 = vunpack.c.l.b16 %v5378
    %v5443 = vpack.c.b16 %v5428, %v5427
    %v5444 = vpack.c.b16 %v5430, %v5429
    %v5445 = vpack.c.b16 %v5432, %v5431
    %v5446 = vpack.c.b16 %v5434, %v5433
    %v5447 = vpack.c.b16 %v5436, %v5435
    %v5448 = vpack.c.b16 %v5438, %v5437
    %v5449 = vpack.c.b16 %v5440, %v5439
    %v5450 = vpack.c.b16 %v5442, %v5441
    %5451 = vrot.lane.b32.xlu0 %v5443, 64
    %v5452 = vpop.permute.xlu0 %5451
    %5453 = vrot.lane.b32.xlu0 %v5444, 64
    %v5454 = vpop.permute.xlu0 %5453
    %5455 = vrot.lane.b32.xlu0 %v5445, 64
    %v5456 = vpop.permute.xlu0 %5455
    %5457 = vrot.lane.b32.xlu0 %v5446, 64
    %v5458 = vpop.permute.xlu0 %5457
    %5459 = vrot.lane.b32.xlu0 %v5447, 64
    %v5460 = vpop.permute.xlu0 %5459
    %5461 = vrot.lane.b32.xlu0 %v5448, 64
    %v5462 = vpop.permute.xlu0 %5461
    %5463 = vrot.lane.b32.xlu0 %v5449, 64
    %v5464 = vpop.permute.xlu0 %5463
    %5465 = vrot.lane.b32.xlu0 %v5450, 64
    %v5466 = vpop.permute.xlu0 %5465
    %v5483 = vunpack.c.l.b16 %v5379
    %v5484 = vunpack.c.l.b16 %v5380
    %v5485 = vunpack.c.l.b16 %v5381
    %v5486 = vunpack.c.l.b16 %v5382
    %v5487 = vunpack.c.l.b16 %v5383
    %v5488 = vunpack.c.l.b16 %v5384
    %v5489 = vunpack.c.l.b16 %v5385
    %v5490 = vunpack.c.l.b16 %v5386
    %v5491 = vunpack.c.l.b16 %v5387
    %v5492 = vunpack.c.l.b16 %v5388
    %v5493 = vunpack.c.l.b16 %v5389
    %v5494 = vunpack.c.l.b16 %v5390
    %v5495 = vunpack.c.l.b16 %v5391
    %v5496 = vunpack.c.l.b16 %v5392
    %v5497 = vunpack.c.l.b16 %v5393
    %v5498 = vunpack.c.l.b16 %v5394
    %v5499 = vpack.c.b16 %v5484, %v5483
    %v5500 = vpack.c.b16 %v5486, %v5485
    %v5501 = vpack.c.b16 %v5488, %v5487
    %v5502 = vpack.c.b16 %v5490, %v5489
    %v5503 = vpack.c.b16 %v5492, %v5491
    %v5504 = vpack.c.b16 %v5494, %v5493
    %v5505 = vpack.c.b16 %v5496, %v5495
    %v5506 = vpack.c.b16 %v5498, %v5497
    %5507 = vrot.lane.b32.xlu0 %v5499, 64
    %v5508 = vpop.permute.xlu0 %5507
    %5509 = vrot.lane.b32.xlu0 %v5500, 64
    %v5510 = vpop.permute.xlu0 %5509
    %5511 = vrot.lane.b32.xlu0 %v5501, 64
    %v5512 = vpop.permute.xlu0 %5511
    %5513 = vrot.lane.b32.xlu0 %v5502, 64
    %v5514 = vpop.permute.xlu0 %5513
    %5515 = vrot.lane.b32.xlu0 %v5503, 64
    %v5516 = vpop.permute.xlu0 %5515
    %5517 = vrot.lane.b32.xlu0 %v5504, 64
    %v5518 = vpop.permute.xlu0 %5517
    %5519 = vrot.lane.b32.xlu0 %v5505, 64
    %v5520 = vpop.permute.xlu0 %5519
    %5521 = vrot.lane.b32.xlu0 %v5506, 64
    %v5522 = vpop.permute.xlu0 %5521
    %v5524 = vsel %vm1266, %v5452, 0
    %v5527 = vsel %vm1266, %v5454, 0
    %v5530 = vsel %vm1266, %v5456, 0
    %v5533 = vsel %vm1266, %v5458, 0
    %v5536 = vsel %vm1266, %v5460, 0
    %v5539 = vsel %vm1266, %v5462, 0
    %v5542 = vsel %vm1266, %v5464, 0
    %v5545 = vsel %vm1266, %v5466, 0
    %v5548 = vsel %vm1266, %v5508, 0
    %v5551 = vsel %vm1266, %v5510, 0
    %v5554 = vsel %vm1266, %v5512, 0
    %v5557 = vsel %vm1266, %v5514, 0
    %v5560 = vsel %vm1266, %v5516, 0
    %v5563 = vsel %vm1266, %v5518, 0
    %v5566 = vsel %vm1266, %v5520, 0
    %v5569 = vsel %vm1266, %v5522, 0
    %5571 = vmatprep.subr.bf16.mxu0 0
    %5572 = vmatpush1.bf16.xpose.msra.mxu0 %v5569
    %5573 = vmatprep.subr.bf16.mxu0 0
    %5574 = vmatpush1.bf16.xpose.msra.mxu0 %v5566
    %5575 = vmatprep.subr.bf16.mxu0 0
    %5576 = vmatpush1.bf16.xpose.msra.mxu0 %v5563
    %5577 = vmatprep.subr.bf16.mxu0 0
    %5578 = vmatpush1.bf16.xpose.msra.mxu0 %v5560
    %5579 = vmatprep.subr.bf16.mxu0 0
    %5580 = vmatpush1.bf16.xpose.msra.mxu0 %v5557
    %5581 = vmatprep.subr.bf16.mxu0 0
    %5582 = vmatpush1.bf16.xpose.msra.mxu0 %v5554
    %5583 = vmatprep.subr.bf16.mxu0 0
    %5584 = vmatpush1.bf16.xpose.msra.mxu0 %v5551
    %5585 = vmatprep.subr.bf16.mxu0 0
    %5586 = vmatpush1.bf16.xpose.msra.mxu0 %v5548
    %5587 = vmatprep.subr.bf16.mxu0 0
    %5588 = vmatpush2.bf16.xpose.msra.mxu0 0
    %5589 = vmatprep.subr.bf16.mxu0 0
    %5590 = vmatpush2.bf16.xpose.msra.mxu0 0
    %5591 = vmatprep.subr.bf16.mxu0 0
    %5592 = vmatpush2.bf16.xpose.msra.mxu0 0
    %5593 = vmatprep.subr.bf16.mxu0 0
    %5594 = vmatpush2.bf16.xpose.msra.mxu0 0
    %5595 = vmatprep.subr.bf16.mxu0 0
    %5596 = vmatpush2.bf16.xpose.msra.mxu0 0
    %5597 = vmatprep.subr.bf16.mxu0 0
    %5598 = vmatpush2.bf16.xpose.msra.mxu0 0
    %5599 = vmatprep.subr.bf16.mxu0 0
    %5600 = vmatpush2.bf16.xpose.msra.mxu0 0
    %5601 = vmatprep.subr.bf16.mxu0 0
    %5602 = vmatpush2.bf16.xpose.msra.mxu0 0
    %5603 = vmatprep.mubr.bf16.mxu0 0
    %5604 = vmatmul.mubr.bf16.gmra.mxu0 %v5524
    %v5605 = vpop.f32.mrf.mxu0
    %v5606 = vadd.f32 0.0, %v5605
    %v5607 = vpop.f32.mrf.mxu0
    %v5608 = vpop.f32.mrf.mxu0
    %v5609 = vadd.f32 0.0, %v5608
    %v5610 = vpop.f32.mrf.mxu0
    %5611 = vmatprep.mubr.bf16.mxu0 0
    %5612 = vmatmul.mubr.bf16.gmra.mxu0 %v5527
    %v5613 = vpop.f32.mrf.mxu0
    %v5614 = vadd.f32 0.0, %v5613
    %v5615 = vpop.f32.mrf.mxu0
    %v5616 = vpop.f32.mrf.mxu0
    %v5617 = vadd.f32 0.0, %v5616
    %v5618 = vpop.f32.mrf.mxu0
    %5619 = vmatprep.mubr.bf16.mxu0 0
    %5620 = vmatmul.mubr.bf16.gmra.mxu0 %v5530
    %v5621 = vpop.f32.mrf.mxu0
    %v5622 = vadd.f32 0.0, %v5621
    %v5623 = vpop.f32.mrf.mxu0
    %v5624 = vpop.f32.mrf.mxu0
    %v5625 = vadd.f32 0.0, %v5624
    %v5626 = vpop.f32.mrf.mxu0
    %5627 = vmatprep.mubr.bf16.mxu0 0
    %5628 = vmatmul.mubr.bf16.gmra.mxu0 %v5533
    %v5629 = vpop.f32.mrf.mxu0
    %v5630 = vadd.f32 0.0, %v5629
    %v5631 = vpop.f32.mrf.mxu0
    %v5632 = vpop.f32.mrf.mxu0
    %v5633 = vadd.f32 0.0, %v5632
    %v5634 = vpop.f32.mrf.mxu0
    %5635 = vmatprep.mubr.bf16.mxu0 0
    %5636 = vmatmul.mubr.bf16.gmra.mxu0 %v5536
    %v5637 = vpop.f32.mrf.mxu0
    %v5638 = vadd.f32 0.0, %v5637
    %v5639 = vpop.f32.mrf.mxu0
    %v5640 = vpop.f32.mrf.mxu0
    %v5641 = vadd.f32 0.0, %v5640
    %v5642 = vpop.f32.mrf.mxu0
    %5643 = vmatprep.mubr.bf16.mxu0 0
    %5644 = vmatmul.mubr.bf16.gmra.mxu0 %v5539
    %v5645 = vpop.f32.mrf.mxu0
    %v5646 = vadd.f32 0.0, %v5645
    %v5647 = vpop.f32.mrf.mxu0
    %v5648 = vpop.f32.mrf.mxu0
    %v5649 = vadd.f32 0.0, %v5648
    %v5650 = vpop.f32.mrf.mxu0
    %5651 = vmatprep.mubr.bf16.mxu0 0
    %5652 = vmatmul.mubr.bf16.gmra.mxu0 %v5542
    %v5653 = vpop.f32.mrf.mxu0
    %v5654 = vadd.f32 0.0, %v5653
    %v5655 = vpop.f32.mrf.mxu0
    %v5656 = vpop.f32.mrf.mxu0
    %v5657 = vadd.f32 0.0, %v5656
    %v5658 = vpop.f32.mrf.mxu0
    %5659 = vmatprep.mubr.bf16.mxu0 0
    %5660 = vmatmul.mubr.bf16.gmra.mxu0 %v5545
    %v5661 = vpop.f32.mrf.mxu0
    %v5662 = vadd.f32 0.0, %v5661
    %v5663 = vpop.f32.mrf.mxu0
    %v5664 = vpop.f32.mrf.mxu0
    %v5665 = vadd.f32 0.0, %v5664
    %v5666 = vpop.f32.mrf.mxu0
    %5667 = vdwg.mxu0
    %5668 = vmax.xlane.f32.xlu0 %v5606
    %v5669 = vpop.xlane.xlu0 %5668
    %5670 = vmax.xlane.f32.xlu0 %v5609
    %v5671 = vpop.xlane.xlu0 %5670
    %5672 = vmax.xlane.f32.xlu0 %v5614
    %v5673 = vpop.xlane.xlu0 %5672
    %5674 = vmax.xlane.f32.xlu0 %v5617
    %v5675 = vpop.xlane.xlu0 %5674
    %5676 = vmax.xlane.f32.xlu0 %v5622
    %v5677 = vpop.xlane.xlu0 %5676
    %5678 = vmax.xlane.f32.xlu0 %v5625
    %v5679 = vpop.xlane.xlu0 %5678
    %5680 = vmax.xlane.f32.xlu0 %v5630
    %v5681 = vpop.xlane.xlu0 %5680
    %5682 = vmax.xlane.f32.xlu0 %v5633
    %v5683 = vpop.xlane.xlu0 %5682
    %5684 = vmax.xlane.f32.xlu0 %v5638
    %v5685 = vpop.xlane.xlu0 %5684
    %5686 = vmax.xlane.f32.xlu0 %v5641
    %v5687 = vpop.xlane.xlu0 %5686
    %5688 = vmax.xlane.f32.xlu0 %v5646
    %v5689 = vpop.xlane.xlu0 %5688
    %5690 = vmax.xlane.f32.xlu0 %v5649
    %v5691 = vpop.xlane.xlu0 %5690
    %5692 = vmax.xlane.f32.xlu0 %v5654
    %v5693 = vpop.xlane.xlu0 %5692
    %5694 = vmax.xlane.f32.xlu0 %v5657
    %v5695 = vpop.xlane.xlu0 %5694
    %5696 = vmax.xlane.f32.xlu0 %v5662
    %v5697 = vpop.xlane.xlu0 %5696
    %5698 = vmax.xlane.f32.xlu0 %v5665
    %v5699 = vpop.xlane.xlu0 %5698
    %v5700 = vsub.f32 %v5606, %v5669
    %v5701 = vsub.f32 %v5609, %v5671
    %v5702 = vsub.f32 %v5614, %v5673
    %v5703 = vsub.f32 %v5617, %v5675
    %v5704 = vsub.f32 %v5622, %v5677
    %v5705 = vsub.f32 %v5625, %v5679
    %v5706 = vsub.f32 %v5630, %v5681
    %v5707 = vsub.f32 %v5633, %v5683
    %v5708 = vsub.f32 %v5638, %v5685
    %v5709 = vsub.f32 %v5641, %v5687
    %v5710 = vsub.f32 %v5646, %v5689
    %v5711 = vsub.f32 %v5649, %v5691
    %v5712 = vsub.f32 %v5654, %v5693
    %v5713 = vsub.f32 %v5657, %v5695
    %v5714 = vsub.f32 %v5662, %v5697
    %v5715 = vsub.f32 %v5665, %v5699
    %v5716 = vmul.f32 %v5700, 1.442695
    %v5717 = vpow.pop %v5716
    %v5718 = vmul.f32 %v5701, 1.442695
    %v5719 = vpow.pop %v5718
    %v5720 = vmul.f32 %v5702, 1.442695
    %v5721 = vpow.pop %v5720
    %v5722 = vmul.f32 %v5703, 1.442695
    %v5723 = vpow.pop %v5722
    %v5724 = vmul.f32 %v5704, 1.442695
    %v5725 = vpow.pop %v5724
    %v5726 = vmul.f32 %v5705, 1.442695
    %v5727 = vpow.pop %v5726
    %v5728 = vmul.f32 %v5706, 1.442695
    %v5729 = vpow.pop %v5728
    %v5730 = vmul.f32 %v5707, 1.442695
    %v5731 = vpow.pop %v5730
    %v5732 = vmul.f32 %v5708, 1.442695
    %v5733 = vpow.pop %v5732
    %v5734 = vmul.f32 %v5709, 1.442695
    %v5735 = vpow.pop %v5734
    %v5736 = vmul.f32 %v5710, 1.442695
    %v5737 = vpow.pop %v5736
    %v5738 = vmul.f32 %v5711, 1.442695
    %v5739 = vpow.pop %v5738
    %v5740 = vmul.f32 %v5712, 1.442695
    %v5741 = vpow.pop %v5740
    %v5742 = vmul.f32 %v5713, 1.442695
    %v5743 = vpow.pop %v5742
    %v5744 = vmul.f32 %v5714, 1.442695
    %v5745 = vpow.pop %v5744
    %v5746 = vmul.f32 %v5715, 1.442695
    %v5747 = vpow.pop %v5746
    %5748 = vadd.xlane.f32.xlu0 %v5717
    %v5749 = vpop.xlane.xlu0 %5748
    %5750 = vadd.xlane.f32.xlu0 %v5719
    %v5751 = vpop.xlane.xlu0 %5750
    %5752 = vadd.xlane.f32.xlu0 %v5721
    %v5753 = vpop.xlane.xlu0 %5752
    %5754 = vadd.xlane.f32.xlu0 %v5723
    %v5755 = vpop.xlane.xlu0 %5754
    %5756 = vadd.xlane.f32.xlu0 %v5725
    %v5757 = vpop.xlane.xlu0 %5756
    %5758 = vadd.xlane.f32.xlu0 %v5727
    %v5759 = vpop.xlane.xlu0 %5758
    %5760 = vadd.xlane.f32.xlu0 %v5729
    %v5761 = vpop.xlane.xlu0 %5760
    %5762 = vadd.xlane.f32.xlu0 %v5731
    %v5763 = vpop.xlane.xlu0 %5762
    %5764 = vadd.xlane.f32.xlu0 %v5733
    %v5765 = vpop.xlane.xlu0 %5764
    %5766 = vadd.xlane.f32.xlu0 %v5735
    %v5767 = vpop.xlane.xlu0 %5766
    %5768 = vadd.xlane.f32.xlu0 %v5737
    %v5769 = vpop.xlane.xlu0 %5768
    %5770 = vadd.xlane.f32.xlu0 %v5739
    %v5771 = vpop.xlane.xlu0 %5770
    %5772 = vadd.xlane.f32.xlu0 %v5741
    %v5773 = vpop.xlane.xlu0 %5772
    %5774 = vadd.xlane.f32.xlu0 %v5743
    %v5775 = vpop.xlane.xlu0 %5774
    %5776 = vadd.xlane.f32.xlu0 %v5745
    %v5777 = vpop.xlane.xlu0 %5776
    %5778 = vadd.xlane.f32.xlu0 %v5747
    %v5779 = vpop.xlane.xlu0 %5778
    %v5780 = vrcp.pop %v5749
    %v5781 = vrcp.pop %v5751
    %v5782 = vrcp.pop %v5753
    %v5783 = vrcp.pop %v5755
    %v5784 = vrcp.pop %v5757
    %v5785 = vrcp.pop %v5759
    %v5786 = vrcp.pop %v5761
    %v5787 = vrcp.pop %v5763
    %v5788 = vrcp.pop %v5765
    %v5789 = vrcp.pop %v5767
    %v5790 = vrcp.pop %v5769
    %v5791 = vrcp.pop %v5771
    %v5792 = vrcp.pop %v5773
    %v5793 = vrcp.pop %v5775
    %v5794 = vrcp.pop %v5777
    %v5795 = vrcp.pop %v5779
    %v5796 = vmul.f32 %v5717, %v5780
    %v5797 = vmul.f32 %v5719, %v5781
    %v5798 = vmul.f32 %v5721, %v5782
    %v5799 = vmul.f32 %v5723, %v5783
    %v5800 = vmul.f32 %v5725, %v5784
    %v5801 = vmul.f32 %v5727, %v5785
    %v5802 = vmul.f32 %v5729, %v5786
    %v5803 = vmul.f32 %v5731, %v5787
    %v5804 = vmul.f32 %v5733, %v5788
    %v5805 = vmul.f32 %v5735, %v5789
    %v5806 = vmul.f32 %v5737, %v5790
    %v5807 = vmul.f32 %v5739, %v5791
    %v5808 = vmul.f32 %v5741, %v5792
    %v5809 = vmul.f32 %v5743, %v5793
    %v5810 = vmul.f32 %v5745, %v5794
    %v5811 = vmul.f32 %v5747, %v5795
    %v5812 = vpack.c.bf16 %v5797, %v5796
    %v5813 = vpack.c.bf16 %v5799, %v5798
    %v5814 = vpack.c.bf16 %v5801, %v5800
    %v5815 = vpack.c.bf16 %v5803, %v5802
    %v5816 = vpack.c.bf16 %v5805, %v5804
    %v5817 = vpack.c.bf16 %v5807, %v5806
    %v5818 = vpack.c.bf16 %v5809, %v5808
    %v5819 = vpack.c.bf16 %v5811, %v5810
    %v5836 = vunpack.c.l.b16 %v5395
    %v5837 = vunpack.c.l.b16 %v5396
    %v5838 = vunpack.c.l.b16 %v5397
    %v5839 = vunpack.c.l.b16 %v5398
    %v5840 = vunpack.c.l.b16 %v5399
    %v5841 = vunpack.c.l.b16 %v5400
    %v5842 = vunpack.c.l.b16 %v5401
    %v5843 = vunpack.c.l.b16 %v5402
    %v5844 = vunpack.c.l.b16 %v5403
    %v5845 = vunpack.c.l.b16 %v5404
    %v5846 = vunpack.c.l.b16 %v5405
    %v5847 = vunpack.c.l.b16 %v5406
    %v5848 = vunpack.c.l.b16 %v5407
    %v5849 = vunpack.c.l.b16 %v5408
    %v5850 = vunpack.c.l.b16 %v5409
    %v5851 = vunpack.c.l.b16 %v5410
    %v5852 = vpack.c.b16 %v5837, %v5836
    %v5853 = vpack.c.b16 %v5839, %v5838
    %v5854 = vpack.c.b16 %v5841, %v5840
    %v5855 = vpack.c.b16 %v5843, %v5842
    %v5856 = vpack.c.b16 %v5845, %v5844
    %v5857 = vpack.c.b16 %v5847, %v5846
    %v5858 = vpack.c.b16 %v5849, %v5848
    %v5859 = vpack.c.b16 %v5851, %v5850
    %5860 = vrot.lane.b32.xlu0 %v5852, 64
    %v5861 = vpop.permute.xlu0 %5860
    %5862 = vrot.lane.b32.xlu0 %v5853, 64
    %v5863 = vpop.permute.xlu0 %5862
    %5864 = vrot.lane.b32.xlu0 %v5854, 64
    %v5865 = vpop.permute.xlu0 %5864
    %5866 = vrot.lane.b32.xlu0 %v5855, 64
    %v5867 = vpop.permute.xlu0 %5866
    %5868 = vrot.lane.b32.xlu0 %v5856, 64
    %v5869 = vpop.permute.xlu0 %5868
    %5870 = vrot.lane.b32.xlu0 %v5857, 64
    %v5871 = vpop.permute.xlu0 %5870
    %5872 = vrot.lane.b32.xlu0 %v5858, 64
    %v5873 = vpop.permute.xlu0 %5872
    %5874 = vrot.lane.b32.xlu0 %v5859, 64
    %v5875 = vpop.permute.xlu0 %5874
    %5884 = vmatprep.subr.bf16.mxu0 0
    %5885 = vmatpush1.bf16.msra.mxu0 %v5875
    %5886 = vmatprep.subr.bf16.mxu0 0
    %5887 = vmatpush1.bf16.msra.mxu0 %v5873
    %5888 = vmatprep.subr.bf16.mxu0 0
    %5889 = vmatpush1.bf16.msra.mxu0 %v5871
    %5890 = vmatprep.subr.bf16.mxu0 0
    %5891 = vmatpush1.bf16.msra.mxu0 %v5869
    %5892 = vmatprep.subr.bf16.mxu0 0
    %5893 = vmatpush1.bf16.msra.mxu0 %v5867
    %5894 = vmatprep.subr.bf16.mxu0 0
    %5895 = vmatpush1.bf16.msra.mxu0 %v5865
    %5896 = vmatprep.subr.bf16.mxu0 0
    %5897 = vmatpush1.bf16.msra.mxu0 %v5863
    %5898 = vmatprep.subr.bf16.mxu0 0
    %5899 = vmatpush1.bf16.msra.mxu0 %v5861
    %5900 = vmatprep.subr.bf16.mxu0 0
    %5901 = vmatpush2.bf16.msra.mxu0 0
    %5902 = vmatprep.subr.bf16.mxu0 0
    %5903 = vmatpush2.bf16.msra.mxu0 0
    %5904 = vmatprep.subr.bf16.mxu0 0
    %5905 = vmatpush2.bf16.msra.mxu0 0
    %5906 = vmatprep.subr.bf16.mxu0 0
    %5907 = vmatpush2.bf16.msra.mxu0 0
    %5908 = vmatprep.subr.bf16.mxu0 0
    %5909 = vmatpush2.bf16.msra.mxu0 0
    %5910 = vmatprep.subr.bf16.mxu0 0
    %5911 = vmatpush2.bf16.msra.mxu0 0
    %5912 = vmatprep.subr.bf16.mxu0 0
    %5913 = vmatpush2.bf16.msra.mxu0 0
    %5914 = vmatprep.subr.bf16.mxu0 0
    %5915 = vmatpush2.bf16.msra.mxu0 0
    %5916 = vmatprep.mubr.bf16.mxu0 0
    %5917 = vmatmul.mubr.bf16.gmra.mxu0 %v5812
    %v5918 = vpop.f32.mrf.mxu0
    %v5919 = vadd.f32 0.0, %v5918
    %v5920 = vpop.f32.mrf.mxu0
    %v5921 = vpop.f32.mrf.mxu0
    %v5922 = vadd.f32 0.0, %v5921
    %v5923 = vpop.f32.mrf.mxu0
    %5924 = vmatprep.mubr.bf16.mxu0 0
    %5925 = vmatmul.mubr.bf16.gmra.mxu0 %v5813
    %v5926 = vpop.f32.mrf.mxu0
    %v5927 = vadd.f32 0.0, %v5926
    %v5928 = vpop.f32.mrf.mxu0
    %v5929 = vpop.f32.mrf.mxu0
    %v5930 = vadd.f32 0.0, %v5929
    %v5931 = vpop.f32.mrf.mxu0
    %5932 = vmatprep.mubr.bf16.mxu0 0
    %5933 = vmatmul.mubr.bf16.gmra.mxu0 %v5814
    %v5934 = vpop.f32.mrf.mxu0
    %v5935 = vadd.f32 0.0, %v5934
    %v5936 = vpop.f32.mrf.mxu0
    %v5937 = vpop.f32.mrf.mxu0
    %v5938 = vadd.f32 0.0, %v5937
    %v5939 = vpop.f32.mrf.mxu0
    %5940 = vmatprep.mubr.bf16.mxu0 0
    %5941 = vmatmul.mubr.bf16.gmra.mxu0 %v5815
    %v5942 = vpop.f32.mrf.mxu0
    %v5943 = vadd.f32 0.0, %v5942
    %v5944 = vpop.f32.mrf.mxu0
    %v5945 = vpop.f32.mrf.mxu0
    %v5946 = vadd.f32 0.0, %v5945
    %v5947 = vpop.f32.mrf.mxu0
    %5948 = vmatprep.mubr.bf16.mxu0 0
    %5949 = vmatmul.mubr.bf16.gmra.mxu0 %v5816
    %v5950 = vpop.f32.mrf.mxu0
    %v5951 = vadd.f32 0.0, %v5950
    %v5952 = vpop.f32.mrf.mxu0
    %v5953 = vpop.f32.mrf.mxu0
    %v5954 = vadd.f32 0.0, %v5953
    %v5955 = vpop.f32.mrf.mxu0
    %5956 = vmatprep.mubr.bf16.mxu0 0
    %5957 = vmatmul.mubr.bf16.gmra.mxu0 %v5817
    %v5958 = vpop.f32.mrf.mxu0
    %v5959 = vadd.f32 0.0, %v5958
    %v5960 = vpop.f32.mrf.mxu0
    %v5961 = vpop.f32.mrf.mxu0
    %v5962 = vadd.f32 0.0, %v5961
    %v5963 = vpop.f32.mrf.mxu0
    %5964 = vmatprep.mubr.bf16.mxu0 0
    %5965 = vmatmul.mubr.bf16.gmra.mxu0 %v5818
    %v5966 = vpop.f32.mrf.mxu0
    %v5967 = vadd.f32 0.0, %v5966
    %v5968 = vpop.f32.mrf.mxu0
    %v5969 = vpop.f32.mrf.mxu0
    %v5970 = vadd.f32 0.0, %v5969
    %v5971 = vpop.f32.mrf.mxu0
    %5972 = vmatprep.mubr.bf16.mxu0 0
    %5973 = vmatmul.mubr.bf16.gmra.mxu0 %v5819
    %v5974 = vpop.f32.mrf.mxu0
    %v5975 = vadd.f32 0.0, %v5974
    %v5976 = vpop.f32.mrf.mxu0
    %v5977 = vpop.f32.mrf.mxu0
    %v5978 = vadd.f32 0.0, %v5977
    %v5979 = vpop.f32.mrf.mxu0
    %5980 = vdwg.mxu0
    %v5981 = vpack.c.bf16 %v5922, %v5919
    %v5982 = vpack.c.bf16 %v5930, %v5927
    %v5983 = vpack.c.bf16 %v5938, %v5935
    %v5984 = vpack.c.bf16 %v5946, %v5943
    %v5985 = vpack.c.bf16 %v5954, %v5951
    %v5986 = vpack.c.bf16 %v5962, %v5959
    %v5987 = vpack.c.bf16 %v5970, %v5967
    %v5988 = vpack.c.bf16 %v5978, %v5975
    %v5997 = vunpack.c.l.b16 %v5981
    %v5998 = vunpack.c.h.b16 %v5981
    %v5999 = vunpack.c.l.b16 %v5982
    %v6000 = vunpack.c.h.b16 %v5982
    %v6001 = vunpack.c.l.b16 %v5983
    %v6002 = vunpack.c.h.b16 %v5983
    %v6003 = vunpack.c.l.b16 %v5984
    %v6004 = vunpack.c.h.b16 %v5984
    %v6005 = vunpack.c.l.b16 %v5985
    %v6006 = vunpack.c.h.b16 %v5985
    %v6007 = vunpack.c.l.b16 %v5986
    %v6008 = vunpack.c.h.b16 %v5986
    %v6009 = vunpack.c.l.b16 %v5987
    %v6010 = vunpack.c.h.b16 %v5987
    %v6011 = vunpack.c.l.b16 %v5988
    %v6012 = vunpack.c.h.b16 %v5988
    %v6013 = vpack.c.b16 %v5997, %v5997
    %v6014 = vpack.c.b16 %v5998, %v5998
    %v6015 = vpack.c.b16 %v5999, %v5999
    %v6016 = vpack.c.b16 %v6000, %v6000
    %v6017 = vpack.c.b16 %v6001, %v6001
    %v6018 = vpack.c.b16 %v6002, %v6002
    %v6019 = vpack.c.b16 %v6003, %v6003
    %v6020 = vpack.c.b16 %v6004, %v6004
    %v6021 = vpack.c.b16 %v6005, %v6005
    %v6022 = vpack.c.b16 %v6006, %v6006
    %v6023 = vpack.c.b16 %v6007, %v6007
    %v6024 = vpack.c.b16 %v6008, %v6008
    %v6025 = vpack.c.b16 %v6009, %v6009
    %v6026 = vpack.c.b16 %v6010, %v6010
    %v6027 = vpack.c.b16 %v6011, %v6011
    %v6028 = vpack.c.b16 %v6012, %v6012
    %6029 = vrot.lane.b32.xlu0 %v6013, 64
    %v6030 = vpop.permute.xlu0 %6029
    %6031 = vrot.lane.b32.xlu0 %v6014, 64
    %v6032 = vpop.permute.xlu0 %6031
    %6033 = vrot.lane.b32.xlu0 %v6015, 64
    %v6034 = vpop.permute.xlu0 %6033
    %6035 = vrot.lane.b32.xlu0 %v6016, 64
    %v6036 = vpop.permute.xlu0 %6035
    %6037 = vrot.lane.b32.xlu0 %v6017, 64
    %v6038 = vpop.permute.xlu0 %6037
    %6039 = vrot.lane.b32.xlu0 %v6018, 64
    %v6040 = vpop.permute.xlu0 %6039
    %6041 = vrot.lane.b32.xlu0 %v6019, 64
    %v6042 = vpop.permute.xlu0 %6041
    %6043 = vrot.lane.b32.xlu0 %v6020, 64
    %v6044 = vpop.permute.xlu0 %6043
    %6045 = vrot.lane.b32.xlu0 %v6021, 64
    %v6046 = vpop.permute.xlu0 %6045
    %6047 = vrot.lane.b32.xlu0 %v6022, 64
    %v6048 = vpop.permute.xlu0 %6047
    %6049 = vrot.lane.b32.xlu0 %v6023, 64
    %v6050 = vpop.permute.xlu0 %6049
    %6051 = vrot.lane.b32.xlu0 %v6024, 64
    %v6052 = vpop.permute.xlu0 %6051
    %6053 = vrot.lane.b32.xlu0 %v6025, 64
    %v6054 = vpop.permute.xlu0 %6053
    %6055 = vrot.lane.b32.xlu0 %v6026, 64
    %v6056 = vpop.permute.xlu0 %6055
    %6057 = vrot.lane.b32.xlu0 %v6027, 64
    %v6058 = vpop.permute.xlu0 %6057
    %6059 = vrot.lane.b32.xlu0 %v6028, 64
    %v6060 = vpop.permute.xlu0 %6059
    %6077 = vst.msk [vmem:[#allocation3 + $0x40] sm:$0xf] %vm3235, %v6030
    %6078 = vst.msk [vmem:[#allocation3 + $0x44] sm:$0xf] %vm3235, %v6032
    %6079 = vst.msk [vmem:[#allocation3 + $0x48] sm:$0xf] %vm3235, %v6034
    %6080 = vst.msk [vmem:[#allocation3 + $0x4c] sm:$0xf] %vm3235, %v6036
    %6081 = vst.msk [vmem:[#allocation3 + $0x50] sm:$0xf] %vm3235, %v6038
    %6082 = vst.msk [vmem:[#allocation3 + $0x54] sm:$0xf] %vm3235, %v6040
    %6083 = vst.msk [vmem:[#allocation3 + $0x58] sm:$0xf] %vm3235, %v6042
    %6084 = vst.msk [vmem:[#allocation3 + $0x5c] sm:$0xf] %vm3235, %v6044
    %6085 = vst.msk [vmem:[#allocation3 + $0x60] sm:$0xf] %vm3235, %v6046
    %6086 = vst.msk [vmem:[#allocation3 + $0x64] sm:$0xf] %vm3235, %v6048
    %6087 = vst.msk [vmem:[#allocation3 + $0x68] sm:$0xf] %vm3235, %v6050
    %6088 = vst.msk [vmem:[#allocation3 + $0x6c] sm:$0xf] %vm3235, %v6052
    %6089 = vst.msk [vmem:[#allocation3 + $0x70] sm:$0xf] %vm3235, %v6054
    %6090 = vst.msk [vmem:[#allocation3 + $0x74] sm:$0xf] %vm3235, %v6056
    %6091 = vst.msk [vmem:[#allocation3 + $0x78] sm:$0xf] %vm3235, %v6058
    %6092 = vst.msk [vmem:[#allocation3 + $0x7c] sm:$0xf] %vm3235, %v6060
    %v6093 = vld [vmem:[#allocation2 + $0xc0] sm:$0xf]
    %v6094 = vld [vmem:[#allocation2 + $0xcc] sm:$0xf]
    %v6095 = vld [vmem:[#allocation2 + $0xd8] sm:$0xf]
    %v6096 = vld [vmem:[#allocation2 + $0xe4] sm:$0xf]
    %v6097 = vld [vmem:[#allocation2 + $0xf0] sm:$0xf]
    %v6098 = vld [vmem:[#allocation2 + $0xfc] sm:$0xf]
    %v6099 = vld [vmem:[#allocation2 + $0x108] sm:$0xf]
    %v6100 = vld [vmem:[#allocation2 + $0x114] sm:$0xf]
    %v6101 = vld [vmem:[#allocation2 + $0x120] sm:$0xf]
    %v6102 = vld [vmem:[#allocation2 + $0x12c] sm:$0xf]
    %v6103 = vld [vmem:[#allocation2 + $0x138] sm:$0xf]
    %v6104 = vld [vmem:[#allocation2 + $0x144] sm:$0xf]
    %v6105 = vld [vmem:[#allocation2 + $0x150] sm:$0xf]
    %v6106 = vld [vmem:[#allocation2 + $0x15c] sm:$0xf]
    %v6107 = vld [vmem:[#allocation2 + $0x168] sm:$0xf]
    %v6108 = vld [vmem:[#allocation2 + $0x174] sm:$0xf]
    %v6109 = vld [vmem:[#allocation2 + $0xc4] sm:$0xf]
    %v6110 = vld [vmem:[#allocation2 + $0xd0] sm:$0xf]
    %v6111 = vld [vmem:[#allocation2 + $0xdc] sm:$0xf]
    %v6112 = vld [vmem:[#allocation2 + $0xe8] sm:$0xf]
    %v6113 = vld [vmem:[#allocation2 + $0xf4] sm:$0xf]
    %v6114 = vld [vmem:[#allocation2 + $0x100] sm:$0xf]
    %v6115 = vld [vmem:[#allocation2 + $0x10c] sm:$0xf]
    %v6116 = vld [vmem:[#allocation2 + $0x118] sm:$0xf]
    %v6117 = vld [vmem:[#allocation2 + $0x124] sm:$0xf]
    %v6118 = vld [vmem:[#allocation2 + $0x130] sm:$0xf]
    %v6119 = vld [vmem:[#allocation2 + $0x13c] sm:$0xf]
    %v6120 = vld [vmem:[#allocation2 + $0x148] sm:$0xf]
    %v6121 = vld [vmem:[#allocation2 + $0x154] sm:$0xf]
    %v6122 = vld [vmem:[#allocation2 + $0x160] sm:$0xf]
    %v6123 = vld [vmem:[#allocation2 + $0x16c] sm:$0xf]
    %v6124 = vld [vmem:[#allocation2 + $0x178] sm:$0xf]
    %v6125 = vld [vmem:[#allocation2 + $0xc8] sm:$0xf]
    %v6126 = vld [vmem:[#allocation2 + $0xd4] sm:$0xf]
    %v6127 = vld [vmem:[#allocation2 + $0xe0] sm:$0xf]
    %v6128 = vld [vmem:[#allocation2 + $0xec] sm:$0xf]
    %v6129 = vld [vmem:[#allocation2 + $0xf8] sm:$0xf]
    %v6130 = vld [vmem:[#allocation2 + $0x104] sm:$0xf]
    %v6131 = vld [vmem:[#allocation2 + $0x110] sm:$0xf]
    %v6132 = vld [vmem:[#allocation2 + $0x11c] sm:$0xf]
    %v6133 = vld [vmem:[#allocation2 + $0x128] sm:$0xf]
    %v6134 = vld [vmem:[#allocation2 + $0x134] sm:$0xf]
    %v6135 = vld [vmem:[#allocation2 + $0x140] sm:$0xf]
    %v6136 = vld [vmem:[#allocation2 + $0x14c] sm:$0xf]
    %v6137 = vld [vmem:[#allocation2 + $0x158] sm:$0xf]
    %v6138 = vld [vmem:[#allocation2 + $0x164] sm:$0xf]
    %v6139 = vld [vmem:[#allocation2 + $0x170] sm:$0xf]
    %v6140 = vld [vmem:[#allocation2 + $0x17c] sm:$0xf]
    %v6157 = vunpack.c.l.b16 %v6093
    %v6158 = vunpack.c.l.b16 %v6094
    %v6159 = vunpack.c.l.b16 %v6095
    %v6160 = vunpack.c.l.b16 %v6096
    %v6161 = vunpack.c.l.b16 %v6097
    %v6162 = vunpack.c.l.b16 %v6098
    %v6163 = vunpack.c.l.b16 %v6099
    %v6164 = vunpack.c.l.b16 %v6100
    %v6165 = vunpack.c.l.b16 %v6101
    %v6166 = vunpack.c.l.b16 %v6102
    %v6167 = vunpack.c.l.b16 %v6103
    %v6168 = vunpack.c.l.b16 %v6104
    %v6169 = vunpack.c.l.b16 %v6105
    %v6170 = vunpack.c.l.b16 %v6106
    %v6171 = vunpack.c.l.b16 %v6107
    %v6172 = vunpack.c.l.b16 %v6108
    %v6173 = vpack.c.b16 %v6158, %v6157
    %v6174 = vpack.c.b16 %v6160, %v6159
    %v6175 = vpack.c.b16 %v6162, %v6161
    %v6176 = vpack.c.b16 %v6164, %v6163
    %v6177 = vpack.c.b16 %v6166, %v6165
    %v6178 = vpack.c.b16 %v6168, %v6167
    %v6179 = vpack.c.b16 %v6170, %v6169
    %v6180 = vpack.c.b16 %v6172, %v6171
    %6181 = vrot.lane.b32.xlu0 %v6173, 32
    %v6182 = vpop.permute.xlu0 %6181
    %6183 = vrot.lane.b32.xlu0 %v6174, 32
    %v6184 = vpop.permute.xlu0 %6183
    %6185 = vrot.lane.b32.xlu0 %v6175, 32
    %v6186 = vpop.permute.xlu0 %6185
    %6187 = vrot.lane.b32.xlu0 %v6176, 32
    %v6188 = vpop.permute.xlu0 %6187
    %6189 = vrot.lane.b32.xlu0 %v6177, 32
    %v6190 = vpop.permute.xlu0 %6189
    %6191 = vrot.lane.b32.xlu0 %v6178, 32
    %v6192 = vpop.permute.xlu0 %6191
    %6193 = vrot.lane.b32.xlu0 %v6179, 32
    %v6194 = vpop.permute.xlu0 %6193
    %6195 = vrot.lane.b32.xlu0 %v6180, 32
    %v6196 = vpop.permute.xlu0 %6195
    %v6213 = vunpack.c.l.b16 %v6109
    %v6214 = vunpack.c.l.b16 %v6110
    %v6215 = vunpack.c.l.b16 %v6111
    %v6216 = vunpack.c.l.b16 %v6112
    %v6217 = vunpack.c.l.b16 %v6113
    %v6218 = vunpack.c.l.b16 %v6114
    %v6219 = vunpack.c.l.b16 %v6115
    %v6220 = vunpack.c.l.b16 %v6116
    %v6221 = vunpack.c.l.b16 %v6117
    %v6222 = vunpack.c.l.b16 %v6118
    %v6223 = vunpack.c.l.b16 %v6119
    %v6224 = vunpack.c.l.b16 %v6120
    %v6225 = vunpack.c.l.b16 %v6121
    %v6226 = vunpack.c.l.b16 %v6122
    %v6227 = vunpack.c.l.b16 %v6123
    %v6228 = vunpack.c.l.b16 %v6124
    %v6229 = vpack.c.b16 %v6214, %v6213
    %v6230 = vpack.c.b16 %v6216, %v6215
    %v6231 = vpack.c.b16 %v6218, %v6217
    %v6232 = vpack.c.b16 %v6220, %v6219
    %v6233 = vpack.c.b16 %v6222, %v6221
    %v6234 = vpack.c.b16 %v6224, %v6223
    %v6235 = vpack.c.b16 %v6226, %v6225
    %v6236 = vpack.c.b16 %v6228, %v6227
    %6237 = vrot.lane.b32.xlu0 %v6229, 32
    %v6238 = vpop.permute.xlu0 %6237
    %6239 = vrot.lane.b32.xlu0 %v6230, 32
    %v6240 = vpop.permute.xlu0 %6239
    %6241 = vrot.lane.b32.xlu0 %v6231, 32
    %v6242 = vpop.permute.xlu0 %6241
    %6243 = vrot.lane.b32.xlu0 %v6232, 32
    %v6244 = vpop.permute.xlu0 %6243
    %6245 = vrot.lane.b32.xlu0 %v6233, 32
    %v6246 = vpop.permute.xlu0 %6245
    %6247 = vrot.lane.b32.xlu0 %v6234, 32
    %v6248 = vpop.permute.xlu0 %6247
    %6249 = vrot.lane.b32.xlu0 %v6235, 32
    %v6250 = vpop.permute.xlu0 %6249
    %6251 = vrot.lane.b32.xlu0 %v6236, 32
    %v6252 = vpop.permute.xlu0 %6251
    %v6254 = vsel %vm1266, %v6182, 0
    %v6257 = vsel %vm1266, %v6184, 0
    %v6260 = vsel %vm1266, %v6186, 0
    %v6263 = vsel %vm1266, %v6188, 0
    %v6266 = vsel %vm1266, %v6190, 0
    %v6269 = vsel %vm1266, %v6192, 0
    %v6272 = vsel %vm1266, %v6194, 0
    %v6275 = vsel %vm1266, %v6196, 0
    %v6278 = vsel %vm1266, %v6238, 0
    %v6281 = vsel %vm1266, %v6240, 0
    %v6284 = vsel %vm1266, %v6242, 0
    %v6287 = vsel %vm1266, %v6244, 0
    %v6290 = vsel %vm1266, %v6246, 0
    %v6293 = vsel %vm1266, %v6248, 0
    %v6296 = vsel %vm1266, %v6250, 0
    %v6299 = vsel %vm1266, %v6252, 0
    %6301 = vmatprep.subr.bf16.mxu0 0
    %6302 = vmatpush1.bf16.xpose.msra.mxu0 %v6299
    %6303 = vmatprep.subr.bf16.mxu0 0
    %6304 = vmatpush1.bf16.xpose.msra.mxu0 %v6296
    %6305 = vmatprep.subr.bf16.mxu0 0
    %6306 = vmatpush1.bf16.xpose.msra.mxu0 %v6293
    %6307 = vmatprep.subr.bf16.mxu0 0
    %6308 = vmatpush1.bf16.xpose.msra.mxu0 %v6290
    %6309 = vmatprep.subr.bf16.mxu0 0
    %6310 = vmatpush1.bf16.xpose.msra.mxu0 %v6287
    %6311 = vmatprep.subr.bf16.mxu0 0
    %6312 = vmatpush1.bf16.xpose.msra.mxu0 %v6284
    %6313 = vmatprep.subr.bf16.mxu0 0
    %6314 = vmatpush1.bf16.xpose.msra.mxu0 %v6281
    %6315 = vmatprep.subr.bf16.mxu0 0
    %6316 = vmatpush1.bf16.xpose.msra.mxu0 %v6278
    %6317 = vmatprep.subr.bf16.mxu0 0
    %6318 = vmatpush2.bf16.xpose.msra.mxu0 0
    %6319 = vmatprep.subr.bf16.mxu0 0
    %6320 = vmatpush2.bf16.xpose.msra.mxu0 0
    %6321 = vmatprep.subr.bf16.mxu0 0
    %6322 = vmatpush2.bf16.xpose.msra.mxu0 0
    %6323 = vmatprep.subr.bf16.mxu0 0
    %6324 = vmatpush2.bf16.xpose.msra.mxu0 0
    %6325 = vmatprep.subr.bf16.mxu0 0
    %6326 = vmatpush2.bf16.xpose.msra.mxu0 0
    %6327 = vmatprep.subr.bf16.mxu0 0
    %6328 = vmatpush2.bf16.xpose.msra.mxu0 0
    %6329 = vmatprep.subr.bf16.mxu0 0
    %6330 = vmatpush2.bf16.xpose.msra.mxu0 0
    %6331 = vmatprep.subr.bf16.mxu0 0
    %6332 = vmatpush2.bf16.xpose.msra.mxu0 0
    %6333 = vmatprep.mubr.bf16.mxu0 0
    %6334 = vmatmul.mubr.bf16.gmra.mxu0 %v6254
    %v6335 = vpop.f32.mrf.mxu0
    %v6336 = vadd.f32 0.0, %v6335
    %v6337 = vpop.f32.mrf.mxu0
    %v6338 = vpop.f32.mrf.mxu0
    %v6339 = vadd.f32 0.0, %v6338
    %v6340 = vpop.f32.mrf.mxu0
    %6341 = vmatprep.mubr.bf16.mxu0 0
    %6342 = vmatmul.mubr.bf16.gmra.mxu0 %v6257
    %v6343 = vpop.f32.mrf.mxu0
    %v6344 = vadd.f32 0.0, %v6343
    %v6345 = vpop.f32.mrf.mxu0
    %v6346 = vpop.f32.mrf.mxu0
    %v6347 = vadd.f32 0.0, %v6346
    %v6348 = vpop.f32.mrf.mxu0
    %6349 = vmatprep.mubr.bf16.mxu0 0
    %6350 = vmatmul.mubr.bf16.gmra.mxu0 %v6260
    %v6351 = vpop.f32.mrf.mxu0
    %v6352 = vadd.f32 0.0, %v6351
    %v6353 = vpop.f32.mrf.mxu0
    %v6354 = vpop.f32.mrf.mxu0
    %v6355 = vadd.f32 0.0, %v6354
    %v6356 = vpop.f32.mrf.mxu0
    %6357 = vmatprep.mubr.bf16.mxu0 0
    %6358 = vmatmul.mubr.bf16.gmra.mxu0 %v6263
    %v6359 = vpop.f32.mrf.mxu0
    %v6360 = vadd.f32 0.0, %v6359
    %v6361 = vpop.f32.mrf.mxu0
    %v6362 = vpop.f32.mrf.mxu0
    %v6363 = vadd.f32 0.0, %v6362
    %v6364 = vpop.f32.mrf.mxu0
    %6365 = vmatprep.mubr.bf16.mxu0 0
    %6366 = vmatmul.mubr.bf16.gmra.mxu0 %v6266
    %v6367 = vpop.f32.mrf.mxu0
    %v6368 = vadd.f32 0.0, %v6367
    %v6369 = vpop.f32.mrf.mxu0
    %v6370 = vpop.f32.mrf.mxu0
    %v6371 = vadd.f32 0.0, %v6370
    %v6372 = vpop.f32.mrf.mxu0
    %6373 = vmatprep.mubr.bf16.mxu0 0
    %6374 = vmatmul.mubr.bf16.gmra.mxu0 %v6269
    %v6375 = vpop.f32.mrf.mxu0
    %v6376 = vadd.f32 0.0, %v6375
    %v6377 = vpop.f32.mrf.mxu0
    %v6378 = vpop.f32.mrf.mxu0
    %v6379 = vadd.f32 0.0, %v6378
    %v6380 = vpop.f32.mrf.mxu0
    %6381 = vmatprep.mubr.bf16.mxu0 0
    %6382 = vmatmul.mubr.bf16.gmra.mxu0 %v6272
    %v6383 = vpop.f32.mrf.mxu0
    %v6384 = vadd.f32 0.0, %v6383
    %v6385 = vpop.f32.mrf.mxu0
    %v6386 = vpop.f32.mrf.mxu0
    %v6387 = vadd.f32 0.0, %v6386
    %v6388 = vpop.f32.mrf.mxu0
    %6389 = vmatprep.mubr.bf16.mxu0 0
    %6390 = vmatmul.mubr.bf16.gmra.mxu0 %v6275
    %v6391 = vpop.f32.mrf.mxu0
    %v6392 = vadd.f32 0.0, %v6391
    %v6393 = vpop.f32.mrf.mxu0
    %v6394 = vpop.f32.mrf.mxu0
    %v6395 = vadd.f32 0.0, %v6394
    %v6396 = vpop.f32.mrf.mxu0
    %6397 = vdwg.mxu0
    %6398 = vmax.xlane.f32.xlu0 %v6336
    %v6399 = vpop.xlane.xlu0 %6398
    %6400 = vmax.xlane.f32.xlu0 %v6339
    %v6401 = vpop.xlane.xlu0 %6400
    %6402 = vmax.xlane.f32.xlu0 %v6344
    %v6403 = vpop.xlane.xlu0 %6402
    %6404 = vmax.xlane.f32.xlu0 %v6347
    %v6405 = vpop.xlane.xlu0 %6404
    %6406 = vmax.xlane.f32.xlu0 %v6352
    %v6407 = vpop.xlane.xlu0 %6406
    %6408 = vmax.xlane.f32.xlu0 %v6355
    %v6409 = vpop.xlane.xlu0 %6408
    %6410 = vmax.xlane.f32.xlu0 %v6360
    %v6411 = vpop.xlane.xlu0 %6410
    %6412 = vmax.xlane.f32.xlu0 %v6363
    %v6413 = vpop.xlane.xlu0 %6412
    %6414 = vmax.xlane.f32.xlu0 %v6368
    %v6415 = vpop.xlane.xlu0 %6414
    %6416 = vmax.xlane.f32.xlu0 %v6371
    %v6417 = vpop.xlane.xlu0 %6416
    %6418 = vmax.xlane.f32.xlu0 %v6376
    %v6419 = vpop.xlane.xlu0 %6418
    %6420 = vmax.xlane.f32.xlu0 %v6379
    %v6421 = vpop.xlane.xlu0 %6420
    %6422 = vmax.xlane.f32.xlu0 %v6384
    %v6423 = vpop.xlane.xlu0 %6422
    %6424 = vmax.xlane.f32.xlu0 %v6387
    %v6425 = vpop.xlane.xlu0 %6424
    %6426 = vmax.xlane.f32.xlu0 %v6392
    %v6427 = vpop.xlane.xlu0 %6426
    %6428 = vmax.xlane.f32.xlu0 %v6395
    %v6429 = vpop.xlane.xlu0 %6428
    %v6430 = vsub.f32 %v6336, %v6399
    %v6431 = vsub.f32 %v6339, %v6401
    %v6432 = vsub.f32 %v6344, %v6403
    %v6433 = vsub.f32 %v6347, %v6405
    %v6434 = vsub.f32 %v6352, %v6407
    %v6435 = vsub.f32 %v6355, %v6409
    %v6436 = vsub.f32 %v6360, %v6411
    %v6437 = vsub.f32 %v6363, %v6413
    %v6438 = vsub.f32 %v6368, %v6415
    %v6439 = vsub.f32 %v6371, %v6417
    %v6440 = vsub.f32 %v6376, %v6419
    %v6441 = vsub.f32 %v6379, %v6421
    %v6442 = vsub.f32 %v6384, %v6423
    %v6443 = vsub.f32 %v6387, %v6425
    %v6444 = vsub.f32 %v6392, %v6427
    %v6445 = vsub.f32 %v6395, %v6429
    %v6446 = vmul.f32 %v6430, 1.442695
    %v6447 = vpow.pop %v6446
    %v6448 = vmul.f32 %v6431, 1.442695
    %v6449 = vpow.pop %v6448
    %v6450 = vmul.f32 %v6432, 1.442695
    %v6451 = vpow.pop %v6450
    %v6452 = vmul.f32 %v6433, 1.442695
    %v6453 = vpow.pop %v6452
    %v6454 = vmul.f32 %v6434, 1.442695
    %v6455 = vpow.pop %v6454
    %v6456 = vmul.f32 %v6435, 1.442695
    %v6457 = vpow.pop %v6456
    %v6458 = vmul.f32 %v6436, 1.442695
    %v6459 = vpow.pop %v6458
    %v6460 = vmul.f32 %v6437, 1.442695
    %v6461 = vpow.pop %v6460
    %v6462 = vmul.f32 %v6438, 1.442695
    %v6463 = vpow.pop %v6462
    %v6464 = vmul.f32 %v6439, 1.442695
    %v6465 = vpow.pop %v6464
    %v6466 = vmul.f32 %v6440, 1.442695
    %v6467 = vpow.pop %v6466
    %v6468 = vmul.f32 %v6441, 1.442695
    %v6469 = vpow.pop %v6468
    %v6470 = vmul.f32 %v6442, 1.442695
    %v6471 = vpow.pop %v6470
    %v6472 = vmul.f32 %v6443, 1.442695
    %v6473 = vpow.pop %v6472
    %v6474 = vmul.f32 %v6444, 1.442695
    %v6475 = vpow.pop %v6474
    %v6476 = vmul.f32 %v6445, 1.442695
    %v6477 = vpow.pop %v6476
    %6478 = vadd.xlane.f32.xlu0 %v6447
    %v6479 = vpop.xlane.xlu0 %6478
    %6480 = vadd.xlane.f32.xlu0 %v6449
    %v6481 = vpop.xlane.xlu0 %6480
    %6482 = vadd.xlane.f32.xlu0 %v6451
    %v6483 = vpop.xlane.xlu0 %6482
    %6484 = vadd.xlane.f32.xlu0 %v6453
    %v6485 = vpop.xlane.xlu0 %6484
    %6486 = vadd.xlane.f32.xlu0 %v6455
    %v6487 = vpop.xlane.xlu0 %6486
    %6488 = vadd.xlane.f32.xlu0 %v6457
    %v6489 = vpop.xlane.xlu0 %6488
    %6490 = vadd.xlane.f32.xlu0 %v6459
    %v6491 = vpop.xlane.xlu0 %6490
    %6492 = vadd.xlane.f32.xlu0 %v6461
    %v6493 = vpop.xlane.xlu0 %6492
    %6494 = vadd.xlane.f32.xlu0 %v6463
    %v6495 = vpop.xlane.xlu0 %6494
    %6496 = vadd.xlane.f32.xlu0 %v6465
    %v6497 = vpop.xlane.xlu0 %6496
    %6498 = vadd.xlane.f32.xlu0 %v6467
    %v6499 = vpop.xlane.xlu0 %6498
    %6500 = vadd.xlane.f32.xlu0 %v6469
    %v6501 = vpop.xlane.xlu0 %6500
    %6502 = vadd.xlane.f32.xlu0 %v6471
    %v6503 = vpop.xlane.xlu0 %6502
    %6504 = vadd.xlane.f32.xlu0 %v6473
    %v6505 = vpop.xlane.xlu0 %6504
    %6506 = vadd.xlane.f32.xlu0 %v6475
    %v6507 = vpop.xlane.xlu0 %6506
    %6508 = vadd.xlane.f32.xlu0 %v6477
    %v6509 = vpop.xlane.xlu0 %6508
    %v6510 = vrcp.pop %v6479
    %v6511 = vrcp.pop %v6481
    %v6512 = vrcp.pop %v6483
    %v6513 = vrcp.pop %v6485
    %v6514 = vrcp.pop %v6487
    %v6515 = vrcp.pop %v6489
    %v6516 = vrcp.pop %v6491
    %v6517 = vrcp.pop %v6493
    %v6518 = vrcp.pop %v6495
    %v6519 = vrcp.pop %v6497
    %v6520 = vrcp.pop %v6499
    %v6521 = vrcp.pop %v6501
    %v6522 = vrcp.pop %v6503
    %v6523 = vrcp.pop %v6505
    %v6524 = vrcp.pop %v6507
    %v6525 = vrcp.pop %v6509
    %v6526 = vmul.f32 %v6447, %v6510
    %v6527 = vmul.f32 %v6449, %v6511
    %v6528 = vmul.f32 %v6451, %v6512
    %v6529 = vmul.f32 %v6453, %v6513
    %v6530 = vmul.f32 %v6455, %v6514
    %v6531 = vmul.f32 %v6457, %v6515
    %v6532 = vmul.f32 %v6459, %v6516
    %v6533 = vmul.f32 %v6461, %v6517
    %v6534 = vmul.f32 %v6463, %v6518
    %v6535 = vmul.f32 %v6465, %v6519
    %v6536 = vmul.f32 %v6467, %v6520
    %v6537 = vmul.f32 %v6469, %v6521
    %v6538 = vmul.f32 %v6471, %v6522
    %v6539 = vmul.f32 %v6473, %v6523
    %v6540 = vmul.f32 %v6475, %v6524
    %v6541 = vmul.f32 %v6477, %v6525
    %v6542 = vpack.c.bf16 %v6527, %v6526
    %v6543 = vpack.c.bf16 %v6529, %v6528
    %v6544 = vpack.c.bf16 %v6531, %v6530
    %v6545 = vpack.c.bf16 %v6533, %v6532
    %v6546 = vpack.c.bf16 %v6535, %v6534
    %v6547 = vpack.c.bf16 %v6537, %v6536
    %v6548 = vpack.c.bf16 %v6539, %v6538
    %v6549 = vpack.c.bf16 %v6541, %v6540
    %v6566 = vunpack.c.l.b16 %v6125
    %v6567 = vunpack.c.l.b16 %v6126
    %v6568 = vunpack.c.l.b16 %v6127
    %v6569 = vunpack.c.l.b16 %v6128
    %v6570 = vunpack.c.l.b16 %v6129
    %v6571 = vunpack.c.l.b16 %v6130
    %v6572 = vunpack.c.l.b16 %v6131
    %v6573 = vunpack.c.l.b16 %v6132
    %v6574 = vunpack.c.l.b16 %v6133
    %v6575 = vunpack.c.l.b16 %v6134
    %v6576 = vunpack.c.l.b16 %v6135
    %v6577 = vunpack.c.l.b16 %v6136
    %v6578 = vunpack.c.l.b16 %v6137
    %v6579 = vunpack.c.l.b16 %v6138
    %v6580 = vunpack.c.l.b16 %v6139
    %v6581 = vunpack.c.l.b16 %v6140
    %v6582 = vpack.c.b16 %v6567, %v6566
    %v6583 = vpack.c.b16 %v6569, %v6568
    %v6584 = vpack.c.b16 %v6571, %v6570
    %v6585 = vpack.c.b16 %v6573, %v6572
    %v6586 = vpack.c.b16 %v6575, %v6574
    %v6587 = vpack.c.b16 %v6577, %v6576
    %v6588 = vpack.c.b16 %v6579, %v6578
    %v6589 = vpack.c.b16 %v6581, %v6580
    %6590 = vrot.lane.b32.xlu0 %v6582, 32
    %v6591 = vpop.permute.xlu0 %6590
    %6592 = vrot.lane.b32.xlu0 %v6583, 32
    %v6593 = vpop.permute.xlu0 %6592
    %6594 = vrot.lane.b32.xlu0 %v6584, 32
    %v6595 = vpop.permute.xlu0 %6594
    %6596 = vrot.lane.b32.xlu0 %v6585, 32
    %v6597 = vpop.permute.xlu0 %6596
    %6598 = vrot.lane.b32.xlu0 %v6586, 32
    %v6599 = vpop.permute.xlu0 %6598
    %6600 = vrot.lane.b32.xlu0 %v6587, 32
    %v6601 = vpop.permute.xlu0 %6600
    %6602 = vrot.lane.b32.xlu0 %v6588, 32
    %v6603 = vpop.permute.xlu0 %6602
    %6604 = vrot.lane.b32.xlu0 %v6589, 32
    %v6605 = vpop.permute.xlu0 %6604
    %6614 = vmatprep.subr.bf16.mxu0 0
    %6615 = vmatpush1.bf16.msra.mxu0 %v6605
    %6616 = vmatprep.subr.bf16.mxu0 0
    %6617 = vmatpush1.bf16.msra.mxu0 %v6603
    %6618 = vmatprep.subr.bf16.mxu0 0
    %6619 = vmatpush1.bf16.msra.mxu0 %v6601
    %6620 = vmatprep.subr.bf16.mxu0 0
    %6621 = vmatpush1.bf16.msra.mxu0 %v6599
    %6622 = vmatprep.subr.bf16.mxu0 0
    %6623 = vmatpush1.bf16.msra.mxu0 %v6597
    %6624 = vmatprep.subr.bf16.mxu0 0
    %6625 = vmatpush1.bf16.msra.mxu0 %v6595
    %6626 = vmatprep.subr.bf16.mxu0 0
    %6627 = vmatpush1.bf16.msra.mxu0 %v6593
    %6628 = vmatprep.subr.bf16.mxu0 0
    %6629 = vmatpush1.bf16.msra.mxu0 %v6591
    %6630 = vmatprep.subr.bf16.mxu0 0
    %6631 = vmatpush2.bf16.msra.mxu0 0
    %6632 = vmatprep.subr.bf16.mxu0 0
    %6633 = vmatpush2.bf16.msra.mxu0 0
    %6634 = vmatprep.subr.bf16.mxu0 0
    %6635 = vmatpush2.bf16.msra.mxu0 0
    %6636 = vmatprep.subr.bf16.mxu0 0
    %6637 = vmatpush2.bf16.msra.mxu0 0
    %6638 = vmatprep.subr.bf16.mxu0 0
    %6639 = vmatpush2.bf16.msra.mxu0 0
    %6640 = vmatprep.subr.bf16.mxu0 0
    %6641 = vmatpush2.bf16.msra.mxu0 0
    %6642 = vmatprep.subr.bf16.mxu0 0
    %6643 = vmatpush2.bf16.msra.mxu0 0
    %6644 = vmatprep.subr.bf16.mxu0 0
    %6645 = vmatpush2.bf16.msra.mxu0 0
    %6646 = vmatprep.mubr.bf16.mxu0 0
    %6647 = vmatmul.mubr.bf16.gmra.mxu0 %v6542
    %v6648 = vpop.f32.mrf.mxu0
    %v6649 = vadd.f32 0.0, %v6648
    %v6650 = vpop.f32.mrf.mxu0
    %v6651 = vpop.f32.mrf.mxu0
    %v6652 = vadd.f32 0.0, %v6651
    %v6653 = vpop.f32.mrf.mxu0
    %6654 = vmatprep.mubr.bf16.mxu0 0
    %6655 = vmatmul.mubr.bf16.gmra.mxu0 %v6543
    %v6656 = vpop.f32.mrf.mxu0
    %v6657 = vadd.f32 0.0, %v6656
    %v6658 = vpop.f32.mrf.mxu0
    %v6659 = vpop.f32.mrf.mxu0
    %v6660 = vadd.f32 0.0, %v6659
    %v6661 = vpop.f32.mrf.mxu0
    %6662 = vmatprep.mubr.bf16.mxu0 0
    %6663 = vmatmul.mubr.bf16.gmra.mxu0 %v6544
    %v6664 = vpop.f32.mrf.mxu0
    %v6665 = vadd.f32 0.0, %v6664
    %v6666 = vpop.f32.mrf.mxu0
    %v6667 = vpop.f32.mrf.mxu0
    %v6668 = vadd.f32 0.0, %v6667
    %v6669 = vpop.f32.mrf.mxu0
    %6670 = vmatprep.mubr.bf16.mxu0 0
    %6671 = vmatmul.mubr.bf16.gmra.mxu0 %v6545
    %v6672 = vpop.f32.mrf.mxu0
    %v6673 = vadd.f32 0.0, %v6672
    %v6674 = vpop.f32.mrf.mxu0
    %v6675 = vpop.f32.mrf.mxu0
    %v6676 = vadd.f32 0.0, %v6675
    %v6677 = vpop.f32.mrf.mxu0
    %6678 = vmatprep.mubr.bf16.mxu0 0
    %6679 = vmatmul.mubr.bf16.gmra.mxu0 %v6546
    %v6680 = vpop.f32.mrf.mxu0
    %v6681 = vadd.f32 0.0, %v6680
    %v6682 = vpop.f32.mrf.mxu0
    %v6683 = vpop.f32.mrf.mxu0
    %v6684 = vadd.f32 0.0, %v6683
    %v6685 = vpop.f32.mrf.mxu0
    %6686 = vmatprep.mubr.bf16.mxu0 0
    %6687 = vmatmul.mubr.bf16.gmra.mxu0 %v6547
    %v6688 = vpop.f32.mrf.mxu0
    %v6689 = vadd.f32 0.0, %v6688
    %v6690 = vpop.f32.mrf.mxu0
    %v6691 = vpop.f32.mrf.mxu0
    %v6692 = vadd.f32 0.0, %v6691
    %v6693 = vpop.f32.mrf.mxu0
    %6694 = vmatprep.mubr.bf16.mxu0 0
    %6695 = vmatmul.mubr.bf16.gmra.mxu0 %v6548
    %v6696 = vpop.f32.mrf.mxu0
    %v6697 = vadd.f32 0.0, %v6696
    %v6698 = vpop.f32.mrf.mxu0
    %v6699 = vpop.f32.mrf.mxu0
    %v6700 = vadd.f32 0.0, %v6699
    %v6701 = vpop.f32.mrf.mxu0
    %6702 = vmatprep.mubr.bf16.mxu0 0
    %6703 = vmatmul.mubr.bf16.gmra.mxu0 %v6549
    %v6704 = vpop.f32.mrf.mxu0
    %v6705 = vadd.f32 0.0, %v6704
    %v6706 = vpop.f32.mrf.mxu0
    %v6707 = vpop.f32.mrf.mxu0
    %v6708 = vadd.f32 0.0, %v6707
    %v6709 = vpop.f32.mrf.mxu0
    %6710 = vdwg.mxu0
    %v6711 = vpack.c.bf16 %v6652, %v6649
    %v6712 = vpack.c.bf16 %v6660, %v6657
    %v6713 = vpack.c.bf16 %v6668, %v6665
    %v6714 = vpack.c.bf16 %v6676, %v6673
    %v6715 = vpack.c.bf16 %v6684, %v6681
    %v6716 = vpack.c.bf16 %v6692, %v6689
    %v6717 = vpack.c.bf16 %v6700, %v6697
    %v6718 = vpack.c.bf16 %v6708, %v6705
    %v6727 = vunpack.c.l.b16 %v6711
    %v6728 = vunpack.c.h.b16 %v6711
    %v6729 = vunpack.c.l.b16 %v6712
    %v6730 = vunpack.c.h.b16 %v6712
    %v6731 = vunpack.c.l.b16 %v6713
    %v6732 = vunpack.c.h.b16 %v6713
    %v6733 = vunpack.c.l.b16 %v6714
    %v6734 = vunpack.c.h.b16 %v6714
    %v6735 = vunpack.c.l.b16 %v6715
    %v6736 = vunpack.c.h.b16 %v6715
    %v6737 = vunpack.c.l.b16 %v6716
    %v6738 = vunpack.c.h.b16 %v6716
    %v6739 = vunpack.c.l.b16 %v6717
    %v6740 = vunpack.c.h.b16 %v6717
    %v6741 = vunpack.c.l.b16 %v6718
    %v6742 = vunpack.c.h.b16 %v6718
    %v6743 = vpack.c.b16 %v6727, %v6727
    %v6744 = vpack.c.b16 %v6728, %v6728
    %v6745 = vpack.c.b16 %v6729, %v6729
    %v6746 = vpack.c.b16 %v6730, %v6730
    %v6747 = vpack.c.b16 %v6731, %v6731
    %v6748 = vpack.c.b16 %v6732, %v6732
    %v6749 = vpack.c.b16 %v6733, %v6733
    %v6750 = vpack.c.b16 %v6734, %v6734
    %v6751 = vpack.c.b16 %v6735, %v6735
    %v6752 = vpack.c.b16 %v6736, %v6736
    %v6753 = vpack.c.b16 %v6737, %v6737
    %v6754 = vpack.c.b16 %v6738, %v6738
    %v6755 = vpack.c.b16 %v6739, %v6739
    %v6756 = vpack.c.b16 %v6740, %v6740
    %v6757 = vpack.c.b16 %v6741, %v6741
    %v6758 = vpack.c.b16 %v6742, %v6742
    %6759 = vrot.lane.b32.xlu0 %v6743, 96
    %v6760 = vpop.permute.xlu0 %6759
    %6761 = vrot.lane.b32.xlu0 %v6744, 96
    %v6762 = vpop.permute.xlu0 %6761
    %6763 = vrot.lane.b32.xlu0 %v6745, 96
    %v6764 = vpop.permute.xlu0 %6763
    %6765 = vrot.lane.b32.xlu0 %v6746, 96
    %v6766 = vpop.permute.xlu0 %6765
    %6767 = vrot.lane.b32.xlu0 %v6747, 96
    %v6768 = vpop.permute.xlu0 %6767
    %6769 = vrot.lane.b32.xlu0 %v6748, 96
    %v6770 = vpop.permute.xlu0 %6769
    %6771 = vrot.lane.b32.xlu0 %v6749, 96
    %v6772 = vpop.permute.xlu0 %6771
    %6773 = vrot.lane.b32.xlu0 %v6750, 96
    %v6774 = vpop.permute.xlu0 %6773
    %6775 = vrot.lane.b32.xlu0 %v6751, 96
    %v6776 = vpop.permute.xlu0 %6775
    %6777 = vrot.lane.b32.xlu0 %v6752, 96
    %v6778 = vpop.permute.xlu0 %6777
    %6779 = vrot.lane.b32.xlu0 %v6753, 96
    %v6780 = vpop.permute.xlu0 %6779
    %6781 = vrot.lane.b32.xlu0 %v6754, 96
    %v6782 = vpop.permute.xlu0 %6781
    %6783 = vrot.lane.b32.xlu0 %v6755, 96
    %v6784 = vpop.permute.xlu0 %6783
    %6785 = vrot.lane.b32.xlu0 %v6756, 96
    %v6786 = vpop.permute.xlu0 %6785
    %6787 = vrot.lane.b32.xlu0 %v6757, 96
    %v6788 = vpop.permute.xlu0 %6787
    %6789 = vrot.lane.b32.xlu0 %v6758, 96
    %v6790 = vpop.permute.xlu0 %6789
    %6807 = vst.msk [vmem:[#allocation3 + $0x40] sm:$0xf] %vm3966, %v6760
    %6808 = vst.msk [vmem:[#allocation3 + $0x44] sm:$0xf] %vm3966, %v6762
    %6809 = vst.msk [vmem:[#allocation3 + $0x48] sm:$0xf] %vm3966, %v6764
    %6810 = vst.msk [vmem:[#allocation3 + $0x4c] sm:$0xf] %vm3966, %v6766
    %6811 = vst.msk [vmem:[#allocation3 + $0x50] sm:$0xf] %vm3966, %v6768
    %6812 = vst.msk [vmem:[#allocation3 + $0x54] sm:$0xf] %vm3966, %v6770
    %6813 = vst.msk [vmem:[#allocation3 + $0x58] sm:$0xf] %vm3966, %v6772
    %6814 = vst.msk [vmem:[#allocation3 + $0x5c] sm:$0xf] %vm3966, %v6774
    %6815 = vst.msk [vmem:[#allocation3 + $0x60] sm:$0xf] %vm3966, %v6776
    %6816 = vst.msk [vmem:[#allocation3 + $0x64] sm:$0xf] %vm3966, %v6778
    %6817 = vst.msk [vmem:[#allocation3 + $0x68] sm:$0xf] %vm3966, %v6780
    %6818 = vst.msk [vmem:[#allocation3 + $0x6c] sm:$0xf] %vm3966, %v6782
    %6819 = vst.msk [vmem:[#allocation3 + $0x70] sm:$0xf] %vm3966, %v6784
    %6820 = vst.msk [vmem:[#allocation3 + $0x74] sm:$0xf] %vm3966, %v6786
    %6821 = vst.msk [vmem:[#allocation3 + $0x78] sm:$0xf] %vm3966, %v6788
    %6822 = vst.msk [vmem:[#allocation3 + $0x7c] sm:$0xf] %vm3966, %v6790
    %v6823 = vld [vmem:[#allocation3] sm:$0xf]
    %v6824 = vld [vmem:[#allocation3 + $0x4] sm:$0xf]
    %v6825 = vld [vmem:[#allocation3 + $0x8] sm:$0xf]
    %v6826 = vld [vmem:[#allocation3 + $0xc] sm:$0xf]
    %v6827 = vld [vmem:[#allocation3 + $0x10] sm:$0xf]
    %v6828 = vld [vmem:[#allocation3 + $0x14] sm:$0xf]
    %v6829 = vld [vmem:[#allocation3 + $0x18] sm:$0xf]
    %v6830 = vld [vmem:[#allocation3 + $0x1c] sm:$0xf]
    %v6831 = vld [vmem:[#allocation3 + $0x20] sm:$0xf]
    %v6832 = vld [vmem:[#allocation3 + $0x24] sm:$0xf]
    %v6833 = vld [vmem:[#allocation3 + $0x28] sm:$0xf]
    %v6834 = vld [vmem:[#allocation3 + $0x2c] sm:$0xf]
    %v6835 = vld [vmem:[#allocation3 + $0x30] sm:$0xf]
    %v6836 = vld [vmem:[#allocation3 + $0x34] sm:$0xf]
    %v6837 = vld [vmem:[#allocation3 + $0x38] sm:$0xf]
    %v6838 = vld [vmem:[#allocation3 + $0x3c] sm:$0xf]
    %v6839 = vld [vmem:[#allocation3 + $0x40] sm:$0xf]
    %v6840 = vld [vmem:[#allocation3 + $0x44] sm:$0xf]
    %v6841 = vld [vmem:[#allocation3 + $0x48] sm:$0xf]
    %v6842 = vld [vmem:[#allocation3 + $0x4c] sm:$0xf]
    %v6843 = vld [vmem:[#allocation3 + $0x50] sm:$0xf]
    %v6844 = vld [vmem:[#allocation3 + $0x54] sm:$0xf]
    %v6845 = vld [vmem:[#allocation3 + $0x58] sm:$0xf]
    %v6846 = vld [vmem:[#allocation3 + $0x5c] sm:$0xf]
    %v6847 = vld [vmem:[#allocation3 + $0x60] sm:$0xf]
    %v6848 = vld [vmem:[#allocation3 + $0x64] sm:$0xf]
    %v6849 = vld [vmem:[#allocation3 + $0x68] sm:$0xf]
    %v6850 = vld [vmem:[#allocation3 + $0x6c] sm:$0xf]
    %v6851 = vld [vmem:[#allocation3 + $0x70] sm:$0xf]
    %v6852 = vld [vmem:[#allocation3 + $0x74] sm:$0xf]
    %v6853 = vld [vmem:[#allocation3 + $0x78] sm:$0xf]
    %v6854 = vld [vmem:[#allocation3 + $0x7c] sm:$0xf]
    %v6855 = vld [vmem:[#allocation9] sm:$0xf]
    %v6856 = vld [vmem:[#allocation9 + $0x4] sm:$0xf]
    %v6857 = vld [vmem:[#allocation9 + $0x8] sm:$0xf]
    %v6858 = vld [vmem:[#allocation9 + $0xc] sm:$0xf]
    %v6859 = vld [vmem:[#allocation9 + $0x10] sm:$0xf]
    %v6860 = vld [vmem:[#allocation9 + $0x14] sm:$0xf]
    %v6861 = vld [vmem:[#allocation9 + $0x18] sm:$0xf]
    %v6862 = vld [vmem:[#allocation9 + $0x1c] sm:$0xf]
    %v6863 = vld [vmem:[#allocation9 + $0x20] sm:$0xf]
    %v6864 = vld [vmem:[#allocation9 + $0x24] sm:$0xf]
    %v6865 = vld [vmem:[#allocation9 + $0x28] sm:$0xf]
    %v6866 = vld [vmem:[#allocation9 + $0x2c] sm:$0xf]
    %v6867 = vld [vmem:[#allocation9 + $0x30] sm:$0xf]
    %v6868 = vld [vmem:[#allocation9 + $0x34] sm:$0xf]
    %v6869 = vld [vmem:[#allocation9 + $0x38] sm:$0xf]
    %v6870 = vld [vmem:[#allocation9 + $0x3c] sm:$0xf]
    %v6871 = vld [vmem:[%s4] sm:$0x1]
    %v6873 = vlaneseq
    %v6874 = vshrl.u32 %v6873, 7
    %v6875 = vsub.s32 0, %v6874
    %v6876 = vrot.slane %v6871, %v6875
    %v6910 = vunpack.c.l.b16 %v6823
    %v6911 = vunpack.c.l.b16 %v6824
    %v6912 = vunpack.c.l.b16 %v6825
    %v6913 = vunpack.c.l.b16 %v6826
    %v6914 = vunpack.c.l.b16 %v6827
    %v6915 = vunpack.c.l.b16 %v6828
    %v6916 = vunpack.c.l.b16 %v6829
    %v6917 = vunpack.c.l.b16 %v6830
    %v6918 = vunpack.c.l.b16 %v6831
    %v6919 = vunpack.c.l.b16 %v6832
    %v6920 = vunpack.c.l.b16 %v6833
    %v6921 = vunpack.c.l.b16 %v6834
    %v6922 = vunpack.c.l.b16 %v6835
    %v6923 = vunpack.c.l.b16 %v6836
    %v6924 = vunpack.c.l.b16 %v6837
    %v6925 = vunpack.c.l.b16 %v6838
    %v6926 = vunpack.c.l.b16 %v6839
    %v6927 = vunpack.c.l.b16 %v6840
    %v6928 = vunpack.c.l.b16 %v6841
    %v6929 = vunpack.c.l.b16 %v6842
    %v6930 = vunpack.c.l.b16 %v6843
    %v6931 = vunpack.c.l.b16 %v6844
    %v6932 = vunpack.c.l.b16 %v6845
    %v6933 = vunpack.c.l.b16 %v6846
    %v6934 = vunpack.c.l.b16 %v6847
    %v6935 = vunpack.c.l.b16 %v6848
    %v6936 = vunpack.c.l.b16 %v6849
    %v6937 = vunpack.c.l.b16 %v6850
    %v6938 = vunpack.c.l.b16 %v6851
    %v6939 = vunpack.c.l.b16 %v6852
    %v6940 = vunpack.c.l.b16 %v6853
    %v6941 = vunpack.c.l.b16 %v6854
    %v6942 = vpack.c.b16 %v6911, %v6910
    %v6943 = vpack.c.b16 %v6913, %v6912
    %v6944 = vpack.c.b16 %v6915, %v6914
    %v6945 = vpack.c.b16 %v6917, %v6916
    %v6946 = vpack.c.b16 %v6919, %v6918
    %v6947 = vpack.c.b16 %v6921, %v6920
    %v6948 = vpack.c.b16 %v6923, %v6922
    %v6949 = vpack.c.b16 %v6925, %v6924
    %v6950 = vpack.c.b16 %v6927, %v6926
    %v6951 = vpack.c.b16 %v6929, %v6928
    %v6952 = vpack.c.b16 %v6931, %v6930
    %v6953 = vpack.c.b16 %v6933, %v6932
    %v6954 = vpack.c.b16 %v6935, %v6934
    %v6955 = vpack.c.b16 %v6937, %v6936
    %v6956 = vpack.c.b16 %v6939, %v6938
    %v6957 = vpack.c.b16 %v6941, %v6940
    %v6990 = vunpack.c.l.b16 %v6855
    %v6991 = vunpack.c.l.b16 %v6856
    %v6992 = vunpack.c.l.b16 %v6857
    %v6993 = vunpack.c.l.b16 %v6858
    %v6994 = vunpack.c.l.b16 %v6859
    %v6995 = vunpack.c.l.b16 %v6860
    %v6996 = vunpack.c.l.b16 %v6861
    %v6997 = vunpack.c.l.b16 %v6862
    %v6998 = vunpack.c.l.b16 %v6863
    %v6999 = vunpack.c.l.b16 %v6864
    %v7000 = vunpack.c.l.b16 %v6865
    %v7001 = vunpack.c.l.b16 %v6866
    %v7002 = vunpack.c.l.b16 %v6867
    %v7003 = vunpack.c.l.b16 %v6868
    %v7004 = vunpack.c.l.b16 %v6869
    %v7005 = vunpack.c.l.b16 %v6870
    %v7006 = vpack.c.b16 %v6991, %v6990
    %v7007 = vpack.c.b16 %v6993, %v6992
    %v7008 = vpack.c.b16 %v6995, %v6994
    %v7009 = vpack.c.b16 %v6997, %v6996
    %v7010 = vpack.c.b16 %v6999, %v6998
    %v7011 = vpack.c.b16 %v7001, %v7000
    %v7012 = vpack.c.b16 %v7003, %v7002
    %v7013 = vpack.c.b16 %v7005, %v7004
    %7022 = vmatprep.subr.bf16.mxu0 0
    %7023 = vmatpush1.bf16.msra.mxu0 %v7013
    %7024 = vmatprep.subr.bf16.mxu0 0
    %7025 = vmatpush1.bf16.msra.mxu0 %v7012
    %7026 = vmatprep.subr.bf16.mxu0 0
    %7027 = vmatpush1.bf16.msra.mxu0 %v7011
    %7028 = vmatprep.subr.bf16.mxu0 0
    %7029 = vmatpush1.bf16.msra.mxu0 %v7010
    %7030 = vmatprep.subr.bf16.mxu0 0
    %7031 = vmatpush1.bf16.msra.mxu0 %v7009
    %7032 = vmatprep.subr.bf16.mxu0 0
    %7033 = vmatpush1.bf16.msra.mxu0 %v7008
    %7034 = vmatprep.subr.bf16.mxu0 0
    %7035 = vmatpush1.bf16.msra.mxu0 %v7007
    %7036 = vmatprep.subr.bf16.mxu0 0
    %7037 = vmatpush1.bf16.msra.mxu0 %v7006
    %7038 = vmatprep.subr.bf16.mxu0 0
    %7039 = vmatpush2.bf16.msra.mxu0 0
    %7040 = vmatprep.subr.bf16.mxu0 0
    %7041 = vmatpush2.bf16.msra.mxu0 0
    %7042 = vmatprep.subr.bf16.mxu0 0
    %7043 = vmatpush2.bf16.msra.mxu0 0
    %7044 = vmatprep.subr.bf16.mxu0 0
    %7045 = vmatpush2.bf16.msra.mxu0 0
    %7046 = vmatprep.subr.bf16.mxu0 0
    %7047 = vmatpush2.bf16.msra.mxu0 0
    %7048 = vmatprep.subr.bf16.mxu0 0
    %7049 = vmatpush2.bf16.msra.mxu0 0
    %7050 = vmatprep.subr.bf16.mxu0 0
    %7051 = vmatpush2.bf16.msra.mxu0 0
    %7052 = vmatprep.subr.bf16.mxu0 0
    %7053 = vmatpush2.bf16.msra.mxu0 0
    %7054 = vmatprep.mubr.bf16.mxu0 0
    %7055 = vmatmul.mubr.bf16.gmra.mxu0 %v6942
    %v7056 = vpop.f32.mrf.mxu0
    %v7057 = vadd.f32 %v6876, %v7056
    %v7058 = vpop.f32.mrf.mxu0
    %v7059 = vpop.f32.mrf.mxu0
    %v7060 = vadd.f32 %v6876, %v7059
    %v7061 = vpop.f32.mrf.mxu0
    %7062 = vmatprep.mubr.bf16.mxu0 0
    %7063 = vmatmul.mubr.bf16.gmra.mxu0 %v6943
    %v7064 = vpop.f32.mrf.mxu0
    %v7065 = vadd.f32 %v6876, %v7064
    %v7066 = vpop.f32.mrf.mxu0
    %v7067 = vpop.f32.mrf.mxu0
    %v7068 = vadd.f32 %v6876, %v7067
    %v7069 = vpop.f32.mrf.mxu0
    %7070 = vmatprep.mubr.bf16.mxu0 0
    %7071 = vmatmul.mubr.bf16.gmra.mxu0 %v6944
    %v7072 = vpop.f32.mrf.mxu0
    %v7073 = vadd.f32 %v6876, %v7072
    %v7074 = vpop.f32.mrf.mxu0
    %v7075 = vpop.f32.mrf.mxu0
    %v7076 = vadd.f32 %v6876, %v7075
    %v7077 = vpop.f32.mrf.mxu0
    %7078 = vmatprep.mubr.bf16.mxu0 0
    %7079 = vmatmul.mubr.bf16.gmra.mxu0 %v6945
    %v7080 = vpop.f32.mrf.mxu0
    %v7081 = vadd.f32 %v6876, %v7080
    %v7082 = vpop.f32.mrf.mxu0
    %v7083 = vpop.f32.mrf.mxu0
    %v7084 = vadd.f32 %v6876, %v7083
    %v7085 = vpop.f32.mrf.mxu0
    %7086 = vmatprep.mubr.bf16.mxu0 0
    %7087 = vmatmul.mubr.bf16.gmra.mxu0 %v6946
    %v7088 = vpop.f32.mrf.mxu0
    %v7089 = vadd.f32 %v6876, %v7088
    %v7090 = vpop.f32.mrf.mxu0
    %v7091 = vpop.f32.mrf.mxu0
    %v7092 = vadd.f32 %v6876, %v7091
    %v7093 = vpop.f32.mrf.mxu0
    %7094 = vmatprep.mubr.bf16.mxu0 0
    %7095 = vmatmul.mubr.bf16.gmra.mxu0 %v6947
    %v7096 = vpop.f32.mrf.mxu0
    %v7097 = vadd.f32 %v6876, %v7096
    %v7098 = vpop.f32.mrf.mxu0
    %v7099 = vpop.f32.mrf.mxu0
    %v7100 = vadd.f32 %v6876, %v7099
    %v7101 = vpop.f32.mrf.mxu0
    %7102 = vmatprep.mubr.bf16.mxu0 0
    %7103 = vmatmul.mubr.bf16.gmra.mxu0 %v6948
    %v7104 = vpop.f32.mrf.mxu0
    %v7105 = vadd.f32 %v6876, %v7104
    %v7106 = vpop.f32.mrf.mxu0
    %v7107 = vpop.f32.mrf.mxu0
    %v7108 = vadd.f32 %v6876, %v7107
    %v7109 = vpop.f32.mrf.mxu0
    %7110 = vmatprep.mubr.bf16.mxu0 0
    %7111 = vmatmul.mubr.bf16.gmra.mxu0 %v6949
    %v7112 = vpop.f32.mrf.mxu0
    %v7113 = vadd.f32 %v6876, %v7112
    %v7114 = vpop.f32.mrf.mxu0
    %v7115 = vpop.f32.mrf.mxu0
    %v7116 = vadd.f32 %v6876, %v7115
    %v7117 = vpop.f32.mrf.mxu0
    %7118 = vmatprep.mubr.bf16.mxu0 0
    %7119 = vmatmul.mubr.bf16.gmra.mxu0 %v6950
    %v7120 = vpop.f32.mrf.mxu0
    %v7121 = vadd.f32 %v6876, %v7120
    %v7122 = vpop.f32.mrf.mxu0
    %v7123 = vpop.f32.mrf.mxu0
    %v7124 = vadd.f32 %v6876, %v7123
    %v7125 = vpop.f32.mrf.mxu0
    %7126 = vmatprep.mubr.bf16.mxu0 0
    %7127 = vmatmul.mubr.bf16.gmra.mxu0 %v6951
    %v7128 = vpop.f32.mrf.mxu0
    %v7129 = vadd.f32 %v6876, %v7128
    %v7130 = vpop.f32.mrf.mxu0
    %v7131 = vpop.f32.mrf.mxu0
    %v7132 = vadd.f32 %v6876, %v7131
    %v7133 = vpop.f32.mrf.mxu0
    %7134 = vmatprep.mubr.bf16.mxu0 0
    %7135 = vmatmul.mubr.bf16.gmra.mxu0 %v6952
    %v7136 = vpop.f32.mrf.mxu0
    %v7137 = vadd.f32 %v6876, %v7136
    %v7138 = vpop.f32.mrf.mxu0
    %v7139 = vpop.f32.mrf.mxu0
    %v7140 = vadd.f32 %v6876, %v7139
    %v7141 = vpop.f32.mrf.mxu0
    %7142 = vmatprep.mubr.bf16.mxu0 0
    %7143 = vmatmul.mubr.bf16.gmra.mxu0 %v6953
    %v7144 = vpop.f32.mrf.mxu0
    %v7145 = vadd.f32 %v6876, %v7144
    %v7146 = vpop.f32.mrf.mxu0
    %v7147 = vpop.f32.mrf.mxu0
    %v7148 = vadd.f32 %v6876, %v7147
    %v7149 = vpop.f32.mrf.mxu0
    %7150 = vmatprep.mubr.bf16.mxu0 0
    %7151 = vmatmul.mubr.bf16.gmra.mxu0 %v6954
    %v7152 = vpop.f32.mrf.mxu0
    %v7153 = vadd.f32 %v6876, %v7152
    %v7154 = vpop.f32.mrf.mxu0
    %v7155 = vpop.f32.mrf.mxu0
    %v7156 = vadd.f32 %v6876, %v7155
    %v7157 = vpop.f32.mrf.mxu0
    %7158 = vmatprep.mubr.bf16.mxu0 0
    %7159 = vmatmul.mubr.bf16.gmra.mxu0 %v6955
    %v7160 = vpop.f32.mrf.mxu0
    %v7161 = vadd.f32 %v6876, %v7160
    %v7162 = vpop.f32.mrf.mxu0
    %v7163 = vpop.f32.mrf.mxu0
    %v7164 = vadd.f32 %v6876, %v7163
    %v7165 = vpop.f32.mrf.mxu0
    %7166 = vmatprep.mubr.bf16.mxu0 0
    %7167 = vmatmul.mubr.bf16.gmra.mxu0 %v6956
    %v7168 = vpop.f32.mrf.mxu0
    %v7169 = vadd.f32 %v6876, %v7168
    %v7170 = vpop.f32.mrf.mxu0
    %v7171 = vpop.f32.mrf.mxu0
    %v7172 = vadd.f32 %v6876, %v7171
    %v7173 = vpop.f32.mrf.mxu0
    %7174 = vmatprep.mubr.bf16.mxu0 0
    %7175 = vmatmul.mubr.bf16.gmra.mxu0 %v6957
    %v7176 = vpop.f32.mrf.mxu0
    %v7177 = vadd.f32 %v6876, %v7176
    %v7178 = vpop.f32.mrf.mxu0
    %v7179 = vpop.f32.mrf.mxu0
    %v7180 = vadd.f32 %v6876, %v7179
    %v7181 = vpop.f32.mrf.mxu0
    %7182 = vdwg.mxu0
    %7183 = vst [vmem:[#allocation10] sm:$0xff] %v7057
    %7184 = vst [vmem:[#allocation10 + $0x8] sm:$0xff] %v7060
    %7185 = vst [vmem:[#allocation10 + $0x10] sm:$0xff] %v7065
    %7186 = vst [vmem:[#allocation10 + $0x18] sm:$0xff] %v7068
    %7187 = vst [vmem:[#allocation10 + $0x20] sm:$0xff] %v7073
    %7188 = vst [vmem:[#allocation10 + $0x28] sm:$0xff] %v7076
    %7189 = vst [vmem:[#allocation10 + $0x30] sm:$0xff] %v7081
    %7190 = vst [vmem:[#allocation10 + $0x38] sm:$0xff] %v7084
    %7191 = vst [vmem:[#allocation10 + $0x40] sm:$0xff] %v7089
    %7192 = vst [vmem:[#allocation10 + $0x48] sm:$0xff] %v7092
    %7193 = vst [vmem:[#allocation10 + $0x50] sm:$0xff] %v7097
    %7194 = vst [vmem:[#allocation10 + $0x58] sm:$0xff] %v7100
    %7195 = vst [vmem:[#allocation10 + $0x60] sm:$0xff] %v7105
    %7196 = vst [vmem:[#allocation10 + $0x68] sm:$0xff] %v7108
    %7197 = vst [vmem:[#allocation10 + $0x70] sm:$0xff] %v7113
    %7198 = vst [vmem:[#allocation10 + $0x78] sm:$0xff] %v7116
    %7199 = vst [vmem:[#allocation10 + $0x80] sm:$0xff] %v7121
    %7200 = vst [vmem:[#allocation10 + $0x88] sm:$0xff] %v7124
    %7201 = vst [vmem:[#allocation10 + $0x90] sm:$0xff] %v7129
    %7202 = vst [vmem:[#allocation10 + $0x98] sm:$0xff] %v7132
    %7203 = vst [vmem:[#allocation10 + $0xa0] sm:$0xff] %v7137
    %7204 = vst [vmem:[#allocation10 + $0xa8] sm:$0xff] %v7140
    %7205 = vst [vmem:[#allocation10 + $0xb0] sm:$0xff] %v7145
    %7206 = vst [vmem:[#allocation10 + $0xb8] sm:$0xff] %v7148
    %7207 = vst [vmem:[#allocation10 + $0xc0] sm:$0xff] %v7153
    %7208 = vst [vmem:[#allocation10 + $0xc8] sm:$0xff] %v7156
    %7209 = vst [vmem:[#allocation10 + $0xd0] sm:$0xff] %v7161
    %7210 = vst [vmem:[#allocation10 + $0xd8] sm:$0xff] %v7164
    %7211 = vst [vmem:[#allocation10 + $0xe0] sm:$0xff] %v7169
    %7212 = vst [vmem:[#allocation10 + $0xe8] sm:$0xff] %v7172
    %7213 = vst [vmem:[#allocation10 + $0xf0] sm:$0xff] %v7177
    %7214 = vst [vmem:[#allocation10 + $0xf8] sm:$0xff] %v7180
    // Predicated region
    $region34: #{tpu_custom_call.1} parent=1 // pred_check
      _
    $region35: #{tpu_custom_call.1} parent=1 // pred_check_branch
      %7216 = sbr.rel (0) target = $region37
    $region36: #{tpu_custom_call.1} parent=1 // pred_region
      %s7218 = ssub.s32 4096, 4096
      %7219 = vsyncadd [#allocation6], %s7218
      %s7220 = sshll.u32 [#allocation10], 4
      %s7221 = int_to_ptr.vmem [resolvable:$true] %s7220
      %7226 = dma.vmem_to_hbm [thread:$0]  %s7221, 4096, %s5, [#allocation6], 128, 128, 8
    $region37: #{tpu_custom_call.1} parent=1 // pred_fallthru
      _
    // Predicated region
    $region38: #{tpu_custom_call.1} parent=1 // pred_check
      _
    $region39: #{tpu_custom_call.1} parent=1 // pred_check_branch
      %7228 = sbr.rel (0) target = $region41
    $region40: #{tpu_custom_call.1} parent=1 // pred_region
      %7229 = dma.done [#allocation6], 4096
    $region41: #{tpu_custom_call.1} parent=1 // pred_fallthru
      _
    %7230 = vsyncpa [#allocation5], 1
    %7231 = vsyncpa [#allocation8], 1
    %7232 = vsyncpa [#allocation6], 1

</llo_original>
